<compile_context>
chip_gen: v7x
topology: tpu7x:2x2x1
jax: 0.10.0
libtpu: 0.0.40
codegen_flags: <defaults>
</compile_context>

<pallas_src>
import functools

import jax
import jax.numpy as jnp
import numpy as np
from jax import lax
from jax.experimental import pallas as pl
from jax.experimental.pallas import tpu as pltpu

EPS = 1e-5
NEG_INF = -1e30  # finite "minus infinity" -> additive mask, no inf arithmetic


def transformer_block_kernel(
    x_ref,       # (Bb*T, Ep)     batch-block of token rows (padded to Ep lanes)
    wqkv_ref,    # (1, Ep, 3*Ep)  THIS head's fused [q | k | v] weights
    wo_ref,      # (1, Ep, Ep)    THIS head's fc_out slice
    bo_ref,      # (1, Ep)  f32
    g1_ref,      # (1, Ep)  norm1 gamma
    be1_ref,     # (1, Ep)  norm1 beta
    g2_ref,      # (1, Ep)  norm2 gamma
    be2_ref,     # (1, Ep)  norm2 beta
    w1_ref,      # (Ep, Ep) ff linear1 (transposed)
    bf1_ref,     # (1, Ep)
    w2_ref,      # (Ep, Ep) ff linear2 (transposed)
    bf2_ref,     # (1, Ep)
    o_ref,       # (Bb*T, Ep)
    att_acc,     # scratch: (Bb*T, Ep) f32 cross-head attention accumulator
    *,
    tokens,
    real_e,
    compute_dtype,
    approx_recip,
    precision,
):
    R, Ep = x_ref.shape
    T = tokens
    Bb = R // T
    h = pl.program_id(1)

    @pl.when(h == 0)
    def _():
        att_acc[...] = jnp.zeros_like(att_acc)

    # Fused lane-dense per-head QKV projection; f32 MXU accumulation, cast to
    # the matmul-input dtype ONCE (no per-slice casts in the loop below).
    x_mm = x_ref[...].astype(compute_dtype)
    qkv = jnp.dot(x_mm, wqkv_ref[0], precision=precision,
                  preferred_element_type=jnp.float32).astype(compute_dtype)
    wo_h = wo_ref[0]                                   # (Ep, Ep) compute_dtype

    # Additive causal mask (strict upper triangle), NaN/inf-safe.
    row = lax.broadcasted_iota(jnp.int32, (T, T), 0)
    col = lax.broadcasted_iota(jnp.int32, (T, T), 1)
    add_mask = jnp.where(col <= row, jnp.float32(0.0), jnp.float32(NEG_INF))

    # Static loop over the (small) batch elements of this block; the head loop
    # lives on the grid, so per-step live ranges stay bounded.
    for b in range(Bb):
        r0 = b * T
        q = qkv[r0:r0 + T, 0:Ep]
        k = qkv[r0:r0 + T, Ep:2 * Ep]
        v = qkv[r0:r0 + T, 2 * Ep:3 * Ep]

        # q @ k^T without materializing a transpose (contract last dims).
        energy = lax.dot_general(
            q, k, dimension_numbers=(((1,), (1,)), ((), ())),
            precision=precision, preferred_element_type=jnp.float32,
        ) + add_mask                                   # (T, T), unscaled

        m = jnp.max(energy, axis=-1, keepdims=True)
        p = jnp.exp(energy - m)
        s = jnp.sum(p, axis=-1, keepdims=True)
        inv_s = pl.reciprocal(s, approx=approx_recip)  # EUP when approx

        head = jnp.dot(p.astype(compute_dtype), v, precision=precision,
                       preferred_element_type=jnp.float32) * inv_s
        contrib = jnp.dot(head.astype(compute_dtype), wo_h, precision=precision,
                          preferred_element_type=jnp.float32)
        att_acc[r0:r0 + T, :] += contrib

    # Bias + residuals + LayerNorms + FFN only once, after the last head.
    @pl.when(h == pl.num_programs(1) - 1)
    def _():
        x_f32 = x_ref[...].astype(jnp.float32)
        att = att_acc[...] + bo_ref[...]               # (Bb*T, Ep) f32

        lane = lax.broadcasted_iota(jnp.int32, (1, Ep), 1)
        lane_mask = (lane < real_e).astype(jnp.float32)
        inv_e = jnp.float32(1.0 / real_e)

        def layernorm(z, gamma, beta):
            # Padded lanes of z are exactly zero, so a plain sum with an
            # explicit 1/E gives the true mean; variance is lane-masked.
            mu = jnp.sum(z, axis=-1, keepdims=True) * inv_e
            d = (z - mu) * lane_mask
            var = jnp.sum(d * d, axis=-1, keepdims=True) * inv_e
            return d * lax.rsqrt(var + EPS) * gamma + beta

        n1 = layernorm(att + x_f32, g1_ref[...], be1_ref[...])

        ff = jnp.dot(n1.astype(compute_dtype), w1_ref[...], precision=precision,
                     preferred_element_type=jnp.float32) + bf1_ref[...]
        ff = jnp.maximum(ff, 0.0)
        ff = jnp.dot(ff.astype(compute_dtype), w2_ref[...], precision=precision,
                     preferred_element_type=jnp.float32) + bf2_ref[...]

        out = layernorm(att + ff, g2_ref[...], be2_ref[...])
        o_ref[...] = out.astype(o_ref.dtype)


def _pack_params(params, Ep, compute_dtype):
    """Pad to Ep lanes; per-head [q|k|v] (H, Ep, 3*Ep) and per-head fc_out (H, Ep, Ep)."""
    H, E, _ = params["wq"].shape
    pe = Ep - E

    def pad_mat(w):
        return jnp.pad(w, ((0, pe), (0, pe)))

    def pad_vec(v):
        return jnp.pad(v, ((0, 0), (0, pe))).astype(jnp.float32)

    wqkv = jnp.stack(
        [jnp.concatenate([pad_mat(params["wq"][h]),
                          pad_mat(params["wk"][h]),
                          pad_mat(params["wv"][h])], axis=1) for h in range(H)],
        axis=0).astype(compute_dtype)                              # (H, Ep, 3*Ep)
    wo = jnp.stack(
        [pad_mat(params["wo"][h * E:(h + 1) * E]) for h in range(H)],
        axis=0).astype(compute_dtype)                              # (H, Ep, Ep)
    w1 = pad_mat(params["w1"]).astype(compute_dtype)
    w2 = pad_mat(params["w2"]).astype(compute_dtype)
    vecs = {k: pad_vec(params[k]) for k in ("bo", "g1", "be1", "g2", "be2", "bf1", "bf2")}
    return wqkv, wo, w1, w2, vecs


def _batch_block(B, T, target_rows=512):
    """Batch elements per grid step: Bb*T % 8 == 0 (or full batch), row slab
    near target_rows, and >= 2 grid steps along the parallel axis when possible."""
    cands = [d for d in range(1, B + 1)
             if B % d == 0 and (d == B or (d * T) % 8 == 0)]
    pref = [d for d in cands if d * T <= target_rows and (B < 2 or B // d >= 2)]
    if not pref:
        pref = [d for d in cands if d * T <= target_rows]
    if not pref:
        pref = [min(cands)]
    return max(pref)


def transformer_block(x, params, *, compute_dtype=jnp.bfloat16, approx_recip=False):
    B, T, E = x.shape
    H = params["wq"].shape[0]
    Ep = ((E + 127) // 128) * 128          # lane-dense working width
    Bb = _batch_block(B, T)
    rows = Bb * T

    wqkv, wo, w1, w2, vecs = _pack_params(params, Ep, compute_dtype)
    x2 = jnp.pad(x.reshape(B * T, E), ((0, 0), (0, Ep - E)))

    is_f32 = jnp.dtype(compute_dtype) == jnp.dtype(jnp.float32)
    precision = lax.Precision.HIGHEST if is_f32 else lax.Precision.DEFAULT

    kernel = functools.partial(
        transformer_block_kernel,
        tokens=T, real_e=E, compute_dtype=compute_dtype,
        approx_recip=approx_recip, precision=precision)

    # ---- generation-aware VMEM budget --------------------------------------
    wb = jnp.dtype(compute_dtype).itemsize
    head_blk = (3 * Ep * Ep + Ep * Ep) * wb            # streamed per-head weights
    const_blk = 2 * Ep * Ep * wb + 7 * Ep * 4          # w1/w2 + bias/LN vectors
    io_blk = 2 * rows * Ep * x.dtype.itemsize          # x block + output block
    act = rows * 3 * Ep * (4 + wb) + 4 * rows * Ep * 4 + 2 * T * T * 4
    est = 2 * (head_blk + io_blk) + 2 * const_blk + rows * Ep * 4 + act
    try:
        physical = int(getattr(pltpu.get_tpu_info(), "vmem_capacity_bytes", 64 << 20))
    except Exception:
        physical = 64 << 20                            # conservative (v7x) default
    vmem_limit = int(min(max(int(1.5 * est), 32 << 20), int(0.85 * physical)))

    grid = (B // Bb, H)

    def run(use_buffered):
        const_kwargs = {"pipeline_mode": pl.Buffered(1)} if use_buffered else {}

        def const_spec(shape):
            return pl.BlockSpec(shape, lambda b, h: (0,) * len(shape), **const_kwargs)

        in_specs = [
            pl.BlockSpec((rows, Ep), lambda b, h: (b, 0)),          # x rows (per batch block)
            pl.BlockSpec((1, Ep, 3 * Ep), lambda b, h: (h, 0, 0)),  # streamed per-head qkv W
            pl.BlockSpec((1, Ep, Ep), lambda b, h: (h, 0, 0)),      # streamed per-head fc_out W
            const_spec((1, Ep)),                                    # bo
            const_spec((1, Ep)), const_spec((1, Ep)),               # norm1 gamma / beta
            const_spec((1, Ep)), const_spec((1, Ep)),               # norm2 gamma / beta
            const_spec((Ep, Ep)), const_spec((1, Ep)),              # ff w1 / b1
            const_spec((Ep, Ep)), const_spec((1, Ep)),              # ff w2 / b2
        ]
        return pl.pallas_call(
            kernel,
            out_shape=jax.ShapeDtypeStruct((B * T, Ep), x.dtype),
            grid_spec=pltpu.PrefetchScalarGridSpec(
                num_scalar_prefetch=0,
                grid=grid,
                in_specs=in_specs,
                out_specs=pl.BlockSpec((rows, Ep), lambda b, h: (b, 0)),
                scratch_shapes=[pltpu.VMEM((rows, Ep), jnp.float32)],
            ),
            compiler_params=pltpu.CompilerParams(
                dimension_semantics=("parallel", "arbitrary"),
                vmem_limit_bytes=vmem_limit,
            ),
        )(x2, wqkv, wo, vecs["bo"], vecs["g1"], vecs["be1"],
          vecs["g2"], vecs["be2"], w1, vecs["bf1"], w2, vecs["bf2"])

    try:
        out2 = run(True)
    except Exception:
        # TODO(synk): drop this fallback once pl.Buffered(1) on constant-index
        #             specs is confirmed on the deployed jax/libtpu version.
        out2 = run(False)

    return out2[:, :E].reshape(B, T, E)


def reference_block(x, params):
    """Pure-JAX replica of the PyTorch forward (f32, HIGHEST precision matmuls)."""
    P = lax.Precision.HIGHEST
    B, T, E = x.shape
    H = params["wq"].shape[0]
    keep = jnp.tril(jnp.ones((T, T), dtype=bool))

    outs = []
    for h in range(H):
        q = jnp.einsum("bte,ef->btf", x, params["wq"][h], precision=P)
        k = jnp.einsum("bte,ef->btf", x, params["wk"][h], precision=P)
        v = jnp.einsum("bte,ef->btf", x, params["wv"][h], precision=P)
        energy = jnp.einsum("bie,bje->bij", q, k, precision=P)
        energy = jnp.where(keep[None], energy, -jnp.inf)
        attn = jax.nn.softmax(energy, axis=-1)
        outs.append(jnp.einsum("bij,bje->bie", attn, v, precision=P))
    concat = jnp.concatenate(outs, axis=-1)
    att = jnp.einsum("btf,fe->bte", concat, params["wo"], precision=P) + params["bo"][0]

    def ln(z, g, b):
        mu = jnp.mean(z, axis=-1, keepdims=True)
        var = jnp.mean((z - mu) ** 2, axis=-1, keepdims=True)
        return (z - mu) / jnp.sqrt(var + EPS) * g[0] + b[0]

    n1 = ln(att + x, params["g1"], params["be1"])
    h1 = jnp.einsum("bte,ef->btf", n1, params["w1"], precision=P) + params["bf1"][0]
    ff = jnp.einsum("bte,ef->btf", jnp.maximum(h1, 0.0), params["w2"], precision=P) + params["bf2"][0]
    return ln(att + ff, params["g2"], params["be2"])


def init_params(key, embed_size, head_count):
    E, H = embed_size, head_count
    ks = jax.random.split(key, 8)
    scale = 0.05
    # Weights are stored pre-transposed (in_features, out_features) so the kernel
    # does `x @ W` directly (equivalent to PyTorch's `x @ weight.T`).
    return {
        "wq": scale * jax.random.normal(ks[0], (H, E, E), jnp.float32),
        "wk": scale * jax.random.normal(ks[1], (H, E, E), jnp.float32),
        "wv": scale * jax.random.normal(ks[2], (H, E, E), jnp.float32),
        "wo": scale * jax.random.normal(ks[3], (H * E, E), jnp.float32),
        "bo": scale * jax.random.normal(ks[4], (1, E), jnp.float32),
        "g1": jnp.ones((1, E), jnp.float32),
        "be1": jnp.zeros((1, E), jnp.float32),
        "g2": jnp.ones((1, E), jnp.float32),
        "be2": jnp.zeros((1, E), jnp.float32),
        "w1": scale * jax.random.normal(ks[5], (E, E), jnp.float32),
        "bf1": scale * jax.random.normal(ks[6], (1, E), jnp.float32),
        "w2": scale * jax.random.normal(ks[7], (E, E), jnp.float32),
        "bf2": jnp.zeros((1, E), jnp.float32),
    }


if __name__ == "__main__":
    B, T, E, H = 2, 8, 32, 2
    key = jax.random.PRNGKey(0)
    k_x, k_p = jax.random.split(key)
    x = jax.random.normal(k_x, (B, T, E), jnp.float32)
    params = init_params(k_p, E, H)

    ref = reference_block(x, params)

    # f32 matmul-input path (HIGHEST-precision MXU passes): tight agreement.
    out_f32 = jax.block_until_ready(
        transformer_block(x, params, compute_dtype=jnp.float32)
    )
    np.testing.assert_allclose(np.asarray(out_f32), np.asarray(ref), rtol=1e-4, atol=1e-4)

    # Default path: bf16 matmul inputs (f32 accumulation, f32 softmax/LayerNorm)
    # with EUP approx reciprocal -- looser tolerance, as expected for bf16.
    out_bf16 = jax.block_until_ready(transformer_block(x, params, approx_recip=True))
    np.testing.assert_allclose(np.asarray(out_bf16), np.asarray(ref), rtol=5e-2, atol=5e-2)

    print("KERNEL_OK")
</pallas_src>

<mosaic_0001>
module attributes {stable_mosaic.version = 11 : i64} {
  func.func @transformer_block_kernel(%arg0: i32, %arg1: i32, %arg2: memref<8x128xf32, #tpu.memory_space<vmem>>, %arg3: memref<1x128x384xf32, #tpu.memory_space<vmem>>, %arg4: memref<1x128x128xf32, #tpu.memory_space<vmem>>, %arg5: memref<1x128xf32, #tpu.memory_space<vmem>>, %arg6: memref<1x128xf32, #tpu.memory_space<vmem>>, %arg7: memref<1x128xf32, #tpu.memory_space<vmem>>, %arg8: memref<1x128xf32, #tpu.memory_space<vmem>>, %arg9: memref<1x128xf32, #tpu.memory_space<vmem>>, %arg10: memref<128x128xf32, #tpu.memory_space<vmem>>, %arg11: memref<1x128xf32, #tpu.memory_space<vmem>>, %arg12: memref<128x128xf32, #tpu.memory_space<vmem>>, %arg13: memref<1x128xf32, #tpu.memory_space<vmem>>, %arg14: memref<8x128xf32, #tpu.memory_space<vmem>>, %arg15: memref<8x128xf32, #tpu.memory_space<vmem>>) attributes {dimension_semantics = [#tpu.dimension_semantics<parallel>, #tpu.dimension_semantics<arbitrary>], iteration_bounds = array<i64: 2, 2>, scalar_prefetch = 0 : i64, scratch_operands = 1 : i64, tpu.core_type = #tpu.core_type<tc>, window_params = [{transform_indices = @transform_0, window_bounds = array<i64: 8, 128>}, {transform_indices = @transform_1, window_bounds = array<i64: 1, 128, 384>}, {transform_indices = @transform_2, window_bounds = array<i64: 1, 128, 128>}, {pipeline_mode = #tpu.pipeline_mode<synchronous>, transform_indices = @transform_3, window_bounds = array<i64: 1, 128>}, {pipeline_mode = #tpu.pipeline_mode<synchronous>, transform_indices = @transform_4, window_bounds = array<i64: 1, 128>}, {pipeline_mode = #tpu.pipeline_mode<synchronous>, transform_indices = @transform_5, window_bounds = array<i64: 1, 128>}, {pipeline_mode = #tpu.pipeline_mode<synchronous>, transform_indices = @transform_6, window_bounds = array<i64: 1, 128>}, {pipeline_mode = #tpu.pipeline_mode<synchronous>, transform_indices = @transform_7, window_bounds = array<i64: 1, 128>}, {pipeline_mode = #tpu.pipeline_mode<synchronous>, transform_indices = @transform_8, window_bounds = array<i64: 128, 128>}, {pipeline_mode = #tpu.pipeline_mode<synchronous>, transform_indices = @transform_9, window_bounds = array<i64: 1, 128>}, {pipeline_mode = #tpu.pipeline_mode<synchronous>, transform_indices = @transform_10, window_bounds = array<i64: 128, 128>}, {pipeline_mode = #tpu.pipeline_mode<synchronous>, transform_indices = @transform_11, window_bounds = array<i64: 1, 128>}, {transform_indices = @transform_12, window_bounds = array<i64: 8, 128>}]} {
    %c0_i32 = arith.constant 0 : i32
    %0 = arith.cmpi eq, %arg1, %c0_i32 : i32
    %1 = arith.extui %0 : i1 to i32
    %c0_i32_0 = arith.constant 0 : i32
    %2 = arith.cmpi ne, %1, %c0_i32_0 : i32
    scf.if %2 {
      %cst_20 = arith.constant 0.000000e+00 : f32
      %38 = vector.broadcast %cst_20 : f32 to vector<8x128xf32>
      %c0_21 = arith.constant 0 : index
      %c0_22 = arith.constant 0 : index
      %39 = vector.load %arg15[%c0_21, %c0_22] : memref<8x128xf32, #tpu.memory_space<vmem>>, vector<8x128xf32>
      tpu.vector_store %arg15[%c0_21, %c0_22], %38 {strides = array<i32>} : memref<8x128xf32, #tpu.memory_space<vmem>>, vector<8x128xf32>,
    } else {
    }
    %c0 = arith.constant 0 : index
    %c0_1 = arith.constant 0 : index
    %3 = vector.load %arg2[%c0, %c0_1] : memref<8x128xf32, #tpu.memory_space<vmem>>, vector<8x128xf32>
    %c0_2 = arith.constant 0 : index
    %c0_3 = arith.constant 0 : index
    %c0_4 = arith.constant 0 : index
    %4 = vector.load %arg3[%c0_2, %c0_3, %c0_4] : memref<1x128x384xf32, #tpu.memory_space<vmem>>, vector<1x128x384xf32>
    %5 = vector.shape_cast %4 : vector<1x128x384xf32> to vector<128x384xf32>
    %cst = arith.constant dense<0.000000e+00> : vector<8x384xf32>
    %6 = tpu.matmul %3, %5, %cst {dimension_numbers = #tpu.dot_dimension_numbers<[1], [0], [0], [1], [0, 0, 1, 1], [], []>, precision = #tpu.contract_precision<fp32>} : vector<8x128xf32>, vector<128x384xf32>, vector<8x384xf32> -> vector<8x384xf32>
    %c0_5 = arith.constant 0 : index
    %c0_6 = arith.constant 0 : index
    %c0_7 = arith.constant 0 : index
    %7 = vector.load %arg4[%c0_5, %c0_6, %c0_7] : memref<1x128x128xf32, #tpu.memory_space<vmem>>, vector<1x128x128xf32>
    %8 = vector.shape_cast %7 : vector<1x128x128xf32> to vector<128x128xf32>
    %9 = tpu.iota {dimensions = array<i32: 0>} : vector<8x8xi32>
    %10 = tpu.iota {dimensions = array<i32: 1>} : vector<8x8xi32>
    %11 = arith.cmpi sle, %10, %9 : vector<8x8xi32>
    %cst_8 = arith.constant 0.000000e+00 : f32
    %cst_9 = arith.constant -1.000000e+30 : f32
    %12 = vector.broadcast %cst_8 : f32 to vector<8x8xf32>
    %13 = vector.broadcast %cst_9 : f32 to vector<8x8xf32>
    %14 = arith.select %11, %12, %13 : vector<8x8xi1>, vector<8x8xf32>
    %15 = vector.extract_strided_slice %6 {offsets = [0, 0], sizes = [8, 128], strides = [1, 1]} : vector<8x384xf32> to vector<8x128xf32>
    %16 = vector.extract_strided_slice %6 {offsets = [0, 128], sizes = [8, 128], strides = [1, 1]} : vector<8x384xf32> to vector<8x128xf32>
    %17 = vector.extract_strided_slice %6 {offsets = [0, 256], sizes = [8, 128], strides = [1, 1]} : vector<8x384xf32> to vector<8x128xf32>
    %cst_10 = arith.constant dense<0.000000e+00> : vector<8x8xf32>
    %18 = tpu.matmul %15, %16, %cst_10 {dimension_numbers = #tpu.dot_dimension_numbers<[1], [1], [0], [0], [0, 0, 1, 0], [], []>, precision = #tpu.contract_precision<fp32>} : vector<8x128xf32>, vector<8x128xf32>, vector<8x8xf32> -> vector<8x8xf32>
    %19 = arith.addf %18, %14 : vector<8x8xf32>
    %cst_11 = arith.constant dense<0xFF800000> : vector<8xf32>
    %20 = vector.multi_reduction <maximumf>, %19, %cst_11 [1] : vector<8x8xf32> to vector<8xf32>
    %21 = vector.shape_cast %20 : vector<8xf32> to vector<8x1xf32>
    %22 = vector.broadcast %21 : vector<8x1xf32> to vector<8x8xf32>
    %23 = arith.subf %19, %22 : vector<8x8xf32>
    %24 = math.exp %23 : vector<8x8xf32>
    %cst_12 = arith.constant dense<0.000000e+00> : vector<8xf32>
    %25 = vector.multi_reduction <add>, %24, %cst_12 [1] : vector<8x8xf32> to vector<8xf32>
    %26 = vector.shape_cast %25 : vector<8xf32> to vector<8x1xf32>
    %27 = tpu.reciprocal %26 : vector<8x1xf32> -> vector<8x1xf32>
    %cst_13 = arith.constant dense<0.000000e+00> : vector<8x128xf32>
    %28 = tpu.matmul %24, %17, %cst_13 {dimension_numbers = #tpu.dot_dimension_numbers<[1], [0], [0], [1], [0, 0, 1, 1], [], []>, precision = #tpu.contract_precision<fp32>} : vector<8x8xf32>, vector<8x128xf32>, vector<8x128xf32> -> vector<8x128xf32>
    %29 = vector.broadcast %27 : vector<8x1xf32> to vector<8x128xf32>
    %30 = arith.mulf %28, %29 : vector<8x128xf32>
    %cst_14 = arith.constant dense<0.000000e+00> : vector<8x128xf32>
    %31 = tpu.matmul %30, %8, %cst_14 {dimension_numbers = #tpu.dot_dimension_numbers<[1], [0], [0], [1], [0, 0, 1, 1], [], []>, precision = #tpu.contract_precision<fp32>} : vector<8x128xf32>, vector<128x128xf32>, vector<8x128xf32> -> vector<8x128xf32>
    %c0_15 = arith.constant 0 : index
    %c0_16 = arith.constant 0 : index
    %32 = vector.load %arg15[%c0_15, %c0_16] : memref<8x128xf32, #tpu.memory_space<vmem>>, vector<8x128xf32>
    %33 = arith.addf %32, %31 : vector<8x128xf32>
    %c0_17 = arith.constant 0 : index
    %c0_18 = arith.constant 0 : index
    %34 = vector.load %arg15[%c0_17, %c0_18] : memref<8x128xf32, #tpu.memory_space<vmem>>, vector<8x128xf32>
    tpu.vector_store %arg15[%c0_17, %c0_18], %33 {strides = array<i32>} : memref<8x128xf32, #tpu.memory_space<vmem>>, vector<8x128xf32>,
    %c1_i32 = arith.constant 1 : i32
    %35 = arith.cmpi eq, %arg1, %c1_i32 : i32
    %36 = arith.extui %35 : i1 to i32
    %c0_i32_19 = arith.constant 0 : i32
    %37 = arith.cmpi ne, %36, %c0_i32_19 : i32
    scf.if %37 {
      %c0_20 = arith.constant 0 : index
      %c0_21 = arith.constant 0 : index
      %38 = vector.load %arg2[%c0_20, %c0_21] : memref<8x128xf32, #tpu.memory_space<vmem>>, vector<8x128xf32>
      %c0_22 = arith.constant 0 : index
      %c0_23 = arith.constant 0 : index
      %39 = vector.load %arg15[%c0_22, %c0_23] : memref<8x128xf32, #tpu.memory_space<vmem>>, vector<8x128xf32>
      %c0_24 = arith.constant 0 : index
      %c0_25 = arith.constant 0 : index
      %40 = vector.load %arg5[%c0_24, %c0_25] : memref<1x128xf32, #tpu.memory_space<vmem>>, vector<1x128xf32>
      %41 = vector.broadcast %40 : vector<1x128xf32> to vector<8x128xf32>
      %42 = arith.addf %39, %41 : vector<8x128xf32>
      %43 = tpu.iota {dimensions = array<i32: 1>} : vector<1x128xi32>
      %c32_i32 = arith.constant 32 : i32
      %44 = vector.broadcast %c32_i32 : i32 to vector<1x128xi32>
      %45 = arith.cmpi slt, %43, %44 : vector<1x128xi32>
      %46 = arith.extui %45 : vector<1x128xi1> to vector<1x128xi32>
      %47 = arith.sitofp %46 : vector<1x128xi32> to vector<1x128xf32>
      %48 = arith.addf %42, %38 : vector<8x128xf32>
      %c0_26 = arith.constant 0 : index
      %c0_27 = arith.constant 0 : index
      %49 = vector.load %arg6[%c0_26, %c0_27] : memref<1x128xf32, #tpu.memory_space<vmem>>, vector<1x128xf32>
      %c0_28 = arith.constant 0 : index
      %c0_29 = arith.constant 0 : index
      %50 = vector.load %arg7[%c0_28, %c0_29] : memref<1x128xf32, #tpu.memory_space<vmem>>, vector<1x128xf32>
      %cst_30 = arith.constant dense<0.000000e+00> : vector<8xf32>
      %51 = vector.multi_reduction <add>, %48, %cst_30 [1] : vector<8x128xf32> to vector<8xf32>
      %52 = vector.shape_cast %51 : vector<8xf32> to vector<8x1xf32>
      %cst_31 = arith.constant 3.125000e-02 : f32
      %53 = vector.broadcast %cst_31 : f32 to vector<8x1xf32>
      %54 = arith.mulf %52, %53 : vector<8x1xf32>
      %55 = vector.broadcast %54 : vector<8x1xf32> to vector<8x128xf32>
      %56 = arith.subf %48, %55 : vector<8x128xf32>
      %57 = vector.broadcast %47 : vector<1x128xf32> to vector<8x128xf32>
      %58 = arith.mulf %56, %57 : vector<8x128xf32>
      %59 = arith.mulf %58, %58 : vector<8x128xf32>
      %cst_32 = arith.constant dense<0.000000e+00> : vector<8xf32>
      %60 = vector.multi_reduction <add>, %59, %cst_32 [1] : vector<8x128xf32> to vector<8xf32>
      %61 = vector.shape_cast %60 : vector<8xf32> to vector<8x1xf32>
      %cst_33 = arith.constant 3.125000e-02 : f32
      %62 = vector.broadcast %cst_33 : f32 to vector<8x1xf32>
      %63 = arith.mulf %61, %62 : vector<8x1xf32>
      %cst_34 = arith.constant 9.99999974E-6 : f32
      %64 = vector.broadcast %cst_34 : f32 to vector<8x1xf32>
      %65 = arith.addf %63, %64 : vector<8x1xf32>
      %66 = math.rsqrt %65 : vector<8x1xf32>
      %67 = vector.broadcast %66 : vector<8x1xf32> to vector<8x128xf32>
      %68 = arith.mulf %58, %67 : vector<8x128xf32>
      %69 = vector.broadcast %49 : vector<1x128xf32> to vector<8x128xf32>
      %70 = arith.mulf %68, %69 : vector<8x128xf32>
      %71 = vector.broadcast %50 : vector<1x128xf32> to vector<8x128xf32>
      %72 = arith.addf %70, %71 : vector<8x128xf32>
      %c0_35 = arith.constant 0 : index
      %c0_36 = arith.constant 0 : index
      %73 = vector.load %arg10[%c0_35, %c0_36] : memref<128x128xf32, #tpu.memory_space<vmem>>, vector<128x128xf32>
      %cst_37 = arith.constant dense<0.000000e+00> : vector<8x128xf32>
      %74 = tpu.matmul %72, %73, %cst_37 {dimension_numbers = #tpu.dot_dimension_numbers<[1], [0], [0], [1], [0, 0, 1, 1], [], []>, precision = #tpu.contract_precision<fp32>} : vector<8x128xf32>, vector<128x128xf32>, vector<8x128xf32> -> vector<8x128xf32>
      %c0_38 = arith.constant 0 : index
      %c0_39 = arith.constant 0 : index
      %75 = vector.load %arg11[%c0_38, %c0_39] : memref<1x128xf32, #tpu.memory_space<vmem>>, vector<1x128xf32>
      %76 = vector.broadcast %75 : vector<1x128xf32> to vector<8x128xf32>
      %77 = arith.addf %74, %76 : vector<8x128xf32>
      %cst_40 = arith.constant 0.000000e+00 : f32
      %78 = vector.broadcast %cst_40 : f32 to vector<8x128xf32>
      %79 = arith.maximumf %77, %78 : vector<8x128xf32>
      %c0_41 = arith.constant 0 : index
      %c0_42 = arith.constant 0 : index
      %80 = vector.load %arg12[%c0_41, %c0_42] : memref<128x128xf32, #tpu.memory_space<vmem>>, vector<128x128xf32>
      %cst_43 = arith.constant dense<0.000000e+00> : vector<8x128xf32>
      %81 = tpu.matmul %79, %80, %cst_43 {dimension_numbers = #tpu.dot_dimension_numbers<[1], [0], [0], [1], [0, 0, 1, 1], [], []>, precision = #tpu.contract_precision<fp32>} : vector<8x128xf32>, vector<128x128xf32>, vector<8x128xf32> -> vector<8x128xf32>
      %c0_44 = arith.constant 0 : index
      %c0_45 = arith.constant 0 : index
      %82 = vector.load %arg13[%c0_44, %c0_45] : memref<1x128xf32, #tpu.memory_space<vmem>>, vector<1x128xf32>
      %83 = vector.broadcast %82 : vector<1x128xf32> to vector<8x128xf32>
      %84 = arith.addf %81, %83 : vector<8x128xf32>
      %85 = arith.addf %42, %84 : vector<8x128xf32>
      %c0_46 = arith.constant 0 : index
      %c0_47 = arith.constant 0 : index
      %86 = vector.load %arg8[%c0_46, %c0_47] : memref<1x128xf32, #tpu.memory_space<vmem>>, vector<1x128xf32>
      %c0_48 = arith.constant 0 : index
      %c0_49 = arith.constant 0 : index
      %87 = vector.load %arg9[%c0_48, %c0_49] : memref<1x128xf32, #tpu.memory_space<vmem>>, vector<1x128xf32>
      %cst_50 = arith.constant dense<0.000000e+00> : vector<8xf32>
      %88 = vector.multi_reduction <add>, %85, %cst_50 [1] : vector<8x128xf32> to vector<8xf32>
      %89 = vector.shape_cast %88 : vector<8xf32> to vector<8x1xf32>
      %cst_51 = arith.constant 3.125000e-02 : f32
      %90 = vector.broadcast %cst_51 : f32 to vector<8x1xf32>
      %91 = arith.mulf %89, %90 : vector<8x1xf32>
      %92 = vector.broadcast %91 : vector<8x1xf32> to vector<8x128xf32>
      %93 = arith.subf %85, %92 : vector<8x128xf32>
      %94 = vector.broadcast %47 : vector<1x128xf32> to vector<8x128xf32>
      %95 = arith.mulf %93, %94 : vector<8x128xf32>
      %96 = arith.mulf %95, %95 : vector<8x128xf32>
      %cst_52 = arith.constant dense<0.000000e+00> : vector<8xf32>
      %97 = vector.multi_reduction <add>, %96, %cst_52 [1] : vector<8x128xf32> to vector<8xf32>
      %98 = vector.shape_cast %97 : vector<8xf32> to vector<8x1xf32>
      %cst_53 = arith.constant 3.125000e-02 : f32
      %99 = vector.broadcast %cst_53 : f32 to vector<8x1xf32>
      %100 = arith.mulf %98, %99 : vector<8x1xf32>
      %cst_54 = arith.constant 9.99999974E-6 : f32
      %101 = vector.broadcast %cst_54 : f32 to vector<8x1xf32>
      %102 = arith.addf %100, %101 : vector<8x1xf32>
      %103 = math.rsqrt %102 : vector<8x1xf32>
      %104 = vector.broadcast %103 : vector<8x1xf32> to vector<8x128xf32>
      %105 = arith.mulf %95, %104 : vector<8x128xf32>
      %106 = vector.broadcast %86 : vector<1x128xf32> to vector<8x128xf32>
      %107 = arith.mulf %105, %106 : vector<8x128xf32>
      %108 = vector.broadcast %87 : vector<1x128xf32> to vector<8x128xf32>
      %109 = arith.addf %107, %108 : vector<8x128xf32>
      %c0_55 = arith.constant 0 : index
      %c0_56 = arith.constant 0 : index
      %110 = vector.load %arg14[%c0_55, %c0_56] : memref<8x128xf32, #tpu.memory_space<vmem>>, vector<8x128xf32>
      tpu.vector_store %arg14[%c0_55, %c0_56], %109 {strides = array<i32>} : memref<8x128xf32, #tpu.memory_space<vmem>>, vector<8x128xf32>,
    } else {
    }
    return
  }
  func.func @transform_0(%arg0: i32, %arg1: i32) -> (i32, i32) {
    %c0_i32 = arith.constant 0 : i32
    %c0_i32_0 = arith.constant 0 : i32
    return %arg0, %c0_i32 : i32, i32
  }
  func.func @transform_1(%arg0: i32, %arg1: i32) -> (i32, i32, i32) {
    %c0_i32 = arith.constant 0 : i32
    %c0_i32_0 = arith.constant 0 : i32
    %c0_i32_1 = arith.constant 0 : i32
    return %arg1, %c0_i32, %c0_i32_0 : i32, i32, i32
  }
  func.func @transform_2(%arg0: i32, %arg1: i32) -> (i32, i32, i32) {
    %c0_i32 = arith.constant 0 : i32
    %c0_i32_0 = arith.constant 0 : i32
    %c0_i32_1 = arith.constant 0 : i32
    return %arg1, %c0_i32, %c0_i32_0 : i32, i32, i32
  }
  func.func @transform_3(%arg0: i32, %arg1: i32) -> (i32, i32) {
    %c0_i32 = arith.constant 0 : i32
    %c0_i32_0 = arith.constant 0 : i32
    %c0_i32_1 = arith.constant 0 : i32
    return %c0_i32, %c0_i32_0 : i32, i32
  }
  func.func @transform_4(%arg0: i32, %arg1: i32) -> (i32, i32) {
    %c0_i32 = arith.constant 0 : i32
    %c0_i32_0 = arith.constant 0 : i32
    %c0_i32_1 = arith.constant 0 : i32
    return %c0_i32, %c0_i32_0 : i32, i32
  }
  func.func @transform_5(%arg0: i32, %arg1: i32) -> (i32, i32) {
    %c0_i32 = arith.constant 0 : i32
    %c0_i32_0 = arith.constant 0 : i32
    %c0_i32_1 = arith.constant 0 : i32
    return %c0_i32, %c0_i32_0 : i32, i32
  }
  func.func @transform_6(%arg0: i32, %arg1: i32) -> (i32, i32) {
    %c0_i32 = arith.constant 0 : i32
    %c0_i32_0 = arith.constant 0 : i32
    %c0_i32_1 = arith.constant 0 : i32
    return %c0_i32, %c0_i32_0 : i32, i32
  }
  func.func @transform_7(%arg0: i32, %arg1: i32) -> (i32, i32) {
    %c0_i32 = arith.constant 0 : i32
    %c0_i32_0 = arith.constant 0 : i32
    %c0_i32_1 = arith.constant 0 : i32
    return %c0_i32, %c0_i32_0 : i32, i32
  }
  func.func @transform_8(%arg0: i32, %arg1: i32) -> (i32, i32) {
    %c0_i32 = arith.constant 0 : i32
    %c0_i32_0 = arith.constant 0 : i32
    %c0_i32_1 = arith.constant 0 : i32
    return %c0_i32, %c0_i32_0 : i32, i32
  }
  func.func @transform_9(%arg0: i32, %arg1: i32) -> (i32, i32) {
    %c0_i32 = arith.constant 0 : i32
    %c0_i32_0 = arith.constant 0 : i32
    %c0_i32_1 = arith.constant 0 : i32
    return %c0_i32, %c0_i32_0 : i32, i32
  }
  func.func @transform_10(%arg0: i32, %arg1: i32) -> (i32, i32) {
    %c0_i32 = arith.constant 0 : i32
    %c0_i32_0 = arith.constant 0 : i32
    %c0_i32_1 = arith.constant 0 : i32
    return %c0_i32, %c0_i32_0 : i32, i32
  }
  func.func @transform_11(%arg0: i32, %arg1: i32) -> (i32, i32) {
    %c0_i32 = arith.constant 0 : i32
    %c0_i32_0 = arith.constant 0 : i32
    %c0_i32_1 = arith.constant 0 : i32
    return %c0_i32, %c0_i32_0 : i32, i32
  }
  func.func @transform_12(%arg0: i32, %arg1: i32) -> (i32, i32) {
    %c0_i32 = arith.constant 0 : i32
    %c0_i32_0 = arith.constant 0 : i32
    return %arg0, %c0_i32 : i32, i32
  }
}

module attributes {stable_mosaic.version = 11 : i64} {
  func.func @transformer_block_kernel(%arg0: i32, %arg1: i32, %arg2: memref<8x128xf32, #tpu.memory_space<vmem>>, %arg3: memref<1x128x384xf32, #tpu.memory_space<vmem>>, %arg4: memref<1x128x128xf32, #tpu.memory_space<vmem>>, %arg5: memref<1x128xf32, #tpu.memory_space<vmem>>, %arg6: memref<1x128xf32, #tpu.memory_space<vmem>>, %arg7: memref<1x128xf32, #tpu.memory_space<vmem>>, %arg8: memref<1x128xf32, #tpu.memory_space<vmem>>, %arg9: memref<1x128xf32, #tpu.memory_space<vmem>>, %arg10: memref<128x128xf32, #tpu.memory_space<vmem>>, %arg11: memref<1x128xf32, #tpu.memory_space<vmem>>, %arg12: memref<128x128xf32, #tpu.memory_space<vmem>>, %arg13: memref<1x128xf32, #tpu.memory_space<vmem>>, %arg14: memref<8x128xf32, #tpu.memory_space<vmem>>, %arg15: memref<8x128xf32, #tpu.memory_space<vmem>>) attributes {dimension_semantics = [#tpu.dimension_semantics<parallel>, #tpu.dimension_semantics<arbitrary>], iteration_bounds = array<i64: 2, 2>, scalar_prefetch = 0 : i64, scratch_operands = 1 : i64, tpu.core_type = #tpu.core_type<tc>, window_params = [{transform_indices = @transform_0, window_bounds = array<i64: 8, 128>}, {transform_indices = @transform_1, window_bounds = array<i64: 1, 128, 384>}, {transform_indices = @transform_2, window_bounds = array<i64: 1, 128, 128>}, {pipeline_mode = #tpu.pipeline_mode<synchronous>, transform_indices = @transform_3, window_bounds = array<i64: 1, 128>}, {pipeline_mode = #tpu.pipeline_mode<synchronous>, transform_indices = @transform_4, window_bounds = array<i64: 1, 128>}, {pipeline_mode = #tpu.pipeline_mode<synchronous>, transform_indices = @transform_5, window_bounds = array<i64: 1, 128>}, {pipeline_mode = #tpu.pipeline_mode<synchronous>, transform_indices = @transform_6, window_bounds = array<i64: 1, 128>}, {pipeline_mode = #tpu.pipeline_mode<synchronous>, transform_indices = @transform_7, window_bounds = array<i64: 1, 128>}, {pipeline_mode = #tpu.pipeline_mode<synchronous>, transform_indices = @transform_8, window_bounds = array<i64: 128, 128>}, {pipeline_mode = #tpu.pipeline_mode<synchronous>, transform_indices = @transform_9, window_bounds = array<i64: 1, 128>}, {pipeline_mode = #tpu.pipeline_mode<synchronous>, transform_indices = @transform_10, window_bounds = array<i64: 128, 128>}, {pipeline_mode = #tpu.pipeline_mode<synchronous>, transform_indices = @transform_11, window_bounds = array<i64: 1, 128>}, {transform_indices = @transform_12, window_bounds = array<i64: 8, 128>}]} {
    %c0_i32 = arith.constant 0 : i32
    %0 = arith.cmpi eq, %arg1, %c0_i32 : i32
    %1 = arith.extui %0 : i1 to i32
    %c0_i32_0 = arith.constant 0 : i32
    %2 = arith.cmpi ne, %1, %c0_i32_0 : i32
    scf.if %2 {
      %cst_20 = arith.constant 0.000000e+00 : f32
      %38 = vector.broadcast %cst_20 : f32 to vector<8x128xf32>
      %c0_21 = arith.constant 0 : index
      %c0_22 = arith.constant 0 : index
      %39 = vector.load %arg15[%c0_21, %c0_22] : memref<8x128xf32, #tpu.memory_space<vmem>>, vector<8x128xf32>
      tpu.vector_store %arg15[%c0_21, %c0_22], %38 {strides = array<i32>} : memref<8x128xf32, #tpu.memory_space<vmem>>, vector<8x128xf32>,
    } else {
    }
    %c0 = arith.constant 0 : index
    %c0_1 = arith.constant 0 : index
    %3 = vector.load %arg2[%c0, %c0_1] : memref<8x128xf32, #tpu.memory_space<vmem>>, vector<8x128xf32>
    %c0_2 = arith.constant 0 : index
    %c0_3 = arith.constant 0 : index
    %c0_4 = arith.constant 0 : index
    %4 = vector.load %arg3[%c0_2, %c0_3, %c0_4] : memref<1x128x384xf32, #tpu.memory_space<vmem>>, vector<1x128x384xf32>
    %5 = vector.shape_cast %4 : vector<1x128x384xf32> to vector<128x384xf32>
    %cst = arith.constant dense<0.000000e+00> : vector<8x384xf32>
    %6 = tpu.matmul %3, %5, %cst {dimension_numbers = #tpu.dot_dimension_numbers<[1], [0], [0], [1], [0, 0, 1, 1], [], []>, precision = #tpu.contract_precision<fp32>} : vector<8x128xf32>, vector<128x384xf32>, vector<8x384xf32> -> vector<8x384xf32>
    %c0_5 = arith.constant 0 : index
    %c0_6 = arith.constant 0 : index
    %c0_7 = arith.constant 0 : index
    %7 = vector.load %arg4[%c0_5, %c0_6, %c0_7] : memref<1x128x128xf32, #tpu.memory_space<vmem>>, vector<1x128x128xf32>
    %8 = vector.shape_cast %7 : vector<1x128x128xf32> to vector<128x128xf32>
    %9 = tpu.iota {dimensions = array<i32: 0>} : vector<8x8xi32>
    %10 = tpu.iota {dimensions = array<i32: 1>} : vector<8x8xi32>
    %11 = arith.cmpi sle, %10, %9 : vector<8x8xi32>
    %cst_8 = arith.constant 0.000000e+00 : f32
    %cst_9 = arith.constant -1.000000e+30 : f32
    %12 = vector.broadcast %cst_8 : f32 to vector<8x8xf32>
    %13 = vector.broadcast %cst_9 : f32 to vector<8x8xf32>
    %14 = arith.select %11, %12, %13 : vector<8x8xi1>, vector<8x8xf32>
    %15 = vector.extract_strided_slice %6 {offsets = [0, 0], sizes = [8, 128], strides = [1, 1]} : vector<8x384xf32> to vector<8x128xf32>
    %16 = vector.extract_strided_slice %6 {offsets = [0, 128], sizes = [8, 128], strides = [1, 1]} : vector<8x384xf32> to vector<8x128xf32>
    %17 = vector.extract_strided_slice %6 {offsets = [0, 256], sizes = [8, 128], strides = [1, 1]} : vector<8x384xf32> to vector<8x128xf32>
    %cst_10 = arith.constant dense<0.000000e+00> : vector<8x8xf32>
    %18 = tpu.matmul %15, %16, %cst_10 {dimension_numbers = #tpu.dot_dimension_numbers<[1], [1], [0], [0], [0, 0, 1, 0], [], []>, precision = #tpu.contract_precision<fp32>} : vector<8x128xf32>, vector<8x128xf32>, vector<8x8xf32> -> vector<8x8xf32>
    %19 = arith.addf %18, %14 : vector<8x8xf32>
    %cst_11 = arith.constant dense<0xFF800000> : vector<8xf32>
    %20 = vector.multi_reduction <maximumf>, %19, %cst_11 [1] : vector<8x8xf32> to vector<8xf32>
    %21 = vector.shape_cast %20 : vector<8xf32> to vector<8x1xf32>
    %22 = vector.broadcast %21 : vector<8x1xf32> to vector<8x8xf32>
    %23 = arith.subf %19, %22 : vector<8x8xf32>
    %24 = math.exp %23 : vector<8x8xf32>
    %cst_12 = arith.constant dense<0.000000e+00> : vector<8xf32>
    %25 = vector.multi_reduction <add>, %24, %cst_12 [1] : vector<8x8xf32> to vector<8xf32>
    %26 = vector.shape_cast %25 : vector<8xf32> to vector<8x1xf32>
    %27 = tpu.reciprocal %26 : vector<8x1xf32> -> vector<8x1xf32>
    %cst_13 = arith.constant dense<0.000000e+00> : vector<8x128xf32>
    %28 = tpu.matmul %24, %17, %cst_13 {dimension_numbers = #tpu.dot_dimension_numbers<[1], [0], [0], [1], [0, 0, 1, 1], [], []>, precision = #tpu.contract_precision<fp32>} : vector<8x8xf32>, vector<8x128xf32>, vector<8x128xf32> -> vector<8x128xf32>
    %29 = vector.broadcast %27 : vector<8x1xf32> to vector<8x128xf32>
    %30 = arith.mulf %28, %29 : vector<8x128xf32>
    %cst_14 = arith.constant dense<0.000000e+00> : vector<8x128xf32>
    %31 = tpu.matmul %30, %8, %cst_14 {dimension_numbers = #tpu.dot_dimension_numbers<[1], [0], [0], [1], [0, 0, 1, 1], [], []>, precision = #tpu.contract_precision<fp32>} : vector<8x128xf32>, vector<128x128xf32>, vector<8x128xf32> -> vector<8x128xf32>
    %c0_15 = arith.constant 0 : index
    %c0_16 = arith.constant 0 : index
    %32 = vector.load %arg15[%c0_15, %c0_16] : memref<8x128xf32, #tpu.memory_space<vmem>>, vector<8x128xf32>
    %33 = arith.addf %32, %31 : vector<8x128xf32>
    %c0_17 = arith.constant 0 : index
    %c0_18 = arith.constant 0 : index
    %34 = vector.load %arg15[%c0_17, %c0_18] : memref<8x128xf32, #tpu.memory_space<vmem>>, vector<8x128xf32>
    tpu.vector_store %arg15[%c0_17, %c0_18], %33 {strides = array<i32>} : memref<8x128xf32, #tpu.memory_space<vmem>>, vector<8x128xf32>,
    %c1_i32 = arith.constant 1 : i32
    %35 = arith.cmpi eq, %arg1, %c1_i32 : i32
    %36 = arith.extui %35 : i1 to i32
    %c0_i32_19 = arith.constant 0 : i32
    %37 = arith.cmpi ne, %36, %c0_i32_19 : i32
    scf.if %37 {
      %c0_20 = arith.constant 0 : index
      %c0_21 = arith.constant 0 : index
      %38 = vector.load %arg2[%c0_20, %c0_21] : memref<8x128xf32, #tpu.memory_space<vmem>>, vector<8x128xf32>
      %c0_22 = arith.constant 0 : index
      %c0_23 = arith.constant 0 : index
      %39 = vector.load %arg15[%c0_22, %c0_23] : memref<8x128xf32, #tpu.memory_space<vmem>>, vector<8x128xf32>
      %c0_24 = arith.constant 0 : index
      %c0_25 = arith.constant 0 : index
      %40 = vector.load %arg5[%c0_24, %c0_25] : memref<1x128xf32, #tpu.memory_space<vmem>>, vector<1x128xf32>
      %41 = vector.broadcast %40 : vector<1x128xf32> to vector<8x128xf32>
      %42 = arith.addf %39, %41 : vector<8x128xf32>
      %43 = tpu.iota {dimensions = array<i32: 1>} : vector<1x128xi32>
      %c32_i32 = arith.constant 32 : i32
      %44 = vector.broadcast %c32_i32 : i32 to vector<1x128xi32>
      %45 = arith.cmpi slt, %43, %44 : vector<1x128xi32>
      %46 = arith.extui %45 : vector<1x128xi1> to vector<1x128xi32>
      %47 = arith.sitofp %46 : vector<1x128xi32> to vector<1x128xf32>
      %48 = arith.addf %42, %38 : vector<8x128xf32>
      %c0_26 = arith.constant 0 : index
      %c0_27 = arith.constant 0 : index
      %49 = vector.load %arg6[%c0_26, %c0_27] : memref<1x128xf32, #tpu.memory_space<vmem>>, vector<1x128xf32>
      %c0_28 = arith.constant 0 : index
      %c0_29 = arith.constant 0 : index
      %50 = vector.load %arg7[%c0_28, %c0_29] : memref<1x128xf32, #tpu.memory_space<vmem>>, vector<1x128xf32>
      %cst_30 = arith.constant dense<0.000000e+00> : vector<8xf32>
      %51 = vector.multi_reduction <add>, %48, %cst_30 [1] : vector<8x128xf32> to vector<8xf32>
      %52 = vector.shape_cast %51 : vector<8xf32> to vector<8x1xf32>
      %cst_31 = arith.constant 3.125000e-02 : f32
      %53 = vector.broadcast %cst_31 : f32 to vector<8x1xf32>
      %54 = arith.mulf %52, %53 : vector<8x1xf32>
      %55 = vector.broadcast %54 : vector<8x1xf32> to vector<8x128xf32>
      %56 = arith.subf %48, %55 : vector<8x128xf32>
      %57 = vector.broadcast %47 : vector<1x128xf32> to vector<8x128xf32>
      %58 = arith.mulf %56, %57 : vector<8x128xf32>
      %59 = arith.mulf %58, %58 : vector<8x128xf32>
      %cst_32 = arith.constant dense<0.000000e+00> : vector<8xf32>
      %60 = vector.multi_reduction <add>, %59, %cst_32 [1] : vector<8x128xf32> to vector<8xf32>
      %61 = vector.shape_cast %60 : vector<8xf32> to vector<8x1xf32>
      %cst_33 = arith.constant 3.125000e-02 : f32
      %62 = vector.broadcast %cst_33 : f32 to vector<8x1xf32>
      %63 = arith.mulf %61, %62 : vector<8x1xf32>
      %cst_34 = arith.constant 9.99999974E-6 : f32
      %64 = vector.broadcast %cst_34 : f32 to vector<8x1xf32>
      %65 = arith.addf %63, %64 : vector<8x1xf32>
      %66 = math.rsqrt %65 : vector<8x1xf32>
      %67 = vector.broadcast %66 : vector<8x1xf32> to vector<8x128xf32>
      %68 = arith.mulf %58, %67 : vector<8x128xf32>
      %69 = vector.broadcast %49 : vector<1x128xf32> to vector<8x128xf32>
      %70 = arith.mulf %68, %69 : vector<8x128xf32>
      %71 = vector.broadcast %50 : vector<1x128xf32> to vector<8x128xf32>
      %72 = arith.addf %70, %71 : vector<8x128xf32>
      %c0_35 = arith.constant 0 : index
      %c0_36 = arith.constant 0 : index
      %73 = vector.load %arg10[%c0_35, %c0_36] : memref<128x128xf32, #tpu.memory_space<vmem>>, vector<128x128xf32>
      %cst_37 = arith.constant dense<0.000000e+00> : vector<8x128xf32>
      %74 = tpu.matmul %72, %73, %cst_37 {dimension_numbers = #tpu.dot_dimension_numbers<[1], [0], [0], [1], [0, 0, 1, 1], [], []>, precision = #tpu.contract_precision<fp32>} : vector<8x128xf32>, vector<128x128xf32>, vector<8x128xf32> -> vector<8x128xf32>
      %c0_38 = arith.constant 0 : index
      %c0_39 = arith.constant 0 : index
      %75 = vector.load %arg11[%c0_38, %c0_39] : memref<1x128xf32, #tpu.memory_space<vmem>>, vector<1x128xf32>
      %76 = vector.broadcast %75 : vector<1x128xf32> to vector<8x128xf32>
      %77 = arith.addf %74, %76 : vector<8x128xf32>
      %cst_40 = arith.constant 0.000000e+00 : f32
      %78 = vector.broadcast %cst_40 : f32 to vector<8x128xf32>
      %79 = arith.maximumf %77, %78 : vector<8x128xf32>
      %c0_41 = arith.constant 0 : index
      %c0_42 = arith.constant 0 : index
      %80 = vector.load %arg12[%c0_41, %c0_42] : memref<128x128xf32, #tpu.memory_space<vmem>>, vector<128x128xf32>
      %cst_43 = arith.constant dense<0.000000e+00> : vector<8x128xf32>
      %81 = tpu.matmul %79, %80, %cst_43 {dimension_numbers = #tpu.dot_dimension_numbers<[1], [0], [0], [1], [0, 0, 1, 1], [], []>, precision = #tpu.contract_precision<fp32>} : vector<8x128xf32>, vector<128x128xf32>, vector<8x128xf32> -> vector<8x128xf32>
      %c0_44 = arith.constant 0 : index
      %c0_45 = arith.constant 0 : index
      %82 = vector.load %arg13[%c0_44, %c0_45] : memref<1x128xf32, #tpu.memory_space<vmem>>, vector<1x128xf32>
      %83 = vector.broadcast %82 : vector<1x128xf32> to vector<8x128xf32>
      %84 = arith.addf %81, %83 : vector<8x128xf32>
      %85 = arith.addf %42, %84 : vector<8x128xf32>
      %c0_46 = arith.constant 0 : index
      %c0_47 = arith.constant 0 : index
      %86 = vector.load %arg8[%c0_46, %c0_47] : memref<1x128xf32, #tpu.memory_space<vmem>>, vector<1x128xf32>
      %c0_48 = arith.constant 0 : index
      %c0_49 = arith.constant 0 : index
      %87 = vector.load %arg9[%c0_48, %c0_49] : memref<1x128xf32, #tpu.memory_space<vmem>>, vector<1x128xf32>
      %cst_50 = arith.constant dense<0.000000e+00> : vector<8xf32>
      %88 = vector.multi_reduction <add>, %85, %cst_50 [1] : vector<8x128xf32> to vector<8xf32>
      %89 = vector.shape_cast %88 : vector<8xf32> to vector<8x1xf32>
      %cst_51 = arith.constant 3.125000e-02 : f32
      %90 = vector.broadcast %cst_51 : f32 to vector<8x1xf32>
      %91 = arith.mulf %89, %90 : vector<8x1xf32>
      %92 = vector.broadcast %91 : vector<8x1xf32> to vector<8x128xf32>
      %93 = arith.subf %85, %92 : vector<8x128xf32>
      %94 = vector.broadcast %47 : vector<1x128xf32> to vector<8x128xf32>
      %95 = arith.mulf %93, %94 : vector<8x128xf32>
      %96 = arith.mulf %95, %95 : vector<8x128xf32>
      %cst_52 = arith.constant dense<0.000000e+00> : vector<8xf32>
      %97 = vector.multi_reduction <add>, %96, %cst_52 [1] : vector<8x128xf32> to vector<8xf32>
      %98 = vector.shape_cast %97 : vector<8xf32> to vector<8x1xf32>
      %cst_53 = arith.constant 3.125000e-02 : f32
      %99 = vector.broadcast %cst_53 : f32 to vector<8x1xf32>
      %100 = arith.mulf %98, %99 : vector<8x1xf32>
      %cst_54 = arith.constant 9.99999974E-6 : f32
      %101 = vector.broadcast %cst_54 : f32 to vector<8x1xf32>
      %102 = arith.addf %100, %101 : vector<8x1xf32>
      %103 = math.rsqrt %102 : vector<8x1xf32>
      %104 = vector.broadcast %103 : vector<8x1xf32> to vector<8x128xf32>
      %105 = arith.mulf %95, %104 : vector<8x128xf32>
      %106 = vector.broadcast %86 : vector<1x128xf32> to vector<8x128xf32>
      %107 = arith.mulf %105, %106 : vector<8x128xf32>
      %108 = vector.broadcast %87 : vector<1x128xf32> to vector<8x128xf32>
      %109 = arith.addf %107, %108 : vector<8x128xf32>
      %c0_55 = arith.constant 0 : index
      %c0_56 = arith.constant 0 : index
      %110 = vector.load %arg14[%c0_55, %c0_56] : memref<8x128xf32, #tpu.memory_space<vmem>>, vector<8x128xf32>
      tpu.vector_store %arg14[%c0_55, %c0_56], %109 {strides = array<i32>} : memref<8x128xf32, #tpu.memory_space<vmem>>, vector<8x128xf32>,
    } else {
    }
    return
  }
  func.func @transform_0(%arg0: i32, %arg1: i32) -> (i32, i32) {
    %c0_i32 = arith.constant 0 : i32
    %c0_i32_0 = arith.constant 0 : i32
    return %arg0, %c0_i32 : i32, i32
  }
  func.func @transform_1(%arg0: i32, %arg1: i32) -> (i32, i32, i32) {
    %c0_i32 = arith.constant 0 : i32
    %c0_i32_0 = arith.constant 0 : i32
    %c0_i32_1 = arith.constant 0 : i32
    return %arg1, %c0_i32, %c0_i32_0 : i32, i32, i32
  }
  func.func @transform_2(%arg0: i32, %arg1: i32) -> (i32, i32, i32) {
    %c0_i32 = arith.constant 0 : i32
    %c0_i32_0 = arith.constant 0 : i32
    %c0_i32_1 = arith.constant 0 : i32
    return %arg1, %c0_i32, %c0_i32_0 : i32, i32, i32
  }
  func.func @transform_3(%arg0: i32, %arg1: i32) -> (i32, i32) {
    %c0_i32 = arith.constant 0 : i32
    %c0_i32_0 = arith.constant 0 : i32
    %c0_i32_1 = arith.constant 0 : i32
    return %c0_i32, %c0_i32_0 : i32, i32
  }
  func.func @transform_4(%arg0: i32, %arg1: i32) -> (i32, i32) {
    %c0_i32 = arith.constant 0 : i32
    %c0_i32_0 = arith.constant 0 : i32
    %c0_i32_1 = arith.constant 0 : i32
    return %c0_i32, %c0_i32_0 : i32, i32
  }
  func.func @transform_5(%arg0: i32, %arg1: i32) -> (i32, i32) {
    %c0_i32 = arith.constant 0 : i32
    %c0_i32_0 = arith.constant 0 : i32
    %c0_i32_1 = arith.constant 0 : i32
    return %c0_i32, %c0_i32_0 : i32, i32
  }
  func.func @transform_6(%arg0: i32, %arg1: i32) -> (i32, i32) {
    %c0_i32 = arith.constant 0 : i32
    %c0_i32_0 = arith.constant 0 : i32
    %c0_i32_1 = arith.constant 0 : i32
    return %c0_i32, %c0_i32_0 : i32, i32
  }
  func.func @transform_7(%arg0: i32, %arg1: i32) -> (i32, i32) {
    %c0_i32 = arith.constant 0 : i32
    %c0_i32_0 = arith.constant 0 : i32
    %c0_i32_1 = arith.constant 0 : i32
    return %c0_i32, %c0_i32_0 : i32, i32
  }
  func.func @transform_8(%arg0: i32, %arg1: i32) -> (i32, i32) {
    %c0_i32 = arith.constant 0 : i32
    %c0_i32_0 = arith.constant 0 : i32
    %c0_i32_1 = arith.constant 0 : i32
    return %c0_i32, %c0_i32_0 : i32, i32
  }
  func.func @transform_9(%arg0: i32, %arg1: i32) -> (i32, i32) {
    %c0_i32 = arith.constant 0 : i32
    %c0_i32_0 = arith.constant 0 : i32
    %c0_i32_1 = arith.constant 0 : i32
    return %c0_i32, %c0_i32_0 : i32, i32
  }
  func.func @transform_10(%arg0: i32, %arg1: i32) -> (i32, i32) {
    %c0_i32 = arith.constant 0 : i32
    %c0_i32_0 = arith.constant 0 : i32
    %c0_i32_1 = arith.constant 0 : i32
    return %c0_i32, %c0_i32_0 : i32, i32
  }
  func.func @transform_11(%arg0: i32, %arg1: i32) -> (i32, i32) {
    %c0_i32 = arith.constant 0 : i32
    %c0_i32_0 = arith.constant 0 : i32
    %c0_i32_1 = arith.constant 0 : i32
    return %c0_i32, %c0_i32_0 : i32, i32
  }
  func.func @transform_12(%arg0: i32, %arg1: i32) -> (i32, i32) {
    %c0_i32 = arith.constant 0 : i32
    %c0_i32_0 = arith.constant 0 : i32
    return %arg0, %c0_i32 : i32, i32
  }
}

</mosaic_0001>

<llo_original>
// kernel: tpu_custom_call.1
$region0: #{tpu_custom_call.1}
  #allocation0 [shape = 'u32[]', space=smem, size = 0x4, offset = 0x4, fixed_abs, tag = 'smem constant byte address 0x4 - core index']
  #allocation1 [shape = 'u32[144,128]{1,0:T(1,128)}', space=vmem, size = 0x12000, scoped, tag = 'internal scratch']
  #allocation2 [shape = 'f32[8,128]{1,0:T(8,128)}', space=vmem, size = 0x1000, scoped, tag = 'scratch operand']
  %s0 = inlined_call_operand.hbm [shape: f32[16,128], index: 0, kind: input, shape index: {}]
  %s1 = inlined_call_operand.hbm [shape: f32[2,128,384], index: 1, kind: input, shape index: {}]
  %s2 = inlined_call_operand.hbm [shape: f32[2,128,128], index: 2, kind: input, shape index: {}]
  %s3 = inlined_call_operand.vmem [shape: f32[1,128], index: 3, kind: input, shape index: {}]
  %s4 = inlined_call_operand.vmem [shape: f32[1,128], index: 4, kind: input, shape index: {}]
  %s5 = inlined_call_operand.vmem [shape: f32[1,128], index: 5, kind: input, shape index: {}]
  %s6 = inlined_call_operand.vmem [shape: f32[1,128], index: 6, kind: input, shape index: {}]
  %s7 = inlined_call_operand.vmem [shape: f32[1,128], index: 7, kind: input, shape index: {}]
  %s8 = inlined_call_operand.hbm [shape: f32[128,128], index: 8, kind: input, shape index: {}]
  %s9 = inlined_call_operand.vmem [shape: f32[1,128], index: 9, kind: input, shape index: {}]
  %s10 = inlined_call_operand.hbm [shape: f32[128,128], index: 10, kind: input, shape index: {}]
  %s11 = inlined_call_operand.vmem [shape: f32[1,128], index: 11, kind: input, shape index: {}]
  %s12 = inlined_call_operand.hbm [shape: f32[16,128], index: 12, kind: output, shape index: {}]
  %s13 = sld [smem:[#allocation0]]
  $region109: #{tpu_custom_call.1} parent=0
    _
  %s15 = ssub.s32 1, %s13
  %s16 = scalar_select 0, %s15, %s13
  $region1: #{tpu_custom_call.1} parent=0
    #allocation3 [shape = 'u8[8192]{0}', space=vmem, size = 0x2000, scoped, tag = 'input window, operand 0']
    #allocation4 [shape = 's32[2]{0}', space=sflag, size = 0x8, scoped, tag = 'scoped memory for tpu_custom_call.1']
    #allocation5 [shape = 's32[2]{0}', space=sflag, size = 0x8, scoped, tag = 'scoped memory for tpu_custom_call.1']
    #allocation6 [shape = 'u8[393216]{0}', space=vmem, size = 0x60000, scoped, tag = 'input window, operand 1']
    #allocation7 [shape = 's32[2]{0}', space=sflag, size = 0x8, scoped, tag = 'scoped memory for tpu_custom_call.1']
    #allocation8 [shape = 'u8[131072]{0}', space=vmem, size = 0x20000, scoped, tag = 'input window, operand 2']
    #allocation9 [shape = 'u8[65536]{0}', space=vmem, size = 0x10000, scoped, tag = 'input window, operand 8, single buffered']
    #allocation10 [shape = 's32[1]{0}', space=sflag, size = 0x4, scoped, tag = 'scoped memory for tpu_custom_call.1']
    #allocation11 [shape = 'u8[65536]{0}', space=vmem, size = 0x10000, scoped, tag = 'input window, operand 10, single buffered']
    #allocation12 [shape = 'u8[8192]{0}', space=vmem, size = 0x2000, scoped, tag = 'output window, operand 0']
    %17 = vsyncpa [#allocation4], 0
    %s18 = scalar_lea.sflag [#allocation4], 1
    %19 = vsyncpa %s18, 0
    %20 = vsyncpa [#allocation7], 0
    %s21 = scalar_lea.sflag [#allocation7], 1
    %22 = vsyncpa %s21, 0
    %23 = vsyncpa [#allocation10], 0
    %24 = vsyncpa [#allocation5], 0
    %s25 = scalar_lea.sflag [#allocation5], 1
    %26 = vsyncpa %s25, 0
    loop: start=0, step=1, limit=6
    $region2: #{tpu_custom_call.1} parent=1 // loop_pre_header
      _
    $region3: #{tpu_custom_call.1} parent=1 // loop_header
      %s28 = sphi 0, %s32
      %p29 = scmp.ge.s32.totalorder %s28, 6
      %s35 = sphi 0, %s47
      %s36 = sphi 0, %s43
      %s37 = sphi 0, %s35
      %s38 = sphi 0, %s36
      %s39 = sphi 0, %s37
      %s40 = sphi 0, %s38
      %s50 = sphi 0, %s52
      %s53 = sphi 0, %s50
      %s54 = sphi 0, %s53
      %s70 = sphi 0, %s54
      %s76 = sphi 0, %s78
      %s79 = sphi 0, %s76
      %s80 = sphi 0, %s79
      %s96 = sphi 0, %s80
      %s102 = sphi 0, %s104
      %s105 = sphi 0, %s102
      %s106 = sphi 0, %s105
      %s122 = sphi 0, %s106
      %s126 = sphi 0, %s126
      %s128 = sphi 0, %s126
      %s129 = sphi 0, %s128
      %s143 = sphi 0, %s129
      %s147 = sphi 0, %s147
      %s149 = sphi 0, %s147
      %s150 = sphi 0, %s149
      %s164 = sphi 0, %s150
      %s168 = sphi 0, %s168
      %s170 = sphi 0, %s168
      %s171 = sphi 0, %s170
      %s185 = sphi 0, %s171
      %s189 = sphi 0, %s189
      %s191 = sphi 0, %s189
      %s192 = sphi 0, %s191
      %s206 = sphi 0, %s192
      %s210 = sphi 0, %s210
      %s212 = sphi 0, %s210
      %s213 = sphi 0, %s212
      %s227 = sphi 0, %s213
      %s231 = sphi 0, %s231
      %s233 = sphi 0, %s231
      %s234 = sphi 0, %s233
      %s248 = sphi 0, %s234
      %s252 = sphi 0, %s252
      %s254 = sphi 0, %s252
      %s255 = sphi 0, %s254
      %s269 = sphi 0, %s255
      %s273 = sphi 0, %s273
      %s275 = sphi 0, %s273
      %s276 = sphi 0, %s275
      %s290 = sphi 0, %s276
      %s294 = sphi 0, %s294
      %s296 = sphi 0, %s294
      %s297 = sphi 0, %s296
      %s311 = sphi 0, %s297
      %s317 = sphi 0, %s319
      %s320 = sphi 0, %s317
      %s321 = sphi 0, %s320
      %s337 = sphi 0, %s321
    $region4: #{tpu_custom_call.1} parent=1 // loop_header_branch
      %31 = sbr.rel (%p29) target = $region8
    $region5: #{tpu_custom_call.1} parent=1 // loop_body
      %s33 = ssub.s32 %s28, 1
      %s34 = ssub.s32 %s28, 2
      %s41 = sadd.s32 1, %s36
      %p42 = scmp.ge.s32.totalorder %s41, 2
      %s43 = scalar_select %p42, 0, %s41
      %s44 = sadd.s32 1, %s35
      %s45 = scalar_select %p42, %s44, %s35
      %p46 = scmp.ge.s32.totalorder %s45, 2
      %s47 = scalar_select %p46, 0, %s45
      %s48 = ssub.s32 %s35, %s47
      %p49 = scmp.eq.s32.totalorder %s48, 0
      %s51 = sadd.s32 %s50, 1
      %s52 = scalar_select %p49, %s50, %s51
      %p55 = pneg %p49
      %p56 = scmp.eq.s32.totalorder %s28, 3
      %p57 = por %p55, %p56
      %p58 = scmp.ne.s32.totalorder %s50, %s53
      %p59 = scmp.eq.s32.totalorder %s28, 0
      %p60 = por %p58, %p59
      %p61 = scmp.ne.s32.totalorder %s50, %s53
      %p62 = scmp.eq.s32.totalorder %s33, 3
      %p63 = por %p61, %p62
      %p64 = scmp.ne.s32.totalorder %s53, %s54
      %p65 = scmp.eq.s32.totalorder %s33, 0
      %p66 = por %p64, %p65
      %p67 = scmp.ne.s32.totalorder %s53, %s54
      %p68 = scmp.eq.s32.totalorder %s34, 3
      %p69 = por %p67, %p68
      %p71 = scmp.ne.s32.totalorder %s54, %s70
      %p72 = scmp.eq.s32.totalorder %s34, 0
      %p73 = por %p71, %p72
      %s74 = ssub.s32 %s36, %s43
      %p75 = scmp.eq.s32.totalorder %s74, 0
      %s77 = sadd.s32 %s76, 1
      %s78 = scalar_select %p75, %s76, %s77
      %p81 = pneg %p75
      %p82 = scmp.eq.s32.totalorder %s28, 3
      %p83 = por %p81, %p82
      %p84 = scmp.ne.s32.totalorder %s76, %s79
      %p85 = scmp.eq.s32.totalorder %s28, 0
      %p86 = por %p84, %p85
      %p87 = scmp.ne.s32.totalorder %s76, %s79
      %p88 = scmp.eq.s32.totalorder %s33, 3
      %p89 = por %p87, %p88
      %p90 = scmp.ne.s32.totalorder %s79, %s80
      %p91 = scmp.eq.s32.totalorder %s33, 0
      %p92 = por %p90, %p91
      %p93 = scmp.ne.s32.totalorder %s79, %s80
      %p94 = scmp.eq.s32.totalorder %s34, 3
      %p95 = por %p93, %p94
      %p97 = scmp.ne.s32.totalorder %s80, %s96
      %p98 = scmp.eq.s32.totalorder %s34, 0
      %p99 = por %p97, %p98
      %s100 = ssub.s32 %s36, %s43
      %p101 = scmp.eq.s32.totalorder %s100, 0
      %s103 = sadd.s32 %s102, 1
      %s104 = scalar_select %p101, %s102, %s103
      %p107 = pneg %p101
      %p108 = scmp.eq.s32.totalorder %s28, 3
      %p109 = por %p107, %p108
      %p110 = scmp.ne.s32.totalorder %s102, %s105
      %p111 = scmp.eq.s32.totalorder %s28, 0
      %p112 = por %p110, %p111
      %p113 = scmp.ne.s32.totalorder %s102, %s105
      %p114 = scmp.eq.s32.totalorder %s33, 3
      %p115 = por %p113, %p114
      %p116 = scmp.ne.s32.totalorder %s105, %s106
      %p117 = scmp.eq.s32.totalorder %s33, 0
      %p118 = por %p116, %p117
      %p119 = scmp.ne.s32.totalorder %s105, %s106
      %p120 = scmp.eq.s32.totalorder %s34, 3
      %p121 = por %p119, %p120
      %p123 = scmp.ne.s32.totalorder %s106, %s122
      %p124 = scmp.eq.s32.totalorder %s34, 0
      %p125 = por %p123, %p124
      %s127 = sadd.s32 %s126, 1
      %p130 = scmp.eq.s32.totalorder %s28, 3
      %p131 = scmp.ne.s32.totalorder %s126, %s128
      %p132 = scmp.eq.s32.totalorder %s28, 0
      %p133 = por %p131, %p132
      %p134 = scmp.ne.s32.totalorder %s126, %s128
      %p135 = scmp.eq.s32.totalorder %s33, 3
      %p136 = por %p134, %p135
      %p137 = scmp.ne.s32.totalorder %s128, %s129
      %p138 = scmp.eq.s32.totalorder %s33, 0
      %p139 = por %p137, %p138
      %p140 = scmp.ne.s32.totalorder %s128, %s129
      %p141 = scmp.eq.s32.totalorder %s34, 3
      %p142 = por %p140, %p141
      %p144 = scmp.ne.s32.totalorder %s129, %s143
      %p145 = scmp.eq.s32.totalorder %s34, 0
      %p146 = por %p144, %p145
      %s148 = sadd.s32 %s147, 1
      %p151 = scmp.eq.s32.totalorder %s28, 3
      %p152 = scmp.ne.s32.totalorder %s147, %s149
      %p153 = scmp.eq.s32.totalorder %s28, 0
      %p154 = por %p152, %p153
      %p155 = scmp.ne.s32.totalorder %s147, %s149
      %p156 = scmp.eq.s32.totalorder %s33, 3
      %p157 = por %p155, %p156
      %p158 = scmp.ne.s32.totalorder %s149, %s150
      %p159 = scmp.eq.s32.totalorder %s33, 0
      %p160 = por %p158, %p159
      %p161 = scmp.ne.s32.totalorder %s149, %s150
      %p162 = scmp.eq.s32.totalorder %s34, 3
      %p163 = por %p161, %p162
      %p165 = scmp.ne.s32.totalorder %s150, %s164
      %p166 = scmp.eq.s32.totalorder %s34, 0
      %p167 = por %p165, %p166
      %s169 = sadd.s32 %s168, 1
      %p172 = scmp.eq.s32.totalorder %s28, 3
      %p173 = scmp.ne.s32.totalorder %s168, %s170
      %p174 = scmp.eq.s32.totalorder %s28, 0
      %p175 = por %p173, %p174
      %p176 = scmp.ne.s32.totalorder %s168, %s170
      %p177 = scmp.eq.s32.totalorder %s33, 3
      %p178 = por %p176, %p177
      %p179 = scmp.ne.s32.totalorder %s170, %s171
      %p180 = scmp.eq.s32.totalorder %s33, 0
      %p181 = por %p179, %p180
      %p182 = scmp.ne.s32.totalorder %s170, %s171
      %p183 = scmp.eq.s32.totalorder %s34, 3
      %p184 = por %p182, %p183
      %p186 = scmp.ne.s32.totalorder %s171, %s185
      %p187 = scmp.eq.s32.totalorder %s34, 0
      %p188 = por %p186, %p187
      %s190 = sadd.s32 %s189, 1
      %p193 = scmp.eq.s32.totalorder %s28, 3
      %p194 = scmp.ne.s32.totalorder %s189, %s191
      %p195 = scmp.eq.s32.totalorder %s28, 0
      %p196 = por %p194, %p195
      %p197 = scmp.ne.s32.totalorder %s189, %s191
      %p198 = scmp.eq.s32.totalorder %s33, 3
      %p199 = por %p197, %p198
      %p200 = scmp.ne.s32.totalorder %s191, %s192
      %p201 = scmp.eq.s32.totalorder %s33, 0
      %p202 = por %p200, %p201
      %p203 = scmp.ne.s32.totalorder %s191, %s192
      %p204 = scmp.eq.s32.totalorder %s34, 3
      %p205 = por %p203, %p204
      %p207 = scmp.ne.s32.totalorder %s192, %s206
      %p208 = scmp.eq.s32.totalorder %s34, 0
      %p209 = por %p207, %p208
      %s211 = sadd.s32 %s210, 1
      %p214 = scmp.eq.s32.totalorder %s28, 3
      %p215 = scmp.ne.s32.totalorder %s210, %s212
      %p216 = scmp.eq.s32.totalorder %s28, 0
      %p217 = por %p215, %p216
      %p218 = scmp.ne.s32.totalorder %s210, %s212
      %p219 = scmp.eq.s32.totalorder %s33, 3
      %p220 = por %p218, %p219
      %p221 = scmp.ne.s32.totalorder %s212, %s213
      %p222 = scmp.eq.s32.totalorder %s33, 0
      %p223 = por %p221, %p222
      %p224 = scmp.ne.s32.totalorder %s212, %s213
      %p225 = scmp.eq.s32.totalorder %s34, 3
      %p226 = por %p224, %p225
      %p228 = scmp.ne.s32.totalorder %s213, %s227
      %p229 = scmp.eq.s32.totalorder %s34, 0
      %p230 = por %p228, %p229
      %s232 = sadd.s32 %s231, 1
      %p235 = scmp.eq.s32.totalorder %s28, 3
      %p236 = scmp.ne.s32.totalorder %s231, %s233
      %p237 = scmp.eq.s32.totalorder %s28, 0
      %p238 = por %p236, %p237
      %p239 = scmp.ne.s32.totalorder %s231, %s233
      %p240 = scmp.eq.s32.totalorder %s33, 3
      %p241 = por %p239, %p240
      %p242 = scmp.ne.s32.totalorder %s233, %s234
      %p243 = scmp.eq.s32.totalorder %s33, 0
      %p244 = por %p242, %p243
      %p245 = scmp.ne.s32.totalorder %s233, %s234
      %p246 = scmp.eq.s32.totalorder %s34, 3
      %p247 = por %p245, %p246
      %p249 = scmp.ne.s32.totalorder %s234, %s248
      %p250 = scmp.eq.s32.totalorder %s34, 0
      %p251 = por %p249, %p250
      %s253 = sadd.s32 %s252, 1
      %p256 = scmp.eq.s32.totalorder %s28, 3
      %p257 = scmp.ne.s32.totalorder %s252, %s254
      %p258 = scmp.eq.s32.totalorder %s28, 0
      %p259 = por %p257, %p258
      %p260 = scmp.ne.s32.totalorder %s252, %s254
      %p261 = scmp.eq.s32.totalorder %s33, 3
      %p262 = por %p260, %p261
      %p263 = scmp.ne.s32.totalorder %s254, %s255
      %p264 = scmp.eq.s32.totalorder %s33, 0
      %p265 = por %p263, %p264
      %p266 = scmp.ne.s32.totalorder %s254, %s255
      %p267 = scmp.eq.s32.totalorder %s34, 3
      %p268 = por %p266, %p267
      %p270 = scmp.ne.s32.totalorder %s255, %s269
      %p271 = scmp.eq.s32.totalorder %s34, 0
      %p272 = por %p270, %p271
      %s274 = sadd.s32 %s273, 1
      %p277 = scmp.eq.s32.totalorder %s28, 3
      %p278 = scmp.ne.s32.totalorder %s273, %s275
      %p279 = scmp.eq.s32.totalorder %s28, 0
      %p280 = por %p278, %p279
      %p281 = scmp.ne.s32.totalorder %s273, %s275
      %p282 = scmp.eq.s32.totalorder %s33, 3
      %p283 = por %p281, %p282
      %p284 = scmp.ne.s32.totalorder %s275, %s276
      %p285 = scmp.eq.s32.totalorder %s33, 0
      %p286 = por %p284, %p285
      %p287 = scmp.ne.s32.totalorder %s275, %s276
      %p288 = scmp.eq.s32.totalorder %s34, 3
      %p289 = por %p287, %p288
      %p291 = scmp.ne.s32.totalorder %s276, %s290
      %p292 = scmp.eq.s32.totalorder %s34, 0
      %p293 = por %p291, %p292
      %s295 = sadd.s32 %s294, 1
      %p298 = scmp.eq.s32.totalorder %s28, 3
      %p299 = scmp.ne.s32.totalorder %s294, %s296
      %p300 = scmp.eq.s32.totalorder %s28, 0
      %p301 = por %p299, %p300
      %p302 = scmp.ne.s32.totalorder %s294, %s296
      %p303 = scmp.eq.s32.totalorder %s33, 3
      %p304 = por %p302, %p303
      %p305 = scmp.ne.s32.totalorder %s296, %s297
      %p306 = scmp.eq.s32.totalorder %s33, 0
      %p307 = por %p305, %p306
      %p308 = scmp.ne.s32.totalorder %s296, %s297
      %p309 = scmp.eq.s32.totalorder %s34, 3
      %p310 = por %p308, %p309
      %p312 = scmp.ne.s32.totalorder %s297, %s311
      %p313 = scmp.eq.s32.totalorder %s34, 0
      %p314 = por %p312, %p313
      %s315 = ssub.s32 %s35, %s47
      %p316 = scmp.eq.s32.totalorder %s315, 0
      %s318 = sadd.s32 %s317, 1
      %s319 = scalar_select %p316, %s317, %s318
      %p322 = pneg %p316
      %p323 = scmp.eq.s32.totalorder %s28, 3
      %p324 = por %p322, %p323
      %p325 = scmp.ne.s32.totalorder %s317, %s320
      %p326 = scmp.eq.s32.totalorder %s28, 0
      %p327 = por %p325, %p326
      %p328 = scmp.ne.s32.totalorder %s317, %s320
      %p329 = scmp.eq.s32.totalorder %s33, 3
      %p330 = por %p328, %p329
      %p331 = scmp.ne.s32.totalorder %s320, %s321
      %p332 = scmp.eq.s32.totalorder %s33, 0
      %p333 = por %p331, %p332
      %p334 = scmp.ne.s32.totalorder %s320, %s321
      %p335 = scmp.eq.s32.totalorder %s34, 3
      %p336 = por %p334, %p335
      %p338 = scmp.ne.s32.totalorder %s321, %s337
      %p339 = scmp.eq.s32.totalorder %s34, 0
      %p340 = por %p338, %p339
      %p341 = scmp.le.s32.totalorder 1, %s28
      %p342 = scmp.lt.s32.totalorder %s28, 5
      %p343 = pnand %p341, %p342
      %p344 = pneg %p343
      // Predicated region
      $region9: #{tpu_custom_call.1} parent=5 // pred_check
        _
      $region10: #{tpu_custom_call.1} parent=5 // pred_check_branch
        %346 = sbr.rel (%p343) target = $region12
      $region11: #{tpu_custom_call.1} parent=5 // pred_region
        %s347 = ssub.s32 %s28, 1
        // Predicated region
        $region13: #{tpu_custom_call.1} parent=11 // pred_check
          %p348 = pneg %p139
        $region14: #{tpu_custom_call.1} parent=11 // pred_check_branch
          %350 = sbr.rel (%p348) target = $region16
        $region15: #{tpu_custom_call.1} parent=11 // pred_region
          _
        $region16: #{tpu_custom_call.1} parent=11 // pred_fallthru
          _
        // Predicated region
        $region17: #{tpu_custom_call.1} parent=11 // pred_check
          %p351 = pneg %p160
        $region18: #{tpu_custom_call.1} parent=11 // pred_check_branch
          %353 = sbr.rel (%p351) target = $region20
        $region19: #{tpu_custom_call.1} parent=11 // pred_region
          _
        $region20: #{tpu_custom_call.1} parent=11 // pred_fallthru
          _
        // Predicated region
        $region21: #{tpu_custom_call.1} parent=11 // pred_check
          %p354 = pneg %p181
        $region22: #{tpu_custom_call.1} parent=11 // pred_check_branch
          %356 = sbr.rel (%p354) target = $region24
        $region23: #{tpu_custom_call.1} parent=11 // pred_region
          _
        $region24: #{tpu_custom_call.1} parent=11 // pred_fallthru
          _
        // Predicated region
        $region25: #{tpu_custom_call.1} parent=11 // pred_check
          %p357 = pneg %p202
        $region26: #{tpu_custom_call.1} parent=11 // pred_check_branch
          %359 = sbr.rel (%p357) target = $region28
        $region27: #{tpu_custom_call.1} parent=11 // pred_region
          _
        $region28: #{tpu_custom_call.1} parent=11 // pred_fallthru
          _
        // Predicated region
        $region29: #{tpu_custom_call.1} parent=11 // pred_check
          %p360 = pneg %p223
        $region30: #{tpu_custom_call.1} parent=11 // pred_check_branch
          %362 = sbr.rel (%p360) target = $region32
        $region31: #{tpu_custom_call.1} parent=11 // pred_region
          _
        $region32: #{tpu_custom_call.1} parent=11 // pred_fallthru
          _
        // Predicated region
        $region33: #{tpu_custom_call.1} parent=11 // pred_check
          %p363 = pneg %p244
        $region34: #{tpu_custom_call.1} parent=11 // pred_check_branch
          %365 = sbr.rel (%p363) target = $region36
        $region35: #{tpu_custom_call.1} parent=11 // pred_region
          %s367 = ssub.s32 2048, 2048
          %368 = vsyncadd [#allocation10], %s367
          %s369 = sshll.u32 [#allocation9], 4
          %s370 = int_to_ptr.vmem [resolvable:$true] %s369
          %375 = dma.hbm_to_vmem [thread:$0]  %s8, 2048, %s370, [#allocation10], 128, 128, 8
        $region36: #{tpu_custom_call.1} parent=11 // pred_fallthru
          _
        // Predicated region
        $region37: #{tpu_custom_call.1} parent=11 // pred_check
          %p376 = pneg %p265
        $region38: #{tpu_custom_call.1} parent=11 // pred_check_branch
          %378 = sbr.rel (%p376) target = $region40
        $region39: #{tpu_custom_call.1} parent=11 // pred_region
          _
        $region40: #{tpu_custom_call.1} parent=11 // pred_fallthru
          _
        // Predicated region
        $region41: #{tpu_custom_call.1} parent=11 // pred_check
          %p379 = pneg %p286
        $region42: #{tpu_custom_call.1} parent=11 // pred_check_branch
          %381 = sbr.rel (%p379) target = $region44
        $region43: #{tpu_custom_call.1} parent=11 // pred_region
          %s383 = ssub.s32 2048, 2048
          %384 = vsyncadd [#allocation10], %s383
          %s385 = sshll.u32 [#allocation11], 4
          %s386 = int_to_ptr.vmem [resolvable:$true] %s385
          %391 = dma.hbm_to_vmem [thread:$0]  %s10, 2048, %s386, [#allocation10], 128, 128, 8
        $region44: #{tpu_custom_call.1} parent=11 // pred_fallthru
          _
        // Predicated region
        $region45: #{tpu_custom_call.1} parent=11 // pred_check
          %p392 = pneg %p307
        $region46: #{tpu_custom_call.1} parent=11 // pred_check_branch
          %394 = sbr.rel (%p392) target = $region48
        $region47: #{tpu_custom_call.1} parent=11 // pred_region
          _
        $region48: #{tpu_custom_call.1} parent=11 // pred_fallthru
          _
      $region12: #{tpu_custom_call.1} parent=5 // pred_fallthru
        _
      %p395 = scmp.lt.s32.totalorder %s28, 4
      // Predicated region
      $region49: #{tpu_custom_call.1} parent=5 // pred_check
        %p396 = pneg %p395
      $region50: #{tpu_custom_call.1} parent=5 // pred_check_branch
        %398 = sbr.rel (%p396) target = $region52
      $region51: #{tpu_custom_call.1} parent=5 // pred_region
        // Predicated region
        $region53: #{tpu_custom_call.1} parent=51 // pred_check
          %p399 = pneg %p60
        $region54: #{tpu_custom_call.1} parent=51 // pred_check_branch
          %401 = sbr.rel (%p399) target = $region56
        $region55: #{tpu_custom_call.1} parent=51 // pred_region
          %s402 = sand.u32 %s50, 1
          %s403 = scalar_lea.sflag [#allocation4], %s402
          %s404 = sand.u32 %s50, 1
          %s405 = smul.addr %s404, 8
          %s406 = scalar_lea.vmem [#allocation3], %s405
          %s408 = ssub.s32 128, 128
          %409 = vsyncadd %s403, %s408
          %s410 = smul.addr %s35, 128
          %s411 = scalar_lea.hbm %s0, %s410
          %s413 = sshll.u32 %s406, 4
          %s414 = int_to_ptr.vmem [resolvable:$true] %s413
          %416 = dma.hbm_to_vmem [thread:$0]  %s411, 128, %s414, %s403
        $region56: #{tpu_custom_call.1} parent=51 // pred_fallthru
          _
        // Predicated region
        $region57: #{tpu_custom_call.1} parent=51 // pred_check
          %p417 = pneg %p86
        $region58: #{tpu_custom_call.1} parent=51 // pred_check_branch
          %419 = sbr.rel (%p417) target = $region60
        $region59: #{tpu_custom_call.1} parent=51 // pred_region
          %s420 = sand.u32 %s28, 1
          %s421 = scalar_lea.sflag [#allocation7], %s420
          %s422 = sand.u32 %s76, 1
          %s423 = smul.addr %s422, 384
          %s424 = scalar_lea.vmem [#allocation6], %s423
          %s426 = ssub.s32 6144, 6144
          %427 = vsyncadd %s421, %s426
          %s428 = smul.addr %s36, 48
          %s429 = smul.addr %s428, 128
          %s430 = scalar_lea.hbm %s1, %s429
          %s431 = sshll.u32 %s424, 4
          %s432 = int_to_ptr.vmem [resolvable:$true] %s431
          %437 = dma.hbm_to_vmem [thread:$0]  %s430, 6144, %s432, %s421, 384, 384, 24
        $region60: #{tpu_custom_call.1} parent=51 // pred_fallthru
          _
        // Predicated region
        $region61: #{tpu_custom_call.1} parent=51 // pred_check
          %p438 = pneg %p112
        $region62: #{tpu_custom_call.1} parent=51 // pred_check_branch
          %440 = sbr.rel (%p438) target = $region64
        $region63: #{tpu_custom_call.1} parent=51 // pred_region
          %s441 = sand.u32 %s28, 1
          %s442 = scalar_lea.sflag [#allocation7], %s441
          %s443 = sand.u32 %s102, 1
          %s444 = smul.addr %s443, 128
          %s445 = scalar_lea.vmem [#allocation8], %s444
          %s447 = ssub.s32 2048, 2048
          %448 = vsyncadd %s442, %s447
          %s449 = smul.addr %s36, 16
          %s450 = smul.addr %s449, 128
          %s451 = scalar_lea.hbm %s2, %s450
          %s452 = sshll.u32 %s445, 4
          %s453 = int_to_ptr.vmem [resolvable:$true] %s452
          %458 = dma.hbm_to_vmem [thread:$0]  %s451, 2048, %s453, %s442, 128, 128, 8
        $region64: #{tpu_custom_call.1} parent=51 // pred_fallthru
          _
      $region52: #{tpu_custom_call.1} parent=5 // pred_fallthru
        _
      %p459 = scmp.le.s32.totalorder 1, %s28
      %p460 = scmp.lt.s32.totalorder %s28, 5
      %p461 = pnand %p459, %p460
      %p462 = pneg %p461
      // Predicated region
      $region65: #{tpu_custom_call.1} parent=5 // pred_check
        _
      $region66: #{tpu_custom_call.1} parent=5 // pred_check_branch
        %464 = sbr.rel (%p461) target = $region68
      $region67: #{tpu_custom_call.1} parent=5 // pred_region
        %s465 = ssub.s32 %s28, 1
        %s466 = sand.u32 %s53, 1
        %s467 = scalar_lea.sflag [#allocation4], %s466
        %s468 = sand.u32 %s53, 1
        %s469 = smul.addr %s468, 8
        %s470 = scalar_lea.vmem [#allocation3], %s469
        // Predicated region
        $region69: #{tpu_custom_call.1} parent=67 // pred_check
          %p471 = pneg %p66
        $region70: #{tpu_custom_call.1} parent=67 // pred_check_branch
          %473 = sbr.rel (%p471) target = $region72
        $region71: #{tpu_custom_call.1} parent=67 // pred_region
          %474 = dma.done %s467, 128
        $region72: #{tpu_custom_call.1} parent=67 // pred_fallthru
          _
        %s475 = sand.u32 %s33, 1
        %s476 = scalar_lea.sflag [#allocation7], %s475
        %s477 = sand.u32 %s79, 1
        %s478 = smul.addr %s477, 384
        %s479 = scalar_lea.vmem [#allocation6], %s478
        // Predicated region
        $region73: #{tpu_custom_call.1} parent=67 // pred_check
          %p480 = pneg %p92
        $region74: #{tpu_custom_call.1} parent=67 // pred_check_branch
          %482 = sbr.rel (%p480) target = $region76
        $region75: #{tpu_custom_call.1} parent=67 // pred_region
          %483 = dma.done %s476, 6144
        $region76: #{tpu_custom_call.1} parent=67 // pred_fallthru
          _
        %s484 = sand.u32 %s33, 1
        %s485 = scalar_lea.sflag [#allocation7], %s484
        %s486 = sand.u32 %s105, 1
        %s487 = smul.addr %s486, 128
        %s488 = scalar_lea.vmem [#allocation8], %s487
        // Predicated region
        $region77: #{tpu_custom_call.1} parent=67 // pred_check
          %p489 = pneg %p118
        $region78: #{tpu_custom_call.1} parent=67 // pred_check_branch
          %491 = sbr.rel (%p489) target = $region80
        $region79: #{tpu_custom_call.1} parent=67 // pred_region
          %492 = dma.done %s485, 2048
        $region80: #{tpu_custom_call.1} parent=67 // pred_fallthru
          _
        // Predicated region
        $region81: #{tpu_custom_call.1} parent=67 // pred_check
          %p493 = pneg %p244
        $region82: #{tpu_custom_call.1} parent=67 // pred_check_branch
          %495 = sbr.rel (%p493) target = $region84
        $region83: #{tpu_custom_call.1} parent=67 // pred_region
          %496 = dma.done [#allocation10], 2048
        $region84: #{tpu_custom_call.1} parent=67 // pred_fallthru
          _
        // Predicated region
        $region85: #{tpu_custom_call.1} parent=67 // pred_check
          %p497 = pneg %p286
        $region86: #{tpu_custom_call.1} parent=67 // pred_check_branch
          %499 = sbr.rel (%p497) target = $region88
        $region87: #{tpu_custom_call.1} parent=67 // pred_region
          %500 = dma.done [#allocation10], 2048
        $region88: #{tpu_custom_call.1} parent=67 // pred_fallthru
          _
        %s501 = sand.u32 %s53, 1
        %s502 = scalar_lea.sflag [#allocation4], %s501
        %s503 = sand.u32 %s53, 1
        %s504 = smul.addr %s503, 8
        %s505 = scalar_lea.vmem [#allocation3], %s504
        %p506 = pneg %p66
        %p507 = pneg %p63
        %s508 = sand.u32 %s33, 1
        %s509 = scalar_lea.sflag [#allocation7], %s508
        %s510 = sand.u32 %s79, 1
        %s511 = smul.addr %s510, 384
        %s512 = scalar_lea.vmem [#allocation6], %s511
        %p513 = pneg %p92
        %p514 = pneg %p89
        %s515 = sand.u32 %s33, 1
        %s516 = scalar_lea.sflag [#allocation7], %s515
        %s517 = sand.u32 %s105, 1
        %s518 = smul.addr %s517, 128
        %s519 = scalar_lea.vmem [#allocation8], %s518
        %p520 = pneg %p118
        %p521 = pneg %p115
        %p522 = pneg %p139
        %p523 = pneg %p136
        %p524 = pneg %p160
        %p525 = pneg %p157
        %p526 = pneg %p181
        %p527 = pneg %p178
        %p528 = pneg %p202
        %p529 = pneg %p199
        %p530 = pneg %p223
        %p531 = pneg %p220
        %p532 = pneg %p244
        %p533 = pneg %p241
        %p534 = pneg %p265
        %p535 = pneg %p262
        %p536 = pneg %p286
        %p537 = pneg %p283
        %p538 = pneg %p307
        %p539 = pneg %p304
        %p540 = pneg %p333
        %p541 = pneg %p330
        %s542 = sand.u32 %s320, 1
        %s543 = scalar_lea.sflag [#allocation5], %s542
        %s544 = sand.u32 %s320, 1
        %s545 = smul.addr %s544, 8
        %s546 = scalar_lea.vmem [#allocation12], %s545
        %p547 = scmp.eq.s32.totalorder %s38, 0
        // Predicated region
        $region89: #{tpu_custom_call.1} parent=67 // pred_check
          %p548 = pneg %p547
        $region90: #{tpu_custom_call.1} parent=67 // pred_check_branch
          %550 = sbr.rel (%p548) target = $region92
        $region91: #{tpu_custom_call.1} parent=67 // pred_region
          %551 = vst [vmem:[#allocation2] sm:$0xff] 0.0
        $region92: #{tpu_custom_call.1} parent=67 // pred_fallthru
          _
        %v552 = vld [vmem:[%s470] sm:$0xff]
        %v553 = vld [vmem:[%s479] sm:$0xff]
        %v554 = vld [vmem:[%s479 + $0x8] sm:$0xff]
        %v555 = vld [vmem:[%s479 + $0x10] sm:$0xff]
        %v556 = vld [vmem:[%s479 + $0x18] sm:$0xff]
        %v557 = vld [vmem:[%s479 + $0x20] sm:$0xff]
        %v558 = vld [vmem:[%s479 + $0x28] sm:$0xff]
        %v559 = vld [vmem:[%s479 + $0x30] sm:$0xff]
        %v560 = vld [vmem:[%s479 + $0x38] sm:$0xff]
        %v561 = vld [vmem:[%s479 + $0x40] sm:$0xff]
        %v562 = vld [vmem:[%s479 + $0x48] sm:$0xff]
        %v563 = vld [vmem:[%s479 + $0x50] sm:$0xff]
        %v564 = vld [vmem:[%s479 + $0x58] sm:$0xff]
        %v565 = vld [vmem:[%s479 + $0x60] sm:$0xff]
        %v566 = vld [vmem:[%s479 + $0x68] sm:$0xff]
        %v567 = vld [vmem:[%s479 + $0x70] sm:$0xff]
        %v568 = vld [vmem:[%s479 + $0x78] sm:$0xff]
        %v569 = vld [vmem:[%s479 + $0x80] sm:$0xff]
        %v570 = vld [vmem:[%s479 + $0x88] sm:$0xff]
        %v571 = vld [vmem:[%s479 + $0x90] sm:$0xff]
        %v572 = vld [vmem:[%s479 + $0x98] sm:$0xff]
        %v573 = vld [vmem:[%s479 + $0xa0] sm:$0xff]
        %v574 = vld [vmem:[%s479 + $0xa8] sm:$0xff]
        %v575 = vld [vmem:[%s479 + $0xb0] sm:$0xff]
        %v576 = vld [vmem:[%s479 + $0xb8] sm:$0xff]
        %v577 = vld [vmem:[%s479 + $0xc0] sm:$0xff]
        %v578 = vld [vmem:[%s479 + $0xc8] sm:$0xff]
        %v579 = vld [vmem:[%s479 + $0xd0] sm:$0xff]
        %v580 = vld [vmem:[%s479 + $0xd8] sm:$0xff]
        %v581 = vld [vmem:[%s479 + $0xe0] sm:$0xff]
        %v582 = vld [vmem:[%s479 + $0xe8] sm:$0xff]
        %v583 = vld [vmem:[%s479 + $0xf0] sm:$0xff]
        %v584 = vld [vmem:[%s479 + $0xf8] sm:$0xff]
        %v585 = vld [vmem:[%s479 + $0x100] sm:$0xff]
        %v586 = vld [vmem:[%s479 + $0x108] sm:$0xff]
        %v587 = vld [vmem:[%s479 + $0x110] sm:$0xff]
        %v588 = vld [vmem:[%s479 + $0x118] sm:$0xff]
        %v589 = vld [vmem:[%s479 + $0x120] sm:$0xff]
        %v590 = vld [vmem:[%s479 + $0x128] sm:$0xff]
        %v591 = vld [vmem:[%s479 + $0x130] sm:$0xff]
        %v592 = vld [vmem:[%s479 + $0x138] sm:$0xff]
        %v593 = vld [vmem:[%s479 + $0x140] sm:$0xff]
        %v594 = vld [vmem:[%s479 + $0x148] sm:$0xff]
        %v595 = vld [vmem:[%s479 + $0x150] sm:$0xff]
        %v596 = vld [vmem:[%s479 + $0x158] sm:$0xff]
        %v597 = vld [vmem:[%s479 + $0x160] sm:$0xff]
        %v598 = vld [vmem:[%s479 + $0x168] sm:$0xff]
        %v599 = vld [vmem:[%s479 + $0x170] sm:$0xff]
        %v600 = vld [vmem:[%s479 + $0x178] sm:$0xff]
        %v601 = vand.u32 %v554, 4294901760
        %602 = vmatprep.subr.mxu0 %v601
        %v603 = vand.u32 %v553, 4294901760
        %604 = vmatpush1.msra.mxu0 %v603
        %v605 = vand.u32 %v557, 4294901760
        %606 = vmatprep.subr.mxu0 %v605
        %v607 = vand.u32 %v556, 4294901760
        %608 = vmatpush1.msra.mxu0 %v607
        %v609 = vand.u32 %v560, 4294901760
        %610 = vmatprep.subr.mxu0 %v609
        %v611 = vand.u32 %v559, 4294901760
        %612 = vmatpush1.msra.mxu0 %v611
        %v613 = vand.u32 %v563, 4294901760
        %614 = vmatprep.subr.mxu0 %v613
        %v615 = vand.u32 %v562, 4294901760
        %616 = vmatpush1.msra.mxu0 %v615
        %v617 = vand.u32 %v566, 4294901760
        %618 = vmatprep.subr.mxu0 %v617
        %v619 = vand.u32 %v565, 4294901760
        %620 = vmatpush1.msra.mxu0 %v619
        %v621 = vand.u32 %v569, 4294901760
        %622 = vmatprep.subr.mxu0 %v621
        %v623 = vand.u32 %v568, 4294901760
        %624 = vmatpush1.msra.mxu0 %v623
        %v625 = vand.u32 %v572, 4294901760
        %626 = vmatprep.subr.mxu0 %v625
        %v627 = vand.u32 %v571, 4294901760
        %628 = vmatpush1.msra.mxu0 %v627
        %v629 = vand.u32 %v575, 4294901760
        %630 = vmatprep.subr.mxu0 %v629
        %v631 = vand.u32 %v574, 4294901760
        %632 = vmatpush1.msra.mxu0 %v631
        %v633 = vand.u32 %v578, 4294901760
        %634 = vmatprep.subr.mxu0 %v633
        %v635 = vand.u32 %v577, 4294901760
        %636 = vmatpush1.msra.mxu0 %v635
        %v637 = vand.u32 %v581, 4294901760
        %638 = vmatprep.subr.mxu0 %v637
        %v639 = vand.u32 %v580, 4294901760
        %640 = vmatpush1.msra.mxu0 %v639
        %v641 = vand.u32 %v584, 4294901760
        %642 = vmatprep.subr.mxu0 %v641
        %v643 = vand.u32 %v583, 4294901760
        %644 = vmatpush1.msra.mxu0 %v643
        %v645 = vand.u32 %v587, 4294901760
        %646 = vmatprep.subr.mxu0 %v645
        %v647 = vand.u32 %v586, 4294901760
        %648 = vmatpush1.msra.mxu0 %v647
        %v649 = vand.u32 %v590, 4294901760
        %650 = vmatprep.subr.mxu0 %v649
        %v651 = vand.u32 %v589, 4294901760
        %652 = vmatpush1.msra.mxu0 %v651
        %v653 = vand.u32 %v593, 4294901760
        %654 = vmatprep.subr.mxu0 %v653
        %v655 = vand.u32 %v592, 4294901760
        %656 = vmatpush1.msra.mxu0 %v655
        %v657 = vand.u32 %v596, 4294901760
        %658 = vmatprep.subr.mxu0 %v657
        %v659 = vand.u32 %v595, 4294901760
        %660 = vmatpush1.msra.mxu0 %v659
        %v661 = vand.u32 %v599, 4294901760
        %662 = vmatprep.subr.mxu0 %v661
        %v663 = vand.u32 %v598, 4294901760
        %664 = vmatpush1.msra.mxu0 %v663
        %665 = vmatprep.subr.mxu0 0.0
        %666 = vmatpush1.msra.mxu0 0.0
        %667 = vmatprep.subr.mxu0 0.0
        %668 = vmatpush1.msra.mxu0 0.0
        %669 = vmatprep.subr.mxu0 0.0
        %670 = vmatpush1.msra.mxu0 0.0
        %671 = vmatprep.subr.mxu0 0.0
        %672 = vmatpush1.msra.mxu0 0.0
        %673 = vmatprep.subr.mxu0 0.0
        %674 = vmatpush1.msra.mxu0 0.0
        %675 = vmatprep.subr.mxu0 0.0
        %676 = vmatpush1.msra.mxu0 0.0
        %677 = vmatprep.subr.mxu0 0.0
        %678 = vmatpush1.msra.mxu0 0.0
        %679 = vmatprep.subr.mxu0 0.0
        %680 = vmatpush1.msra.mxu0 0.0
        %681 = vmatprep.subr.mxu0 0.0
        %682 = vmatpush1.msra.mxu0 0.0
        %683 = vmatprep.subr.mxu0 0.0
        %684 = vmatpush1.msra.mxu0 0.0
        %685 = vmatprep.subr.mxu0 0.0
        %686 = vmatpush1.msra.mxu0 0.0
        %687 = vmatprep.subr.mxu0 0.0
        %688 = vmatpush1.msra.mxu0 0.0
        %689 = vmatprep.subr.mxu0 0.0
        %690 = vmatpush1.msra.mxu0 0.0
        %691 = vmatprep.subr.mxu0 0.0
        %692 = vmatpush1.msra.mxu0 0.0
        %693 = vmatprep.subr.mxu0 0.0
        %694 = vmatpush1.msra.mxu0 0.0
        %695 = vmatprep.subr.mxu0 0.0
        %696 = vmatpush1.msra.mxu0 0.0
        %697 = vmatprep.mubr.f32.mxu0 0.0
        %v698 = vand.u32 %v552, 4294901760
        %v699 = vsub.f32 %v552, %v698
        %v700 = vand.u32 %v699, 4294901760
        %v701 = vsub.f32 %v699, %v700
        %v702 = vand.u32 %v701, 4294901760
        %703 = vmatmul.mubr.f32.gmra.mrb[0].mxu0 %v702
        %v704 = vpop.f32.mrb[0].mxu0
        %v705 = vadd.f32 0.0, %v704
        %v706 = vpop.f32.mrb[0].mxu0
        %v707 = vadd.f32 0.0, %v706
        %708 = vdwg.mxu0
        %v709 = vand.u32 %v554, 4294901760
        %v710 = vsub.f32 %v554, %v709
        %v711 = vand.u32 %v710, 4294901760
        %v712 = vsub.f32 %v710, %v711
        %v713 = vand.u32 %v712, 4294901760
        %714 = vmatprep.subr.mxu0 %v713
        %v715 = vand.u32 %v553, 4294901760
        %v716 = vsub.f32 %v553, %v715
        %v717 = vand.u32 %v716, 4294901760
        %v718 = vsub.f32 %v716, %v717
        %v719 = vand.u32 %v718, 4294901760
        %720 = vmatpush1.msra.mxu0 %v719
        %v721 = vand.u32 %v557, 4294901760
        %v722 = vsub.f32 %v557, %v721
        %v723 = vand.u32 %v722, 4294901760
        %v724 = vsub.f32 %v722, %v723
        %v725 = vand.u32 %v724, 4294901760
        %726 = vmatprep.subr.mxu0 %v725
        %v727 = vand.u32 %v556, 4294901760
        %v728 = vsub.f32 %v556, %v727
        %v729 = vand.u32 %v728, 4294901760
        %v730 = vsub.f32 %v728, %v729
        %v731 = vand.u32 %v730, 4294901760
        %732 = vmatpush1.msra.mxu0 %v731
        %v733 = vand.u32 %v560, 4294901760
        %v734 = vsub.f32 %v560, %v733
        %v735 = vand.u32 %v734, 4294901760
        %v736 = vsub.f32 %v734, %v735
        %v737 = vand.u32 %v736, 4294901760
        %738 = vmatprep.subr.mxu0 %v737
        %v739 = vand.u32 %v559, 4294901760
        %v740 = vsub.f32 %v559, %v739
        %v741 = vand.u32 %v740, 4294901760
        %v742 = vsub.f32 %v740, %v741
        %v743 = vand.u32 %v742, 4294901760
        %744 = vmatpush1.msra.mxu0 %v743
        %v745 = vand.u32 %v563, 4294901760
        %v746 = vsub.f32 %v563, %v745
        %v747 = vand.u32 %v746, 4294901760
        %v748 = vsub.f32 %v746, %v747
        %v749 = vand.u32 %v748, 4294901760
        %750 = vmatprep.subr.mxu0 %v749
        %v751 = vand.u32 %v562, 4294901760
        %v752 = vsub.f32 %v562, %v751
        %v753 = vand.u32 %v752, 4294901760
        %v754 = vsub.f32 %v752, %v753
        %v755 = vand.u32 %v754, 4294901760
        %756 = vmatpush1.msra.mxu0 %v755
        %v757 = vand.u32 %v566, 4294901760
        %v758 = vsub.f32 %v566, %v757
        %v759 = vand.u32 %v758, 4294901760
        %v760 = vsub.f32 %v758, %v759
        %v761 = vand.u32 %v760, 4294901760
        %762 = vmatprep.subr.mxu0 %v761
        %v763 = vand.u32 %v565, 4294901760
        %v764 = vsub.f32 %v565, %v763
        %v765 = vand.u32 %v764, 4294901760
        %v766 = vsub.f32 %v764, %v765
        %v767 = vand.u32 %v766, 4294901760
        %768 = vmatpush1.msra.mxu0 %v767
        %v769 = vand.u32 %v569, 4294901760
        %v770 = vsub.f32 %v569, %v769
        %v771 = vand.u32 %v770, 4294901760
        %v772 = vsub.f32 %v770, %v771
        %v773 = vand.u32 %v772, 4294901760
        %774 = vmatprep.subr.mxu0 %v773
        %v775 = vand.u32 %v568, 4294901760
        %v776 = vsub.f32 %v568, %v775
        %v777 = vand.u32 %v776, 4294901760
        %v778 = vsub.f32 %v776, %v777
        %v779 = vand.u32 %v778, 4294901760
        %780 = vmatpush1.msra.mxu0 %v779
        %v781 = vand.u32 %v572, 4294901760
        %v782 = vsub.f32 %v572, %v781
        %v783 = vand.u32 %v782, 4294901760
        %v784 = vsub.f32 %v782, %v783
        %v785 = vand.u32 %v784, 4294901760
        %786 = vmatprep.subr.mxu0 %v785
        %v787 = vand.u32 %v571, 4294901760
        %v788 = vsub.f32 %v571, %v787
        %v789 = vand.u32 %v788, 4294901760
        %v790 = vsub.f32 %v788, %v789
        %v791 = vand.u32 %v790, 4294901760
        %792 = vmatpush1.msra.mxu0 %v791
        %v793 = vand.u32 %v575, 4294901760
        %v794 = vsub.f32 %v575, %v793
        %v795 = vand.u32 %v794, 4294901760
        %v796 = vsub.f32 %v794, %v795
        %v797 = vand.u32 %v796, 4294901760
        %798 = vmatprep.subr.mxu0 %v797
        %v799 = vand.u32 %v574, 4294901760
        %v800 = vsub.f32 %v574, %v799
        %v801 = vand.u32 %v800, 4294901760
        %v802 = vsub.f32 %v800, %v801
        %v803 = vand.u32 %v802, 4294901760
        %804 = vmatpush1.msra.mxu0 %v803
        %v805 = vand.u32 %v578, 4294901760
        %v806 = vsub.f32 %v578, %v805
        %v807 = vand.u32 %v806, 4294901760
        %v808 = vsub.f32 %v806, %v807
        %v809 = vand.u32 %v808, 4294901760
        %810 = vmatprep.subr.mxu0 %v809
        %v811 = vand.u32 %v577, 4294901760
        %v812 = vsub.f32 %v577, %v811
        %v813 = vand.u32 %v812, 4294901760
        %v814 = vsub.f32 %v812, %v813
        %v815 = vand.u32 %v814, 4294901760
        %816 = vmatpush1.msra.mxu0 %v815
        %v817 = vand.u32 %v581, 4294901760
        %v818 = vsub.f32 %v581, %v817
        %v819 = vand.u32 %v818, 4294901760
        %v820 = vsub.f32 %v818, %v819
        %v821 = vand.u32 %v820, 4294901760
        %822 = vmatprep.subr.mxu0 %v821
        %v823 = vand.u32 %v580, 4294901760
        %v824 = vsub.f32 %v580, %v823
        %v825 = vand.u32 %v824, 4294901760
        %v826 = vsub.f32 %v824, %v825
        %v827 = vand.u32 %v826, 4294901760
        %828 = vmatpush1.msra.mxu0 %v827
        %v829 = vand.u32 %v584, 4294901760
        %v830 = vsub.f32 %v584, %v829
        %v831 = vand.u32 %v830, 4294901760
        %v832 = vsub.f32 %v830, %v831
        %v833 = vand.u32 %v832, 4294901760
        %834 = vmatprep.subr.mxu0 %v833
        %v835 = vand.u32 %v583, 4294901760
        %v836 = vsub.f32 %v583, %v835
        %v837 = vand.u32 %v836, 4294901760
        %v838 = vsub.f32 %v836, %v837
        %v839 = vand.u32 %v838, 4294901760
        %840 = vmatpush1.msra.mxu0 %v839
        %v841 = vand.u32 %v587, 4294901760
        %v842 = vsub.f32 %v587, %v841
        %v843 = vand.u32 %v842, 4294901760
        %v844 = vsub.f32 %v842, %v843
        %v845 = vand.u32 %v844, 4294901760
        %846 = vmatprep.subr.mxu0 %v845
        %v847 = vand.u32 %v586, 4294901760
        %v848 = vsub.f32 %v586, %v847
        %v849 = vand.u32 %v848, 4294901760
        %v850 = vsub.f32 %v848, %v849
        %v851 = vand.u32 %v850, 4294901760
        %852 = vmatpush1.msra.mxu0 %v851
        %v853 = vand.u32 %v590, 4294901760
        %v854 = vsub.f32 %v590, %v853
        %v855 = vand.u32 %v854, 4294901760
        %v856 = vsub.f32 %v854, %v855
        %v857 = vand.u32 %v856, 4294901760
        %858 = vmatprep.subr.mxu0 %v857
        %v859 = vand.u32 %v589, 4294901760
        %v860 = vsub.f32 %v589, %v859
        %v861 = vand.u32 %v860, 4294901760
        %v862 = vsub.f32 %v860, %v861
        %v863 = vand.u32 %v862, 4294901760
        %864 = vmatpush1.msra.mxu0 %v863
        %v865 = vand.u32 %v593, 4294901760
        %v866 = vsub.f32 %v593, %v865
        %v867 = vand.u32 %v866, 4294901760
        %v868 = vsub.f32 %v866, %v867
        %v869 = vand.u32 %v868, 4294901760
        %870 = vmatprep.subr.mxu0 %v869
        %v871 = vand.u32 %v592, 4294901760
        %v872 = vsub.f32 %v592, %v871
        %v873 = vand.u32 %v872, 4294901760
        %v874 = vsub.f32 %v872, %v873
        %v875 = vand.u32 %v874, 4294901760
        %876 = vmatpush1.msra.mxu0 %v875
        %v877 = vand.u32 %v596, 4294901760
        %v878 = vsub.f32 %v596, %v877
        %v879 = vand.u32 %v878, 4294901760
        %v880 = vsub.f32 %v878, %v879
        %v881 = vand.u32 %v880, 4294901760
        %882 = vmatprep.subr.mxu0 %v881
        %v883 = vand.u32 %v595, 4294901760
        %v884 = vsub.f32 %v595, %v883
        %v885 = vand.u32 %v884, 4294901760
        %v886 = vsub.f32 %v884, %v885
        %v887 = vand.u32 %v886, 4294901760
        %888 = vmatpush1.msra.mxu0 %v887
        %v889 = vand.u32 %v599, 4294901760
        %v890 = vsub.f32 %v599, %v889
        %v891 = vand.u32 %v890, 4294901760
        %v892 = vsub.f32 %v890, %v891
        %v893 = vand.u32 %v892, 4294901760
        %894 = vmatprep.subr.mxu0 %v893
        %v895 = vand.u32 %v598, 4294901760
        %v896 = vsub.f32 %v598, %v895
        %v897 = vand.u32 %v896, 4294901760
        %v898 = vsub.f32 %v896, %v897
        %v899 = vand.u32 %v898, 4294901760
        %900 = vmatpush1.msra.mxu0 %v899
        %901 = vmatprep.subr.mxu0 0.0
        %902 = vmatpush1.msra.mxu0 0.0
        %903 = vmatprep.subr.mxu0 0.0
        %904 = vmatpush1.msra.mxu0 0.0
        %905 = vmatprep.subr.mxu0 0.0
        %906 = vmatpush1.msra.mxu0 0.0
        %907 = vmatprep.subr.mxu0 0.0
        %908 = vmatpush1.msra.mxu0 0.0
        %909 = vmatprep.subr.mxu0 0.0
        %910 = vmatpush1.msra.mxu0 0.0
        %911 = vmatprep.subr.mxu0 0.0
        %912 = vmatpush1.msra.mxu0 0.0
        %913 = vmatprep.subr.mxu0 0.0
        %914 = vmatpush1.msra.mxu0 0.0
        %915 = vmatprep.subr.mxu0 0.0
        %916 = vmatpush1.msra.mxu0 0.0
        %917 = vmatprep.subr.mxu0 0.0
        %918 = vmatpush1.msra.mxu0 0.0
        %919 = vmatprep.subr.mxu0 0.0
        %920 = vmatpush1.msra.mxu0 0.0
        %921 = vmatprep.subr.mxu0 0.0
        %922 = vmatpush1.msra.mxu0 0.0
        %923 = vmatprep.subr.mxu0 0.0
        %924 = vmatpush1.msra.mxu0 0.0
        %925 = vmatprep.subr.mxu0 0.0
        %926 = vmatpush1.msra.mxu0 0.0
        %927 = vmatprep.subr.mxu0 0.0
        %928 = vmatpush1.msra.mxu0 0.0
        %929 = vmatprep.subr.mxu0 0.0
        %930 = vmatpush1.msra.mxu0 0.0
        %931 = vmatprep.subr.mxu0 0.0
        %932 = vmatpush1.msra.mxu0 0.0
        %933 = vmatprep.mubr.f32.mxu0 0.0
        %v934 = vand.u32 %v552, 4294901760
        %935 = vmatmul.mubr.f32.gmra.mrb[0].mxu0 %v934
        %v936 = vpop.f32.mrb[0].mxu0
        %v937 = vadd.f32 %v705, %v936
        %v938 = vpop.f32.mrb[0].mxu0
        %v939 = vadd.f32 %v707, %v938
        %940 = vdwg.mxu0
        %v941 = vand.u32 %v554, 4294901760
        %v942 = vsub.f32 %v554, %v941
        %943 = vmatprep.subr.mxu0 %v942
        %v944 = vand.u32 %v553, 4294901760
        %v945 = vsub.f32 %v553, %v944
        %946 = vmatpush1.msra.mxu0 %v945
        %v947 = vand.u32 %v557, 4294901760
        %v948 = vsub.f32 %v557, %v947
        %949 = vmatprep.subr.mxu0 %v948
        %v950 = vand.u32 %v556, 4294901760
        %v951 = vsub.f32 %v556, %v950
        %952 = vmatpush1.msra.mxu0 %v951
        %v953 = vand.u32 %v560, 4294901760
        %v954 = vsub.f32 %v560, %v953
        %955 = vmatprep.subr.mxu0 %v954
        %v956 = vand.u32 %v559, 4294901760
        %v957 = vsub.f32 %v559, %v956
        %958 = vmatpush1.msra.mxu0 %v957
        %v959 = vand.u32 %v563, 4294901760
        %v960 = vsub.f32 %v563, %v959
        %961 = vmatprep.subr.mxu0 %v960
        %v962 = vand.u32 %v562, 4294901760
        %v963 = vsub.f32 %v562, %v962
        %964 = vmatpush1.msra.mxu0 %v963
        %v965 = vand.u32 %v566, 4294901760
        %v966 = vsub.f32 %v566, %v965
        %967 = vmatprep.subr.mxu0 %v966
        %v968 = vand.u32 %v565, 4294901760
        %v969 = vsub.f32 %v565, %v968
        %970 = vmatpush1.msra.mxu0 %v969
        %v971 = vand.u32 %v569, 4294901760
        %v972 = vsub.f32 %v569, %v971
        %973 = vmatprep.subr.mxu0 %v972
        %v974 = vand.u32 %v568, 4294901760
        %v975 = vsub.f32 %v568, %v974
        %976 = vmatpush1.msra.mxu0 %v975
        %v977 = vand.u32 %v572, 4294901760
        %v978 = vsub.f32 %v572, %v977
        %979 = vmatprep.subr.mxu0 %v978
        %v980 = vand.u32 %v571, 4294901760
        %v981 = vsub.f32 %v571, %v980
        %982 = vmatpush1.msra.mxu0 %v981
        %v983 = vand.u32 %v575, 4294901760
        %v984 = vsub.f32 %v575, %v983
        %985 = vmatprep.subr.mxu0 %v984
        %v986 = vand.u32 %v574, 4294901760
        %v987 = vsub.f32 %v574, %v986
        %988 = vmatpush1.msra.mxu0 %v987
        %v989 = vand.u32 %v578, 4294901760
        %v990 = vsub.f32 %v578, %v989
        %991 = vmatprep.subr.mxu0 %v990
        %v992 = vand.u32 %v577, 4294901760
        %v993 = vsub.f32 %v577, %v992
        %994 = vmatpush1.msra.mxu0 %v993
        %v995 = vand.u32 %v581, 4294901760
        %v996 = vsub.f32 %v581, %v995
        %997 = vmatprep.subr.mxu0 %v996
        %v998 = vand.u32 %v580, 4294901760
        %v999 = vsub.f32 %v580, %v998
        %1000 = vmatpush1.msra.mxu0 %v999
        %v1001 = vand.u32 %v584, 4294901760
        %v1002 = vsub.f32 %v584, %v1001
        %1003 = vmatprep.subr.mxu0 %v1002
        %v1004 = vand.u32 %v583, 4294901760
        %v1005 = vsub.f32 %v583, %v1004
        %1006 = vmatpush1.msra.mxu0 %v1005
        %v1007 = vand.u32 %v587, 4294901760
        %v1008 = vsub.f32 %v587, %v1007
        %1009 = vmatprep.subr.mxu0 %v1008
        %v1010 = vand.u32 %v586, 4294901760
        %v1011 = vsub.f32 %v586, %v1010
        %1012 = vmatpush1.msra.mxu0 %v1011
        %v1013 = vand.u32 %v590, 4294901760
        %v1014 = vsub.f32 %v590, %v1013
        %1015 = vmatprep.subr.mxu0 %v1014
        %v1016 = vand.u32 %v589, 4294901760
        %v1017 = vsub.f32 %v589, %v1016
        %1018 = vmatpush1.msra.mxu0 %v1017
        %v1019 = vand.u32 %v593, 4294901760
        %v1020 = vsub.f32 %v593, %v1019
        %1021 = vmatprep.subr.mxu0 %v1020
        %v1022 = vand.u32 %v592, 4294901760
        %v1023 = vsub.f32 %v592, %v1022
        %1024 = vmatpush1.msra.mxu0 %v1023
        %v1025 = vand.u32 %v596, 4294901760
        %v1026 = vsub.f32 %v596, %v1025
        %1027 = vmatprep.subr.mxu0 %v1026
        %v1028 = vand.u32 %v595, 4294901760
        %v1029 = vsub.f32 %v595, %v1028
        %1030 = vmatpush1.msra.mxu0 %v1029
        %v1031 = vand.u32 %v599, 4294901760
        %v1032 = vsub.f32 %v599, %v1031
        %1033 = vmatprep.subr.mxu0 %v1032
        %v1034 = vand.u32 %v598, 4294901760
        %v1035 = vsub.f32 %v598, %v1034
        %1036 = vmatpush1.msra.mxu0 %v1035
        %1037 = vmatprep.subr.mxu0 0.0
        %1038 = vmatpush1.msra.mxu0 0.0
        %1039 = vmatprep.subr.mxu0 0.0
        %1040 = vmatpush1.msra.mxu0 0.0
        %1041 = vmatprep.subr.mxu0 0.0
        %1042 = vmatpush1.msra.mxu0 0.0
        %1043 = vmatprep.subr.mxu0 0.0
        %1044 = vmatpush1.msra.mxu0 0.0
        %1045 = vmatprep.subr.mxu0 0.0
        %1046 = vmatpush1.msra.mxu0 0.0
        %1047 = vmatprep.subr.mxu0 0.0
        %1048 = vmatpush1.msra.mxu0 0.0
        %1049 = vmatprep.subr.mxu0 0.0
        %1050 = vmatpush1.msra.mxu0 0.0
        %1051 = vmatprep.subr.mxu0 0.0
        %1052 = vmatpush1.msra.mxu0 0.0
        %1053 = vmatprep.subr.mxu0 0.0
        %1054 = vmatpush1.msra.mxu0 0.0
        %1055 = vmatprep.subr.mxu0 0.0
        %1056 = vmatpush1.msra.mxu0 0.0
        %1057 = vmatprep.subr.mxu0 0.0
        %1058 = vmatpush1.msra.mxu0 0.0
        %1059 = vmatprep.subr.mxu0 0.0
        %1060 = vmatpush1.msra.mxu0 0.0
        %1061 = vmatprep.subr.mxu0 0.0
        %1062 = vmatpush1.msra.mxu0 0.0
        %1063 = vmatprep.subr.mxu0 0.0
        %1064 = vmatpush1.msra.mxu0 0.0
        %1065 = vmatprep.subr.mxu0 0.0
        %1066 = vmatpush1.msra.mxu0 0.0
        %1067 = vmatprep.subr.mxu0 0.0
        %1068 = vmatpush1.msra.mxu0 0.0
        %1069 = vmatprep.mubr.f32.mxu0 0.0
        %v1070 = vand.u32 %v552, 4294901760
        %v1071 = vsub.f32 %v552, %v1070
        %1072 = vmatmul.mubr.f32.gmra.mrb[0].mxu0 %v1071
        %v1073 = vpop.f32.mrb[0].mxu0
        %v1074 = vadd.f32 %v937, %v1073
        %v1075 = vpop.f32.mrb[0].mxu0
        %v1076 = vadd.f32 %v939, %v1075
        %1077 = vdwg.mxu0
        %v1078 = vand.u32 %v554, 4294901760
        %1079 = vmatprep.subr.mxu0 %v1078
        %v1080 = vand.u32 %v553, 4294901760
        %1081 = vmatpush1.msra.mxu0 %v1080
        %v1082 = vand.u32 %v557, 4294901760
        %1083 = vmatprep.subr.mxu0 %v1082
        %v1084 = vand.u32 %v556, 4294901760
        %1085 = vmatpush1.msra.mxu0 %v1084
        %v1086 = vand.u32 %v560, 4294901760
        %1087 = vmatprep.subr.mxu0 %v1086
        %v1088 = vand.u32 %v559, 4294901760
        %1089 = vmatpush1.msra.mxu0 %v1088
        %v1090 = vand.u32 %v563, 4294901760
        %1091 = vmatprep.subr.mxu0 %v1090
        %v1092 = vand.u32 %v562, 4294901760
        %1093 = vmatpush1.msra.mxu0 %v1092
        %v1094 = vand.u32 %v566, 4294901760
        %1095 = vmatprep.subr.mxu0 %v1094
        %v1096 = vand.u32 %v565, 4294901760
        %1097 = vmatpush1.msra.mxu0 %v1096
        %v1098 = vand.u32 %v569, 4294901760
        %1099 = vmatprep.subr.mxu0 %v1098
        %v1100 = vand.u32 %v568, 4294901760
        %1101 = vmatpush1.msra.mxu0 %v1100
        %v1102 = vand.u32 %v572, 4294901760
        %1103 = vmatprep.subr.mxu0 %v1102
        %v1104 = vand.u32 %v571, 4294901760
        %1105 = vmatpush1.msra.mxu0 %v1104
        %v1106 = vand.u32 %v575, 4294901760
        %1107 = vmatprep.subr.mxu0 %v1106
        %v1108 = vand.u32 %v574, 4294901760
        %1109 = vmatpush1.msra.mxu0 %v1108
        %v1110 = vand.u32 %v578, 4294901760
        %1111 = vmatprep.subr.mxu0 %v1110
        %v1112 = vand.u32 %v577, 4294901760
        %1113 = vmatpush1.msra.mxu0 %v1112
        %v1114 = vand.u32 %v581, 4294901760
        %1115 = vmatprep.subr.mxu0 %v1114
        %v1116 = vand.u32 %v580, 4294901760
        %1117 = vmatpush1.msra.mxu0 %v1116
        %v1118 = vand.u32 %v584, 4294901760
        %1119 = vmatprep.subr.mxu0 %v1118
        %v1120 = vand.u32 %v583, 4294901760
        %1121 = vmatpush1.msra.mxu0 %v1120
        %v1122 = vand.u32 %v587, 4294901760
        %1123 = vmatprep.subr.mxu0 %v1122
        %v1124 = vand.u32 %v586, 4294901760
        %1125 = vmatpush1.msra.mxu0 %v1124
        %v1126 = vand.u32 %v590, 4294901760
        %1127 = vmatprep.subr.mxu0 %v1126
        %v1128 = vand.u32 %v589, 4294901760
        %1129 = vmatpush1.msra.mxu0 %v1128
        %v1130 = vand.u32 %v593, 4294901760
        %1131 = vmatprep.subr.mxu0 %v1130
        %v1132 = vand.u32 %v592, 4294901760
        %1133 = vmatpush1.msra.mxu0 %v1132
        %v1134 = vand.u32 %v596, 4294901760
        %1135 = vmatprep.subr.mxu0 %v1134
        %v1136 = vand.u32 %v595, 4294901760
        %1137 = vmatpush1.msra.mxu0 %v1136
        %v1138 = vand.u32 %v599, 4294901760
        %1139 = vmatprep.subr.mxu0 %v1138
        %v1140 = vand.u32 %v598, 4294901760
        %1141 = vmatpush1.msra.mxu0 %v1140
        %1142 = vmatprep.subr.mxu0 0.0
        %1143 = vmatpush1.msra.mxu0 0.0
        %1144 = vmatprep.subr.mxu0 0.0
        %1145 = vmatpush1.msra.mxu0 0.0
        %1146 = vmatprep.subr.mxu0 0.0
        %1147 = vmatpush1.msra.mxu0 0.0
        %1148 = vmatprep.subr.mxu0 0.0
        %1149 = vmatpush1.msra.mxu0 0.0
        %1150 = vmatprep.subr.mxu0 0.0
        %1151 = vmatpush1.msra.mxu0 0.0
        %1152 = vmatprep.subr.mxu0 0.0
        %1153 = vmatpush1.msra.mxu0 0.0
        %1154 = vmatprep.subr.mxu0 0.0
        %1155 = vmatpush1.msra.mxu0 0.0
        %1156 = vmatprep.subr.mxu0 0.0
        %1157 = vmatpush1.msra.mxu0 0.0
        %1158 = vmatprep.subr.mxu0 0.0
        %1159 = vmatpush1.msra.mxu0 0.0
        %1160 = vmatprep.subr.mxu0 0.0
        %1161 = vmatpush1.msra.mxu0 0.0
        %1162 = vmatprep.subr.mxu0 0.0
        %1163 = vmatpush1.msra.mxu0 0.0
        %1164 = vmatprep.subr.mxu0 0.0
        %1165 = vmatpush1.msra.mxu0 0.0
        %1166 = vmatprep.subr.mxu0 0.0
        %1167 = vmatpush1.msra.mxu0 0.0
        %1168 = vmatprep.subr.mxu0 0.0
        %1169 = vmatpush1.msra.mxu0 0.0
        %1170 = vmatprep.subr.mxu0 0.0
        %1171 = vmatpush1.msra.mxu0 0.0
        %1172 = vmatprep.subr.mxu0 0.0
        %1173 = vmatpush1.msra.mxu0 0.0
        %1174 = vmatprep.mubr.f32.mxu0 0.0
        %v1175 = vand.u32 %v552, 4294901760
        %v1176 = vsub.f32 %v552, %v1175
        %v1177 = vand.u32 %v1176, 4294901760
        %1178 = vmatmul.mubr.f32.gmra.mrb[0].mxu0 %v1177
        %v1179 = vpop.f32.mrb[0].mxu0
        %v1180 = vadd.f32 %v1074, %v1179
        %v1181 = vpop.f32.mrb[0].mxu0
        %v1182 = vadd.f32 %v1076, %v1181
        %1183 = vdwg.mxu0
        %v1184 = vand.u32 %v554, 4294901760
        %v1185 = vsub.f32 %v554, %v1184
        %v1186 = vand.u32 %v1185, 4294901760
        %1187 = vmatprep.subr.mxu0 %v1186
        %v1188 = vand.u32 %v553, 4294901760
        %v1189 = vsub.f32 %v553, %v1188
        %v1190 = vand.u32 %v1189, 4294901760
        %1191 = vmatpush1.msra.mxu0 %v1190
        %v1192 = vand.u32 %v557, 4294901760
        %v1193 = vsub.f32 %v557, %v1192
        %v1194 = vand.u32 %v1193, 4294901760
        %1195 = vmatprep.subr.mxu0 %v1194
        %v1196 = vand.u32 %v556, 4294901760
        %v1197 = vsub.f32 %v556, %v1196
        %v1198 = vand.u32 %v1197, 4294901760
        %1199 = vmatpush1.msra.mxu0 %v1198
        %v1200 = vand.u32 %v560, 4294901760
        %v1201 = vsub.f32 %v560, %v1200
        %v1202 = vand.u32 %v1201, 4294901760
        %1203 = vmatprep.subr.mxu0 %v1202
        %v1204 = vand.u32 %v559, 4294901760
        %v1205 = vsub.f32 %v559, %v1204
        %v1206 = vand.u32 %v1205, 4294901760
        %1207 = vmatpush1.msra.mxu0 %v1206
        %v1208 = vand.u32 %v563, 4294901760
        %v1209 = vsub.f32 %v563, %v1208
        %v1210 = vand.u32 %v1209, 4294901760
        %1211 = vmatprep.subr.mxu0 %v1210
        %v1212 = vand.u32 %v562, 4294901760
        %v1213 = vsub.f32 %v562, %v1212
        %v1214 = vand.u32 %v1213, 4294901760
        %1215 = vmatpush1.msra.mxu0 %v1214
        %v1216 = vand.u32 %v566, 4294901760
        %v1217 = vsub.f32 %v566, %v1216
        %v1218 = vand.u32 %v1217, 4294901760
        %1219 = vmatprep.subr.mxu0 %v1218
        %v1220 = vand.u32 %v565, 4294901760
        %v1221 = vsub.f32 %v565, %v1220
        %v1222 = vand.u32 %v1221, 4294901760
        %1223 = vmatpush1.msra.mxu0 %v1222
        %v1224 = vand.u32 %v569, 4294901760
        %v1225 = vsub.f32 %v569, %v1224
        %v1226 = vand.u32 %v1225, 4294901760
        %1227 = vmatprep.subr.mxu0 %v1226
        %v1228 = vand.u32 %v568, 4294901760
        %v1229 = vsub.f32 %v568, %v1228
        %v1230 = vand.u32 %v1229, 4294901760
        %1231 = vmatpush1.msra.mxu0 %v1230
        %v1232 = vand.u32 %v572, 4294901760
        %v1233 = vsub.f32 %v572, %v1232
        %v1234 = vand.u32 %v1233, 4294901760
        %1235 = vmatprep.subr.mxu0 %v1234
        %v1236 = vand.u32 %v571, 4294901760
        %v1237 = vsub.f32 %v571, %v1236
        %v1238 = vand.u32 %v1237, 4294901760
        %1239 = vmatpush1.msra.mxu0 %v1238
        %v1240 = vand.u32 %v575, 4294901760
        %v1241 = vsub.f32 %v575, %v1240
        %v1242 = vand.u32 %v1241, 4294901760
        %1243 = vmatprep.subr.mxu0 %v1242
        %v1244 = vand.u32 %v574, 4294901760
        %v1245 = vsub.f32 %v574, %v1244
        %v1246 = vand.u32 %v1245, 4294901760
        %1247 = vmatpush1.msra.mxu0 %v1246
        %v1248 = vand.u32 %v578, 4294901760
        %v1249 = vsub.f32 %v578, %v1248
        %v1250 = vand.u32 %v1249, 4294901760
        %1251 = vmatprep.subr.mxu0 %v1250
        %v1252 = vand.u32 %v577, 4294901760
        %v1253 = vsub.f32 %v577, %v1252
        %v1254 = vand.u32 %v1253, 4294901760
        %1255 = vmatpush1.msra.mxu0 %v1254
        %v1256 = vand.u32 %v581, 4294901760
        %v1257 = vsub.f32 %v581, %v1256
        %v1258 = vand.u32 %v1257, 4294901760
        %1259 = vmatprep.subr.mxu0 %v1258
        %v1260 = vand.u32 %v580, 4294901760
        %v1261 = vsub.f32 %v580, %v1260
        %v1262 = vand.u32 %v1261, 4294901760
        %1263 = vmatpush1.msra.mxu0 %v1262
        %v1264 = vand.u32 %v584, 4294901760
        %v1265 = vsub.f32 %v584, %v1264
        %v1266 = vand.u32 %v1265, 4294901760
        %1267 = vmatprep.subr.mxu0 %v1266
        %v1268 = vand.u32 %v583, 4294901760
        %v1269 = vsub.f32 %v583, %v1268
        %v1270 = vand.u32 %v1269, 4294901760
        %1271 = vmatpush1.msra.mxu0 %v1270
        %v1272 = vand.u32 %v587, 4294901760
        %v1273 = vsub.f32 %v587, %v1272
        %v1274 = vand.u32 %v1273, 4294901760
        %1275 = vmatprep.subr.mxu0 %v1274
        %v1276 = vand.u32 %v586, 4294901760
        %v1277 = vsub.f32 %v586, %v1276
        %v1278 = vand.u32 %v1277, 4294901760
        %1279 = vmatpush1.msra.mxu0 %v1278
        %v1280 = vand.u32 %v590, 4294901760
        %v1281 = vsub.f32 %v590, %v1280
        %v1282 = vand.u32 %v1281, 4294901760
        %1283 = vmatprep.subr.mxu0 %v1282
        %v1284 = vand.u32 %v589, 4294901760
        %v1285 = vsub.f32 %v589, %v1284
        %v1286 = vand.u32 %v1285, 4294901760
        %1287 = vmatpush1.msra.mxu0 %v1286
        %v1288 = vand.u32 %v593, 4294901760
        %v1289 = vsub.f32 %v593, %v1288
        %v1290 = vand.u32 %v1289, 4294901760
        %1291 = vmatprep.subr.mxu0 %v1290
        %v1292 = vand.u32 %v592, 4294901760
        %v1293 = vsub.f32 %v592, %v1292
        %v1294 = vand.u32 %v1293, 4294901760
        %1295 = vmatpush1.msra.mxu0 %v1294
        %v1296 = vand.u32 %v596, 4294901760
        %v1297 = vsub.f32 %v596, %v1296
        %v1298 = vand.u32 %v1297, 4294901760
        %1299 = vmatprep.subr.mxu0 %v1298
        %v1300 = vand.u32 %v595, 4294901760
        %v1301 = vsub.f32 %v595, %v1300
        %v1302 = vand.u32 %v1301, 4294901760
        %1303 = vmatpush1.msra.mxu0 %v1302
        %v1304 = vand.u32 %v599, 4294901760
        %v1305 = vsub.f32 %v599, %v1304
        %v1306 = vand.u32 %v1305, 4294901760
        %1307 = vmatprep.subr.mxu0 %v1306
        %v1308 = vand.u32 %v598, 4294901760
        %v1309 = vsub.f32 %v598, %v1308
        %v1310 = vand.u32 %v1309, 4294901760
        %1311 = vmatpush1.msra.mxu0 %v1310
        %1312 = vmatprep.subr.mxu0 0.0
        %1313 = vmatpush1.msra.mxu0 0.0
        %1314 = vmatprep.subr.mxu0 0.0
        %1315 = vmatpush1.msra.mxu0 0.0
        %1316 = vmatprep.subr.mxu0 0.0
        %1317 = vmatpush1.msra.mxu0 0.0
        %1318 = vmatprep.subr.mxu0 0.0
        %1319 = vmatpush1.msra.mxu0 0.0
        %1320 = vmatprep.subr.mxu0 0.0
        %1321 = vmatpush1.msra.mxu0 0.0
        %1322 = vmatprep.subr.mxu0 0.0
        %1323 = vmatpush1.msra.mxu0 0.0
        %1324 = vmatprep.subr.mxu0 0.0
        %1325 = vmatpush1.msra.mxu0 0.0
        %1326 = vmatprep.subr.mxu0 0.0
        %1327 = vmatpush1.msra.mxu0 0.0
        %1328 = vmatprep.subr.mxu0 0.0
        %1329 = vmatpush1.msra.mxu0 0.0
        %1330 = vmatprep.subr.mxu0 0.0
        %1331 = vmatpush1.msra.mxu0 0.0
        %1332 = vmatprep.subr.mxu0 0.0
        %1333 = vmatpush1.msra.mxu0 0.0
        %1334 = vmatprep.subr.mxu0 0.0
        %1335 = vmatpush1.msra.mxu0 0.0
        %1336 = vmatprep.subr.mxu0 0.0
        %1337 = vmatpush1.msra.mxu0 0.0
        %1338 = vmatprep.subr.mxu0 0.0
        %1339 = vmatpush1.msra.mxu0 0.0
        %1340 = vmatprep.subr.mxu0 0.0
        %1341 = vmatpush1.msra.mxu0 0.0
        %1342 = vmatprep.subr.mxu0 0.0
        %1343 = vmatpush1.msra.mxu0 0.0
        %1344 = vmatprep.mubr.f32.mxu0 0.0
        %v1345 = vand.u32 %v552, 4294901760
        %1346 = vmatmul.mubr.f32.gmra.mrb[0].mxu0 %v1345
        %v1347 = vpop.f32.mrb[0].mxu0
        %v1348 = vadd.f32 %v1180, %v1347
        %v1349 = vpop.f32.mrb[0].mxu0
        %v1350 = vadd.f32 %v1182, %v1349
        %1351 = vdwg.mxu0
        %v1352 = vand.u32 %v554, 4294901760
        %1353 = vmatprep.subr.mxu0 %v1352
        %v1354 = vand.u32 %v553, 4294901760
        %1355 = vmatpush1.msra.mxu0 %v1354
        %v1356 = vand.u32 %v557, 4294901760
        %1357 = vmatprep.subr.mxu0 %v1356
        %v1358 = vand.u32 %v556, 4294901760
        %1359 = vmatpush1.msra.mxu0 %v1358
        %v1360 = vand.u32 %v560, 4294901760
        %1361 = vmatprep.subr.mxu0 %v1360
        %v1362 = vand.u32 %v559, 4294901760
        %1363 = vmatpush1.msra.mxu0 %v1362
        %v1364 = vand.u32 %v563, 4294901760
        %1365 = vmatprep.subr.mxu0 %v1364
        %v1366 = vand.u32 %v562, 4294901760
        %1367 = vmatpush1.msra.mxu0 %v1366
        %v1368 = vand.u32 %v566, 4294901760
        %1369 = vmatprep.subr.mxu0 %v1368
        %v1370 = vand.u32 %v565, 4294901760
        %1371 = vmatpush1.msra.mxu0 %v1370
        %v1372 = vand.u32 %v569, 4294901760
        %1373 = vmatprep.subr.mxu0 %v1372
        %v1374 = vand.u32 %v568, 4294901760
        %1375 = vmatpush1.msra.mxu0 %v1374
        %v1376 = vand.u32 %v572, 4294901760
        %1377 = vmatprep.subr.mxu0 %v1376
        %v1378 = vand.u32 %v571, 4294901760
        %1379 = vmatpush1.msra.mxu0 %v1378
        %v1380 = vand.u32 %v575, 4294901760
        %1381 = vmatprep.subr.mxu0 %v1380
        %v1382 = vand.u32 %v574, 4294901760
        %1383 = vmatpush1.msra.mxu0 %v1382
        %v1384 = vand.u32 %v578, 4294901760
        %1385 = vmatprep.subr.mxu0 %v1384
        %v1386 = vand.u32 %v577, 4294901760
        %1387 = vmatpush1.msra.mxu0 %v1386
        %v1388 = vand.u32 %v581, 4294901760
        %1389 = vmatprep.subr.mxu0 %v1388
        %v1390 = vand.u32 %v580, 4294901760
        %1391 = vmatpush1.msra.mxu0 %v1390
        %v1392 = vand.u32 %v584, 4294901760
        %1393 = vmatprep.subr.mxu0 %v1392
        %v1394 = vand.u32 %v583, 4294901760
        %1395 = vmatpush1.msra.mxu0 %v1394
        %v1396 = vand.u32 %v587, 4294901760
        %1397 = vmatprep.subr.mxu0 %v1396
        %v1398 = vand.u32 %v586, 4294901760
        %1399 = vmatpush1.msra.mxu0 %v1398
        %v1400 = vand.u32 %v590, 4294901760
        %1401 = vmatprep.subr.mxu0 %v1400
        %v1402 = vand.u32 %v589, 4294901760
        %1403 = vmatpush1.msra.mxu0 %v1402
        %v1404 = vand.u32 %v593, 4294901760
        %1405 = vmatprep.subr.mxu0 %v1404
        %v1406 = vand.u32 %v592, 4294901760
        %1407 = vmatpush1.msra.mxu0 %v1406
        %v1408 = vand.u32 %v596, 4294901760
        %1409 = vmatprep.subr.mxu0 %v1408
        %v1410 = vand.u32 %v595, 4294901760
        %1411 = vmatpush1.msra.mxu0 %v1410
        %v1412 = vand.u32 %v599, 4294901760
        %1413 = vmatprep.subr.mxu0 %v1412
        %v1414 = vand.u32 %v598, 4294901760
        %1415 = vmatpush1.msra.mxu0 %v1414
        %1416 = vmatprep.subr.mxu0 0.0
        %1417 = vmatpush1.msra.mxu0 0.0
        %1418 = vmatprep.subr.mxu0 0.0
        %1419 = vmatpush1.msra.mxu0 0.0
        %1420 = vmatprep.subr.mxu0 0.0
        %1421 = vmatpush1.msra.mxu0 0.0
        %1422 = vmatprep.subr.mxu0 0.0
        %1423 = vmatpush1.msra.mxu0 0.0
        %1424 = vmatprep.subr.mxu0 0.0
        %1425 = vmatpush1.msra.mxu0 0.0
        %1426 = vmatprep.subr.mxu0 0.0
        %1427 = vmatpush1.msra.mxu0 0.0
        %1428 = vmatprep.subr.mxu0 0.0
        %1429 = vmatpush1.msra.mxu0 0.0
        %1430 = vmatprep.subr.mxu0 0.0
        %1431 = vmatpush1.msra.mxu0 0.0
        %1432 = vmatprep.subr.mxu0 0.0
        %1433 = vmatpush1.msra.mxu0 0.0
        %1434 = vmatprep.subr.mxu0 0.0
        %1435 = vmatpush1.msra.mxu0 0.0
        %1436 = vmatprep.subr.mxu0 0.0
        %1437 = vmatpush1.msra.mxu0 0.0
        %1438 = vmatprep.subr.mxu0 0.0
        %1439 = vmatpush1.msra.mxu0 0.0
        %1440 = vmatprep.subr.mxu0 0.0
        %1441 = vmatpush1.msra.mxu0 0.0
        %1442 = vmatprep.subr.mxu0 0.0
        %1443 = vmatpush1.msra.mxu0 0.0
        %1444 = vmatprep.subr.mxu0 0.0
        %1445 = vmatpush1.msra.mxu0 0.0
        %1446 = vmatprep.subr.mxu0 0.0
        %1447 = vmatpush1.msra.mxu0 0.0
        %1448 = vmatprep.mubr.f32.mxu0 0.0
        %v1449 = vand.u32 %v552, 4294901760
        %1450 = vmatmul.mubr.f32.gmra.mrb[0].mxu0 %v1449
        %v1451 = vpop.f32.mrb[0].mxu0
        %v1452 = vadd.f32 %v1348, %v1451
        %v1453 = vpop.f32.mrb[0].mxu0
        %v1454 = vadd.f32 %v1350, %v1453
        %1455 = vdwg.mxu0
        %1456 = vmatprep.subr.mxu0 0.0
        %v1457 = vand.u32 %v555, 4294901760
        %1458 = vmatpush1.msra.mxu0 %v1457
        %1459 = vmatprep.subr.mxu0 0.0
        %v1460 = vand.u32 %v558, 4294901760
        %1461 = vmatpush1.msra.mxu0 %v1460
        %1462 = vmatprep.subr.mxu0 0.0
        %v1463 = vand.u32 %v561, 4294901760
        %1464 = vmatpush1.msra.mxu0 %v1463
        %1465 = vmatprep.subr.mxu0 0.0
        %v1466 = vand.u32 %v564, 4294901760
        %1467 = vmatpush1.msra.mxu0 %v1466
        %1468 = vmatprep.subr.mxu0 0.0
        %v1469 = vand.u32 %v567, 4294901760
        %1470 = vmatpush1.msra.mxu0 %v1469
        %1471 = vmatprep.subr.mxu0 0.0
        %v1472 = vand.u32 %v570, 4294901760
        %1473 = vmatpush1.msra.mxu0 %v1472
        %1474 = vmatprep.subr.mxu0 0.0
        %v1475 = vand.u32 %v573, 4294901760
        %1476 = vmatpush1.msra.mxu0 %v1475
        %1477 = vmatprep.subr.mxu0 0.0
        %v1478 = vand.u32 %v576, 4294901760
        %1479 = vmatpush1.msra.mxu0 %v1478
        %1480 = vmatprep.subr.mxu0 0.0
        %v1481 = vand.u32 %v579, 4294901760
        %1482 = vmatpush1.msra.mxu0 %v1481
        %1483 = vmatprep.subr.mxu0 0.0
        %v1484 = vand.u32 %v582, 4294901760
        %1485 = vmatpush1.msra.mxu0 %v1484
        %1486 = vmatprep.subr.mxu0 0.0
        %v1487 = vand.u32 %v585, 4294901760
        %1488 = vmatpush1.msra.mxu0 %v1487
        %1489 = vmatprep.subr.mxu0 0.0
        %v1490 = vand.u32 %v588, 4294901760
        %1491 = vmatpush1.msra.mxu0 %v1490
        %1492 = vmatprep.subr.mxu0 0.0
        %v1493 = vand.u32 %v591, 4294901760
        %1494 = vmatpush1.msra.mxu0 %v1493
        %1495 = vmatprep.subr.mxu0 0.0
        %v1496 = vand.u32 %v594, 4294901760
        %1497 = vmatpush1.msra.mxu0 %v1496
        %1498 = vmatprep.subr.mxu0 0.0
        %v1499 = vand.u32 %v597, 4294901760
        %1500 = vmatpush1.msra.mxu0 %v1499
        %1501 = vmatprep.subr.mxu0 0.0
        %v1502 = vand.u32 %v600, 4294901760
        %1503 = vmatpush1.msra.mxu0 %v1502
        %1504 = vmatprep.subr.mxu0 0.0
        %1505 = vmatpush1.msra.mxu0 0.0
        %1506 = vmatprep.subr.mxu0 0.0
        %1507 = vmatpush1.msra.mxu0 0.0
        %1508 = vmatprep.subr.mxu0 0.0
        %1509 = vmatpush1.msra.mxu0 0.0
        %1510 = vmatprep.subr.mxu0 0.0
        %1511 = vmatpush1.msra.mxu0 0.0
        %1512 = vmatprep.subr.mxu0 0.0
        %1513 = vmatpush1.msra.mxu0 0.0
        %1514 = vmatprep.subr.mxu0 0.0
        %1515 = vmatpush1.msra.mxu0 0.0
        %1516 = vmatprep.subr.mxu0 0.0
        %1517 = vmatpush1.msra.mxu0 0.0
        %1518 = vmatprep.subr.mxu0 0.0
        %1519 = vmatpush1.msra.mxu0 0.0
        %1520 = vmatprep.subr.mxu0 0.0
        %1521 = vmatpush1.msra.mxu0 0.0
        %1522 = vmatprep.subr.mxu0 0.0
        %1523 = vmatpush1.msra.mxu0 0.0
        %1524 = vmatprep.subr.mxu0 0.0
        %1525 = vmatpush1.msra.mxu0 0.0
        %1526 = vmatprep.subr.mxu0 0.0
        %1527 = vmatpush1.msra.mxu0 0.0
        %1528 = vmatprep.subr.mxu0 0.0
        %1529 = vmatpush1.msra.mxu0 0.0
        %1530 = vmatprep.subr.mxu0 0.0
        %1531 = vmatpush1.msra.mxu0 0.0
        %1532 = vmatprep.subr.mxu0 0.0
        %1533 = vmatpush1.msra.mxu0 0.0
        %1534 = vmatprep.subr.mxu0 0.0
        %1535 = vmatpush1.msra.mxu0 0.0
        %1536 = vmatprep.mubr.f32.mxu0 0.0
        %v1537 = vand.u32 %v552, 4294901760
        %v1538 = vsub.f32 %v552, %v1537
        %v1539 = vand.u32 %v1538, 4294901760
        %v1540 = vsub.f32 %v1538, %v1539
        %v1541 = vand.u32 %v1540, 4294901760
        %1542 = vmatmul.mubr.f32.gmra.mrb[0].mxu0 %v1541
        %v1543 = vpop.f32.mrb[0].mxu0
        %v1544 = vadd.f32 0.0, %v1543
        %v1545 = vpop.f32.mrb[0].mxu0
        %1546 = vdwg.mxu0
        %1547 = vmatprep.subr.mxu0 0.0
        %v1548 = vand.u32 %v555, 4294901760
        %v1549 = vsub.f32 %v555, %v1548
        %v1550 = vand.u32 %v1549, 4294901760
        %v1551 = vsub.f32 %v1549, %v1550
        %v1552 = vand.u32 %v1551, 4294901760
        %1553 = vmatpush1.msra.mxu0 %v1552
        %1554 = vmatprep.subr.mxu0 0.0
        %v1555 = vand.u32 %v558, 4294901760
        %v1556 = vsub.f32 %v558, %v1555
        %v1557 = vand.u32 %v1556, 4294901760
        %v1558 = vsub.f32 %v1556, %v1557
        %v1559 = vand.u32 %v1558, 4294901760
        %1560 = vmatpush1.msra.mxu0 %v1559
        %1561 = vmatprep.subr.mxu0 0.0
        %v1562 = vand.u32 %v561, 4294901760
        %v1563 = vsub.f32 %v561, %v1562
        %v1564 = vand.u32 %v1563, 4294901760
        %v1565 = vsub.f32 %v1563, %v1564
        %v1566 = vand.u32 %v1565, 4294901760
        %1567 = vmatpush1.msra.mxu0 %v1566
        %1568 = vmatprep.subr.mxu0 0.0
        %v1569 = vand.u32 %v564, 4294901760
        %v1570 = vsub.f32 %v564, %v1569
        %v1571 = vand.u32 %v1570, 4294901760
        %v1572 = vsub.f32 %v1570, %v1571
        %v1573 = vand.u32 %v1572, 4294901760
        %1574 = vmatpush1.msra.mxu0 %v1573
        %1575 = vmatprep.subr.mxu0 0.0
        %v1576 = vand.u32 %v567, 4294901760
        %v1577 = vsub.f32 %v567, %v1576
        %v1578 = vand.u32 %v1577, 4294901760
        %v1579 = vsub.f32 %v1577, %v1578
        %v1580 = vand.u32 %v1579, 4294901760
        %1581 = vmatpush1.msra.mxu0 %v1580
        %1582 = vmatprep.subr.mxu0 0.0
        %v1583 = vand.u32 %v570, 4294901760
        %v1584 = vsub.f32 %v570, %v1583
        %v1585 = vand.u32 %v1584, 4294901760
        %v1586 = vsub.f32 %v1584, %v1585
        %v1587 = vand.u32 %v1586, 4294901760
        %1588 = vmatpush1.msra.mxu0 %v1587
        %1589 = vmatprep.subr.mxu0 0.0
        %v1590 = vand.u32 %v573, 4294901760
        %v1591 = vsub.f32 %v573, %v1590
        %v1592 = vand.u32 %v1591, 4294901760
        %v1593 = vsub.f32 %v1591, %v1592
        %v1594 = vand.u32 %v1593, 4294901760
        %1595 = vmatpush1.msra.mxu0 %v1594
        %1596 = vmatprep.subr.mxu0 0.0
        %v1597 = vand.u32 %v576, 4294901760
        %v1598 = vsub.f32 %v576, %v1597
        %v1599 = vand.u32 %v1598, 4294901760
        %v1600 = vsub.f32 %v1598, %v1599
        %v1601 = vand.u32 %v1600, 4294901760
        %1602 = vmatpush1.msra.mxu0 %v1601
        %1603 = vmatprep.subr.mxu0 0.0
        %v1604 = vand.u32 %v579, 4294901760
        %v1605 = vsub.f32 %v579, %v1604
        %v1606 = vand.u32 %v1605, 4294901760
        %v1607 = vsub.f32 %v1605, %v1606
        %v1608 = vand.u32 %v1607, 4294901760
        %1609 = vmatpush1.msra.mxu0 %v1608
        %1610 = vmatprep.subr.mxu0 0.0
        %v1611 = vand.u32 %v582, 4294901760
        %v1612 = vsub.f32 %v582, %v1611
        %v1613 = vand.u32 %v1612, 4294901760
        %v1614 = vsub.f32 %v1612, %v1613
        %v1615 = vand.u32 %v1614, 4294901760
        %1616 = vmatpush1.msra.mxu0 %v1615
        %1617 = vmatprep.subr.mxu0 0.0
        %v1618 = vand.u32 %v585, 4294901760
        %v1619 = vsub.f32 %v585, %v1618
        %v1620 = vand.u32 %v1619, 4294901760
        %v1621 = vsub.f32 %v1619, %v1620
        %v1622 = vand.u32 %v1621, 4294901760
        %1623 = vmatpush1.msra.mxu0 %v1622
        %1624 = vmatprep.subr.mxu0 0.0
        %v1625 = vand.u32 %v588, 4294901760
        %v1626 = vsub.f32 %v588, %v1625
        %v1627 = vand.u32 %v1626, 4294901760
        %v1628 = vsub.f32 %v1626, %v1627
        %v1629 = vand.u32 %v1628, 4294901760
        %1630 = vmatpush1.msra.mxu0 %v1629
        %1631 = vmatprep.subr.mxu0 0.0
        %v1632 = vand.u32 %v591, 4294901760
        %v1633 = vsub.f32 %v591, %v1632
        %v1634 = vand.u32 %v1633, 4294901760
        %v1635 = vsub.f32 %v1633, %v1634
        %v1636 = vand.u32 %v1635, 4294901760
        %1637 = vmatpush1.msra.mxu0 %v1636
        %1638 = vmatprep.subr.mxu0 0.0
        %v1639 = vand.u32 %v594, 4294901760
        %v1640 = vsub.f32 %v594, %v1639
        %v1641 = vand.u32 %v1640, 4294901760
        %v1642 = vsub.f32 %v1640, %v1641
        %v1643 = vand.u32 %v1642, 4294901760
        %1644 = vmatpush1.msra.mxu0 %v1643
        %1645 = vmatprep.subr.mxu0 0.0
        %v1646 = vand.u32 %v597, 4294901760
        %v1647 = vsub.f32 %v597, %v1646
        %v1648 = vand.u32 %v1647, 4294901760
        %v1649 = vsub.f32 %v1647, %v1648
        %v1650 = vand.u32 %v1649, 4294901760
        %1651 = vmatpush1.msra.mxu0 %v1650
        %1652 = vmatprep.subr.mxu0 0.0
        %v1653 = vand.u32 %v600, 4294901760
        %v1654 = vsub.f32 %v600, %v1653
        %v1655 = vand.u32 %v1654, 4294901760
        %v1656 = vsub.f32 %v1654, %v1655
        %v1657 = vand.u32 %v1656, 4294901760
        %1658 = vmatpush1.msra.mxu0 %v1657
        %1659 = vmatprep.subr.mxu0 0.0
        %1660 = vmatpush1.msra.mxu0 0.0
        %1661 = vmatprep.subr.mxu0 0.0
        %1662 = vmatpush1.msra.mxu0 0.0
        %1663 = vmatprep.subr.mxu0 0.0
        %1664 = vmatpush1.msra.mxu0 0.0
        %1665 = vmatprep.subr.mxu0 0.0
        %1666 = vmatpush1.msra.mxu0 0.0
        %1667 = vmatprep.subr.mxu0 0.0
        %1668 = vmatpush1.msra.mxu0 0.0
        %1669 = vmatprep.subr.mxu0 0.0
        %1670 = vmatpush1.msra.mxu0 0.0
        %1671 = vmatprep.subr.mxu0 0.0
        %1672 = vmatpush1.msra.mxu0 0.0
        %1673 = vmatprep.subr.mxu0 0.0
        %1674 = vmatpush1.msra.mxu0 0.0
        %1675 = vmatprep.subr.mxu0 0.0
        %1676 = vmatpush1.msra.mxu0 0.0
        %1677 = vmatprep.subr.mxu0 0.0
        %1678 = vmatpush1.msra.mxu0 0.0
        %1679 = vmatprep.subr.mxu0 0.0
        %1680 = vmatpush1.msra.mxu0 0.0
        %1681 = vmatprep.subr.mxu0 0.0
        %1682 = vmatpush1.msra.mxu0 0.0
        %1683 = vmatprep.subr.mxu0 0.0
        %1684 = vmatpush1.msra.mxu0 0.0
        %1685 = vmatprep.subr.mxu0 0.0
        %1686 = vmatpush1.msra.mxu0 0.0
        %1687 = vmatprep.subr.mxu0 0.0
        %1688 = vmatpush1.msra.mxu0 0.0
        %1689 = vmatprep.subr.mxu0 0.0
        %1690 = vmatpush1.msra.mxu0 0.0
        %1691 = vmatprep.mubr.f32.mxu0 0.0
        %v1692 = vand.u32 %v552, 4294901760
        %1693 = vmatmul.mubr.f32.gmra.mrb[0].mxu0 %v1692
        %v1694 = vpop.f32.mrb[0].mxu0
        %v1695 = vadd.f32 %v1544, %v1694
        %v1696 = vpop.f32.mrb[0].mxu0
        %1697 = vdwg.mxu0
        %1698 = vmatprep.subr.mxu0 0.0
        %v1699 = vand.u32 %v555, 4294901760
        %v1700 = vsub.f32 %v555, %v1699
        %1701 = vmatpush1.msra.mxu0 %v1700
        %1702 = vmatprep.subr.mxu0 0.0
        %v1703 = vand.u32 %v558, 4294901760
        %v1704 = vsub.f32 %v558, %v1703
        %1705 = vmatpush1.msra.mxu0 %v1704
        %1706 = vmatprep.subr.mxu0 0.0
        %v1707 = vand.u32 %v561, 4294901760
        %v1708 = vsub.f32 %v561, %v1707
        %1709 = vmatpush1.msra.mxu0 %v1708
        %1710 = vmatprep.subr.mxu0 0.0
        %v1711 = vand.u32 %v564, 4294901760
        %v1712 = vsub.f32 %v564, %v1711
        %1713 = vmatpush1.msra.mxu0 %v1712
        %1714 = vmatprep.subr.mxu0 0.0
        %v1715 = vand.u32 %v567, 4294901760
        %v1716 = vsub.f32 %v567, %v1715
        %1717 = vmatpush1.msra.mxu0 %v1716
        %1718 = vmatprep.subr.mxu0 0.0
        %v1719 = vand.u32 %v570, 4294901760
        %v1720 = vsub.f32 %v570, %v1719
        %1721 = vmatpush1.msra.mxu0 %v1720
        %1722 = vmatprep.subr.mxu0 0.0
        %v1723 = vand.u32 %v573, 4294901760
        %v1724 = vsub.f32 %v573, %v1723
        %1725 = vmatpush1.msra.mxu0 %v1724
        %1726 = vmatprep.subr.mxu0 0.0
        %v1727 = vand.u32 %v576, 4294901760
        %v1728 = vsub.f32 %v576, %v1727
        %1729 = vmatpush1.msra.mxu0 %v1728
        %1730 = vmatprep.subr.mxu0 0.0
        %v1731 = vand.u32 %v579, 4294901760
        %v1732 = vsub.f32 %v579, %v1731
        %1733 = vmatpush1.msra.mxu0 %v1732
        %1734 = vmatprep.subr.mxu0 0.0
        %v1735 = vand.u32 %v582, 4294901760
        %v1736 = vsub.f32 %v582, %v1735
        %1737 = vmatpush1.msra.mxu0 %v1736
        %1738 = vmatprep.subr.mxu0 0.0
        %v1739 = vand.u32 %v585, 4294901760
        %v1740 = vsub.f32 %v585, %v1739
        %1741 = vmatpush1.msra.mxu0 %v1740
        %1742 = vmatprep.subr.mxu0 0.0
        %v1743 = vand.u32 %v588, 4294901760
        %v1744 = vsub.f32 %v588, %v1743
        %1745 = vmatpush1.msra.mxu0 %v1744
        %1746 = vmatprep.subr.mxu0 0.0
        %v1747 = vand.u32 %v591, 4294901760
        %v1748 = vsub.f32 %v591, %v1747
        %1749 = vmatpush1.msra.mxu0 %v1748
        %1750 = vmatprep.subr.mxu0 0.0
        %v1751 = vand.u32 %v594, 4294901760
        %v1752 = vsub.f32 %v594, %v1751
        %1753 = vmatpush1.msra.mxu0 %v1752
        %1754 = vmatprep.subr.mxu0 0.0
        %v1755 = vand.u32 %v597, 4294901760
        %v1756 = vsub.f32 %v597, %v1755
        %1757 = vmatpush1.msra.mxu0 %v1756
        %1758 = vmatprep.subr.mxu0 0.0
        %v1759 = vand.u32 %v600, 4294901760
        %v1760 = vsub.f32 %v600, %v1759
        %1761 = vmatpush1.msra.mxu0 %v1760
        %1762 = vmatprep.subr.mxu0 0.0
        %1763 = vmatpush1.msra.mxu0 0.0
        %1764 = vmatprep.subr.mxu0 0.0
        %1765 = vmatpush1.msra.mxu0 0.0
        %1766 = vmatprep.subr.mxu0 0.0
        %1767 = vmatpush1.msra.mxu0 0.0
        %1768 = vmatprep.subr.mxu0 0.0
        %1769 = vmatpush1.msra.mxu0 0.0
        %1770 = vmatprep.subr.mxu0 0.0
        %1771 = vmatpush1.msra.mxu0 0.0
        %1772 = vmatprep.subr.mxu0 0.0
        %1773 = vmatpush1.msra.mxu0 0.0
        %1774 = vmatprep.subr.mxu0 0.0
        %1775 = vmatpush1.msra.mxu0 0.0
        %1776 = vmatprep.subr.mxu0 0.0
        %1777 = vmatpush1.msra.mxu0 0.0
        %1778 = vmatprep.subr.mxu0 0.0
        %1779 = vmatpush1.msra.mxu0 0.0
        %1780 = vmatprep.subr.mxu0 0.0
        %1781 = vmatpush1.msra.mxu0 0.0
        %1782 = vmatprep.subr.mxu0 0.0
        %1783 = vmatpush1.msra.mxu0 0.0
        %1784 = vmatprep.subr.mxu0 0.0
        %1785 = vmatpush1.msra.mxu0 0.0
        %1786 = vmatprep.subr.mxu0 0.0
        %1787 = vmatpush1.msra.mxu0 0.0
        %1788 = vmatprep.subr.mxu0 0.0
        %1789 = vmatpush1.msra.mxu0 0.0
        %1790 = vmatprep.subr.mxu0 0.0
        %1791 = vmatpush1.msra.mxu0 0.0
        %1792 = vmatprep.subr.mxu0 0.0
        %1793 = vmatpush1.msra.mxu0 0.0
        %1794 = vmatprep.mubr.f32.mxu0 0.0
        %v1795 = vand.u32 %v552, 4294901760
        %v1796 = vsub.f32 %v552, %v1795
        %1797 = vmatmul.mubr.f32.gmra.mrb[0].mxu0 %v1796
        %v1798 = vpop.f32.mrb[0].mxu0
        %v1799 = vadd.f32 %v1695, %v1798
        %v1800 = vpop.f32.mrb[0].mxu0
        %1801 = vdwg.mxu0
        %1802 = vmatprep.subr.mxu0 0.0
        %v1803 = vand.u32 %v555, 4294901760
        %1804 = vmatpush1.msra.mxu0 %v1803
        %1805 = vmatprep.subr.mxu0 0.0
        %v1806 = vand.u32 %v558, 4294901760
        %1807 = vmatpush1.msra.mxu0 %v1806
        %1808 = vmatprep.subr.mxu0 0.0
        %v1809 = vand.u32 %v561, 4294901760
        %1810 = vmatpush1.msra.mxu0 %v1809
        %1811 = vmatprep.subr.mxu0 0.0
        %v1812 = vand.u32 %v564, 4294901760
        %1813 = vmatpush1.msra.mxu0 %v1812
        %1814 = vmatprep.subr.mxu0 0.0
        %v1815 = vand.u32 %v567, 4294901760
        %1816 = vmatpush1.msra.mxu0 %v1815
        %1817 = vmatprep.subr.mxu0 0.0
        %v1818 = vand.u32 %v570, 4294901760
        %1819 = vmatpush1.msra.mxu0 %v1818
        %1820 = vmatprep.subr.mxu0 0.0
        %v1821 = vand.u32 %v573, 4294901760
        %1822 = vmatpush1.msra.mxu0 %v1821
        %1823 = vmatprep.subr.mxu0 0.0
        %v1824 = vand.u32 %v576, 4294901760
        %1825 = vmatpush1.msra.mxu0 %v1824
        %1826 = vmatprep.subr.mxu0 0.0
        %v1827 = vand.u32 %v579, 4294901760
        %1828 = vmatpush1.msra.mxu0 %v1827
        %1829 = vmatprep.subr.mxu0 0.0
        %v1830 = vand.u32 %v582, 4294901760
        %1831 = vmatpush1.msra.mxu0 %v1830
        %1832 = vmatprep.subr.mxu0 0.0
        %v1833 = vand.u32 %v585, 4294901760
        %1834 = vmatpush1.msra.mxu0 %v1833
        %1835 = vmatprep.subr.mxu0 0.0
        %v1836 = vand.u32 %v588, 4294901760
        %1837 = vmatpush1.msra.mxu0 %v1836
        %1838 = vmatprep.subr.mxu0 0.0
        %v1839 = vand.u32 %v591, 4294901760
        %1840 = vmatpush1.msra.mxu0 %v1839
        %1841 = vmatprep.subr.mxu0 0.0
        %v1842 = vand.u32 %v594, 4294901760
        %1843 = vmatpush1.msra.mxu0 %v1842
        %1844 = vmatprep.subr.mxu0 0.0
        %v1845 = vand.u32 %v597, 4294901760
        %1846 = vmatpush1.msra.mxu0 %v1845
        %1847 = vmatprep.subr.mxu0 0.0
        %v1848 = vand.u32 %v600, 4294901760
        %1849 = vmatpush1.msra.mxu0 %v1848
        %1850 = vmatprep.subr.mxu0 0.0
        %1851 = vmatpush1.msra.mxu0 0.0
        %1852 = vmatprep.subr.mxu0 0.0
        %1853 = vmatpush1.msra.mxu0 0.0
        %1854 = vmatprep.subr.mxu0 0.0
        %1855 = vmatpush1.msra.mxu0 0.0
        %1856 = vmatprep.subr.mxu0 0.0
        %1857 = vmatpush1.msra.mxu0 0.0
        %1858 = vmatprep.subr.mxu0 0.0
        %1859 = vmatpush1.msra.mxu0 0.0
        %1860 = vmatprep.subr.mxu0 0.0
        %1861 = vmatpush1.msra.mxu0 0.0
        %1862 = vmatprep.subr.mxu0 0.0
        %1863 = vmatpush1.msra.mxu0 0.0
        %1864 = vmatprep.subr.mxu0 0.0
        %1865 = vmatpush1.msra.mxu0 0.0
        %1866 = vmatprep.subr.mxu0 0.0
        %1867 = vmatpush1.msra.mxu0 0.0
        %1868 = vmatprep.subr.mxu0 0.0
        %1869 = vmatpush1.msra.mxu0 0.0
        %1870 = vmatprep.subr.mxu0 0.0
        %1871 = vmatpush1.msra.mxu0 0.0
        %1872 = vmatprep.subr.mxu0 0.0
        %1873 = vmatpush1.msra.mxu0 0.0
        %1874 = vmatprep.subr.mxu0 0.0
        %1875 = vmatpush1.msra.mxu0 0.0
        %1876 = vmatprep.subr.mxu0 0.0
        %1877 = vmatpush1.msra.mxu0 0.0
        %1878 = vmatprep.subr.mxu0 0.0
        %1879 = vmatpush1.msra.mxu0 0.0
        %1880 = vmatprep.subr.mxu0 0.0
        %1881 = vmatpush1.msra.mxu0 0.0
        %1882 = vmatprep.mubr.f32.mxu0 0.0
        %v1883 = vand.u32 %v552, 4294901760
        %v1884 = vsub.f32 %v552, %v1883
        %v1885 = vand.u32 %v1884, 4294901760
        %1886 = vmatmul.mubr.f32.gmra.mrb[0].mxu0 %v1885
        %v1887 = vpop.f32.mrb[0].mxu0
        %v1888 = vadd.f32 %v1799, %v1887
        %v1889 = vpop.f32.mrb[0].mxu0
        %1890 = vdwg.mxu0
        %1891 = vmatprep.subr.mxu0 0.0
        %v1892 = vand.u32 %v555, 4294901760
        %v1893 = vsub.f32 %v555, %v1892
        %v1894 = vand.u32 %v1893, 4294901760
        %1895 = vmatpush1.msra.mxu0 %v1894
        %1896 = vmatprep.subr.mxu0 0.0
        %v1897 = vand.u32 %v558, 4294901760
        %v1898 = vsub.f32 %v558, %v1897
        %v1899 = vand.u32 %v1898, 4294901760
        %1900 = vmatpush1.msra.mxu0 %v1899
        %1901 = vmatprep.subr.mxu0 0.0
        %v1902 = vand.u32 %v561, 4294901760
        %v1903 = vsub.f32 %v561, %v1902
        %v1904 = vand.u32 %v1903, 4294901760
        %1905 = vmatpush1.msra.mxu0 %v1904
        %1906 = vmatprep.subr.mxu0 0.0
        %v1907 = vand.u32 %v564, 4294901760
        %v1908 = vsub.f32 %v564, %v1907
        %v1909 = vand.u32 %v1908, 4294901760
        %1910 = vmatpush1.msra.mxu0 %v1909
        %1911 = vmatprep.subr.mxu0 0.0
        %v1912 = vand.u32 %v567, 4294901760
        %v1913 = vsub.f32 %v567, %v1912
        %v1914 = vand.u32 %v1913, 4294901760
        %1915 = vmatpush1.msra.mxu0 %v1914
        %1916 = vmatprep.subr.mxu0 0.0
        %v1917 = vand.u32 %v570, 4294901760
        %v1918 = vsub.f32 %v570, %v1917
        %v1919 = vand.u32 %v1918, 4294901760
        %1920 = vmatpush1.msra.mxu0 %v1919
        %1921 = vmatprep.subr.mxu0 0.0
        %v1922 = vand.u32 %v573, 4294901760
        %v1923 = vsub.f32 %v573, %v1922
        %v1924 = vand.u32 %v1923, 4294901760
        %1925 = vmatpush1.msra.mxu0 %v1924
        %1926 = vmatprep.subr.mxu0 0.0
        %v1927 = vand.u32 %v576, 4294901760
        %v1928 = vsub.f32 %v576, %v1927
        %v1929 = vand.u32 %v1928, 4294901760
        %1930 = vmatpush1.msra.mxu0 %v1929
        %1931 = vmatprep.subr.mxu0 0.0
        %v1932 = vand.u32 %v579, 4294901760
        %v1933 = vsub.f32 %v579, %v1932
        %v1934 = vand.u32 %v1933, 4294901760
        %1935 = vmatpush1.msra.mxu0 %v1934
        %1936 = vmatprep.subr.mxu0 0.0
        %v1937 = vand.u32 %v582, 4294901760
        %v1938 = vsub.f32 %v582, %v1937
        %v1939 = vand.u32 %v1938, 4294901760
        %1940 = vmatpush1.msra.mxu0 %v1939
        %1941 = vmatprep.subr.mxu0 0.0
        %v1942 = vand.u32 %v585, 4294901760
        %v1943 = vsub.f32 %v585, %v1942
        %v1944 = vand.u32 %v1943, 4294901760
        %1945 = vmatpush1.msra.mxu0 %v1944
        %1946 = vmatprep.subr.mxu0 0.0
        %v1947 = vand.u32 %v588, 4294901760
        %v1948 = vsub.f32 %v588, %v1947
        %v1949 = vand.u32 %v1948, 4294901760
        %1950 = vmatpush1.msra.mxu0 %v1949
        %1951 = vmatprep.subr.mxu0 0.0
        %v1952 = vand.u32 %v591, 4294901760
        %v1953 = vsub.f32 %v591, %v1952
        %v1954 = vand.u32 %v1953, 4294901760
        %1955 = vmatpush1.msra.mxu0 %v1954
        %1956 = vmatprep.subr.mxu0 0.0
        %v1957 = vand.u32 %v594, 4294901760
        %v1958 = vsub.f32 %v594, %v1957
        %v1959 = vand.u32 %v1958, 4294901760
        %1960 = vmatpush1.msra.mxu0 %v1959
        %1961 = vmatprep.subr.mxu0 0.0
        %v1962 = vand.u32 %v597, 4294901760
        %v1963 = vsub.f32 %v597, %v1962
        %v1964 = vand.u32 %v1963, 4294901760
        %1965 = vmatpush1.msra.mxu0 %v1964
        %1966 = vmatprep.subr.mxu0 0.0
        %v1967 = vand.u32 %v600, 4294901760
        %v1968 = vsub.f32 %v600, %v1967
        %v1969 = vand.u32 %v1968, 4294901760
        %1970 = vmatpush1.msra.mxu0 %v1969
        %1971 = vmatprep.subr.mxu0 0.0
        %1972 = vmatpush1.msra.mxu0 0.0
        %1973 = vmatprep.subr.mxu0 0.0
        %1974 = vmatpush1.msra.mxu0 0.0
        %1975 = vmatprep.subr.mxu0 0.0
        %1976 = vmatpush1.msra.mxu0 0.0
        %1977 = vmatprep.subr.mxu0 0.0
        %1978 = vmatpush1.msra.mxu0 0.0
        %1979 = vmatprep.subr.mxu0 0.0
        %1980 = vmatpush1.msra.mxu0 0.0
        %1981 = vmatprep.subr.mxu0 0.0
        %1982 = vmatpush1.msra.mxu0 0.0
        %1983 = vmatprep.subr.mxu0 0.0
        %1984 = vmatpush1.msra.mxu0 0.0
        %1985 = vmatprep.subr.mxu0 0.0
        %1986 = vmatpush1.msra.mxu0 0.0
        %1987 = vmatprep.subr.mxu0 0.0
        %1988 = vmatpush1.msra.mxu0 0.0
        %1989 = vmatprep.subr.mxu0 0.0
        %1990 = vmatpush1.msra.mxu0 0.0
        %1991 = vmatprep.subr.mxu0 0.0
        %1992 = vmatpush1.msra.mxu0 0.0
        %1993 = vmatprep.subr.mxu0 0.0
        %1994 = vmatpush1.msra.mxu0 0.0
        %1995 = vmatprep.subr.mxu0 0.0
        %1996 = vmatpush1.msra.mxu0 0.0
        %1997 = vmatprep.subr.mxu0 0.0
        %1998 = vmatpush1.msra.mxu0 0.0
        %1999 = vmatprep.subr.mxu0 0.0
        %2000 = vmatpush1.msra.mxu0 0.0
        %2001 = vmatprep.subr.mxu0 0.0
        %2002 = vmatpush1.msra.mxu0 0.0
        %2003 = vmatprep.mubr.f32.mxu0 0.0
        %v2004 = vand.u32 %v552, 4294901760
        %2005 = vmatmul.mubr.f32.gmra.mrb[0].mxu0 %v2004
        %v2006 = vpop.f32.mrb[0].mxu0
        %v2007 = vadd.f32 %v1888, %v2006
        %v2008 = vpop.f32.mrb[0].mxu0
        %2009 = vdwg.mxu0
        %2010 = vmatprep.subr.mxu0 0.0
        %v2011 = vand.u32 %v555, 4294901760
        %2012 = vmatpush1.msra.mxu0 %v2011
        %2013 = vmatprep.subr.mxu0 0.0
        %v2014 = vand.u32 %v558, 4294901760
        %2015 = vmatpush1.msra.mxu0 %v2014
        %2016 = vmatprep.subr.mxu0 0.0
        %v2017 = vand.u32 %v561, 4294901760
        %2018 = vmatpush1.msra.mxu0 %v2017
        %2019 = vmatprep.subr.mxu0 0.0
        %v2020 = vand.u32 %v564, 4294901760
        %2021 = vmatpush1.msra.mxu0 %v2020
        %2022 = vmatprep.subr.mxu0 0.0
        %v2023 = vand.u32 %v567, 4294901760
        %2024 = vmatpush1.msra.mxu0 %v2023
        %2025 = vmatprep.subr.mxu0 0.0
        %v2026 = vand.u32 %v570, 4294901760
        %2027 = vmatpush1.msra.mxu0 %v2026
        %2028 = vmatprep.subr.mxu0 0.0
        %v2029 = vand.u32 %v573, 4294901760
        %2030 = vmatpush1.msra.mxu0 %v2029
        %2031 = vmatprep.subr.mxu0 0.0
        %v2032 = vand.u32 %v576, 4294901760
        %2033 = vmatpush1.msra.mxu0 %v2032
        %2034 = vmatprep.subr.mxu0 0.0
        %v2035 = vand.u32 %v579, 4294901760
        %2036 = vmatpush1.msra.mxu0 %v2035
        %2037 = vmatprep.subr.mxu0 0.0
        %v2038 = vand.u32 %v582, 4294901760
        %2039 = vmatpush1.msra.mxu0 %v2038
        %2040 = vmatprep.subr.mxu0 0.0
        %v2041 = vand.u32 %v585, 4294901760
        %2042 = vmatpush1.msra.mxu0 %v2041
        %2043 = vmatprep.subr.mxu0 0.0
        %v2044 = vand.u32 %v588, 4294901760
        %2045 = vmatpush1.msra.mxu0 %v2044
        %2046 = vmatprep.subr.mxu0 0.0
        %v2047 = vand.u32 %v591, 4294901760
        %2048 = vmatpush1.msra.mxu0 %v2047
        %2049 = vmatprep.subr.mxu0 0.0
        %v2050 = vand.u32 %v594, 4294901760
        %2051 = vmatpush1.msra.mxu0 %v2050
        %2052 = vmatprep.subr.mxu0 0.0
        %v2053 = vand.u32 %v597, 4294901760
        %2054 = vmatpush1.msra.mxu0 %v2053
        %2055 = vmatprep.subr.mxu0 0.0
        %v2056 = vand.u32 %v600, 4294901760
        %2057 = vmatpush1.msra.mxu0 %v2056
        %2058 = vmatprep.subr.mxu0 0.0
        %2059 = vmatpush1.msra.mxu0 0.0
        %2060 = vmatprep.subr.mxu0 0.0
        %2061 = vmatpush1.msra.mxu0 0.0
        %2062 = vmatprep.subr.mxu0 0.0
        %2063 = vmatpush1.msra.mxu0 0.0
        %2064 = vmatprep.subr.mxu0 0.0
        %2065 = vmatpush1.msra.mxu0 0.0
        %2066 = vmatprep.subr.mxu0 0.0
        %2067 = vmatpush1.msra.mxu0 0.0
        %2068 = vmatprep.subr.mxu0 0.0
        %2069 = vmatpush1.msra.mxu0 0.0
        %2070 = vmatprep.subr.mxu0 0.0
        %2071 = vmatpush1.msra.mxu0 0.0
        %2072 = vmatprep.subr.mxu0 0.0
        %2073 = vmatpush1.msra.mxu0 0.0
        %2074 = vmatprep.subr.mxu0 0.0
        %2075 = vmatpush1.msra.mxu0 0.0
        %2076 = vmatprep.subr.mxu0 0.0
        %2077 = vmatpush1.msra.mxu0 0.0
        %2078 = vmatprep.subr.mxu0 0.0
        %2079 = vmatpush1.msra.mxu0 0.0
        %2080 = vmatprep.subr.mxu0 0.0
        %2081 = vmatpush1.msra.mxu0 0.0
        %2082 = vmatprep.subr.mxu0 0.0
        %2083 = vmatpush1.msra.mxu0 0.0
        %2084 = vmatprep.subr.mxu0 0.0
        %2085 = vmatpush1.msra.mxu0 0.0
        %2086 = vmatprep.subr.mxu0 0.0
        %2087 = vmatpush1.msra.mxu0 0.0
        %2088 = vmatprep.subr.mxu0 0.0
        %2089 = vmatpush1.msra.mxu0 0.0
        %2090 = vmatprep.mubr.f32.mxu0 0.0
        %v2091 = vand.u32 %v552, 4294901760
        %2092 = vmatmul.mubr.f32.gmra.mrb[0].mxu0 %v2091
        %v2093 = vpop.f32.mrb[0].mxu0
        %v2094 = vadd.f32 %v2007, %v2093
        %v2095 = vpop.f32.mrb[0].mxu0
        %2096 = vdwg.mxu0
        %v2097 = vld [vmem:[%s488] sm:$0xff]
        %v2098 = vld [vmem:[%s488 + $0x8] sm:$0xff]
        %v2099 = vld [vmem:[%s488 + $0x10] sm:$0xff]
        %v2100 = vld [vmem:[%s488 + $0x18] sm:$0xff]
        %v2101 = vld [vmem:[%s488 + $0x20] sm:$0xff]
        %v2102 = vld [vmem:[%s488 + $0x28] sm:$0xff]
        %v2103 = vld [vmem:[%s488 + $0x30] sm:$0xff]
        %v2104 = vld [vmem:[%s488 + $0x38] sm:$0xff]
        %v2105 = vld [vmem:[%s488 + $0x40] sm:$0xff]
        %v2106 = vld [vmem:[%s488 + $0x48] sm:$0xff]
        %v2107 = vld [vmem:[%s488 + $0x50] sm:$0xff]
        %v2108 = vld [vmem:[%s488 + $0x58] sm:$0xff]
        %v2109 = vld [vmem:[%s488 + $0x60] sm:$0xff]
        %v2110 = vld [vmem:[%s488 + $0x68] sm:$0xff]
        %v2111 = vld [vmem:[%s488 + $0x70] sm:$0xff]
        %v2112 = vld [vmem:[%s488 + $0x78] sm:$0xff]
        %v2113 = vlaneseq
        %v2114 = vshrl.u32 %v2113, 7
        %v2115 = vlaneseq
        %v2116 = vand.u32 %v2115, 127
        %vm2117 = vcmp.le.s32.totalorder %v2116, %v2114
        %v2118 = vsel %vm2117, 0.0, -1e+30
        %2119 = vmatprep.subr.mxu0 0.0
        %v2120 = vand.u32 %v1454, 4294901760
        %2121 = vmatpush1.xpose.msra.mxu0 %v2120
        %2122 = vmatprep.subr.mxu0 0.0
        %2123 = vmatpush1.xpose.msra.mxu0 0.0
        %2124 = vmatprep.subr.mxu0 0.0
        %2125 = vmatpush1.xpose.msra.mxu0 0.0
        %2126 = vmatprep.subr.mxu0 0.0
        %2127 = vmatpush1.xpose.msra.mxu0 0.0
        %2128 = vmatprep.subr.mxu0 0.0
        %2129 = vmatpush1.xpose.msra.mxu0 0.0
        %2130 = vmatprep.subr.mxu0 0.0
        %2131 = vmatpush1.xpose.msra.mxu0 0.0
        %2132 = vmatprep.subr.mxu0 0.0
        %2133 = vmatpush1.xpose.msra.mxu0 0.0
        %2134 = vmatprep.subr.mxu0 0.0
        %2135 = vmatpush1.xpose.msra.mxu0 0.0
        %2136 = vmatprep.subr.mxu0 0.0
        %2137 = vmatpush1.xpose.msra.mxu0 0.0
        %2138 = vmatprep.subr.mxu0 0.0
        %2139 = vmatpush1.xpose.msra.mxu0 0.0
        %2140 = vmatprep.subr.mxu0 0.0
        %2141 = vmatpush1.xpose.msra.mxu0 0.0
        %2142 = vmatprep.subr.mxu0 0.0
        %2143 = vmatpush1.xpose.msra.mxu0 0.0
        %2144 = vmatprep.subr.mxu0 0.0
        %2145 = vmatpush1.xpose.msra.mxu0 0.0
        %2146 = vmatprep.subr.mxu0 0.0
        %2147 = vmatpush1.xpose.msra.mxu0 0.0
        %2148 = vmatprep.subr.mxu0 0.0
        %2149 = vmatpush1.xpose.msra.mxu0 0.0
        %2150 = vmatprep.subr.mxu0 0.0
        %2151 = vmatpush1.xpose.msra.mxu0 0.0
        %2152 = vmatprep.subr.mxu0 0.0
        %2153 = vmatpush1.xpose.msra.mxu0 0.0
        %2154 = vmatprep.subr.mxu0 0.0
        %2155 = vmatpush1.xpose.msra.mxu0 0.0
        %2156 = vmatprep.subr.mxu0 0.0
        %2157 = vmatpush1.xpose.msra.mxu0 0.0
        %2158 = vmatprep.subr.mxu0 0.0
        %2159 = vmatpush1.xpose.msra.mxu0 0.0
        %2160 = vmatprep.subr.mxu0 0.0
        %2161 = vmatpush1.xpose.msra.mxu0 0.0
        %2162 = vmatprep.subr.mxu0 0.0
        %2163 = vmatpush1.xpose.msra.mxu0 0.0
        %2164 = vmatprep.subr.mxu0 0.0
        %2165 = vmatpush1.xpose.msra.mxu0 0.0
        %2166 = vmatprep.subr.mxu0 0.0
        %2167 = vmatpush1.xpose.msra.mxu0 0.0
        %2168 = vmatprep.subr.mxu0 0.0
        %2169 = vmatpush1.xpose.msra.mxu0 0.0
        %2170 = vmatprep.subr.mxu0 0.0
        %2171 = vmatpush1.xpose.msra.mxu0 0.0
        %2172 = vmatprep.subr.mxu0 0.0
        %2173 = vmatpush1.xpose.msra.mxu0 0.0
        %2174 = vmatprep.subr.mxu0 0.0
        %2175 = vmatpush1.xpose.msra.mxu0 0.0
        %2176 = vmatprep.subr.mxu0 0.0
        %2177 = vmatpush1.xpose.msra.mxu0 0.0
        %2178 = vmatprep.subr.mxu0 0.0
        %2179 = vmatpush1.xpose.msra.mxu0 0.0
        %2180 = vmatprep.subr.mxu0 0.0
        %2181 = vmatpush1.xpose.msra.mxu0 0.0
        %2182 = vmatprep.subr.mxu0 0.0
        %2183 = vmatpush1.xpose.msra.mxu0 0.0
        %2184 = vmatprep.mubr.f32.mxu0 0.0
        %v2185 = vand.u32 %v1452, 4294901760
        %v2186 = vsub.f32 %v1452, %v2185
        %v2187 = vand.u32 %v2186, 4294901760
        %v2188 = vsub.f32 %v2186, %v2187
        %v2189 = vand.u32 %v2188, 4294901760
        %2190 = vmatmul.mubr.f32.gmra.mrb[0].mxu0 %v2189
        %v2191 = vpop.f32.mrb[0].mxu0
        %v2192 = vadd.f32 %v2118, %v2191
        %v2193 = vpop.f32.mrb[0].mxu0
        %2194 = vdwg.mxu0
        %2195 = vmatprep.subr.mxu0 0.0
        %v2196 = vand.u32 %v1454, 4294901760
        %v2197 = vsub.f32 %v1454, %v2196
        %v2198 = vand.u32 %v2197, 4294901760
        %v2199 = vsub.f32 %v2197, %v2198
        %v2200 = vand.u32 %v2199, 4294901760
        %2201 = vmatpush1.xpose.msra.mxu0 %v2200
        %2202 = vmatprep.subr.mxu0 0.0
        %2203 = vmatpush1.xpose.msra.mxu0 0.0
        %2204 = vmatprep.subr.mxu0 0.0
        %2205 = vmatpush1.xpose.msra.mxu0 0.0
        %2206 = vmatprep.subr.mxu0 0.0
        %2207 = vmatpush1.xpose.msra.mxu0 0.0
        %2208 = vmatprep.subr.mxu0 0.0
        %2209 = vmatpush1.xpose.msra.mxu0 0.0
        %2210 = vmatprep.subr.mxu0 0.0
        %2211 = vmatpush1.xpose.msra.mxu0 0.0
        %2212 = vmatprep.subr.mxu0 0.0
        %2213 = vmatpush1.xpose.msra.mxu0 0.0
        %2214 = vmatprep.subr.mxu0 0.0
        %2215 = vmatpush1.xpose.msra.mxu0 0.0
        %2216 = vmatprep.subr.mxu0 0.0
        %2217 = vmatpush1.xpose.msra.mxu0 0.0
        %2218 = vmatprep.subr.mxu0 0.0
        %2219 = vmatpush1.xpose.msra.mxu0 0.0
        %2220 = vmatprep.subr.mxu0 0.0
        %2221 = vmatpush1.xpose.msra.mxu0 0.0
        %2222 = vmatprep.subr.mxu0 0.0
        %2223 = vmatpush1.xpose.msra.mxu0 0.0
        %2224 = vmatprep.subr.mxu0 0.0
        %2225 = vmatpush1.xpose.msra.mxu0 0.0
        %2226 = vmatprep.subr.mxu0 0.0
        %2227 = vmatpush1.xpose.msra.mxu0 0.0
        %2228 = vmatprep.subr.mxu0 0.0
        %2229 = vmatpush1.xpose.msra.mxu0 0.0
        %2230 = vmatprep.subr.mxu0 0.0
        %2231 = vmatpush1.xpose.msra.mxu0 0.0
        %2232 = vmatprep.subr.mxu0 0.0
        %2233 = vmatpush1.xpose.msra.mxu0 0.0
        %2234 = vmatprep.subr.mxu0 0.0
        %2235 = vmatpush1.xpose.msra.mxu0 0.0
        %2236 = vmatprep.subr.mxu0 0.0
        %2237 = vmatpush1.xpose.msra.mxu0 0.0
        %2238 = vmatprep.subr.mxu0 0.0
        %2239 = vmatpush1.xpose.msra.mxu0 0.0
        %2240 = vmatprep.subr.mxu0 0.0
        %2241 = vmatpush1.xpose.msra.mxu0 0.0
        %2242 = vmatprep.subr.mxu0 0.0
        %2243 = vmatpush1.xpose.msra.mxu0 0.0
        %2244 = vmatprep.subr.mxu0 0.0
        %2245 = vmatpush1.xpose.msra.mxu0 0.0
        %2246 = vmatprep.subr.mxu0 0.0
        %2247 = vmatpush1.xpose.msra.mxu0 0.0
        %2248 = vmatprep.subr.mxu0 0.0
        %2249 = vmatpush1.xpose.msra.mxu0 0.0
        %2250 = vmatprep.subr.mxu0 0.0
        %2251 = vmatpush1.xpose.msra.mxu0 0.0
        %2252 = vmatprep.subr.mxu0 0.0
        %2253 = vmatpush1.xpose.msra.mxu0 0.0
        %2254 = vmatprep.subr.mxu0 0.0
        %2255 = vmatpush1.xpose.msra.mxu0 0.0
        %2256 = vmatprep.subr.mxu0 0.0
        %2257 = vmatpush1.xpose.msra.mxu0 0.0
        %2258 = vmatprep.subr.mxu0 0.0
        %2259 = vmatpush1.xpose.msra.mxu0 0.0
        %2260 = vmatprep.subr.mxu0 0.0
        %2261 = vmatpush1.xpose.msra.mxu0 0.0
        %2262 = vmatprep.subr.mxu0 0.0
        %2263 = vmatpush1.xpose.msra.mxu0 0.0
        %2264 = vmatprep.mubr.f32.mxu0 0.0
        %v2265 = vand.u32 %v1452, 4294901760
        %2266 = vmatmul.mubr.f32.gmra.mrb[0].mxu0 %v2265
        %v2267 = vpop.f32.mrb[0].mxu0
        %v2268 = vadd.f32 %v2192, %v2267
        %v2269 = vpop.f32.mrb[0].mxu0
        %2270 = vdwg.mxu0
        %2271 = vmatprep.subr.mxu0 0.0
        %v2272 = vand.u32 %v1454, 4294901760
        %v2273 = vsub.f32 %v1454, %v2272
        %2274 = vmatpush1.xpose.msra.mxu0 %v2273
        %2275 = vmatprep.subr.mxu0 0.0
        %2276 = vmatpush1.xpose.msra.mxu0 0.0
        %2277 = vmatprep.subr.mxu0 0.0
        %2278 = vmatpush1.xpose.msra.mxu0 0.0
        %2279 = vmatprep.subr.mxu0 0.0
        %2280 = vmatpush1.xpose.msra.mxu0 0.0
        %2281 = vmatprep.subr.mxu0 0.0
        %2282 = vmatpush1.xpose.msra.mxu0 0.0
        %2283 = vmatprep.subr.mxu0 0.0
        %2284 = vmatpush1.xpose.msra.mxu0 0.0
        %2285 = vmatprep.subr.mxu0 0.0
        %2286 = vmatpush1.xpose.msra.mxu0 0.0
        %2287 = vmatprep.subr.mxu0 0.0
        %2288 = vmatpush1.xpose.msra.mxu0 0.0
        %2289 = vmatprep.subr.mxu0 0.0
        %2290 = vmatpush1.xpose.msra.mxu0 0.0
        %2291 = vmatprep.subr.mxu0 0.0
        %2292 = vmatpush1.xpose.msra.mxu0 0.0
        %2293 = vmatprep.subr.mxu0 0.0
        %2294 = vmatpush1.xpose.msra.mxu0 0.0
        %2295 = vmatprep.subr.mxu0 0.0
        %2296 = vmatpush1.xpose.msra.mxu0 0.0
        %2297 = vmatprep.subr.mxu0 0.0
        %2298 = vmatpush1.xpose.msra.mxu0 0.0
        %2299 = vmatprep.subr.mxu0 0.0
        %2300 = vmatpush1.xpose.msra.mxu0 0.0
        %2301 = vmatprep.subr.mxu0 0.0
        %2302 = vmatpush1.xpose.msra.mxu0 0.0
        %2303 = vmatprep.subr.mxu0 0.0
        %2304 = vmatpush1.xpose.msra.mxu0 0.0
        %2305 = vmatprep.subr.mxu0 0.0
        %2306 = vmatpush1.xpose.msra.mxu0 0.0
        %2307 = vmatprep.subr.mxu0 0.0
        %2308 = vmatpush1.xpose.msra.mxu0 0.0
        %2309 = vmatprep.subr.mxu0 0.0
        %2310 = vmatpush1.xpose.msra.mxu0 0.0
        %2311 = vmatprep.subr.mxu0 0.0
        %2312 = vmatpush1.xpose.msra.mxu0 0.0
        %2313 = vmatprep.subr.mxu0 0.0
        %2314 = vmatpush1.xpose.msra.mxu0 0.0
        %2315 = vmatprep.subr.mxu0 0.0
        %2316 = vmatpush1.xpose.msra.mxu0 0.0
        %2317 = vmatprep.subr.mxu0 0.0
        %2318 = vmatpush1.xpose.msra.mxu0 0.0
        %2319 = vmatprep.subr.mxu0 0.0
        %2320 = vmatpush1.xpose.msra.mxu0 0.0
        %2321 = vmatprep.subr.mxu0 0.0
        %2322 = vmatpush1.xpose.msra.mxu0 0.0
        %2323 = vmatprep.subr.mxu0 0.0
        %2324 = vmatpush1.xpose.msra.mxu0 0.0
        %2325 = vmatprep.subr.mxu0 0.0
        %2326 = vmatpush1.xpose.msra.mxu0 0.0
        %2327 = vmatprep.subr.mxu0 0.0
        %2328 = vmatpush1.xpose.msra.mxu0 0.0
        %2329 = vmatprep.subr.mxu0 0.0
        %2330 = vmatpush1.xpose.msra.mxu0 0.0
        %2331 = vmatprep.subr.mxu0 0.0
        %2332 = vmatpush1.xpose.msra.mxu0 0.0
        %2333 = vmatprep.subr.mxu0 0.0
        %2334 = vmatpush1.xpose.msra.mxu0 0.0
        %2335 = vmatprep.subr.mxu0 0.0
        %2336 = vmatpush1.xpose.msra.mxu0 0.0
        %2337 = vmatprep.mubr.f32.mxu0 0.0
        %v2338 = vand.u32 %v1452, 4294901760
        %v2339 = vsub.f32 %v1452, %v2338
        %2340 = vmatmul.mubr.f32.gmra.mrb[0].mxu0 %v2339
        %v2341 = vpop.f32.mrb[0].mxu0
        %v2342 = vadd.f32 %v2268, %v2341
        %v2343 = vpop.f32.mrb[0].mxu0
        %2344 = vdwg.mxu0
        %2345 = vmatprep.subr.mxu0 0.0
        %v2346 = vand.u32 %v1454, 4294901760
        %2347 = vmatpush1.xpose.msra.mxu0 %v2346
        %2348 = vmatprep.subr.mxu0 0.0
        %2349 = vmatpush1.xpose.msra.mxu0 0.0
        %2350 = vmatprep.subr.mxu0 0.0
        %2351 = vmatpush1.xpose.msra.mxu0 0.0
        %2352 = vmatprep.subr.mxu0 0.0
        %2353 = vmatpush1.xpose.msra.mxu0 0.0
        %2354 = vmatprep.subr.mxu0 0.0
        %2355 = vmatpush1.xpose.msra.mxu0 0.0
        %2356 = vmatprep.subr.mxu0 0.0
        %2357 = vmatpush1.xpose.msra.mxu0 0.0
        %2358 = vmatprep.subr.mxu0 0.0
        %2359 = vmatpush1.xpose.msra.mxu0 0.0
        %2360 = vmatprep.subr.mxu0 0.0
        %2361 = vmatpush1.xpose.msra.mxu0 0.0
        %2362 = vmatprep.subr.mxu0 0.0
        %2363 = vmatpush1.xpose.msra.mxu0 0.0
        %2364 = vmatprep.subr.mxu0 0.0
        %2365 = vmatpush1.xpose.msra.mxu0 0.0
        %2366 = vmatprep.subr.mxu0 0.0
        %2367 = vmatpush1.xpose.msra.mxu0 0.0
        %2368 = vmatprep.subr.mxu0 0.0
        %2369 = vmatpush1.xpose.msra.mxu0 0.0
        %2370 = vmatprep.subr.mxu0 0.0
        %2371 = vmatpush1.xpose.msra.mxu0 0.0
        %2372 = vmatprep.subr.mxu0 0.0
        %2373 = vmatpush1.xpose.msra.mxu0 0.0
        %2374 = vmatprep.subr.mxu0 0.0
        %2375 = vmatpush1.xpose.msra.mxu0 0.0
        %2376 = vmatprep.subr.mxu0 0.0
        %2377 = vmatpush1.xpose.msra.mxu0 0.0
        %2378 = vmatprep.subr.mxu0 0.0
        %2379 = vmatpush1.xpose.msra.mxu0 0.0
        %2380 = vmatprep.subr.mxu0 0.0
        %2381 = vmatpush1.xpose.msra.mxu0 0.0
        %2382 = vmatprep.subr.mxu0 0.0
        %2383 = vmatpush1.xpose.msra.mxu0 0.0
        %2384 = vmatprep.subr.mxu0 0.0
        %2385 = vmatpush1.xpose.msra.mxu0 0.0
        %2386 = vmatprep.subr.mxu0 0.0
        %2387 = vmatpush1.xpose.msra.mxu0 0.0
        %2388 = vmatprep.subr.mxu0 0.0
        %2389 = vmatpush1.xpose.msra.mxu0 0.0
        %2390 = vmatprep.subr.mxu0 0.0
        %2391 = vmatpush1.xpose.msra.mxu0 0.0
        %2392 = vmatprep.subr.mxu0 0.0
        %2393 = vmatpush1.xpose.msra.mxu0 0.0
        %2394 = vmatprep.subr.mxu0 0.0
        %2395 = vmatpush1.xpose.msra.mxu0 0.0
        %2396 = vmatprep.subr.mxu0 0.0
        %2397 = vmatpush1.xpose.msra.mxu0 0.0
        %2398 = vmatprep.subr.mxu0 0.0
        %2399 = vmatpush1.xpose.msra.mxu0 0.0
        %2400 = vmatprep.subr.mxu0 0.0
        %2401 = vmatpush1.xpose.msra.mxu0 0.0
        %2402 = vmatprep.subr.mxu0 0.0
        %2403 = vmatpush1.xpose.msra.mxu0 0.0
        %2404 = vmatprep.subr.mxu0 0.0
        %2405 = vmatpush1.xpose.msra.mxu0 0.0
        %2406 = vmatprep.subr.mxu0 0.0
        %2407 = vmatpush1.xpose.msra.mxu0 0.0
        %2408 = vmatprep.subr.mxu0 0.0
        %2409 = vmatpush1.xpose.msra.mxu0 0.0
        %2410 = vmatprep.mubr.f32.mxu0 0.0
        %v2411 = vand.u32 %v1452, 4294901760
        %v2412 = vsub.f32 %v1452, %v2411
        %v2413 = vand.u32 %v2412, 4294901760
        %2414 = vmatmul.mubr.f32.gmra.mrb[0].mxu0 %v2413
        %v2415 = vpop.f32.mrb[0].mxu0
        %v2416 = vadd.f32 %v2342, %v2415
        %v2417 = vpop.f32.mrb[0].mxu0
        %2418 = vdwg.mxu0
        %2419 = vmatprep.subr.mxu0 0.0
        %v2420 = vand.u32 %v1454, 4294901760
        %v2421 = vsub.f32 %v1454, %v2420
        %v2422 = vand.u32 %v2421, 4294901760
        %2423 = vmatpush1.xpose.msra.mxu0 %v2422
        %2424 = vmatprep.subr.mxu0 0.0
        %2425 = vmatpush1.xpose.msra.mxu0 0.0
        %2426 = vmatprep.subr.mxu0 0.0
        %2427 = vmatpush1.xpose.msra.mxu0 0.0
        %2428 = vmatprep.subr.mxu0 0.0
        %2429 = vmatpush1.xpose.msra.mxu0 0.0
        %2430 = vmatprep.subr.mxu0 0.0
        %2431 = vmatpush1.xpose.msra.mxu0 0.0
        %2432 = vmatprep.subr.mxu0 0.0
        %2433 = vmatpush1.xpose.msra.mxu0 0.0
        %2434 = vmatprep.subr.mxu0 0.0
        %2435 = vmatpush1.xpose.msra.mxu0 0.0
        %2436 = vmatprep.subr.mxu0 0.0
        %2437 = vmatpush1.xpose.msra.mxu0 0.0
        %2438 = vmatprep.subr.mxu0 0.0
        %2439 = vmatpush1.xpose.msra.mxu0 0.0
        %2440 = vmatprep.subr.mxu0 0.0
        %2441 = vmatpush1.xpose.msra.mxu0 0.0
        %2442 = vmatprep.subr.mxu0 0.0
        %2443 = vmatpush1.xpose.msra.mxu0 0.0
        %2444 = vmatprep.subr.mxu0 0.0
        %2445 = vmatpush1.xpose.msra.mxu0 0.0
        %2446 = vmatprep.subr.mxu0 0.0
        %2447 = vmatpush1.xpose.msra.mxu0 0.0
        %2448 = vmatprep.subr.mxu0 0.0
        %2449 = vmatpush1.xpose.msra.mxu0 0.0
        %2450 = vmatprep.subr.mxu0 0.0
        %2451 = vmatpush1.xpose.msra.mxu0 0.0
        %2452 = vmatprep.subr.mxu0 0.0
        %2453 = vmatpush1.xpose.msra.mxu0 0.0
        %2454 = vmatprep.subr.mxu0 0.0
        %2455 = vmatpush1.xpose.msra.mxu0 0.0
        %2456 = vmatprep.subr.mxu0 0.0
        %2457 = vmatpush1.xpose.msra.mxu0 0.0
        %2458 = vmatprep.subr.mxu0 0.0
        %2459 = vmatpush1.xpose.msra.mxu0 0.0
        %2460 = vmatprep.subr.mxu0 0.0
        %2461 = vmatpush1.xpose.msra.mxu0 0.0
        %2462 = vmatprep.subr.mxu0 0.0
        %2463 = vmatpush1.xpose.msra.mxu0 0.0
        %2464 = vmatprep.subr.mxu0 0.0
        %2465 = vmatpush1.xpose.msra.mxu0 0.0
        %2466 = vmatprep.subr.mxu0 0.0
        %2467 = vmatpush1.xpose.msra.mxu0 0.0
        %2468 = vmatprep.subr.mxu0 0.0
        %2469 = vmatpush1.xpose.msra.mxu0 0.0
        %2470 = vmatprep.subr.mxu0 0.0
        %2471 = vmatpush1.xpose.msra.mxu0 0.0
        %2472 = vmatprep.subr.mxu0 0.0
        %2473 = vmatpush1.xpose.msra.mxu0 0.0
        %2474 = vmatprep.subr.mxu0 0.0
        %2475 = vmatpush1.xpose.msra.mxu0 0.0
        %2476 = vmatprep.subr.mxu0 0.0
        %2477 = vmatpush1.xpose.msra.mxu0 0.0
        %2478 = vmatprep.subr.mxu0 0.0
        %2479 = vmatpush1.xpose.msra.mxu0 0.0
        %2480 = vmatprep.subr.mxu0 0.0
        %2481 = vmatpush1.xpose.msra.mxu0 0.0
        %2482 = vmatprep.subr.mxu0 0.0
        %2483 = vmatpush1.xpose.msra.mxu0 0.0
        %2484 = vmatprep.subr.mxu0 0.0
        %2485 = vmatpush1.xpose.msra.mxu0 0.0
        %2486 = vmatprep.mubr.f32.mxu0 0.0
        %v2487 = vand.u32 %v1452, 4294901760
        %2488 = vmatmul.mubr.f32.gmra.mrb[0].mxu0 %v2487
        %v2489 = vpop.f32.mrb[0].mxu0
        %v2490 = vadd.f32 %v2416, %v2489
        %v2491 = vpop.f32.mrb[0].mxu0
        %2492 = vdwg.mxu0
        %2493 = vmatprep.subr.mxu0 0.0
        %v2494 = vand.u32 %v1454, 4294901760
        %2495 = vmatpush1.xpose.msra.mxu0 %v2494
        %2496 = vmatprep.subr.mxu0 0.0
        %2497 = vmatpush1.xpose.msra.mxu0 0.0
        %2498 = vmatprep.subr.mxu0 0.0
        %2499 = vmatpush1.xpose.msra.mxu0 0.0
        %2500 = vmatprep.subr.mxu0 0.0
        %2501 = vmatpush1.xpose.msra.mxu0 0.0
        %2502 = vmatprep.subr.mxu0 0.0
        %2503 = vmatpush1.xpose.msra.mxu0 0.0
        %2504 = vmatprep.subr.mxu0 0.0
        %2505 = vmatpush1.xpose.msra.mxu0 0.0
        %2506 = vmatprep.subr.mxu0 0.0
        %2507 = vmatpush1.xpose.msra.mxu0 0.0
        %2508 = vmatprep.subr.mxu0 0.0
        %2509 = vmatpush1.xpose.msra.mxu0 0.0
        %2510 = vmatprep.subr.mxu0 0.0
        %2511 = vmatpush1.xpose.msra.mxu0 0.0
        %2512 = vmatprep.subr.mxu0 0.0
        %2513 = vmatpush1.xpose.msra.mxu0 0.0
        %2514 = vmatprep.subr.mxu0 0.0
        %2515 = vmatpush1.xpose.msra.mxu0 0.0
        %2516 = vmatprep.subr.mxu0 0.0
        %2517 = vmatpush1.xpose.msra.mxu0 0.0
        %2518 = vmatprep.subr.mxu0 0.0
        %2519 = vmatpush1.xpose.msra.mxu0 0.0
        %2520 = vmatprep.subr.mxu0 0.0
        %2521 = vmatpush1.xpose.msra.mxu0 0.0
        %2522 = vmatprep.subr.mxu0 0.0
        %2523 = vmatpush1.xpose.msra.mxu0 0.0
        %2524 = vmatprep.subr.mxu0 0.0
        %2525 = vmatpush1.xpose.msra.mxu0 0.0
        %2526 = vmatprep.subr.mxu0 0.0
        %2527 = vmatpush1.xpose.msra.mxu0 0.0
        %2528 = vmatprep.subr.mxu0 0.0
        %2529 = vmatpush1.xpose.msra.mxu0 0.0
        %2530 = vmatprep.subr.mxu0 0.0
        %2531 = vmatpush1.xpose.msra.mxu0 0.0
        %2532 = vmatprep.subr.mxu0 0.0
        %2533 = vmatpush1.xpose.msra.mxu0 0.0
        %2534 = vmatprep.subr.mxu0 0.0
        %2535 = vmatpush1.xpose.msra.mxu0 0.0
        %2536 = vmatprep.subr.mxu0 0.0
        %2537 = vmatpush1.xpose.msra.mxu0 0.0
        %2538 = vmatprep.subr.mxu0 0.0
        %2539 = vmatpush1.xpose.msra.mxu0 0.0
        %2540 = vmatprep.subr.mxu0 0.0
        %2541 = vmatpush1.xpose.msra.mxu0 0.0
        %2542 = vmatprep.subr.mxu0 0.0
        %2543 = vmatpush1.xpose.msra.mxu0 0.0
        %2544 = vmatprep.subr.mxu0 0.0
        %2545 = vmatpush1.xpose.msra.mxu0 0.0
        %2546 = vmatprep.subr.mxu0 0.0
        %2547 = vmatpush1.xpose.msra.mxu0 0.0
        %2548 = vmatprep.subr.mxu0 0.0
        %2549 = vmatpush1.xpose.msra.mxu0 0.0
        %2550 = vmatprep.subr.mxu0 0.0
        %2551 = vmatpush1.xpose.msra.mxu0 0.0
        %2552 = vmatprep.subr.mxu0 0.0
        %2553 = vmatpush1.xpose.msra.mxu0 0.0
        %2554 = vmatprep.subr.mxu0 0.0
        %2555 = vmatpush1.xpose.msra.mxu0 0.0
        %2556 = vmatprep.subr.mxu0 0.0
        %2557 = vmatpush1.xpose.msra.mxu0 0.0
        %2558 = vmatprep.mubr.f32.mxu0 0.0
        %v2559 = vand.u32 %v1452, 4294901760
        %2560 = vmatmul.mubr.f32.gmra.mrb[0].mxu0 %v2559
        %v2561 = vpop.f32.mrb[0].mxu0
        %v2562 = vadd.f32 %v2490, %v2561
        %v2563 = vpop.f32.mrb[0].mxu0
        %2564 = vdwg.mxu0
        %vm2565 = vcmask 64512
        %v2566 = vsel %vm2565, %v2562, -inf
        %2567 = vmax.xlane.f32.xlu0 %v2566
        %v2568 = vpop.xlane.xlu0 %2567
        %v2569 = vsub.f32 %v2562, %v2568
        %v2570 = vmul.f32 %v2569, 1.442695
        %v2571 = vpow.pop %v2570
        %v2572 = vsel %vm2565, %v2571, 0.0
        %2573 = vadd.xlane.f32.xlu0 %v2572
        %v2574 = vpop.xlane.xlu0 %2573
        %v2575 = vrcp.pop %v2574
        %v2577 = vsel %vm2565, %v2571, 0
        %2579 = vmatprep.subr.mxu0 0.0
        %v2580 = vand.u32 %v2094, 4294901760
        %2581 = vmatpush1.msra.mxu0 %v2580
        %2582 = vmatprep.subr.mxu0 0.0
        %2583 = vmatpush1.msra.mxu0 0.0
        %2584 = vmatprep.subr.mxu0 0.0
        %2585 = vmatpush1.msra.mxu0 0.0
        %2586 = vmatprep.subr.mxu0 0.0
        %2587 = vmatpush1.msra.mxu0 0.0
        %2588 = vmatprep.subr.mxu0 0.0
        %2589 = vmatpush1.msra.mxu0 0.0
        %2590 = vmatprep.subr.mxu0 0.0
        %2591 = vmatpush1.msra.mxu0 0.0
        %2592 = vmatprep.subr.mxu0 0.0
        %2593 = vmatpush1.msra.mxu0 0.0
        %2594 = vmatprep.subr.mxu0 0.0
        %2595 = vmatpush1.msra.mxu0 0.0
        %2596 = vmatprep.subr.mxu0 0.0
        %2597 = vmatpush1.msra.mxu0 0.0
        %2598 = vmatprep.subr.mxu0 0.0
        %2599 = vmatpush1.msra.mxu0 0.0
        %2600 = vmatprep.subr.mxu0 0.0
        %2601 = vmatpush1.msra.mxu0 0.0
        %2602 = vmatprep.subr.mxu0 0.0
        %2603 = vmatpush1.msra.mxu0 0.0
        %2604 = vmatprep.subr.mxu0 0.0
        %2605 = vmatpush1.msra.mxu0 0.0
        %2606 = vmatprep.subr.mxu0 0.0
        %2607 = vmatpush1.msra.mxu0 0.0
        %2608 = vmatprep.subr.mxu0 0.0
        %2609 = vmatpush1.msra.mxu0 0.0
        %2610 = vmatprep.subr.mxu0 0.0
        %2611 = vmatpush1.msra.mxu0 0.0
        %2612 = vmatprep.subr.mxu0 0.0
        %2613 = vmatpush1.msra.mxu0 0.0
        %2614 = vmatprep.subr.mxu0 0.0
        %2615 = vmatpush1.msra.mxu0 0.0
        %2616 = vmatprep.subr.mxu0 0.0
        %2617 = vmatpush1.msra.mxu0 0.0
        %2618 = vmatprep.subr.mxu0 0.0
        %2619 = vmatpush1.msra.mxu0 0.0
        %2620 = vmatprep.subr.mxu0 0.0
        %2621 = vmatpush1.msra.mxu0 0.0
        %2622 = vmatprep.subr.mxu0 0.0
        %2623 = vmatpush1.msra.mxu0 0.0
        %2624 = vmatprep.subr.mxu0 0.0
        %2625 = vmatpush1.msra.mxu0 0.0
        %2626 = vmatprep.subr.mxu0 0.0
        %2627 = vmatpush1.msra.mxu0 0.0
        %2628 = vmatprep.subr.mxu0 0.0
        %2629 = vmatpush1.msra.mxu0 0.0
        %2630 = vmatprep.subr.mxu0 0.0
        %2631 = vmatpush1.msra.mxu0 0.0
        %2632 = vmatprep.subr.mxu0 0.0
        %2633 = vmatpush1.msra.mxu0 0.0
        %2634 = vmatprep.subr.mxu0 0.0
        %2635 = vmatpush1.msra.mxu0 0.0
        %2636 = vmatprep.subr.mxu0 0.0
        %2637 = vmatpush1.msra.mxu0 0.0
        %2638 = vmatprep.subr.mxu0 0.0
        %2639 = vmatpush1.msra.mxu0 0.0
        %2640 = vmatprep.subr.mxu0 0.0
        %2641 = vmatpush1.msra.mxu0 0.0
        %2642 = vmatprep.subr.mxu0 0.0
        %2643 = vmatpush1.msra.mxu0 0.0
        %2644 = vmatprep.mubr.f32.mxu0 0.0
        %v2645 = vand.u32 %v2577, 4294901760
        %v2646 = vsub.f32 %v2577, %v2645
        %v2647 = vand.u32 %v2646, 4294901760
        %v2648 = vsub.f32 %v2646, %v2647
        %v2649 = vand.u32 %v2648, 4294901760
        %2650 = vmatmul.mubr.f32.gmra.mrb[0].mxu0 %v2649
        %v2651 = vpop.f32.mrb[0].mxu0
        %v2652 = vadd.f32 0.0, %v2651
        %v2653 = vpop.f32.mrb[0].mxu0
        %2654 = vdwg.mxu0
        %2655 = vmatprep.subr.mxu0 0.0
        %v2656 = vand.u32 %v2094, 4294901760
        %v2657 = vsub.f32 %v2094, %v2656
        %v2658 = vand.u32 %v2657, 4294901760
        %v2659 = vsub.f32 %v2657, %v2658
        %v2660 = vand.u32 %v2659, 4294901760
        %2661 = vmatpush1.msra.mxu0 %v2660
        %2662 = vmatprep.subr.mxu0 0.0
        %2663 = vmatpush1.msra.mxu0 0.0
        %2664 = vmatprep.subr.mxu0 0.0
        %2665 = vmatpush1.msra.mxu0 0.0
        %2666 = vmatprep.subr.mxu0 0.0
        %2667 = vmatpush1.msra.mxu0 0.0
        %2668 = vmatprep.subr.mxu0 0.0
        %2669 = vmatpush1.msra.mxu0 0.0
        %2670 = vmatprep.subr.mxu0 0.0
        %2671 = vmatpush1.msra.mxu0 0.0
        %2672 = vmatprep.subr.mxu0 0.0
        %2673 = vmatpush1.msra.mxu0 0.0
        %2674 = vmatprep.subr.mxu0 0.0
        %2675 = vmatpush1.msra.mxu0 0.0
        %2676 = vmatprep.subr.mxu0 0.0
        %2677 = vmatpush1.msra.mxu0 0.0
        %2678 = vmatprep.subr.mxu0 0.0
        %2679 = vmatpush1.msra.mxu0 0.0
        %2680 = vmatprep.subr.mxu0 0.0
        %2681 = vmatpush1.msra.mxu0 0.0
        %2682 = vmatprep.subr.mxu0 0.0
        %2683 = vmatpush1.msra.mxu0 0.0
        %2684 = vmatprep.subr.mxu0 0.0
        %2685 = vmatpush1.msra.mxu0 0.0
        %2686 = vmatprep.subr.mxu0 0.0
        %2687 = vmatpush1.msra.mxu0 0.0
        %2688 = vmatprep.subr.mxu0 0.0
        %2689 = vmatpush1.msra.mxu0 0.0
        %2690 = vmatprep.subr.mxu0 0.0
        %2691 = vmatpush1.msra.mxu0 0.0
        %2692 = vmatprep.subr.mxu0 0.0
        %2693 = vmatpush1.msra.mxu0 0.0
        %2694 = vmatprep.subr.mxu0 0.0
        %2695 = vmatpush1.msra.mxu0 0.0
        %2696 = vmatprep.subr.mxu0 0.0
        %2697 = vmatpush1.msra.mxu0 0.0
        %2698 = vmatprep.subr.mxu0 0.0
        %2699 = vmatpush1.msra.mxu0 0.0
        %2700 = vmatprep.subr.mxu0 0.0
        %2701 = vmatpush1.msra.mxu0 0.0
        %2702 = vmatprep.subr.mxu0 0.0
        %2703 = vmatpush1.msra.mxu0 0.0
        %2704 = vmatprep.subr.mxu0 0.0
        %2705 = vmatpush1.msra.mxu0 0.0
        %2706 = vmatprep.subr.mxu0 0.0
        %2707 = vmatpush1.msra.mxu0 0.0
        %2708 = vmatprep.subr.mxu0 0.0
        %2709 = vmatpush1.msra.mxu0 0.0
        %2710 = vmatprep.subr.mxu0 0.0
        %2711 = vmatpush1.msra.mxu0 0.0
        %2712 = vmatprep.subr.mxu0 0.0
        %2713 = vmatpush1.msra.mxu0 0.0
        %2714 = vmatprep.subr.mxu0 0.0
        %2715 = vmatpush1.msra.mxu0 0.0
        %2716 = vmatprep.subr.mxu0 0.0
        %2717 = vmatpush1.msra.mxu0 0.0
        %2718 = vmatprep.subr.mxu0 0.0
        %2719 = vmatpush1.msra.mxu0 0.0
        %2720 = vmatprep.subr.mxu0 0.0
        %2721 = vmatpush1.msra.mxu0 0.0
        %2722 = vmatprep.subr.mxu0 0.0
        %2723 = vmatpush1.msra.mxu0 0.0
        %2724 = vmatprep.mubr.f32.mxu0 0.0
        %v2725 = vand.u32 %v2577, 4294901760
        %2726 = vmatmul.mubr.f32.gmra.mrb[0].mxu0 %v2725
        %v2727 = vpop.f32.mrb[0].mxu0
        %v2728 = vadd.f32 %v2652, %v2727
        %v2729 = vpop.f32.mrb[0].mxu0
        %2730 = vdwg.mxu0
        %2731 = vmatprep.subr.mxu0 0.0
        %v2732 = vand.u32 %v2094, 4294901760
        %v2733 = vsub.f32 %v2094, %v2732
        %2734 = vmatpush1.msra.mxu0 %v2733
        %2735 = vmatprep.subr.mxu0 0.0
        %2736 = vmatpush1.msra.mxu0 0.0
        %2737 = vmatprep.subr.mxu0 0.0
        %2738 = vmatpush1.msra.mxu0 0.0
        %2739 = vmatprep.subr.mxu0 0.0
        %2740 = vmatpush1.msra.mxu0 0.0
        %2741 = vmatprep.subr.mxu0 0.0
        %2742 = vmatpush1.msra.mxu0 0.0
        %2743 = vmatprep.subr.mxu0 0.0
        %2744 = vmatpush1.msra.mxu0 0.0
        %2745 = vmatprep.subr.mxu0 0.0
        %2746 = vmatpush1.msra.mxu0 0.0
        %2747 = vmatprep.subr.mxu0 0.0
        %2748 = vmatpush1.msra.mxu0 0.0
        %2749 = vmatprep.subr.mxu0 0.0
        %2750 = vmatpush1.msra.mxu0 0.0
        %2751 = vmatprep.subr.mxu0 0.0
        %2752 = vmatpush1.msra.mxu0 0.0
        %2753 = vmatprep.subr.mxu0 0.0
        %2754 = vmatpush1.msra.mxu0 0.0
        %2755 = vmatprep.subr.mxu0 0.0
        %2756 = vmatpush1.msra.mxu0 0.0
        %2757 = vmatprep.subr.mxu0 0.0
        %2758 = vmatpush1.msra.mxu0 0.0
        %2759 = vmatprep.subr.mxu0 0.0
        %2760 = vmatpush1.msra.mxu0 0.0
        %2761 = vmatprep.subr.mxu0 0.0
        %2762 = vmatpush1.msra.mxu0 0.0
        %2763 = vmatprep.subr.mxu0 0.0
        %2764 = vmatpush1.msra.mxu0 0.0
        %2765 = vmatprep.subr.mxu0 0.0
        %2766 = vmatpush1.msra.mxu0 0.0
        %2767 = vmatprep.subr.mxu0 0.0
        %2768 = vmatpush1.msra.mxu0 0.0
        %2769 = vmatprep.subr.mxu0 0.0
        %2770 = vmatpush1.msra.mxu0 0.0
        %2771 = vmatprep.subr.mxu0 0.0
        %2772 = vmatpush1.msra.mxu0 0.0
        %2773 = vmatprep.subr.mxu0 0.0
        %2774 = vmatpush1.msra.mxu0 0.0
        %2775 = vmatprep.subr.mxu0 0.0
        %2776 = vmatpush1.msra.mxu0 0.0
        %2777 = vmatprep.subr.mxu0 0.0
        %2778 = vmatpush1.msra.mxu0 0.0
        %2779 = vmatprep.subr.mxu0 0.0
        %2780 = vmatpush1.msra.mxu0 0.0
        %2781 = vmatprep.subr.mxu0 0.0
        %2782 = vmatpush1.msra.mxu0 0.0
        %2783 = vmatprep.subr.mxu0 0.0
        %2784 = vmatpush1.msra.mxu0 0.0
        %2785 = vmatprep.subr.mxu0 0.0
        %2786 = vmatpush1.msra.mxu0 0.0
        %2787 = vmatprep.subr.mxu0 0.0
        %2788 = vmatpush1.msra.mxu0 0.0
        %2789 = vmatprep.subr.mxu0 0.0
        %2790 = vmatpush1.msra.mxu0 0.0
        %2791 = vmatprep.subr.mxu0 0.0
        %2792 = vmatpush1.msra.mxu0 0.0
        %2793 = vmatprep.subr.mxu0 0.0
        %2794 = vmatpush1.msra.mxu0 0.0
        %2795 = vmatprep.subr.mxu0 0.0
        %2796 = vmatpush1.msra.mxu0 0.0
        %2797 = vmatprep.mubr.f32.mxu0 0.0
        %v2798 = vand.u32 %v2577, 4294901760
        %v2799 = vsub.f32 %v2577, %v2798
        %2800 = vmatmul.mubr.f32.gmra.mrb[0].mxu0 %v2799
        %v2801 = vpop.f32.mrb[0].mxu0
        %v2802 = vadd.f32 %v2728, %v2801
        %v2803 = vpop.f32.mrb[0].mxu0
        %2804 = vdwg.mxu0
        %2805 = vmatprep.subr.mxu0 0.0
        %v2806 = vand.u32 %v2094, 4294901760
        %2807 = vmatpush1.msra.mxu0 %v2806
        %2808 = vmatprep.subr.mxu0 0.0
        %2809 = vmatpush1.msra.mxu0 0.0
        %2810 = vmatprep.subr.mxu0 0.0
        %2811 = vmatpush1.msra.mxu0 0.0
        %2812 = vmatprep.subr.mxu0 0.0
        %2813 = vmatpush1.msra.mxu0 0.0
        %2814 = vmatprep.subr.mxu0 0.0
        %2815 = vmatpush1.msra.mxu0 0.0
        %2816 = vmatprep.subr.mxu0 0.0
        %2817 = vmatpush1.msra.mxu0 0.0
        %2818 = vmatprep.subr.mxu0 0.0
        %2819 = vmatpush1.msra.mxu0 0.0
        %2820 = vmatprep.subr.mxu0 0.0
        %2821 = vmatpush1.msra.mxu0 0.0
        %2822 = vmatprep.subr.mxu0 0.0
        %2823 = vmatpush1.msra.mxu0 0.0
        %2824 = vmatprep.subr.mxu0 0.0
        %2825 = vmatpush1.msra.mxu0 0.0
        %2826 = vmatprep.subr.mxu0 0.0
        %2827 = vmatpush1.msra.mxu0 0.0
        %2828 = vmatprep.subr.mxu0 0.0
        %2829 = vmatpush1.msra.mxu0 0.0
        %2830 = vmatprep.subr.mxu0 0.0
        %2831 = vmatpush1.msra.mxu0 0.0
        %2832 = vmatprep.subr.mxu0 0.0
        %2833 = vmatpush1.msra.mxu0 0.0
        %2834 = vmatprep.subr.mxu0 0.0
        %2835 = vmatpush1.msra.mxu0 0.0
        %2836 = vmatprep.subr.mxu0 0.0
        %2837 = vmatpush1.msra.mxu0 0.0
        %2838 = vmatprep.subr.mxu0 0.0
        %2839 = vmatpush1.msra.mxu0 0.0
        %2840 = vmatprep.subr.mxu0 0.0
        %2841 = vmatpush1.msra.mxu0 0.0
        %2842 = vmatprep.subr.mxu0 0.0
        %2843 = vmatpush1.msra.mxu0 0.0
        %2844 = vmatprep.subr.mxu0 0.0
        %2845 = vmatpush1.msra.mxu0 0.0
        %2846 = vmatprep.subr.mxu0 0.0
        %2847 = vmatpush1.msra.mxu0 0.0
        %2848 = vmatprep.subr.mxu0 0.0
        %2849 = vmatpush1.msra.mxu0 0.0
        %2850 = vmatprep.subr.mxu0 0.0
        %2851 = vmatpush1.msra.mxu0 0.0
        %2852 = vmatprep.subr.mxu0 0.0
        %2853 = vmatpush1.msra.mxu0 0.0
        %2854 = vmatprep.subr.mxu0 0.0
        %2855 = vmatpush1.msra.mxu0 0.0
        %2856 = vmatprep.subr.mxu0 0.0
        %2857 = vmatpush1.msra.mxu0 0.0
        %2858 = vmatprep.subr.mxu0 0.0
        %2859 = vmatpush1.msra.mxu0 0.0
        %2860 = vmatprep.subr.mxu0 0.0
        %2861 = vmatpush1.msra.mxu0 0.0
        %2862 = vmatprep.subr.mxu0 0.0
        %2863 = vmatpush1.msra.mxu0 0.0
        %2864 = vmatprep.subr.mxu0 0.0
        %2865 = vmatpush1.msra.mxu0 0.0
        %2866 = vmatprep.subr.mxu0 0.0
        %2867 = vmatpush1.msra.mxu0 0.0
        %2868 = vmatprep.subr.mxu0 0.0
        %2869 = vmatpush1.msra.mxu0 0.0
        %2870 = vmatprep.mubr.f32.mxu0 0.0
        %v2871 = vand.u32 %v2577, 4294901760
        %v2872 = vsub.f32 %v2577, %v2871
        %v2873 = vand.u32 %v2872, 4294901760
        %2874 = vmatmul.mubr.f32.gmra.mrb[0].mxu0 %v2873
        %v2875 = vpop.f32.mrb[0].mxu0
        %v2876 = vadd.f32 %v2802, %v2875
        %v2877 = vpop.f32.mrb[0].mxu0
        %2878 = vdwg.mxu0
        %2879 = vmatprep.subr.mxu0 0.0
        %v2880 = vand.u32 %v2094, 4294901760
        %v2881 = vsub.f32 %v2094, %v2880
        %v2882 = vand.u32 %v2881, 4294901760
        %2883 = vmatpush1.msra.mxu0 %v2882
        %2884 = vmatprep.subr.mxu0 0.0
        %2885 = vmatpush1.msra.mxu0 0.0
        %2886 = vmatprep.subr.mxu0 0.0
        %2887 = vmatpush1.msra.mxu0 0.0
        %2888 = vmatprep.subr.mxu0 0.0
        %2889 = vmatpush1.msra.mxu0 0.0
        %2890 = vmatprep.subr.mxu0 0.0
        %2891 = vmatpush1.msra.mxu0 0.0
        %2892 = vmatprep.subr.mxu0 0.0
        %2893 = vmatpush1.msra.mxu0 0.0
        %2894 = vmatprep.subr.mxu0 0.0
        %2895 = vmatpush1.msra.mxu0 0.0
        %2896 = vmatprep.subr.mxu0 0.0
        %2897 = vmatpush1.msra.mxu0 0.0
        %2898 = vmatprep.subr.mxu0 0.0
        %2899 = vmatpush1.msra.mxu0 0.0
        %2900 = vmatprep.subr.mxu0 0.0
        %2901 = vmatpush1.msra.mxu0 0.0
        %2902 = vmatprep.subr.mxu0 0.0
        %2903 = vmatpush1.msra.mxu0 0.0
        %2904 = vmatprep.subr.mxu0 0.0
        %2905 = vmatpush1.msra.mxu0 0.0
        %2906 = vmatprep.subr.mxu0 0.0
        %2907 = vmatpush1.msra.mxu0 0.0
        %2908 = vmatprep.subr.mxu0 0.0
        %2909 = vmatpush1.msra.mxu0 0.0
        %2910 = vmatprep.subr.mxu0 0.0
        %2911 = vmatpush1.msra.mxu0 0.0
        %2912 = vmatprep.subr.mxu0 0.0
        %2913 = vmatpush1.msra.mxu0 0.0
        %2914 = vmatprep.subr.mxu0 0.0
        %2915 = vmatpush1.msra.mxu0 0.0
        %2916 = vmatprep.subr.mxu0 0.0
        %2917 = vmatpush1.msra.mxu0 0.0
        %2918 = vmatprep.subr.mxu0 0.0
        %2919 = vmatpush1.msra.mxu0 0.0
        %2920 = vmatprep.subr.mxu0 0.0
        %2921 = vmatpush1.msra.mxu0 0.0
        %2922 = vmatprep.subr.mxu0 0.0
        %2923 = vmatpush1.msra.mxu0 0.0
        %2924 = vmatprep.subr.mxu0 0.0
        %2925 = vmatpush1.msra.mxu0 0.0
        %2926 = vmatprep.subr.mxu0 0.0
        %2927 = vmatpush1.msra.mxu0 0.0
        %2928 = vmatprep.subr.mxu0 0.0
        %2929 = vmatpush1.msra.mxu0 0.0
        %2930 = vmatprep.subr.mxu0 0.0
        %2931 = vmatpush1.msra.mxu0 0.0
        %2932 = vmatprep.subr.mxu0 0.0
        %2933 = vmatpush1.msra.mxu0 0.0
        %2934 = vmatprep.subr.mxu0 0.0
        %2935 = vmatpush1.msra.mxu0 0.0
        %2936 = vmatprep.subr.mxu0 0.0
        %2937 = vmatpush1.msra.mxu0 0.0
        %2938 = vmatprep.subr.mxu0 0.0
        %2939 = vmatpush1.msra.mxu0 0.0
        %2940 = vmatprep.subr.mxu0 0.0
        %2941 = vmatpush1.msra.mxu0 0.0
        %2942 = vmatprep.subr.mxu0 0.0
        %2943 = vmatpush1.msra.mxu0 0.0
        %2944 = vmatprep.subr.mxu0 0.0
        %2945 = vmatpush1.msra.mxu0 0.0
        %2946 = vmatprep.mubr.f32.mxu0 0.0
        %v2947 = vand.u32 %v2577, 4294901760
        %2948 = vmatmul.mubr.f32.gmra.mrb[0].mxu0 %v2947
        %v2949 = vpop.f32.mrb[0].mxu0
        %v2950 = vadd.f32 %v2876, %v2949
        %v2951 = vpop.f32.mrb[0].mxu0
        %2952 = vdwg.mxu0
        %2953 = vmatprep.subr.mxu0 0.0
        %v2954 = vand.u32 %v2094, 4294901760
        %2955 = vmatpush1.msra.mxu0 %v2954
        %2956 = vmatprep.subr.mxu0 0.0
        %2957 = vmatpush1.msra.mxu0 0.0
        %2958 = vmatprep.subr.mxu0 0.0
        %2959 = vmatpush1.msra.mxu0 0.0
        %2960 = vmatprep.subr.mxu0 0.0
        %2961 = vmatpush1.msra.mxu0 0.0
        %2962 = vmatprep.subr.mxu0 0.0
        %2963 = vmatpush1.msra.mxu0 0.0
        %2964 = vmatprep.subr.mxu0 0.0
        %2965 = vmatpush1.msra.mxu0 0.0
        %2966 = vmatprep.subr.mxu0 0.0
        %2967 = vmatpush1.msra.mxu0 0.0
        %2968 = vmatprep.subr.mxu0 0.0
        %2969 = vmatpush1.msra.mxu0 0.0
        %2970 = vmatprep.subr.mxu0 0.0
        %2971 = vmatpush1.msra.mxu0 0.0
        %2972 = vmatprep.subr.mxu0 0.0
        %2973 = vmatpush1.msra.mxu0 0.0
        %2974 = vmatprep.subr.mxu0 0.0
        %2975 = vmatpush1.msra.mxu0 0.0
        %2976 = vmatprep.subr.mxu0 0.0
        %2977 = vmatpush1.msra.mxu0 0.0
        %2978 = vmatprep.subr.mxu0 0.0
        %2979 = vmatpush1.msra.mxu0 0.0
        %2980 = vmatprep.subr.mxu0 0.0
        %2981 = vmatpush1.msra.mxu0 0.0
        %2982 = vmatprep.subr.mxu0 0.0
        %2983 = vmatpush1.msra.mxu0 0.0
        %2984 = vmatprep.subr.mxu0 0.0
        %2985 = vmatpush1.msra.mxu0 0.0
        %2986 = vmatprep.subr.mxu0 0.0
        %2987 = vmatpush1.msra.mxu0 0.0
        %2988 = vmatprep.subr.mxu0 0.0
        %2989 = vmatpush1.msra.mxu0 0.0
        %2990 = vmatprep.subr.mxu0 0.0
        %2991 = vmatpush1.msra.mxu0 0.0
        %2992 = vmatprep.subr.mxu0 0.0
        %2993 = vmatpush1.msra.mxu0 0.0
        %2994 = vmatprep.subr.mxu0 0.0
        %2995 = vmatpush1.msra.mxu0 0.0
        %2996 = vmatprep.subr.mxu0 0.0
        %2997 = vmatpush1.msra.mxu0 0.0
        %2998 = vmatprep.subr.mxu0 0.0
        %2999 = vmatpush1.msra.mxu0 0.0
        %3000 = vmatprep.subr.mxu0 0.0
        %3001 = vmatpush1.msra.mxu0 0.0
        %3002 = vmatprep.subr.mxu0 0.0
        %3003 = vmatpush1.msra.mxu0 0.0
        %3004 = vmatprep.subr.mxu0 0.0
        %3005 = vmatpush1.msra.mxu0 0.0
        %3006 = vmatprep.subr.mxu0 0.0
        %3007 = vmatpush1.msra.mxu0 0.0
        %3008 = vmatprep.subr.mxu0 0.0
        %3009 = vmatpush1.msra.mxu0 0.0
        %3010 = vmatprep.subr.mxu0 0.0
        %3011 = vmatpush1.msra.mxu0 0.0
        %3012 = vmatprep.subr.mxu0 0.0
        %3013 = vmatpush1.msra.mxu0 0.0
        %3014 = vmatprep.subr.mxu0 0.0
        %3015 = vmatpush1.msra.mxu0 0.0
        %3016 = vmatprep.subr.mxu0 0.0
        %3017 = vmatpush1.msra.mxu0 0.0
        %3018 = vmatprep.mubr.f32.mxu0 0.0
        %v3019 = vand.u32 %v2577, 4294901760
        %3020 = vmatmul.mubr.f32.gmra.mrb[0].mxu0 %v3019
        %v3021 = vpop.f32.mrb[0].mxu0
        %v3022 = vadd.f32 %v2950, %v3021
        %v3023 = vpop.f32.mrb[0].mxu0
        %3024 = vdwg.mxu0
        %v3025 = vmul.f32 %v3022, %v2575
        %3026 = vmatprep.subr.mxu0 0.0
        %v3027 = vand.u32 %v2097, 4294901760
        %3028 = vmatpush1.msra.mxu0 %v3027
        %3029 = vmatprep.subr.mxu0 0.0
        %v3030 = vand.u32 %v2098, 4294901760
        %3031 = vmatpush1.msra.mxu0 %v3030
        %3032 = vmatprep.subr.mxu0 0.0
        %v3033 = vand.u32 %v2099, 4294901760
        %3034 = vmatpush1.msra.mxu0 %v3033
        %3035 = vmatprep.subr.mxu0 0.0
        %v3036 = vand.u32 %v2100, 4294901760
        %3037 = vmatpush1.msra.mxu0 %v3036
        %3038 = vmatprep.subr.mxu0 0.0
        %v3039 = vand.u32 %v2101, 4294901760
        %3040 = vmatpush1.msra.mxu0 %v3039
        %3041 = vmatprep.subr.mxu0 0.0
        %v3042 = vand.u32 %v2102, 4294901760
        %3043 = vmatpush1.msra.mxu0 %v3042
        %3044 = vmatprep.subr.mxu0 0.0
        %v3045 = vand.u32 %v2103, 4294901760
        %3046 = vmatpush1.msra.mxu0 %v3045
        %3047 = vmatprep.subr.mxu0 0.0
        %v3048 = vand.u32 %v2104, 4294901760
        %3049 = vmatpush1.msra.mxu0 %v3048
        %3050 = vmatprep.subr.mxu0 0.0
        %v3051 = vand.u32 %v2105, 4294901760
        %3052 = vmatpush1.msra.mxu0 %v3051
        %3053 = vmatprep.subr.mxu0 0.0
        %v3054 = vand.u32 %v2106, 4294901760
        %3055 = vmatpush1.msra.mxu0 %v3054
        %3056 = vmatprep.subr.mxu0 0.0
        %v3057 = vand.u32 %v2107, 4294901760
        %3058 = vmatpush1.msra.mxu0 %v3057
        %3059 = vmatprep.subr.mxu0 0.0
        %v3060 = vand.u32 %v2108, 4294901760
        %3061 = vmatpush1.msra.mxu0 %v3060
        %3062 = vmatprep.subr.mxu0 0.0
        %v3063 = vand.u32 %v2109, 4294901760
        %3064 = vmatpush1.msra.mxu0 %v3063
        %3065 = vmatprep.subr.mxu0 0.0
        %v3066 = vand.u32 %v2110, 4294901760
        %3067 = vmatpush1.msra.mxu0 %v3066
        %3068 = vmatprep.subr.mxu0 0.0
        %v3069 = vand.u32 %v2111, 4294901760
        %3070 = vmatpush1.msra.mxu0 %v3069
        %3071 = vmatprep.subr.mxu0 0.0
        %v3072 = vand.u32 %v2112, 4294901760
        %3073 = vmatpush1.msra.mxu0 %v3072
        %3074 = vmatprep.subr.mxu0 0.0
        %3075 = vmatpush1.msra.mxu0 0.0
        %3076 = vmatprep.subr.mxu0 0.0
        %3077 = vmatpush1.msra.mxu0 0.0
        %3078 = vmatprep.subr.mxu0 0.0
        %3079 = vmatpush1.msra.mxu0 0.0
        %3080 = vmatprep.subr.mxu0 0.0
        %3081 = vmatpush1.msra.mxu0 0.0
        %3082 = vmatprep.subr.mxu0 0.0
        %3083 = vmatpush1.msra.mxu0 0.0
        %3084 = vmatprep.subr.mxu0 0.0
        %3085 = vmatpush1.msra.mxu0 0.0
        %3086 = vmatprep.subr.mxu0 0.0
        %3087 = vmatpush1.msra.mxu0 0.0
        %3088 = vmatprep.subr.mxu0 0.0
        %3089 = vmatpush1.msra.mxu0 0.0
        %3090 = vmatprep.subr.mxu0 0.0
        %3091 = vmatpush1.msra.mxu0 0.0
        %3092 = vmatprep.subr.mxu0 0.0
        %3093 = vmatpush1.msra.mxu0 0.0
        %3094 = vmatprep.subr.mxu0 0.0
        %3095 = vmatpush1.msra.mxu0 0.0
        %3096 = vmatprep.subr.mxu0 0.0
        %3097 = vmatpush1.msra.mxu0 0.0
        %3098 = vmatprep.subr.mxu0 0.0
        %3099 = vmatpush1.msra.mxu0 0.0
        %3100 = vmatprep.subr.mxu0 0.0
        %3101 = vmatpush1.msra.mxu0 0.0
        %3102 = vmatprep.subr.mxu0 0.0
        %3103 = vmatpush1.msra.mxu0 0.0
        %3104 = vmatprep.subr.mxu0 0.0
        %3105 = vmatpush1.msra.mxu0 0.0
        %3106 = vmatprep.mubr.f32.mxu0 0.0
        %v3107 = vand.u32 %v3025, 4294901760
        %v3108 = vsub.f32 %v3025, %v3107
        %v3109 = vand.u32 %v3108, 4294901760
        %v3110 = vsub.f32 %v3108, %v3109
        %v3111 = vand.u32 %v3110, 4294901760
        %3112 = vmatmul.mubr.f32.gmra.mrb[0].mxu0 %v3111
        %v3113 = vpop.f32.mrb[0].mxu0
        %v3114 = vadd.f32 0.0, %v3113
        %v3115 = vpop.f32.mrb[0].mxu0
        %3116 = vdwg.mxu0
        %3117 = vmatprep.subr.mxu0 0.0
        %v3118 = vand.u32 %v2097, 4294901760
        %v3119 = vsub.f32 %v2097, %v3118
        %v3120 = vand.u32 %v3119, 4294901760
        %v3121 = vsub.f32 %v3119, %v3120
        %v3122 = vand.u32 %v3121, 4294901760
        %3123 = vmatpush1.msra.mxu0 %v3122
        %3124 = vmatprep.subr.mxu0 0.0
        %v3125 = vand.u32 %v2098, 4294901760
        %v3126 = vsub.f32 %v2098, %v3125
        %v3127 = vand.u32 %v3126, 4294901760
        %v3128 = vsub.f32 %v3126, %v3127
        %v3129 = vand.u32 %v3128, 4294901760
        %3130 = vmatpush1.msra.mxu0 %v3129
        %3131 = vmatprep.subr.mxu0 0.0
        %v3132 = vand.u32 %v2099, 4294901760
        %v3133 = vsub.f32 %v2099, %v3132
        %v3134 = vand.u32 %v3133, 4294901760
        %v3135 = vsub.f32 %v3133, %v3134
        %v3136 = vand.u32 %v3135, 4294901760
        %3137 = vmatpush1.msra.mxu0 %v3136
        %3138 = vmatprep.subr.mxu0 0.0
        %v3139 = vand.u32 %v2100, 4294901760
        %v3140 = vsub.f32 %v2100, %v3139
        %v3141 = vand.u32 %v3140, 4294901760
        %v3142 = vsub.f32 %v3140, %v3141
        %v3143 = vand.u32 %v3142, 4294901760
        %3144 = vmatpush1.msra.mxu0 %v3143
        %3145 = vmatprep.subr.mxu0 0.0
        %v3146 = vand.u32 %v2101, 4294901760
        %v3147 = vsub.f32 %v2101, %v3146
        %v3148 = vand.u32 %v3147, 4294901760
        %v3149 = vsub.f32 %v3147, %v3148
        %v3150 = vand.u32 %v3149, 4294901760
        %3151 = vmatpush1.msra.mxu0 %v3150
        %3152 = vmatprep.subr.mxu0 0.0
        %v3153 = vand.u32 %v2102, 4294901760
        %v3154 = vsub.f32 %v2102, %v3153
        %v3155 = vand.u32 %v3154, 4294901760
        %v3156 = vsub.f32 %v3154, %v3155
        %v3157 = vand.u32 %v3156, 4294901760
        %3158 = vmatpush1.msra.mxu0 %v3157
        %3159 = vmatprep.subr.mxu0 0.0
        %v3160 = vand.u32 %v2103, 4294901760
        %v3161 = vsub.f32 %v2103, %v3160
        %v3162 = vand.u32 %v3161, 4294901760
        %v3163 = vsub.f32 %v3161, %v3162
        %v3164 = vand.u32 %v3163, 4294901760
        %3165 = vmatpush1.msra.mxu0 %v3164
        %3166 = vmatprep.subr.mxu0 0.0
        %v3167 = vand.u32 %v2104, 4294901760
        %v3168 = vsub.f32 %v2104, %v3167
        %v3169 = vand.u32 %v3168, 4294901760
        %v3170 = vsub.f32 %v3168, %v3169
        %v3171 = vand.u32 %v3170, 4294901760
        %3172 = vmatpush1.msra.mxu0 %v3171
        %3173 = vmatprep.subr.mxu0 0.0
        %v3174 = vand.u32 %v2105, 4294901760
        %v3175 = vsub.f32 %v2105, %v3174
        %v3176 = vand.u32 %v3175, 4294901760
        %v3177 = vsub.f32 %v3175, %v3176
        %v3178 = vand.u32 %v3177, 4294901760
        %3179 = vmatpush1.msra.mxu0 %v3178
        %3180 = vmatprep.subr.mxu0 0.0
        %v3181 = vand.u32 %v2106, 4294901760
        %v3182 = vsub.f32 %v2106, %v3181
        %v3183 = vand.u32 %v3182, 4294901760
        %v3184 = vsub.f32 %v3182, %v3183
        %v3185 = vand.u32 %v3184, 4294901760
        %3186 = vmatpush1.msra.mxu0 %v3185
        %3187 = vmatprep.subr.mxu0 0.0
        %v3188 = vand.u32 %v2107, 4294901760
        %v3189 = vsub.f32 %v2107, %v3188
        %v3190 = vand.u32 %v3189, 4294901760
        %v3191 = vsub.f32 %v3189, %v3190
        %v3192 = vand.u32 %v3191, 4294901760
        %3193 = vmatpush1.msra.mxu0 %v3192
        %3194 = vmatprep.subr.mxu0 0.0
        %v3195 = vand.u32 %v2108, 4294901760
        %v3196 = vsub.f32 %v2108, %v3195
        %v3197 = vand.u32 %v3196, 4294901760
        %v3198 = vsub.f32 %v3196, %v3197
        %v3199 = vand.u32 %v3198, 4294901760
        %3200 = vmatpush1.msra.mxu0 %v3199
        %3201 = vmatprep.subr.mxu0 0.0
        %v3202 = vand.u32 %v2109, 4294901760
        %v3203 = vsub.f32 %v2109, %v3202
        %v3204 = vand.u32 %v3203, 4294901760
        %v3205 = vsub.f32 %v3203, %v3204
        %v3206 = vand.u32 %v3205, 4294901760
        %3207 = vmatpush1.msra.mxu0 %v3206
        %3208 = vmatprep.subr.mxu0 0.0
        %v3209 = vand.u32 %v2110, 4294901760
        %v3210 = vsub.f32 %v2110, %v3209
        %v3211 = vand.u32 %v3210, 4294901760
        %v3212 = vsub.f32 %v3210, %v3211
        %v3213 = vand.u32 %v3212, 4294901760
        %3214 = vmatpush1.msra.mxu0 %v3213
        %3215 = vmatprep.subr.mxu0 0.0
        %v3216 = vand.u32 %v2111, 4294901760
        %v3217 = vsub.f32 %v2111, %v3216
        %v3218 = vand.u32 %v3217, 4294901760
        %v3219 = vsub.f32 %v3217, %v3218
        %v3220 = vand.u32 %v3219, 4294901760
        %3221 = vmatpush1.msra.mxu0 %v3220
        %3222 = vmatprep.subr.mxu0 0.0
        %v3223 = vand.u32 %v2112, 4294901760
        %v3224 = vsub.f32 %v2112, %v3223
        %v3225 = vand.u32 %v3224, 4294901760
        %v3226 = vsub.f32 %v3224, %v3225
        %v3227 = vand.u32 %v3226, 4294901760
        %3228 = vmatpush1.msra.mxu0 %v3227
        %3229 = vmatprep.subr.mxu0 0.0
        %3230 = vmatpush1.msra.mxu0 0.0
        %3231 = vmatprep.subr.mxu0 0.0
        %3232 = vmatpush1.msra.mxu0 0.0
        %3233 = vmatprep.subr.mxu0 0.0
        %3234 = vmatpush1.msra.mxu0 0.0
        %3235 = vmatprep.subr.mxu0 0.0
        %3236 = vmatpush1.msra.mxu0 0.0
        %3237 = vmatprep.subr.mxu0 0.0
        %3238 = vmatpush1.msra.mxu0 0.0
        %3239 = vmatprep.subr.mxu0 0.0
        %3240 = vmatpush1.msra.mxu0 0.0
        %3241 = vmatprep.subr.mxu0 0.0
        %3242 = vmatpush1.msra.mxu0 0.0
        %3243 = vmatprep.subr.mxu0 0.0
        %3244 = vmatpush1.msra.mxu0 0.0
        %3245 = vmatprep.subr.mxu0 0.0
        %3246 = vmatpush1.msra.mxu0 0.0
        %3247 = vmatprep.subr.mxu0 0.0
        %3248 = vmatpush1.msra.mxu0 0.0
        %3249 = vmatprep.subr.mxu0 0.0
        %3250 = vmatpush1.msra.mxu0 0.0
        %3251 = vmatprep.subr.mxu0 0.0
        %3252 = vmatpush1.msra.mxu0 0.0
        %3253 = vmatprep.subr.mxu0 0.0
        %3254 = vmatpush1.msra.mxu0 0.0
        %3255 = vmatprep.subr.mxu0 0.0
        %3256 = vmatpush1.msra.mxu0 0.0
        %3257 = vmatprep.subr.mxu0 0.0
        %3258 = vmatpush1.msra.mxu0 0.0
        %3259 = vmatprep.subr.mxu0 0.0
        %3260 = vmatpush1.msra.mxu0 0.0
        %3261 = vmatprep.mubr.f32.mxu0 0.0
        %v3262 = vand.u32 %v3025, 4294901760
        %3263 = vmatmul.mubr.f32.gmra.mrb[0].mxu0 %v3262
        %v3264 = vpop.f32.mrb[0].mxu0
        %v3265 = vadd.f32 %v3114, %v3264
        %v3266 = vpop.f32.mrb[0].mxu0
        %3267 = vdwg.mxu0
        %3268 = vmatprep.subr.mxu0 0.0
        %v3269 = vand.u32 %v2097, 4294901760
        %v3270 = vsub.f32 %v2097, %v3269
        %3271 = vmatpush1.msra.mxu0 %v3270
        %3272 = vmatprep.subr.mxu0 0.0
        %v3273 = vand.u32 %v2098, 4294901760
        %v3274 = vsub.f32 %v2098, %v3273
        %3275 = vmatpush1.msra.mxu0 %v3274
        %3276 = vmatprep.subr.mxu0 0.0
        %v3277 = vand.u32 %v2099, 4294901760
        %v3278 = vsub.f32 %v2099, %v3277
        %3279 = vmatpush1.msra.mxu0 %v3278
        %3280 = vmatprep.subr.mxu0 0.0
        %v3281 = vand.u32 %v2100, 4294901760
        %v3282 = vsub.f32 %v2100, %v3281
        %3283 = vmatpush1.msra.mxu0 %v3282
        %3284 = vmatprep.subr.mxu0 0.0
        %v3285 = vand.u32 %v2101, 4294901760
        %v3286 = vsub.f32 %v2101, %v3285
        %3287 = vmatpush1.msra.mxu0 %v3286
        %3288 = vmatprep.subr.mxu0 0.0
        %v3289 = vand.u32 %v2102, 4294901760
        %v3290 = vsub.f32 %v2102, %v3289
        %3291 = vmatpush1.msra.mxu0 %v3290
        %3292 = vmatprep.subr.mxu0 0.0
        %v3293 = vand.u32 %v2103, 4294901760
        %v3294 = vsub.f32 %v2103, %v3293
        %3295 = vmatpush1.msra.mxu0 %v3294
        %3296 = vmatprep.subr.mxu0 0.0
        %v3297 = vand.u32 %v2104, 4294901760
        %v3298 = vsub.f32 %v2104, %v3297
        %3299 = vmatpush1.msra.mxu0 %v3298
        %3300 = vmatprep.subr.mxu0 0.0
        %v3301 = vand.u32 %v2105, 4294901760
        %v3302 = vsub.f32 %v2105, %v3301
        %3303 = vmatpush1.msra.mxu0 %v3302
        %3304 = vmatprep.subr.mxu0 0.0
        %v3305 = vand.u32 %v2106, 4294901760
        %v3306 = vsub.f32 %v2106, %v3305
        %3307 = vmatpush1.msra.mxu0 %v3306
        %3308 = vmatprep.subr.mxu0 0.0
        %v3309 = vand.u32 %v2107, 4294901760
        %v3310 = vsub.f32 %v2107, %v3309
        %3311 = vmatpush1.msra.mxu0 %v3310
        %3312 = vmatprep.subr.mxu0 0.0
        %v3313 = vand.u32 %v2108, 4294901760
        %v3314 = vsub.f32 %v2108, %v3313
        %3315 = vmatpush1.msra.mxu0 %v3314
        %3316 = vmatprep.subr.mxu0 0.0
        %v3317 = vand.u32 %v2109, 4294901760
        %v3318 = vsub.f32 %v2109, %v3317
        %3319 = vmatpush1.msra.mxu0 %v3318
        %3320 = vmatprep.subr.mxu0 0.0
        %v3321 = vand.u32 %v2110, 4294901760
        %v3322 = vsub.f32 %v2110, %v3321
        %3323 = vmatpush1.msra.mxu0 %v3322
        %3324 = vmatprep.subr.mxu0 0.0
        %v3325 = vand.u32 %v2111, 4294901760
        %v3326 = vsub.f32 %v2111, %v3325
        %3327 = vmatpush1.msra.mxu0 %v3326
        %3328 = vmatprep.subr.mxu0 0.0
        %v3329 = vand.u32 %v2112, 4294901760
        %v3330 = vsub.f32 %v2112, %v3329
        %3331 = vmatpush1.msra.mxu0 %v3330
        %3332 = vmatprep.subr.mxu0 0.0
        %3333 = vmatpush1.msra.mxu0 0.0
        %3334 = vmatprep.subr.mxu0 0.0
        %3335 = vmatpush1.msra.mxu0 0.0
        %3336 = vmatprep.subr.mxu0 0.0
        %3337 = vmatpush1.msra.mxu0 0.0
        %3338 = vmatprep.subr.mxu0 0.0
        %3339 = vmatpush1.msra.mxu0 0.0
        %3340 = vmatprep.subr.mxu0 0.0
        %3341 = vmatpush1.msra.mxu0 0.0
        %3342 = vmatprep.subr.mxu0 0.0
        %3343 = vmatpush1.msra.mxu0 0.0
        %3344 = vmatprep.subr.mxu0 0.0
        %3345 = vmatpush1.msra.mxu0 0.0
        %3346 = vmatprep.subr.mxu0 0.0
        %3347 = vmatpush1.msra.mxu0 0.0
        %3348 = vmatprep.subr.mxu0 0.0
        %3349 = vmatpush1.msra.mxu0 0.0
        %3350 = vmatprep.subr.mxu0 0.0
        %3351 = vmatpush1.msra.mxu0 0.0
        %3352 = vmatprep.subr.mxu0 0.0
        %3353 = vmatpush1.msra.mxu0 0.0
        %3354 = vmatprep.subr.mxu0 0.0
        %3355 = vmatpush1.msra.mxu0 0.0
        %3356 = vmatprep.subr.mxu0 0.0
        %3357 = vmatpush1.msra.mxu0 0.0
        %3358 = vmatprep.subr.mxu0 0.0
        %3359 = vmatpush1.msra.mxu0 0.0
        %3360 = vmatprep.subr.mxu0 0.0
        %3361 = vmatpush1.msra.mxu0 0.0
        %3362 = vmatprep.subr.mxu0 0.0
        %3363 = vmatpush1.msra.mxu0 0.0
        %3364 = vmatprep.mubr.f32.mxu0 0.0
        %v3365 = vand.u32 %v3025, 4294901760
        %v3366 = vsub.f32 %v3025, %v3365
        %3367 = vmatmul.mubr.f32.gmra.mrb[0].mxu0 %v3366
        %v3368 = vpop.f32.mrb[0].mxu0
        %v3369 = vadd.f32 %v3265, %v3368
        %v3370 = vpop.f32.mrb[0].mxu0
        %3371 = vdwg.mxu0
        %3372 = vmatprep.subr.mxu0 0.0
        %v3373 = vand.u32 %v2097, 4294901760
        %3374 = vmatpush1.msra.mxu0 %v3373
        %3375 = vmatprep.subr.mxu0 0.0
        %v3376 = vand.u32 %v2098, 4294901760
        %3377 = vmatpush1.msra.mxu0 %v3376
        %3378 = vmatprep.subr.mxu0 0.0
        %v3379 = vand.u32 %v2099, 4294901760
        %3380 = vmatpush1.msra.mxu0 %v3379
        %3381 = vmatprep.subr.mxu0 0.0
        %v3382 = vand.u32 %v2100, 4294901760
        %3383 = vmatpush1.msra.mxu0 %v3382
        %3384 = vmatprep.subr.mxu0 0.0
        %v3385 = vand.u32 %v2101, 4294901760
        %3386 = vmatpush1.msra.mxu0 %v3385
        %3387 = vmatprep.subr.mxu0 0.0
        %v3388 = vand.u32 %v2102, 4294901760
        %3389 = vmatpush1.msra.mxu0 %v3388
        %3390 = vmatprep.subr.mxu0 0.0
        %v3391 = vand.u32 %v2103, 4294901760
        %3392 = vmatpush1.msra.mxu0 %v3391
        %3393 = vmatprep.subr.mxu0 0.0
        %v3394 = vand.u32 %v2104, 4294901760
        %3395 = vmatpush1.msra.mxu0 %v3394
        %3396 = vmatprep.subr.mxu0 0.0
        %v3397 = vand.u32 %v2105, 4294901760
        %3398 = vmatpush1.msra.mxu0 %v3397
        %3399 = vmatprep.subr.mxu0 0.0
        %v3400 = vand.u32 %v2106, 4294901760
        %3401 = vmatpush1.msra.mxu0 %v3400
        %3402 = vmatprep.subr.mxu0 0.0
        %v3403 = vand.u32 %v2107, 4294901760
        %3404 = vmatpush1.msra.mxu0 %v3403
        %3405 = vmatprep.subr.mxu0 0.0
        %v3406 = vand.u32 %v2108, 4294901760
        %3407 = vmatpush1.msra.mxu0 %v3406
        %3408 = vmatprep.subr.mxu0 0.0
        %v3409 = vand.u32 %v2109, 4294901760
        %3410 = vmatpush1.msra.mxu0 %v3409
        %3411 = vmatprep.subr.mxu0 0.0
        %v3412 = vand.u32 %v2110, 4294901760
        %3413 = vmatpush1.msra.mxu0 %v3412
        %3414 = vmatprep.subr.mxu0 0.0
        %v3415 = vand.u32 %v2111, 4294901760
        %3416 = vmatpush1.msra.mxu0 %v3415
        %3417 = vmatprep.subr.mxu0 0.0
        %v3418 = vand.u32 %v2112, 4294901760
        %3419 = vmatpush1.msra.mxu0 %v3418
        %3420 = vmatprep.subr.mxu0 0.0
        %3421 = vmatpush1.msra.mxu0 0.0
        %3422 = vmatprep.subr.mxu0 0.0
        %3423 = vmatpush1.msra.mxu0 0.0
        %3424 = vmatprep.subr.mxu0 0.0
        %3425 = vmatpush1.msra.mxu0 0.0
        %3426 = vmatprep.subr.mxu0 0.0
        %3427 = vmatpush1.msra.mxu0 0.0
        %3428 = vmatprep.subr.mxu0 0.0
        %3429 = vmatpush1.msra.mxu0 0.0
        %3430 = vmatprep.subr.mxu0 0.0
        %3431 = vmatpush1.msra.mxu0 0.0
        %3432 = vmatprep.subr.mxu0 0.0
        %3433 = vmatpush1.msra.mxu0 0.0
        %3434 = vmatprep.subr.mxu0 0.0
        %3435 = vmatpush1.msra.mxu0 0.0
        %3436 = vmatprep.subr.mxu0 0.0
        %3437 = vmatpush1.msra.mxu0 0.0
        %3438 = vmatprep.subr.mxu0 0.0
        %3439 = vmatpush1.msra.mxu0 0.0
        %3440 = vmatprep.subr.mxu0 0.0
        %3441 = vmatpush1.msra.mxu0 0.0
        %3442 = vmatprep.subr.mxu0 0.0
        %3443 = vmatpush1.msra.mxu0 0.0
        %3444 = vmatprep.subr.mxu0 0.0
        %3445 = vmatpush1.msra.mxu0 0.0
        %3446 = vmatprep.subr.mxu0 0.0
        %3447 = vmatpush1.msra.mxu0 0.0
        %3448 = vmatprep.subr.mxu0 0.0
        %3449 = vmatpush1.msra.mxu0 0.0
        %3450 = vmatprep.subr.mxu0 0.0
        %3451 = vmatpush1.msra.mxu0 0.0
        %3452 = vmatprep.mubr.f32.mxu0 0.0
        %v3453 = vand.u32 %v3025, 4294901760
        %v3454 = vsub.f32 %v3025, %v3453
        %v3455 = vand.u32 %v3454, 4294901760
        %3456 = vmatmul.mubr.f32.gmra.mrb[0].mxu0 %v3455
        %v3457 = vpop.f32.mrb[0].mxu0
        %v3458 = vadd.f32 %v3369, %v3457
        %v3459 = vpop.f32.mrb[0].mxu0
        %3460 = vdwg.mxu0
        %3461 = vmatprep.subr.mxu0 0.0
        %v3462 = vand.u32 %v2097, 4294901760
        %v3463 = vsub.f32 %v2097, %v3462
        %v3464 = vand.u32 %v3463, 4294901760
        %3465 = vmatpush1.msra.mxu0 %v3464
        %3466 = vmatprep.subr.mxu0 0.0
        %v3467 = vand.u32 %v2098, 4294901760
        %v3468 = vsub.f32 %v2098, %v3467
        %v3469 = vand.u32 %v3468, 4294901760
        %3470 = vmatpush1.msra.mxu0 %v3469
        %3471 = vmatprep.subr.mxu0 0.0
        %v3472 = vand.u32 %v2099, 4294901760
        %v3473 = vsub.f32 %v2099, %v3472
        %v3474 = vand.u32 %v3473, 4294901760
        %3475 = vmatpush1.msra.mxu0 %v3474
        %3476 = vmatprep.subr.mxu0 0.0
        %v3477 = vand.u32 %v2100, 4294901760
        %v3478 = vsub.f32 %v2100, %v3477
        %v3479 = vand.u32 %v3478, 4294901760
        %3480 = vmatpush1.msra.mxu0 %v3479
        %3481 = vmatprep.subr.mxu0 0.0
        %v3482 = vand.u32 %v2101, 4294901760
        %v3483 = vsub.f32 %v2101, %v3482
        %v3484 = vand.u32 %v3483, 4294901760
        %3485 = vmatpush1.msra.mxu0 %v3484
        %3486 = vmatprep.subr.mxu0 0.0
        %v3487 = vand.u32 %v2102, 4294901760
        %v3488 = vsub.f32 %v2102, %v3487
        %v3489 = vand.u32 %v3488, 4294901760
        %3490 = vmatpush1.msra.mxu0 %v3489
        %3491 = vmatprep.subr.mxu0 0.0
        %v3492 = vand.u32 %v2103, 4294901760
        %v3493 = vsub.f32 %v2103, %v3492
        %v3494 = vand.u32 %v3493, 4294901760
        %3495 = vmatpush1.msra.mxu0 %v3494
        %3496 = vmatprep.subr.mxu0 0.0
        %v3497 = vand.u32 %v2104, 4294901760
        %v3498 = vsub.f32 %v2104, %v3497
        %v3499 = vand.u32 %v3498, 4294901760
        %3500 = vmatpush1.msra.mxu0 %v3499
        %3501 = vmatprep.subr.mxu0 0.0
        %v3502 = vand.u32 %v2105, 4294901760
        %v3503 = vsub.f32 %v2105, %v3502
        %v3504 = vand.u32 %v3503, 4294901760
        %3505 = vmatpush1.msra.mxu0 %v3504
        %3506 = vmatprep.subr.mxu0 0.0
        %v3507 = vand.u32 %v2106, 4294901760
        %v3508 = vsub.f32 %v2106, %v3507
        %v3509 = vand.u32 %v3508, 4294901760
        %3510 = vmatpush1.msra.mxu0 %v3509
        %3511 = vmatprep.subr.mxu0 0.0
        %v3512 = vand.u32 %v2107, 4294901760
        %v3513 = vsub.f32 %v2107, %v3512
        %v3514 = vand.u32 %v3513, 4294901760
        %3515 = vmatpush1.msra.mxu0 %v3514
        %3516 = vmatprep.subr.mxu0 0.0
        %v3517 = vand.u32 %v2108, 4294901760
        %v3518 = vsub.f32 %v2108, %v3517
        %v3519 = vand.u32 %v3518, 4294901760
        %3520 = vmatpush1.msra.mxu0 %v3519
        %3521 = vmatprep.subr.mxu0 0.0
        %v3522 = vand.u32 %v2109, 4294901760
        %v3523 = vsub.f32 %v2109, %v3522
        %v3524 = vand.u32 %v3523, 4294901760
        %3525 = vmatpush1.msra.mxu0 %v3524
        %3526 = vmatprep.subr.mxu0 0.0
        %v3527 = vand.u32 %v2110, 4294901760
        %v3528 = vsub.f32 %v2110, %v3527
        %v3529 = vand.u32 %v3528, 4294901760
        %3530 = vmatpush1.msra.mxu0 %v3529
        %3531 = vmatprep.subr.mxu0 0.0
        %v3532 = vand.u32 %v2111, 4294901760
        %v3533 = vsub.f32 %v2111, %v3532
        %v3534 = vand.u32 %v3533, 4294901760
        %3535 = vmatpush1.msra.mxu0 %v3534
        %3536 = vmatprep.subr.mxu0 0.0
        %v3537 = vand.u32 %v2112, 4294901760
        %v3538 = vsub.f32 %v2112, %v3537
        %v3539 = vand.u32 %v3538, 4294901760
        %3540 = vmatpush1.msra.mxu0 %v3539
        %3541 = vmatprep.subr.mxu0 0.0
        %3542 = vmatpush1.msra.mxu0 0.0
        %3543 = vmatprep.subr.mxu0 0.0
        %3544 = vmatpush1.msra.mxu0 0.0
        %3545 = vmatprep.subr.mxu0 0.0
        %3546 = vmatpush1.msra.mxu0 0.0
        %3547 = vmatprep.subr.mxu0 0.0
        %3548 = vmatpush1.msra.mxu0 0.0
        %3549 = vmatprep.subr.mxu0 0.0
        %3550 = vmatpush1.msra.mxu0 0.0
        %3551 = vmatprep.subr.mxu0 0.0
        %3552 = vmatpush1.msra.mxu0 0.0
        %3553 = vmatprep.subr.mxu0 0.0
        %3554 = vmatpush1.msra.mxu0 0.0
        %3555 = vmatprep.subr.mxu0 0.0
        %3556 = vmatpush1.msra.mxu0 0.0
        %3557 = vmatprep.subr.mxu0 0.0
        %3558 = vmatpush1.msra.mxu0 0.0
        %3559 = vmatprep.subr.mxu0 0.0
        %3560 = vmatpush1.msra.mxu0 0.0
        %3561 = vmatprep.subr.mxu0 0.0
        %3562 = vmatpush1.msra.mxu0 0.0
        %3563 = vmatprep.subr.mxu0 0.0
        %3564 = vmatpush1.msra.mxu0 0.0
        %3565 = vmatprep.subr.mxu0 0.0
        %3566 = vmatpush1.msra.mxu0 0.0
        %3567 = vmatprep.subr.mxu0 0.0
        %3568 = vmatpush1.msra.mxu0 0.0
        %3569 = vmatprep.subr.mxu0 0.0
        %3570 = vmatpush1.msra.mxu0 0.0
        %3571 = vmatprep.subr.mxu0 0.0
        %3572 = vmatpush1.msra.mxu0 0.0
        %3573 = vmatprep.mubr.f32.mxu0 0.0
        %v3574 = vand.u32 %v3025, 4294901760
        %3575 = vmatmul.mubr.f32.gmra.mrb[0].mxu0 %v3574
        %v3576 = vpop.f32.mrb[0].mxu0
        %v3577 = vadd.f32 %v3458, %v3576
        %v3578 = vpop.f32.mrb[0].mxu0
        %3579 = vdwg.mxu0
        %3580 = vmatprep.subr.mxu0 0.0
        %v3581 = vand.u32 %v2097, 4294901760
        %3582 = vmatpush1.msra.mxu0 %v3581
        %3583 = vmatprep.subr.mxu0 0.0
        %v3584 = vand.u32 %v2098, 4294901760
        %3585 = vmatpush1.msra.mxu0 %v3584
        %3586 = vmatprep.subr.mxu0 0.0
        %v3587 = vand.u32 %v2099, 4294901760
        %3588 = vmatpush1.msra.mxu0 %v3587
        %3589 = vmatprep.subr.mxu0 0.0
        %v3590 = vand.u32 %v2100, 4294901760
        %3591 = vmatpush1.msra.mxu0 %v3590
        %3592 = vmatprep.subr.mxu0 0.0
        %v3593 = vand.u32 %v2101, 4294901760
        %3594 = vmatpush1.msra.mxu0 %v3593
        %3595 = vmatprep.subr.mxu0 0.0
        %v3596 = vand.u32 %v2102, 4294901760
        %3597 = vmatpush1.msra.mxu0 %v3596
        %3598 = vmatprep.subr.mxu0 0.0
        %v3599 = vand.u32 %v2103, 4294901760
        %3600 = vmatpush1.msra.mxu0 %v3599
        %3601 = vmatprep.subr.mxu0 0.0
        %v3602 = vand.u32 %v2104, 4294901760
        %3603 = vmatpush1.msra.mxu0 %v3602
        %3604 = vmatprep.subr.mxu0 0.0
        %v3605 = vand.u32 %v2105, 4294901760
        %3606 = vmatpush1.msra.mxu0 %v3605
        %3607 = vmatprep.subr.mxu0 0.0
        %v3608 = vand.u32 %v2106, 4294901760
        %3609 = vmatpush1.msra.mxu0 %v3608
        %3610 = vmatprep.subr.mxu0 0.0
        %v3611 = vand.u32 %v2107, 4294901760
        %3612 = vmatpush1.msra.mxu0 %v3611
        %3613 = vmatprep.subr.mxu0 0.0
        %v3614 = vand.u32 %v2108, 4294901760
        %3615 = vmatpush1.msra.mxu0 %v3614
        %3616 = vmatprep.subr.mxu0 0.0
        %v3617 = vand.u32 %v2109, 4294901760
        %3618 = vmatpush1.msra.mxu0 %v3617
        %3619 = vmatprep.subr.mxu0 0.0
        %v3620 = vand.u32 %v2110, 4294901760
        %3621 = vmatpush1.msra.mxu0 %v3620
        %3622 = vmatprep.subr.mxu0 0.0
        %v3623 = vand.u32 %v2111, 4294901760
        %3624 = vmatpush1.msra.mxu0 %v3623
        %3625 = vmatprep.subr.mxu0 0.0
        %v3626 = vand.u32 %v2112, 4294901760
        %3627 = vmatpush1.msra.mxu0 %v3626
        %3628 = vmatprep.subr.mxu0 0.0
        %3629 = vmatpush1.msra.mxu0 0.0
        %3630 = vmatprep.subr.mxu0 0.0
        %3631 = vmatpush1.msra.mxu0 0.0
        %3632 = vmatprep.subr.mxu0 0.0
        %3633 = vmatpush1.msra.mxu0 0.0
        %3634 = vmatprep.subr.mxu0 0.0
        %3635 = vmatpush1.msra.mxu0 0.0
        %3636 = vmatprep.subr.mxu0 0.0
        %3637 = vmatpush1.msra.mxu0 0.0
        %3638 = vmatprep.subr.mxu0 0.0
        %3639 = vmatpush1.msra.mxu0 0.0
        %3640 = vmatprep.subr.mxu0 0.0
        %3641 = vmatpush1.msra.mxu0 0.0
        %3642 = vmatprep.subr.mxu0 0.0
        %3643 = vmatpush1.msra.mxu0 0.0
        %3644 = vmatprep.subr.mxu0 0.0
        %3645 = vmatpush1.msra.mxu0 0.0
        %3646 = vmatprep.subr.mxu0 0.0
        %3647 = vmatpush1.msra.mxu0 0.0
        %3648 = vmatprep.subr.mxu0 0.0
        %3649 = vmatpush1.msra.mxu0 0.0
        %3650 = vmatprep.subr.mxu0 0.0
        %3651 = vmatpush1.msra.mxu0 0.0
        %3652 = vmatprep.subr.mxu0 0.0
        %3653 = vmatpush1.msra.mxu0 0.0
        %3654 = vmatprep.subr.mxu0 0.0
        %3655 = vmatpush1.msra.mxu0 0.0
        %3656 = vmatprep.subr.mxu0 0.0
        %3657 = vmatpush1.msra.mxu0 0.0
        %3658 = vmatprep.subr.mxu0 0.0
        %3659 = vmatpush1.msra.mxu0 0.0
        %3660 = vmatprep.mubr.f32.mxu0 0.0
        %v3661 = vand.u32 %v3025, 4294901760
        %3662 = vmatmul.mubr.f32.gmra.mrb[0].mxu0 %v3661
        %v3663 = vpop.f32.mrb[0].mxu0
        %v3664 = vadd.f32 %v3577, %v3663
        %v3665 = vpop.f32.mrb[0].mxu0
        %3666 = vdwg.mxu0
        %v3667 = vld [vmem:[#allocation2] sm:$0xff]
        %v3668 = vadd.f32 %v3667, %v3664
        %3669 = vst [vmem:[#allocation2] sm:$0xff] %v3668
        %p3670 = scmp.eq.s32.totalorder %s38, 1
        // Predicated region
        $region93: #{tpu_custom_call.1} parent=67 // pred_check
          %p3671 = pneg %p3670
        $region94: #{tpu_custom_call.1} parent=67 // pred_check_branch
          %3673 = sbr.rel (%p3671) target = $region96
        $region95: #{tpu_custom_call.1} parent=67 // pred_region
          %v3674 = vld [vmem:[%s470] sm:$0xff]
          %v3675 = vld [vmem:[#allocation2] sm:$0xff]
          %v3676 = vld [vmem:[%s3] sm:$0x1]
          %v3678 = vlaneseq
          %v3679 = vshrl.u32 %v3678, 7
          %v3680 = vsub.s32 0, %v3679
          %v3681 = vrot.slane %v3676, %v3680
          %v3683 = vadd.f32 %v3675, %v3681
          %vm3684 = vcmp.lt.s32.totalorder %v2116, 32
          %v3685 = vsel %vm3684, 1, 0
          %v3686 = vcvt.s32.f32 %v3685
          %v3687 = vadd.f32 %v3683, %v3674
          %v3688 = vld [vmem:[%s4] sm:$0x1]
          %v3689 = vld [vmem:[%s5] sm:$0x1]
          %3690 = vadd.xlane.f32.xlu0 %v3687
          %v3691 = vpop.xlane.xlu0 %3690
          %v3692 = vmul.f32 %v3691, 0.03125
          %v3693 = vsub.f32 %v3687, %v3692
          %v3694 = vmul.f32 %v3693, %v3686
          %v3695 = vmul.f32 %v3694, %v3694
          %3696 = vadd.xlane.f32.xlu0 %v3695
          %v3697 = vpop.xlane.xlu0 %3696
          %v3698 = vmul.f32 %v3697, 0.03125
          %v3699 = vadd.f32 %v3698, 1e-05
          %v3700 = vrsqrt.pop %v3699
          %v3701 = vmul.f32 %v3694, %v3700
          %v3703 = vlaneseq
          %v3704 = vshrl.u32 %v3703, 7
          %v3705 = vsub.s32 0, %v3704
          %v3706 = vrot.slane %v3688, %v3705
          %v3708 = vmul.f32 %v3701, %v3706
          %v3710 = vlaneseq
          %v3711 = vshrl.u32 %v3710, 7
          %v3712 = vsub.s32 0, %v3711
          %v3713 = vrot.slane %v3689, %v3712
          %v3715 = vadd.f32 %v3708, %v3713
          %v3716 = vld [vmem:[#allocation9] sm:$0xff]
          %v3717 = vld [vmem:[#allocation9 + $0x8] sm:$0xff]
          %v3718 = vld [vmem:[#allocation9 + $0x10] sm:$0xff]
          %v3719 = vld [vmem:[#allocation9 + $0x18] sm:$0xff]
          %v3720 = vld [vmem:[#allocation9 + $0x20] sm:$0xff]
          %v3721 = vld [vmem:[#allocation9 + $0x28] sm:$0xff]
          %v3722 = vld [vmem:[#allocation9 + $0x30] sm:$0xff]
          %v3723 = vld [vmem:[#allocation9 + $0x38] sm:$0xff]
          %v3724 = vld [vmem:[#allocation9 + $0x40] sm:$0xff]
          %v3725 = vld [vmem:[#allocation9 + $0x48] sm:$0xff]
          %v3726 = vld [vmem:[#allocation9 + $0x50] sm:$0xff]
          %v3727 = vld [vmem:[#allocation9 + $0x58] sm:$0xff]
          %v3728 = vld [vmem:[#allocation9 + $0x60] sm:$0xff]
          %v3729 = vld [vmem:[#allocation9 + $0x68] sm:$0xff]
          %v3730 = vld [vmem:[#allocation9 + $0x70] sm:$0xff]
          %v3731 = vld [vmem:[#allocation9 + $0x78] sm:$0xff]
          %v3732 = vld [vmem:[%s9] sm:$0x1]
          %v3734 = vlaneseq
          %v3735 = vshrl.u32 %v3734, 7
          %v3736 = vsub.s32 0, %v3735
          %v3737 = vrot.slane %v3732, %v3736
          %3739 = vmatprep.subr.mxu0 0.0
          %v3740 = vand.u32 %v3716, 4294901760
          %3741 = vmatpush1.msra.mxu0 %v3740
          %3742 = vmatprep.subr.mxu0 0.0
          %v3743 = vand.u32 %v3717, 4294901760
          %3744 = vmatpush1.msra.mxu0 %v3743
          %3745 = vmatprep.subr.mxu0 0.0
          %v3746 = vand.u32 %v3718, 4294901760
          %3747 = vmatpush1.msra.mxu0 %v3746
          %3748 = vmatprep.subr.mxu0 0.0
          %v3749 = vand.u32 %v3719, 4294901760
          %3750 = vmatpush1.msra.mxu0 %v3749
          %3751 = vmatprep.subr.mxu0 0.0
          %v3752 = vand.u32 %v3720, 4294901760
          %3753 = vmatpush1.msra.mxu0 %v3752
          %3754 = vmatprep.subr.mxu0 0.0
          %v3755 = vand.u32 %v3721, 4294901760
          %3756 = vmatpush1.msra.mxu0 %v3755
          %3757 = vmatprep.subr.mxu0 0.0
          %v3758 = vand.u32 %v3722, 4294901760
          %3759 = vmatpush1.msra.mxu0 %v3758
          %3760 = vmatprep.subr.mxu0 0.0
          %v3761 = vand.u32 %v3723, 4294901760
          %3762 = vmatpush1.msra.mxu0 %v3761
          %3763 = vmatprep.subr.mxu0 0.0
          %v3764 = vand.u32 %v3724, 4294901760
          %3765 = vmatpush1.msra.mxu0 %v3764
          %3766 = vmatprep.subr.mxu0 0.0
          %v3767 = vand.u32 %v3725, 4294901760
          %3768 = vmatpush1.msra.mxu0 %v3767
          %3769 = vmatprep.subr.mxu0 0.0
          %v3770 = vand.u32 %v3726, 4294901760
          %3771 = vmatpush1.msra.mxu0 %v3770
          %3772 = vmatprep.subr.mxu0 0.0
          %v3773 = vand.u32 %v3727, 4294901760
          %3774 = vmatpush1.msra.mxu0 %v3773
          %3775 = vmatprep.subr.mxu0 0.0
          %v3776 = vand.u32 %v3728, 4294901760
          %3777 = vmatpush1.msra.mxu0 %v3776
          %3778 = vmatprep.subr.mxu0 0.0
          %v3779 = vand.u32 %v3729, 4294901760
          %3780 = vmatpush1.msra.mxu0 %v3779
          %3781 = vmatprep.subr.mxu0 0.0
          %v3782 = vand.u32 %v3730, 4294901760
          %3783 = vmatpush1.msra.mxu0 %v3782
          %3784 = vmatprep.subr.mxu0 0.0
          %v3785 = vand.u32 %v3731, 4294901760
          %3786 = vmatpush1.msra.mxu0 %v3785
          %3787 = vmatprep.subr.mxu0 0.0
          %3788 = vmatpush1.msra.mxu0 0.0
          %3789 = vmatprep.subr.mxu0 0.0
          %3790 = vmatpush1.msra.mxu0 0.0
          %3791 = vmatprep.subr.mxu0 0.0
          %3792 = vmatpush1.msra.mxu0 0.0
          %3793 = vmatprep.subr.mxu0 0.0
          %3794 = vmatpush1.msra.mxu0 0.0
          %3795 = vmatprep.subr.mxu0 0.0
          %3796 = vmatpush1.msra.mxu0 0.0
          %3797 = vmatprep.subr.mxu0 0.0
          %3798 = vmatpush1.msra.mxu0 0.0
          %3799 = vmatprep.subr.mxu0 0.0
          %3800 = vmatpush1.msra.mxu0 0.0
          %3801 = vmatprep.subr.mxu0 0.0
          %3802 = vmatpush1.msra.mxu0 0.0
          %3803 = vmatprep.subr.mxu0 0.0
          %3804 = vmatpush1.msra.mxu0 0.0
          %3805 = vmatprep.subr.mxu0 0.0
          %3806 = vmatpush1.msra.mxu0 0.0
          %3807 = vmatprep.subr.mxu0 0.0
          %3808 = vmatpush1.msra.mxu0 0.0
          %3809 = vmatprep.subr.mxu0 0.0
          %3810 = vmatpush1.msra.mxu0 0.0
          %3811 = vmatprep.subr.mxu0 0.0
          %3812 = vmatpush1.msra.mxu0 0.0
          %3813 = vmatprep.subr.mxu0 0.0
          %3814 = vmatpush1.msra.mxu0 0.0
          %3815 = vmatprep.subr.mxu0 0.0
          %3816 = vmatpush1.msra.mxu0 0.0
          %3817 = vmatprep.subr.mxu0 0.0
          %3818 = vmatpush1.msra.mxu0 0.0
          %3819 = vmatprep.mubr.f32.mxu0 0.0
          %v3820 = vand.u32 %v3715, 4294901760
          %v3821 = vsub.f32 %v3715, %v3820
          %v3822 = vand.u32 %v3821, 4294901760
          %v3823 = vsub.f32 %v3821, %v3822
          %v3824 = vand.u32 %v3823, 4294901760
          %3825 = vmatmul.mubr.f32.gmra.mrb[0].mxu0 %v3824
          %v3826 = vpop.f32.mrb[0].mxu0
          %v3827 = vadd.f32 %v3737, %v3826
          %v3828 = vpop.f32.mrb[0].mxu0
          %3829 = vdwg.mxu0
          %3830 = vmatprep.subr.mxu0 0.0
          %v3831 = vand.u32 %v3716, 4294901760
          %v3832 = vsub.f32 %v3716, %v3831
          %v3833 = vand.u32 %v3832, 4294901760
          %v3834 = vsub.f32 %v3832, %v3833
          %v3835 = vand.u32 %v3834, 4294901760
          %3836 = vmatpush1.msra.mxu0 %v3835
          %3837 = vmatprep.subr.mxu0 0.0
          %v3838 = vand.u32 %v3717, 4294901760
          %v3839 = vsub.f32 %v3717, %v3838
          %v3840 = vand.u32 %v3839, 4294901760
          %v3841 = vsub.f32 %v3839, %v3840
          %v3842 = vand.u32 %v3841, 4294901760
          %3843 = vmatpush1.msra.mxu0 %v3842
          %3844 = vmatprep.subr.mxu0 0.0
          %v3845 = vand.u32 %v3718, 4294901760
          %v3846 = vsub.f32 %v3718, %v3845
          %v3847 = vand.u32 %v3846, 4294901760
          %v3848 = vsub.f32 %v3846, %v3847
          %v3849 = vand.u32 %v3848, 4294901760
          %3850 = vmatpush1.msra.mxu0 %v3849
          %3851 = vmatprep.subr.mxu0 0.0
          %v3852 = vand.u32 %v3719, 4294901760
          %v3853 = vsub.f32 %v3719, %v3852
          %v3854 = vand.u32 %v3853, 4294901760
          %v3855 = vsub.f32 %v3853, %v3854
          %v3856 = vand.u32 %v3855, 4294901760
          %3857 = vmatpush1.msra.mxu0 %v3856
          %3858 = vmatprep.subr.mxu0 0.0
          %v3859 = vand.u32 %v3720, 4294901760
          %v3860 = vsub.f32 %v3720, %v3859
          %v3861 = vand.u32 %v3860, 4294901760
          %v3862 = vsub.f32 %v3860, %v3861
          %v3863 = vand.u32 %v3862, 4294901760
          %3864 = vmatpush1.msra.mxu0 %v3863
          %3865 = vmatprep.subr.mxu0 0.0
          %v3866 = vand.u32 %v3721, 4294901760
          %v3867 = vsub.f32 %v3721, %v3866
          %v3868 = vand.u32 %v3867, 4294901760
          %v3869 = vsub.f32 %v3867, %v3868
          %v3870 = vand.u32 %v3869, 4294901760
          %3871 = vmatpush1.msra.mxu0 %v3870
          %3872 = vmatprep.subr.mxu0 0.0
          %v3873 = vand.u32 %v3722, 4294901760
          %v3874 = vsub.f32 %v3722, %v3873
          %v3875 = vand.u32 %v3874, 4294901760
          %v3876 = vsub.f32 %v3874, %v3875
          %v3877 = vand.u32 %v3876, 4294901760
          %3878 = vmatpush1.msra.mxu0 %v3877
          %3879 = vmatprep.subr.mxu0 0.0
          %v3880 = vand.u32 %v3723, 4294901760
          %v3881 = vsub.f32 %v3723, %v3880
          %v3882 = vand.u32 %v3881, 4294901760
          %v3883 = vsub.f32 %v3881, %v3882
          %v3884 = vand.u32 %v3883, 4294901760
          %3885 = vmatpush1.msra.mxu0 %v3884
          %3886 = vmatprep.subr.mxu0 0.0
          %v3887 = vand.u32 %v3724, 4294901760
          %v3888 = vsub.f32 %v3724, %v3887
          %v3889 = vand.u32 %v3888, 4294901760
          %v3890 = vsub.f32 %v3888, %v3889
          %v3891 = vand.u32 %v3890, 4294901760
          %3892 = vmatpush1.msra.mxu0 %v3891
          %3893 = vmatprep.subr.mxu0 0.0
          %v3894 = vand.u32 %v3725, 4294901760
          %v3895 = vsub.f32 %v3725, %v3894
          %v3896 = vand.u32 %v3895, 4294901760
          %v3897 = vsub.f32 %v3895, %v3896
          %v3898 = vand.u32 %v3897, 4294901760
          %3899 = vmatpush1.msra.mxu0 %v3898
          %3900 = vmatprep.subr.mxu0 0.0
          %v3901 = vand.u32 %v3726, 4294901760
          %v3902 = vsub.f32 %v3726, %v3901
          %v3903 = vand.u32 %v3902, 4294901760
          %v3904 = vsub.f32 %v3902, %v3903
          %v3905 = vand.u32 %v3904, 4294901760
          %3906 = vmatpush1.msra.mxu0 %v3905
          %3907 = vmatprep.subr.mxu0 0.0
          %v3908 = vand.u32 %v3727, 4294901760
          %v3909 = vsub.f32 %v3727, %v3908
          %v3910 = vand.u32 %v3909, 4294901760
          %v3911 = vsub.f32 %v3909, %v3910
          %v3912 = vand.u32 %v3911, 4294901760
          %3913 = vmatpush1.msra.mxu0 %v3912
          %3914 = vmatprep.subr.mxu0 0.0
          %v3915 = vand.u32 %v3728, 4294901760
          %v3916 = vsub.f32 %v3728, %v3915
          %v3917 = vand.u32 %v3916, 4294901760
          %v3918 = vsub.f32 %v3916, %v3917
          %v3919 = vand.u32 %v3918, 4294901760
          %3920 = vmatpush1.msra.mxu0 %v3919
          %3921 = vmatprep.subr.mxu0 0.0
          %v3922 = vand.u32 %v3729, 4294901760
          %v3923 = vsub.f32 %v3729, %v3922
          %v3924 = vand.u32 %v3923, 4294901760
          %v3925 = vsub.f32 %v3923, %v3924
          %v3926 = vand.u32 %v3925, 4294901760
          %3927 = vmatpush1.msra.mxu0 %v3926
          %3928 = vmatprep.subr.mxu0 0.0
          %v3929 = vand.u32 %v3730, 4294901760
          %v3930 = vsub.f32 %v3730, %v3929
          %v3931 = vand.u32 %v3930, 4294901760
          %v3932 = vsub.f32 %v3930, %v3931
          %v3933 = vand.u32 %v3932, 4294901760
          %3934 = vmatpush1.msra.mxu0 %v3933
          %3935 = vmatprep.subr.mxu0 0.0
          %v3936 = vand.u32 %v3731, 4294901760
          %v3937 = vsub.f32 %v3731, %v3936
          %v3938 = vand.u32 %v3937, 4294901760
          %v3939 = vsub.f32 %v3937, %v3938
          %v3940 = vand.u32 %v3939, 4294901760
          %3941 = vmatpush1.msra.mxu0 %v3940
          %3942 = vmatprep.subr.mxu0 0.0
          %3943 = vmatpush1.msra.mxu0 0.0
          %3944 = vmatprep.subr.mxu0 0.0
          %3945 = vmatpush1.msra.mxu0 0.0
          %3946 = vmatprep.subr.mxu0 0.0
          %3947 = vmatpush1.msra.mxu0 0.0
          %3948 = vmatprep.subr.mxu0 0.0
          %3949 = vmatpush1.msra.mxu0 0.0
          %3950 = vmatprep.subr.mxu0 0.0
          %3951 = vmatpush1.msra.mxu0 0.0
          %3952 = vmatprep.subr.mxu0 0.0
          %3953 = vmatpush1.msra.mxu0 0.0
          %3954 = vmatprep.subr.mxu0 0.0
          %3955 = vmatpush1.msra.mxu0 0.0
          %3956 = vmatprep.subr.mxu0 0.0
          %3957 = vmatpush1.msra.mxu0 0.0
          %3958 = vmatprep.subr.mxu0 0.0
          %3959 = vmatpush1.msra.mxu0 0.0
          %3960 = vmatprep.subr.mxu0 0.0
          %3961 = vmatpush1.msra.mxu0 0.0
          %3962 = vmatprep.subr.mxu0 0.0
          %3963 = vmatpush1.msra.mxu0 0.0
          %3964 = vmatprep.subr.mxu0 0.0
          %3965 = vmatpush1.msra.mxu0 0.0
          %3966 = vmatprep.subr.mxu0 0.0
          %3967 = vmatpush1.msra.mxu0 0.0
          %3968 = vmatprep.subr.mxu0 0.0
          %3969 = vmatpush1.msra.mxu0 0.0
          %3970 = vmatprep.subr.mxu0 0.0
          %3971 = vmatpush1.msra.mxu0 0.0
          %3972 = vmatprep.subr.mxu0 0.0
          %3973 = vmatpush1.msra.mxu0 0.0
          %3974 = vmatprep.mubr.f32.mxu0 0.0
          %v3975 = vand.u32 %v3715, 4294901760
          %3976 = vmatmul.mubr.f32.gmra.mrb[0].mxu0 %v3975
          %v3977 = vpop.f32.mrb[0].mxu0
          %v3978 = vadd.f32 %v3827, %v3977
          %v3979 = vpop.f32.mrb[0].mxu0
          %3980 = vdwg.mxu0
          %3981 = vmatprep.subr.mxu0 0.0
          %v3982 = vand.u32 %v3716, 4294901760
          %v3983 = vsub.f32 %v3716, %v3982
          %3984 = vmatpush1.msra.mxu0 %v3983
          %3985 = vmatprep.subr.mxu0 0.0
          %v3986 = vand.u32 %v3717, 4294901760
          %v3987 = vsub.f32 %v3717, %v3986
          %3988 = vmatpush1.msra.mxu0 %v3987
          %3989 = vmatprep.subr.mxu0 0.0
          %v3990 = vand.u32 %v3718, 4294901760
          %v3991 = vsub.f32 %v3718, %v3990
          %3992 = vmatpush1.msra.mxu0 %v3991
          %3993 = vmatprep.subr.mxu0 0.0
          %v3994 = vand.u32 %v3719, 4294901760
          %v3995 = vsub.f32 %v3719, %v3994
          %3996 = vmatpush1.msra.mxu0 %v3995
          %3997 = vmatprep.subr.mxu0 0.0
          %v3998 = vand.u32 %v3720, 4294901760
          %v3999 = vsub.f32 %v3720, %v3998
          %4000 = vmatpush1.msra.mxu0 %v3999
          %4001 = vmatprep.subr.mxu0 0.0
          %v4002 = vand.u32 %v3721, 4294901760
          %v4003 = vsub.f32 %v3721, %v4002
          %4004 = vmatpush1.msra.mxu0 %v4003
          %4005 = vmatprep.subr.mxu0 0.0
          %v4006 = vand.u32 %v3722, 4294901760
          %v4007 = vsub.f32 %v3722, %v4006
          %4008 = vmatpush1.msra.mxu0 %v4007
          %4009 = vmatprep.subr.mxu0 0.0
          %v4010 = vand.u32 %v3723, 4294901760
          %v4011 = vsub.f32 %v3723, %v4010
          %4012 = vmatpush1.msra.mxu0 %v4011
          %4013 = vmatprep.subr.mxu0 0.0
          %v4014 = vand.u32 %v3724, 4294901760
          %v4015 = vsub.f32 %v3724, %v4014
          %4016 = vmatpush1.msra.mxu0 %v4015
          %4017 = vmatprep.subr.mxu0 0.0
          %v4018 = vand.u32 %v3725, 4294901760
          %v4019 = vsub.f32 %v3725, %v4018
          %4020 = vmatpush1.msra.mxu0 %v4019
          %4021 = vmatprep.subr.mxu0 0.0
          %v4022 = vand.u32 %v3726, 4294901760
          %v4023 = vsub.f32 %v3726, %v4022
          %4024 = vmatpush1.msra.mxu0 %v4023
          %4025 = vmatprep.subr.mxu0 0.0
          %v4026 = vand.u32 %v3727, 4294901760
          %v4027 = vsub.f32 %v3727, %v4026
          %4028 = vmatpush1.msra.mxu0 %v4027
          %4029 = vmatprep.subr.mxu0 0.0
          %v4030 = vand.u32 %v3728, 4294901760
          %v4031 = vsub.f32 %v3728, %v4030
          %4032 = vmatpush1.msra.mxu0 %v4031
          %4033 = vmatprep.subr.mxu0 0.0
          %v4034 = vand.u32 %v3729, 4294901760
          %v4035 = vsub.f32 %v3729, %v4034
          %4036 = vmatpush1.msra.mxu0 %v4035
          %4037 = vmatprep.subr.mxu0 0.0
          %v4038 = vand.u32 %v3730, 4294901760
          %v4039 = vsub.f32 %v3730, %v4038
          %4040 = vmatpush1.msra.mxu0 %v4039
          %4041 = vmatprep.subr.mxu0 0.0
          %v4042 = vand.u32 %v3731, 4294901760
          %v4043 = vsub.f32 %v3731, %v4042
          %4044 = vmatpush1.msra.mxu0 %v4043
          %4045 = vmatprep.subr.mxu0 0.0
          %4046 = vmatpush1.msra.mxu0 0.0
          %4047 = vmatprep.subr.mxu0 0.0
          %4048 = vmatpush1.msra.mxu0 0.0
          %4049 = vmatprep.subr.mxu0 0.0
          %4050 = vmatpush1.msra.mxu0 0.0
          %4051 = vmatprep.subr.mxu0 0.0
          %4052 = vmatpush1.msra.mxu0 0.0
          %4053 = vmatprep.subr.mxu0 0.0
          %4054 = vmatpush1.msra.mxu0 0.0
          %4055 = vmatprep.subr.mxu0 0.0
          %4056 = vmatpush1.msra.mxu0 0.0
          %4057 = vmatprep.subr.mxu0 0.0
          %4058 = vmatpush1.msra.mxu0 0.0
          %4059 = vmatprep.subr.mxu0 0.0
          %4060 = vmatpush1.msra.mxu0 0.0
          %4061 = vmatprep.subr.mxu0 0.0
          %4062 = vmatpush1.msra.mxu0 0.0
          %4063 = vmatprep.subr.mxu0 0.0
          %4064 = vmatpush1.msra.mxu0 0.0
          %4065 = vmatprep.subr.mxu0 0.0
          %4066 = vmatpush1.msra.mxu0 0.0
          %4067 = vmatprep.subr.mxu0 0.0
          %4068 = vmatpush1.msra.mxu0 0.0
          %4069 = vmatprep.subr.mxu0 0.0
          %4070 = vmatpush1.msra.mxu0 0.0
          %4071 = vmatprep.subr.mxu0 0.0
          %4072 = vmatpush1.msra.mxu0 0.0
          %4073 = vmatprep.subr.mxu0 0.0
          %4074 = vmatpush1.msra.mxu0 0.0
          %4075 = vmatprep.subr.mxu0 0.0
          %4076 = vmatpush1.msra.mxu0 0.0
          %4077 = vmatprep.mubr.f32.mxu0 0.0
          %v4078 = vand.u32 %v3715, 4294901760
          %v4079 = vsub.f32 %v3715, %v4078
          %4080 = vmatmul.mubr.f32.gmra.mrb[0].mxu0 %v4079
          %v4081 = vpop.f32.mrb[0].mxu0
          %v4082 = vadd.f32 %v3978, %v4081
          %v4083 = vpop.f32.mrb[0].mxu0
          %4084 = vdwg.mxu0
          %4085 = vmatprep.subr.mxu0 0.0
          %v4086 = vand.u32 %v3716, 4294901760
          %4087 = vmatpush1.msra.mxu0 %v4086
          %4088 = vmatprep.subr.mxu0 0.0
          %v4089 = vand.u32 %v3717, 4294901760
          %4090 = vmatpush1.msra.mxu0 %v4089
          %4091 = vmatprep.subr.mxu0 0.0
          %v4092 = vand.u32 %v3718, 4294901760
          %4093 = vmatpush1.msra.mxu0 %v4092
          %4094 = vmatprep.subr.mxu0 0.0
          %v4095 = vand.u32 %v3719, 4294901760
          %4096 = vmatpush1.msra.mxu0 %v4095
          %4097 = vmatprep.subr.mxu0 0.0
          %v4098 = vand.u32 %v3720, 4294901760
          %4099 = vmatpush1.msra.mxu0 %v4098
          %4100 = vmatprep.subr.mxu0 0.0
          %v4101 = vand.u32 %v3721, 4294901760
          %4102 = vmatpush1.msra.mxu0 %v4101
          %4103 = vmatprep.subr.mxu0 0.0
          %v4104 = vand.u32 %v3722, 4294901760
          %4105 = vmatpush1.msra.mxu0 %v4104
          %4106 = vmatprep.subr.mxu0 0.0
          %v4107 = vand.u32 %v3723, 4294901760
          %4108 = vmatpush1.msra.mxu0 %v4107
          %4109 = vmatprep.subr.mxu0 0.0
          %v4110 = vand.u32 %v3724, 4294901760
          %4111 = vmatpush1.msra.mxu0 %v4110
          %4112 = vmatprep.subr.mxu0 0.0
          %v4113 = vand.u32 %v3725, 4294901760
          %4114 = vmatpush1.msra.mxu0 %v4113
          %4115 = vmatprep.subr.mxu0 0.0
          %v4116 = vand.u32 %v3726, 4294901760
          %4117 = vmatpush1.msra.mxu0 %v4116
          %4118 = vmatprep.subr.mxu0 0.0
          %v4119 = vand.u32 %v3727, 4294901760
          %4120 = vmatpush1.msra.mxu0 %v4119
          %4121 = vmatprep.subr.mxu0 0.0
          %v4122 = vand.u32 %v3728, 4294901760
          %4123 = vmatpush1.msra.mxu0 %v4122
          %4124 = vmatprep.subr.mxu0 0.0
          %v4125 = vand.u32 %v3729, 4294901760
          %4126 = vmatpush1.msra.mxu0 %v4125
          %4127 = vmatprep.subr.mxu0 0.0
          %v4128 = vand.u32 %v3730, 4294901760
          %4129 = vmatpush1.msra.mxu0 %v4128
          %4130 = vmatprep.subr.mxu0 0.0
          %v4131 = vand.u32 %v3731, 4294901760
          %4132 = vmatpush1.msra.mxu0 %v4131
          %4133 = vmatprep.subr.mxu0 0.0
          %4134 = vmatpush1.msra.mxu0 0.0
          %4135 = vmatprep.subr.mxu0 0.0
          %4136 = vmatpush1.msra.mxu0 0.0
          %4137 = vmatprep.subr.mxu0 0.0
          %4138 = vmatpush1.msra.mxu0 0.0
          %4139 = vmatprep.subr.mxu0 0.0
          %4140 = vmatpush1.msra.mxu0 0.0
          %4141 = vmatprep.subr.mxu0 0.0
          %4142 = vmatpush1.msra.mxu0 0.0
          %4143 = vmatprep.subr.mxu0 0.0
          %4144 = vmatpush1.msra.mxu0 0.0
          %4145 = vmatprep.subr.mxu0 0.0
          %4146 = vmatpush1.msra.mxu0 0.0
          %4147 = vmatprep.subr.mxu0 0.0
          %4148 = vmatpush1.msra.mxu0 0.0
          %4149 = vmatprep.subr.mxu0 0.0
          %4150 = vmatpush1.msra.mxu0 0.0
          %4151 = vmatprep.subr.mxu0 0.0
          %4152 = vmatpush1.msra.mxu0 0.0
          %4153 = vmatprep.subr.mxu0 0.0
          %4154 = vmatpush1.msra.mxu0 0.0
          %4155 = vmatprep.subr.mxu0 0.0
          %4156 = vmatpush1.msra.mxu0 0.0
          %4157 = vmatprep.subr.mxu0 0.0
          %4158 = vmatpush1.msra.mxu0 0.0
          %4159 = vmatprep.subr.mxu0 0.0
          %4160 = vmatpush1.msra.mxu0 0.0
          %4161 = vmatprep.subr.mxu0 0.0
          %4162 = vmatpush1.msra.mxu0 0.0
          %4163 = vmatprep.subr.mxu0 0.0
          %4164 = vmatpush1.msra.mxu0 0.0
          %4165 = vmatprep.mubr.f32.mxu0 0.0
          %v4166 = vand.u32 %v3715, 4294901760
          %v4167 = vsub.f32 %v3715, %v4166
          %v4168 = vand.u32 %v4167, 4294901760
          %4169 = vmatmul.mubr.f32.gmra.mrb[0].mxu0 %v4168
          %v4170 = vpop.f32.mrb[0].mxu0
          %v4171 = vadd.f32 %v4082, %v4170
          %v4172 = vpop.f32.mrb[0].mxu0
          %4173 = vdwg.mxu0
          %4174 = vmatprep.subr.mxu0 0.0
          %v4175 = vand.u32 %v3716, 4294901760
          %v4176 = vsub.f32 %v3716, %v4175
          %v4177 = vand.u32 %v4176, 4294901760
          %4178 = vmatpush1.msra.mxu0 %v4177
          %4179 = vmatprep.subr.mxu0 0.0
          %v4180 = vand.u32 %v3717, 4294901760
          %v4181 = vsub.f32 %v3717, %v4180
          %v4182 = vand.u32 %v4181, 4294901760
          %4183 = vmatpush1.msra.mxu0 %v4182
          %4184 = vmatprep.subr.mxu0 0.0
          %v4185 = vand.u32 %v3718, 4294901760
          %v4186 = vsub.f32 %v3718, %v4185
          %v4187 = vand.u32 %v4186, 4294901760
          %4188 = vmatpush1.msra.mxu0 %v4187
          %4189 = vmatprep.subr.mxu0 0.0
          %v4190 = vand.u32 %v3719, 4294901760
          %v4191 = vsub.f32 %v3719, %v4190
          %v4192 = vand.u32 %v4191, 4294901760
          %4193 = vmatpush1.msra.mxu0 %v4192
          %4194 = vmatprep.subr.mxu0 0.0
          %v4195 = vand.u32 %v3720, 4294901760
          %v4196 = vsub.f32 %v3720, %v4195
          %v4197 = vand.u32 %v4196, 4294901760
          %4198 = vmatpush1.msra.mxu0 %v4197
          %4199 = vmatprep.subr.mxu0 0.0
          %v4200 = vand.u32 %v3721, 4294901760
          %v4201 = vsub.f32 %v3721, %v4200
          %v4202 = vand.u32 %v4201, 4294901760
          %4203 = vmatpush1.msra.mxu0 %v4202
          %4204 = vmatprep.subr.mxu0 0.0
          %v4205 = vand.u32 %v3722, 4294901760
          %v4206 = vsub.f32 %v3722, %v4205
          %v4207 = vand.u32 %v4206, 4294901760
          %4208 = vmatpush1.msra.mxu0 %v4207
          %4209 = vmatprep.subr.mxu0 0.0
          %v4210 = vand.u32 %v3723, 4294901760
          %v4211 = vsub.f32 %v3723, %v4210
          %v4212 = vand.u32 %v4211, 4294901760
          %4213 = vmatpush1.msra.mxu0 %v4212
          %4214 = vmatprep.subr.mxu0 0.0
          %v4215 = vand.u32 %v3724, 4294901760
          %v4216 = vsub.f32 %v3724, %v4215
          %v4217 = vand.u32 %v4216, 4294901760
          %4218 = vmatpush1.msra.mxu0 %v4217
          %4219 = vmatprep.subr.mxu0 0.0
          %v4220 = vand.u32 %v3725, 4294901760
          %v4221 = vsub.f32 %v3725, %v4220
          %v4222 = vand.u32 %v4221, 4294901760
          %4223 = vmatpush1.msra.mxu0 %v4222
          %4224 = vmatprep.subr.mxu0 0.0
          %v4225 = vand.u32 %v3726, 4294901760
          %v4226 = vsub.f32 %v3726, %v4225
          %v4227 = vand.u32 %v4226, 4294901760
          %4228 = vmatpush1.msra.mxu0 %v4227
          %4229 = vmatprep.subr.mxu0 0.0
          %v4230 = vand.u32 %v3727, 4294901760
          %v4231 = vsub.f32 %v3727, %v4230
          %v4232 = vand.u32 %v4231, 4294901760
          %4233 = vmatpush1.msra.mxu0 %v4232
          %4234 = vmatprep.subr.mxu0 0.0
          %v4235 = vand.u32 %v3728, 4294901760
          %v4236 = vsub.f32 %v3728, %v4235
          %v4237 = vand.u32 %v4236, 4294901760
          %4238 = vmatpush1.msra.mxu0 %v4237
          %4239 = vmatprep.subr.mxu0 0.0
          %v4240 = vand.u32 %v3729, 4294901760
          %v4241 = vsub.f32 %v3729, %v4240
          %v4242 = vand.u32 %v4241, 4294901760
          %4243 = vmatpush1.msra.mxu0 %v4242
          %4244 = vmatprep.subr.mxu0 0.0
          %v4245 = vand.u32 %v3730, 4294901760
          %v4246 = vsub.f32 %v3730, %v4245
          %v4247 = vand.u32 %v4246, 4294901760
          %4248 = vmatpush1.msra.mxu0 %v4247
          %4249 = vmatprep.subr.mxu0 0.0
          %v4250 = vand.u32 %v3731, 4294901760
          %v4251 = vsub.f32 %v3731, %v4250
          %v4252 = vand.u32 %v4251, 4294901760
          %4253 = vmatpush1.msra.mxu0 %v4252
          %4254 = vmatprep.subr.mxu0 0.0
          %4255 = vmatpush1.msra.mxu0 0.0
          %4256 = vmatprep.subr.mxu0 0.0
          %4257 = vmatpush1.msra.mxu0 0.0
          %4258 = vmatprep.subr.mxu0 0.0
          %4259 = vmatpush1.msra.mxu0 0.0
          %4260 = vmatprep.subr.mxu0 0.0
          %4261 = vmatpush1.msra.mxu0 0.0
          %4262 = vmatprep.subr.mxu0 0.0
          %4263 = vmatpush1.msra.mxu0 0.0
          %4264 = vmatprep.subr.mxu0 0.0
          %4265 = vmatpush1.msra.mxu0 0.0
          %4266 = vmatprep.subr.mxu0 0.0
          %4267 = vmatpush1.msra.mxu0 0.0
          %4268 = vmatprep.subr.mxu0 0.0
          %4269 = vmatpush1.msra.mxu0 0.0
          %4270 = vmatprep.subr.mxu0 0.0
          %4271 = vmatpush1.msra.mxu0 0.0
          %4272 = vmatprep.subr.mxu0 0.0
          %4273 = vmatpush1.msra.mxu0 0.0
          %4274 = vmatprep.subr.mxu0 0.0
          %4275 = vmatpush1.msra.mxu0 0.0
          %4276 = vmatprep.subr.mxu0 0.0
          %4277 = vmatpush1.msra.mxu0 0.0
          %4278 = vmatprep.subr.mxu0 0.0
          %4279 = vmatpush1.msra.mxu0 0.0
          %4280 = vmatprep.subr.mxu0 0.0
          %4281 = vmatpush1.msra.mxu0 0.0
          %4282 = vmatprep.subr.mxu0 0.0
          %4283 = vmatpush1.msra.mxu0 0.0
          %4284 = vmatprep.subr.mxu0 0.0
          %4285 = vmatpush1.msra.mxu0 0.0
          %4286 = vmatprep.mubr.f32.mxu0 0.0
          %v4287 = vand.u32 %v3715, 4294901760
          %4288 = vmatmul.mubr.f32.gmra.mrb[0].mxu0 %v4287
          %v4289 = vpop.f32.mrb[0].mxu0
          %v4290 = vadd.f32 %v4171, %v4289
          %v4291 = vpop.f32.mrb[0].mxu0
          %4292 = vdwg.mxu0
          %4293 = vmatprep.subr.mxu0 0.0
          %v4294 = vand.u32 %v3716, 4294901760
          %4295 = vmatpush1.msra.mxu0 %v4294
          %4296 = vmatprep.subr.mxu0 0.0
          %v4297 = vand.u32 %v3717, 4294901760
          %4298 = vmatpush1.msra.mxu0 %v4297
          %4299 = vmatprep.subr.mxu0 0.0
          %v4300 = vand.u32 %v3718, 4294901760
          %4301 = vmatpush1.msra.mxu0 %v4300
          %4302 = vmatprep.subr.mxu0 0.0
          %v4303 = vand.u32 %v3719, 4294901760
          %4304 = vmatpush1.msra.mxu0 %v4303
          %4305 = vmatprep.subr.mxu0 0.0
          %v4306 = vand.u32 %v3720, 4294901760
          %4307 = vmatpush1.msra.mxu0 %v4306
          %4308 = vmatprep.subr.mxu0 0.0
          %v4309 = vand.u32 %v3721, 4294901760
          %4310 = vmatpush1.msra.mxu0 %v4309
          %4311 = vmatprep.subr.mxu0 0.0
          %v4312 = vand.u32 %v3722, 4294901760
          %4313 = vmatpush1.msra.mxu0 %v4312
          %4314 = vmatprep.subr.mxu0 0.0
          %v4315 = vand.u32 %v3723, 4294901760
          %4316 = vmatpush1.msra.mxu0 %v4315
          %4317 = vmatprep.subr.mxu0 0.0
          %v4318 = vand.u32 %v3724, 4294901760
          %4319 = vmatpush1.msra.mxu0 %v4318
          %4320 = vmatprep.subr.mxu0 0.0
          %v4321 = vand.u32 %v3725, 4294901760
          %4322 = vmatpush1.msra.mxu0 %v4321
          %4323 = vmatprep.subr.mxu0 0.0
          %v4324 = vand.u32 %v3726, 4294901760
          %4325 = vmatpush1.msra.mxu0 %v4324
          %4326 = vmatprep.subr.mxu0 0.0
          %v4327 = vand.u32 %v3727, 4294901760
          %4328 = vmatpush1.msra.mxu0 %v4327
          %4329 = vmatprep.subr.mxu0 0.0
          %v4330 = vand.u32 %v3728, 4294901760
          %4331 = vmatpush1.msra.mxu0 %v4330
          %4332 = vmatprep.subr.mxu0 0.0
          %v4333 = vand.u32 %v3729, 4294901760
          %4334 = vmatpush1.msra.mxu0 %v4333
          %4335 = vmatprep.subr.mxu0 0.0
          %v4336 = vand.u32 %v3730, 4294901760
          %4337 = vmatpush1.msra.mxu0 %v4336
          %4338 = vmatprep.subr.mxu0 0.0
          %v4339 = vand.u32 %v3731, 4294901760
          %4340 = vmatpush1.msra.mxu0 %v4339
          %4341 = vmatprep.subr.mxu0 0.0
          %4342 = vmatpush1.msra.mxu0 0.0
          %4343 = vmatprep.subr.mxu0 0.0
          %4344 = vmatpush1.msra.mxu0 0.0
          %4345 = vmatprep.subr.mxu0 0.0
          %4346 = vmatpush1.msra.mxu0 0.0
          %4347 = vmatprep.subr.mxu0 0.0
          %4348 = vmatpush1.msra.mxu0 0.0
          %4349 = vmatprep.subr.mxu0 0.0
          %4350 = vmatpush1.msra.mxu0 0.0
          %4351 = vmatprep.subr.mxu0 0.0
          %4352 = vmatpush1.msra.mxu0 0.0
          %4353 = vmatprep.subr.mxu0 0.0
          %4354 = vmatpush1.msra.mxu0 0.0
          %4355 = vmatprep.subr.mxu0 0.0
          %4356 = vmatpush1.msra.mxu0 0.0
          %4357 = vmatprep.subr.mxu0 0.0
          %4358 = vmatpush1.msra.mxu0 0.0
          %4359 = vmatprep.subr.mxu0 0.0
          %4360 = vmatpush1.msra.mxu0 0.0
          %4361 = vmatprep.subr.mxu0 0.0
          %4362 = vmatpush1.msra.mxu0 0.0
          %4363 = vmatprep.subr.mxu0 0.0
          %4364 = vmatpush1.msra.mxu0 0.0
          %4365 = vmatprep.subr.mxu0 0.0
          %4366 = vmatpush1.msra.mxu0 0.0
          %4367 = vmatprep.subr.mxu0 0.0
          %4368 = vmatpush1.msra.mxu0 0.0
          %4369 = vmatprep.subr.mxu0 0.0
          %4370 = vmatpush1.msra.mxu0 0.0
          %4371 = vmatprep.subr.mxu0 0.0
          %4372 = vmatpush1.msra.mxu0 0.0
          %4373 = vmatprep.mubr.f32.mxu0 0.0
          %v4374 = vand.u32 %v3715, 4294901760
          %4375 = vmatmul.mubr.f32.gmra.mrb[0].mxu0 %v4374
          %v4376 = vpop.f32.mrb[0].mxu0
          %v4377 = vadd.f32 %v4290, %v4376
          %v4378 = vpop.f32.mrb[0].mxu0
          %4379 = vdwg.mxu0
          %v4380 = vmax.f32 %v4377, 0.0
          %v4381 = vld [vmem:[#allocation11] sm:$0xff]
          %v4382 = vld [vmem:[#allocation11 + $0x8] sm:$0xff]
          %v4383 = vld [vmem:[#allocation11 + $0x10] sm:$0xff]
          %v4384 = vld [vmem:[#allocation11 + $0x18] sm:$0xff]
          %v4385 = vld [vmem:[#allocation11 + $0x20] sm:$0xff]
          %v4386 = vld [vmem:[#allocation11 + $0x28] sm:$0xff]
          %v4387 = vld [vmem:[#allocation11 + $0x30] sm:$0xff]
          %v4388 = vld [vmem:[#allocation11 + $0x38] sm:$0xff]
          %v4389 = vld [vmem:[#allocation11 + $0x40] sm:$0xff]
          %v4390 = vld [vmem:[#allocation11 + $0x48] sm:$0xff]
          %v4391 = vld [vmem:[#allocation11 + $0x50] sm:$0xff]
          %v4392 = vld [vmem:[#allocation11 + $0x58] sm:$0xff]
          %v4393 = vld [vmem:[#allocation11 + $0x60] sm:$0xff]
          %v4394 = vld [vmem:[#allocation11 + $0x68] sm:$0xff]
          %v4395 = vld [vmem:[#allocation11 + $0x70] sm:$0xff]
          %v4396 = vld [vmem:[#allocation11 + $0x78] sm:$0xff]
          %v4397 = vld [vmem:[%s11] sm:$0x1]
          %v4399 = vlaneseq
          %v4400 = vshrl.u32 %v4399, 7
          %v4401 = vsub.s32 0, %v4400
          %v4402 = vrot.slane %v4397, %v4401
          %4404 = vmatprep.subr.mxu0 0.0
          %v4405 = vand.u32 %v4381, 4294901760
          %4406 = vmatpush1.msra.mxu0 %v4405
          %4407 = vmatprep.subr.mxu0 0.0
          %v4408 = vand.u32 %v4382, 4294901760
          %4409 = vmatpush1.msra.mxu0 %v4408
          %4410 = vmatprep.subr.mxu0 0.0
          %v4411 = vand.u32 %v4383, 4294901760
          %4412 = vmatpush1.msra.mxu0 %v4411
          %4413 = vmatprep.subr.mxu0 0.0
          %v4414 = vand.u32 %v4384, 4294901760
          %4415 = vmatpush1.msra.mxu0 %v4414
          %4416 = vmatprep.subr.mxu0 0.0
          %v4417 = vand.u32 %v4385, 4294901760
          %4418 = vmatpush1.msra.mxu0 %v4417
          %4419 = vmatprep.subr.mxu0 0.0
          %v4420 = vand.u32 %v4386, 4294901760
          %4421 = vmatpush1.msra.mxu0 %v4420
          %4422 = vmatprep.subr.mxu0 0.0
          %v4423 = vand.u32 %v4387, 4294901760
          %4424 = vmatpush1.msra.mxu0 %v4423
          %4425 = vmatprep.subr.mxu0 0.0
          %v4426 = vand.u32 %v4388, 4294901760
          %4427 = vmatpush1.msra.mxu0 %v4426
          %4428 = vmatprep.subr.mxu0 0.0
          %v4429 = vand.u32 %v4389, 4294901760
          %4430 = vmatpush1.msra.mxu0 %v4429
          %4431 = vmatprep.subr.mxu0 0.0
          %v4432 = vand.u32 %v4390, 4294901760
          %4433 = vmatpush1.msra.mxu0 %v4432
          %4434 = vmatprep.subr.mxu0 0.0
          %v4435 = vand.u32 %v4391, 4294901760
          %4436 = vmatpush1.msra.mxu0 %v4435
          %4437 = vmatprep.subr.mxu0 0.0
          %v4438 = vand.u32 %v4392, 4294901760
          %4439 = vmatpush1.msra.mxu0 %v4438
          %4440 = vmatprep.subr.mxu0 0.0
          %v4441 = vand.u32 %v4393, 4294901760
          %4442 = vmatpush1.msra.mxu0 %v4441
          %4443 = vmatprep.subr.mxu0 0.0
          %v4444 = vand.u32 %v4394, 4294901760
          %4445 = vmatpush1.msra.mxu0 %v4444
          %4446 = vmatprep.subr.mxu0 0.0
          %v4447 = vand.u32 %v4395, 4294901760
          %4448 = vmatpush1.msra.mxu0 %v4447
          %4449 = vmatprep.subr.mxu0 0.0
          %v4450 = vand.u32 %v4396, 4294901760
          %4451 = vmatpush1.msra.mxu0 %v4450
          %4452 = vmatprep.subr.mxu0 0.0
          %4453 = vmatpush1.msra.mxu0 0.0
          %4454 = vmatprep.subr.mxu0 0.0
          %4455 = vmatpush1.msra.mxu0 0.0
          %4456 = vmatprep.subr.mxu0 0.0
          %4457 = vmatpush1.msra.mxu0 0.0
          %4458 = vmatprep.subr.mxu0 0.0
          %4459 = vmatpush1.msra.mxu0 0.0
          %4460 = vmatprep.subr.mxu0 0.0
          %4461 = vmatpush1.msra.mxu0 0.0
          %4462 = vmatprep.subr.mxu0 0.0
          %4463 = vmatpush1.msra.mxu0 0.0
          %4464 = vmatprep.subr.mxu0 0.0
          %4465 = vmatpush1.msra.mxu0 0.0
          %4466 = vmatprep.subr.mxu0 0.0
          %4467 = vmatpush1.msra.mxu0 0.0
          %4468 = vmatprep.subr.mxu0 0.0
          %4469 = vmatpush1.msra.mxu0 0.0
          %4470 = vmatprep.subr.mxu0 0.0
          %4471 = vmatpush1.msra.mxu0 0.0
          %4472 = vmatprep.subr.mxu0 0.0
          %4473 = vmatpush1.msra.mxu0 0.0
          %4474 = vmatprep.subr.mxu0 0.0
          %4475 = vmatpush1.msra.mxu0 0.0
          %4476 = vmatprep.subr.mxu0 0.0
          %4477 = vmatpush1.msra.mxu0 0.0
          %4478 = vmatprep.subr.mxu0 0.0
          %4479 = vmatpush1.msra.mxu0 0.0
          %4480 = vmatprep.subr.mxu0 0.0
          %4481 = vmatpush1.msra.mxu0 0.0
          %4482 = vmatprep.subr.mxu0 0.0
          %4483 = vmatpush1.msra.mxu0 0.0
          %4484 = vmatprep.mubr.f32.mxu0 0.0
          %v4485 = vand.u32 %v4380, 4294901760
          %v4486 = vsub.f32 %v4380, %v4485
          %v4487 = vand.u32 %v4486, 4294901760
          %v4488 = vsub.f32 %v4486, %v4487
          %v4489 = vand.u32 %v4488, 4294901760
          %4490 = vmatmul.mubr.f32.gmra.mrb[0].mxu0 %v4489
          %v4491 = vpop.f32.mrb[0].mxu0
          %v4492 = vadd.f32 %v4402, %v4491
          %v4493 = vpop.f32.mrb[0].mxu0
          %4494 = vdwg.mxu0
          %4495 = vmatprep.subr.mxu0 0.0
          %v4496 = vand.u32 %v4381, 4294901760
          %v4497 = vsub.f32 %v4381, %v4496
          %v4498 = vand.u32 %v4497, 4294901760
          %v4499 = vsub.f32 %v4497, %v4498
          %v4500 = vand.u32 %v4499, 4294901760
          %4501 = vmatpush1.msra.mxu0 %v4500
          %4502 = vmatprep.subr.mxu0 0.0
          %v4503 = vand.u32 %v4382, 4294901760
          %v4504 = vsub.f32 %v4382, %v4503
          %v4505 = vand.u32 %v4504, 4294901760
          %v4506 = vsub.f32 %v4504, %v4505
          %v4507 = vand.u32 %v4506, 4294901760
          %4508 = vmatpush1.msra.mxu0 %v4507
          %4509 = vmatprep.subr.mxu0 0.0
          %v4510 = vand.u32 %v4383, 4294901760
          %v4511 = vsub.f32 %v4383, %v4510
          %v4512 = vand.u32 %v4511, 4294901760
          %v4513 = vsub.f32 %v4511, %v4512
          %v4514 = vand.u32 %v4513, 4294901760
          %4515 = vmatpush1.msra.mxu0 %v4514
          %4516 = vmatprep.subr.mxu0 0.0
          %v4517 = vand.u32 %v4384, 4294901760
          %v4518 = vsub.f32 %v4384, %v4517
          %v4519 = vand.u32 %v4518, 4294901760
          %v4520 = vsub.f32 %v4518, %v4519
          %v4521 = vand.u32 %v4520, 4294901760
          %4522 = vmatpush1.msra.mxu0 %v4521
          %4523 = vmatprep.subr.mxu0 0.0
          %v4524 = vand.u32 %v4385, 4294901760
          %v4525 = vsub.f32 %v4385, %v4524
          %v4526 = vand.u32 %v4525, 4294901760
          %v4527 = vsub.f32 %v4525, %v4526
          %v4528 = vand.u32 %v4527, 4294901760
          %4529 = vmatpush1.msra.mxu0 %v4528
          %4530 = vmatprep.subr.mxu0 0.0
          %v4531 = vand.u32 %v4386, 4294901760
          %v4532 = vsub.f32 %v4386, %v4531
          %v4533 = vand.u32 %v4532, 4294901760
          %v4534 = vsub.f32 %v4532, %v4533
          %v4535 = vand.u32 %v4534, 4294901760
          %4536 = vmatpush1.msra.mxu0 %v4535
          %4537 = vmatprep.subr.mxu0 0.0
          %v4538 = vand.u32 %v4387, 4294901760
          %v4539 = vsub.f32 %v4387, %v4538
          %v4540 = vand.u32 %v4539, 4294901760
          %v4541 = vsub.f32 %v4539, %v4540
          %v4542 = vand.u32 %v4541, 4294901760
          %4543 = vmatpush1.msra.mxu0 %v4542
          %4544 = vmatprep.subr.mxu0 0.0
          %v4545 = vand.u32 %v4388, 4294901760
          %v4546 = vsub.f32 %v4388, %v4545
          %v4547 = vand.u32 %v4546, 4294901760
          %v4548 = vsub.f32 %v4546, %v4547
          %v4549 = vand.u32 %v4548, 4294901760
          %4550 = vmatpush1.msra.mxu0 %v4549
          %4551 = vmatprep.subr.mxu0 0.0
          %v4552 = vand.u32 %v4389, 4294901760
          %v4553 = vsub.f32 %v4389, %v4552
          %v4554 = vand.u32 %v4553, 4294901760
          %v4555 = vsub.f32 %v4553, %v4554
          %v4556 = vand.u32 %v4555, 4294901760
          %4557 = vmatpush1.msra.mxu0 %v4556
          %4558 = vmatprep.subr.mxu0 0.0
          %v4559 = vand.u32 %v4390, 4294901760
          %v4560 = vsub.f32 %v4390, %v4559
          %v4561 = vand.u32 %v4560, 4294901760
          %v4562 = vsub.f32 %v4560, %v4561
          %v4563 = vand.u32 %v4562, 4294901760
          %4564 = vmatpush1.msra.mxu0 %v4563
          %4565 = vmatprep.subr.mxu0 0.0
          %v4566 = vand.u32 %v4391, 4294901760
          %v4567 = vsub.f32 %v4391, %v4566
          %v4568 = vand.u32 %v4567, 4294901760
          %v4569 = vsub.f32 %v4567, %v4568
          %v4570 = vand.u32 %v4569, 4294901760
          %4571 = vmatpush1.msra.mxu0 %v4570
          %4572 = vmatprep.subr.mxu0 0.0
          %v4573 = vand.u32 %v4392, 4294901760
          %v4574 = vsub.f32 %v4392, %v4573
          %v4575 = vand.u32 %v4574, 4294901760
          %v4576 = vsub.f32 %v4574, %v4575
          %v4577 = vand.u32 %v4576, 4294901760
          %4578 = vmatpush1.msra.mxu0 %v4577
          %4579 = vmatprep.subr.mxu0 0.0
          %v4580 = vand.u32 %v4393, 4294901760
          %v4581 = vsub.f32 %v4393, %v4580
          %v4582 = vand.u32 %v4581, 4294901760
          %v4583 = vsub.f32 %v4581, %v4582
          %v4584 = vand.u32 %v4583, 4294901760
          %4585 = vmatpush1.msra.mxu0 %v4584
          %4586 = vmatprep.subr.mxu0 0.0
          %v4587 = vand.u32 %v4394, 4294901760
          %v4588 = vsub.f32 %v4394, %v4587
          %v4589 = vand.u32 %v4588, 4294901760
          %v4590 = vsub.f32 %v4588, %v4589
          %v4591 = vand.u32 %v4590, 4294901760
          %4592 = vmatpush1.msra.mxu0 %v4591
          %4593 = vmatprep.subr.mxu0 0.0
          %v4594 = vand.u32 %v4395, 4294901760
          %v4595 = vsub.f32 %v4395, %v4594
          %v4596 = vand.u32 %v4595, 4294901760
          %v4597 = vsub.f32 %v4595, %v4596
          %v4598 = vand.u32 %v4597, 4294901760
          %4599 = vmatpush1.msra.mxu0 %v4598
          %4600 = vmatprep.subr.mxu0 0.0
          %v4601 = vand.u32 %v4396, 4294901760
          %v4602 = vsub.f32 %v4396, %v4601
          %v4603 = vand.u32 %v4602, 4294901760
          %v4604 = vsub.f32 %v4602, %v4603
          %v4605 = vand.u32 %v4604, 4294901760
          %4606 = vmatpush1.msra.mxu0 %v4605
          %4607 = vmatprep.subr.mxu0 0.0
          %4608 = vmatpush1.msra.mxu0 0.0
          %4609 = vmatprep.subr.mxu0 0.0
          %4610 = vmatpush1.msra.mxu0 0.0
          %4611 = vmatprep.subr.mxu0 0.0
          %4612 = vmatpush1.msra.mxu0 0.0
          %4613 = vmatprep.subr.mxu0 0.0
          %4614 = vmatpush1.msra.mxu0 0.0
          %4615 = vmatprep.subr.mxu0 0.0
          %4616 = vmatpush1.msra.mxu0 0.0
          %4617 = vmatprep.subr.mxu0 0.0
          %4618 = vmatpush1.msra.mxu0 0.0
          %4619 = vmatprep.subr.mxu0 0.0
          %4620 = vmatpush1.msra.mxu0 0.0
          %4621 = vmatprep.subr.mxu0 0.0
          %4622 = vmatpush1.msra.mxu0 0.0
          %4623 = vmatprep.subr.mxu0 0.0
          %4624 = vmatpush1.msra.mxu0 0.0
          %4625 = vmatprep.subr.mxu0 0.0
          %4626 = vmatpush1.msra.mxu0 0.0
          %4627 = vmatprep.subr.mxu0 0.0
          %4628 = vmatpush1.msra.mxu0 0.0
          %4629 = vmatprep.subr.mxu0 0.0
          %4630 = vmatpush1.msra.mxu0 0.0
          %4631 = vmatprep.subr.mxu0 0.0
          %4632 = vmatpush1.msra.mxu0 0.0
          %4633 = vmatprep.subr.mxu0 0.0
          %4634 = vmatpush1.msra.mxu0 0.0
          %4635 = vmatprep.subr.mxu0 0.0
          %4636 = vmatpush1.msra.mxu0 0.0
          %4637 = vmatprep.subr.mxu0 0.0
          %4638 = vmatpush1.msra.mxu0 0.0
          %4639 = vmatprep.mubr.f32.mxu0 0.0
          %v4640 = vand.u32 %v4380, 4294901760
          %4641 = vmatmul.mubr.f32.gmra.mrb[0].mxu0 %v4640
          %v4642 = vpop.f32.mrb[0].mxu0
          %v4643 = vadd.f32 %v4492, %v4642
          %v4644 = vpop.f32.mrb[0].mxu0
          %4645 = vdwg.mxu0
          %4646 = vmatprep.subr.mxu0 0.0
          %v4647 = vand.u32 %v4381, 4294901760
          %v4648 = vsub.f32 %v4381, %v4647
          %4649 = vmatpush1.msra.mxu0 %v4648
          %4650 = vmatprep.subr.mxu0 0.0
          %v4651 = vand.u32 %v4382, 4294901760
          %v4652 = vsub.f32 %v4382, %v4651
          %4653 = vmatpush1.msra.mxu0 %v4652
          %4654 = vmatprep.subr.mxu0 0.0
          %v4655 = vand.u32 %v4383, 4294901760
          %v4656 = vsub.f32 %v4383, %v4655
          %4657 = vmatpush1.msra.mxu0 %v4656
          %4658 = vmatprep.subr.mxu0 0.0
          %v4659 = vand.u32 %v4384, 4294901760
          %v4660 = vsub.f32 %v4384, %v4659
          %4661 = vmatpush1.msra.mxu0 %v4660
          %4662 = vmatprep.subr.mxu0 0.0
          %v4663 = vand.u32 %v4385, 4294901760
          %v4664 = vsub.f32 %v4385, %v4663
          %4665 = vmatpush1.msra.mxu0 %v4664
          %4666 = vmatprep.subr.mxu0 0.0
          %v4667 = vand.u32 %v4386, 4294901760
          %v4668 = vsub.f32 %v4386, %v4667
          %4669 = vmatpush1.msra.mxu0 %v4668
          %4670 = vmatprep.subr.mxu0 0.0
          %v4671 = vand.u32 %v4387, 4294901760
          %v4672 = vsub.f32 %v4387, %v4671
          %4673 = vmatpush1.msra.mxu0 %v4672
          %4674 = vmatprep.subr.mxu0 0.0
          %v4675 = vand.u32 %v4388, 4294901760
          %v4676 = vsub.f32 %v4388, %v4675
          %4677 = vmatpush1.msra.mxu0 %v4676
          %4678 = vmatprep.subr.mxu0 0.0
          %v4679 = vand.u32 %v4389, 4294901760
          %v4680 = vsub.f32 %v4389, %v4679
          %4681 = vmatpush1.msra.mxu0 %v4680
          %4682 = vmatprep.subr.mxu0 0.0
          %v4683 = vand.u32 %v4390, 4294901760
          %v4684 = vsub.f32 %v4390, %v4683
          %4685 = vmatpush1.msra.mxu0 %v4684
          %4686 = vmatprep.subr.mxu0 0.0
          %v4687 = vand.u32 %v4391, 4294901760
          %v4688 = vsub.f32 %v4391, %v4687
          %4689 = vmatpush1.msra.mxu0 %v4688
          %4690 = vmatprep.subr.mxu0 0.0
          %v4691 = vand.u32 %v4392, 4294901760
          %v4692 = vsub.f32 %v4392, %v4691
          %4693 = vmatpush1.msra.mxu0 %v4692
          %4694 = vmatprep.subr.mxu0 0.0
          %v4695 = vand.u32 %v4393, 4294901760
          %v4696 = vsub.f32 %v4393, %v4695
          %4697 = vmatpush1.msra.mxu0 %v4696
          %4698 = vmatprep.subr.mxu0 0.0
          %v4699 = vand.u32 %v4394, 4294901760
          %v4700 = vsub.f32 %v4394, %v4699
          %4701 = vmatpush1.msra.mxu0 %v4700
          %4702 = vmatprep.subr.mxu0 0.0
          %v4703 = vand.u32 %v4395, 4294901760
          %v4704 = vsub.f32 %v4395, %v4703
          %4705 = vmatpush1.msra.mxu0 %v4704
          %4706 = vmatprep.subr.mxu0 0.0
          %v4707 = vand.u32 %v4396, 4294901760
          %v4708 = vsub.f32 %v4396, %v4707
          %4709 = vmatpush1.msra.mxu0 %v4708
          %4710 = vmatprep.subr.mxu0 0.0
          %4711 = vmatpush1.msra.mxu0 0.0
          %4712 = vmatprep.subr.mxu0 0.0
          %4713 = vmatpush1.msra.mxu0 0.0
          %4714 = vmatprep.subr.mxu0 0.0
          %4715 = vmatpush1.msra.mxu0 0.0
          %4716 = vmatprep.subr.mxu0 0.0
          %4717 = vmatpush1.msra.mxu0 0.0
          %4718 = vmatprep.subr.mxu0 0.0
          %4719 = vmatpush1.msra.mxu0 0.0
          %4720 = vmatprep.subr.mxu0 0.0
          %4721 = vmatpush1.msra.mxu0 0.0
          %4722 = vmatprep.subr.mxu0 0.0
          %4723 = vmatpush1.msra.mxu0 0.0
          %4724 = vmatprep.subr.mxu0 0.0
          %4725 = vmatpush1.msra.mxu0 0.0
          %4726 = vmatprep.subr.mxu0 0.0
          %4727 = vmatpush1.msra.mxu0 0.0
          %4728 = vmatprep.subr.mxu0 0.0
          %4729 = vmatpush1.msra.mxu0 0.0
          %4730 = vmatprep.subr.mxu0 0.0
          %4731 = vmatpush1.msra.mxu0 0.0
          %4732 = vmatprep.subr.mxu0 0.0
          %4733 = vmatpush1.msra.mxu0 0.0
          %4734 = vmatprep.subr.mxu0 0.0
          %4735 = vmatpush1.msra.mxu0 0.0
          %4736 = vmatprep.subr.mxu0 0.0
          %4737 = vmatpush1.msra.mxu0 0.0
          %4738 = vmatprep.subr.mxu0 0.0
          %4739 = vmatpush1.msra.mxu0 0.0
          %4740 = vmatprep.subr.mxu0 0.0
          %4741 = vmatpush1.msra.mxu0 0.0
          %4742 = vmatprep.mubr.f32.mxu0 0.0
          %v4743 = vand.u32 %v4380, 4294901760
          %v4744 = vsub.f32 %v4380, %v4743
          %4745 = vmatmul.mubr.f32.gmra.mrb[0].mxu0 %v4744
          %v4746 = vpop.f32.mrb[0].mxu0
          %v4747 = vadd.f32 %v4643, %v4746
          %v4748 = vpop.f32.mrb[0].mxu0
          %4749 = vdwg.mxu0
          %4750 = vmatprep.subr.mxu0 0.0
          %v4751 = vand.u32 %v4381, 4294901760
          %4752 = vmatpush1.msra.mxu0 %v4751
          %4753 = vmatprep.subr.mxu0 0.0
          %v4754 = vand.u32 %v4382, 4294901760
          %4755 = vmatpush1.msra.mxu0 %v4754
          %4756 = vmatprep.subr.mxu0 0.0
          %v4757 = vand.u32 %v4383, 4294901760
          %4758 = vmatpush1.msra.mxu0 %v4757
          %4759 = vmatprep.subr.mxu0 0.0
          %v4760 = vand.u32 %v4384, 4294901760
          %4761 = vmatpush1.msra.mxu0 %v4760
          %4762 = vmatprep.subr.mxu0 0.0
          %v4763 = vand.u32 %v4385, 4294901760
          %4764 = vmatpush1.msra.mxu0 %v4763
          %4765 = vmatprep.subr.mxu0 0.0
          %v4766 = vand.u32 %v4386, 4294901760
          %4767 = vmatpush1.msra.mxu0 %v4766
          %4768 = vmatprep.subr.mxu0 0.0
          %v4769 = vand.u32 %v4387, 4294901760
          %4770 = vmatpush1.msra.mxu0 %v4769
          %4771 = vmatprep.subr.mxu0 0.0
          %v4772 = vand.u32 %v4388, 4294901760
          %4773 = vmatpush1.msra.mxu0 %v4772
          %4774 = vmatprep.subr.mxu0 0.0
          %v4775 = vand.u32 %v4389, 4294901760
          %4776 = vmatpush1.msra.mxu0 %v4775
          %4777 = vmatprep.subr.mxu0 0.0
          %v4778 = vand.u32 %v4390, 4294901760
          %4779 = vmatpush1.msra.mxu0 %v4778
          %4780 = vmatprep.subr.mxu0 0.0
          %v4781 = vand.u32 %v4391, 4294901760
          %4782 = vmatpush1.msra.mxu0 %v4781
          %4783 = vmatprep.subr.mxu0 0.0
          %v4784 = vand.u32 %v4392, 4294901760
          %4785 = vmatpush1.msra.mxu0 %v4784
          %4786 = vmatprep.subr.mxu0 0.0
          %v4787 = vand.u32 %v4393, 4294901760
          %4788 = vmatpush1.msra.mxu0 %v4787
          %4789 = vmatprep.subr.mxu0 0.0
          %v4790 = vand.u32 %v4394, 4294901760
          %4791 = vmatpush1.msra.mxu0 %v4790
          %4792 = vmatprep.subr.mxu0 0.0
          %v4793 = vand.u32 %v4395, 4294901760
          %4794 = vmatpush1.msra.mxu0 %v4793
          %4795 = vmatprep.subr.mxu0 0.0
          %v4796 = vand.u32 %v4396, 4294901760
          %4797 = vmatpush1.msra.mxu0 %v4796
          %4798 = vmatprep.subr.mxu0 0.0
          %4799 = vmatpush1.msra.mxu0 0.0
          %4800 = vmatprep.subr.mxu0 0.0
          %4801 = vmatpush1.msra.mxu0 0.0
          %4802 = vmatprep.subr.mxu0 0.0
          %4803 = vmatpush1.msra.mxu0 0.0
          %4804 = vmatprep.subr.mxu0 0.0
          %4805 = vmatpush1.msra.mxu0 0.0
          %4806 = vmatprep.subr.mxu0 0.0
          %4807 = vmatpush1.msra.mxu0 0.0
          %4808 = vmatprep.subr.mxu0 0.0
          %4809 = vmatpush1.msra.mxu0 0.0
          %4810 = vmatprep.subr.mxu0 0.0
          %4811 = vmatpush1.msra.mxu0 0.0
          %4812 = vmatprep.subr.mxu0 0.0
          %4813 = vmatpush1.msra.mxu0 0.0
          %4814 = vmatprep.subr.mxu0 0.0
          %4815 = vmatpush1.msra.mxu0 0.0
          %4816 = vmatprep.subr.mxu0 0.0
          %4817 = vmatpush1.msra.mxu0 0.0
          %4818 = vmatprep.subr.mxu0 0.0
          %4819 = vmatpush1.msra.mxu0 0.0
          %4820 = vmatprep.subr.mxu0 0.0
          %4821 = vmatpush1.msra.mxu0 0.0
          %4822 = vmatprep.subr.mxu0 0.0
          %4823 = vmatpush1.msra.mxu0 0.0
          %4824 = vmatprep.subr.mxu0 0.0
          %4825 = vmatpush1.msra.mxu0 0.0
          %4826 = vmatprep.subr.mxu0 0.0
          %4827 = vmatpush1.msra.mxu0 0.0
          %4828 = vmatprep.subr.mxu0 0.0
          %4829 = vmatpush1.msra.mxu0 0.0
          %4830 = vmatprep.mubr.f32.mxu0 0.0
          %v4831 = vand.u32 %v4380, 4294901760
          %v4832 = vsub.f32 %v4380, %v4831
          %v4833 = vand.u32 %v4832, 4294901760
          %4834 = vmatmul.mubr.f32.gmra.mrb[0].mxu0 %v4833
          %v4835 = vpop.f32.mrb[0].mxu0
          %v4836 = vadd.f32 %v4747, %v4835
          %v4837 = vpop.f32.mrb[0].mxu0
          %4838 = vdwg.mxu0
          %4839 = vmatprep.subr.mxu0 0.0
          %v4840 = vand.u32 %v4381, 4294901760
          %v4841 = vsub.f32 %v4381, %v4840
          %v4842 = vand.u32 %v4841, 4294901760
          %4843 = vmatpush1.msra.mxu0 %v4842
          %4844 = vmatprep.subr.mxu0 0.0
          %v4845 = vand.u32 %v4382, 4294901760
          %v4846 = vsub.f32 %v4382, %v4845
          %v4847 = vand.u32 %v4846, 4294901760
          %4848 = vmatpush1.msra.mxu0 %v4847
          %4849 = vmatprep.subr.mxu0 0.0
          %v4850 = vand.u32 %v4383, 4294901760
          %v4851 = vsub.f32 %v4383, %v4850
          %v4852 = vand.u32 %v4851, 4294901760
          %4853 = vmatpush1.msra.mxu0 %v4852
          %4854 = vmatprep.subr.mxu0 0.0
          %v4855 = vand.u32 %v4384, 4294901760
          %v4856 = vsub.f32 %v4384, %v4855
          %v4857 = vand.u32 %v4856, 4294901760
          %4858 = vmatpush1.msra.mxu0 %v4857
          %4859 = vmatprep.subr.mxu0 0.0
          %v4860 = vand.u32 %v4385, 4294901760
          %v4861 = vsub.f32 %v4385, %v4860
          %v4862 = vand.u32 %v4861, 4294901760
          %4863 = vmatpush1.msra.mxu0 %v4862
          %4864 = vmatprep.subr.mxu0 0.0
          %v4865 = vand.u32 %v4386, 4294901760
          %v4866 = vsub.f32 %v4386, %v4865
          %v4867 = vand.u32 %v4866, 4294901760
          %4868 = vmatpush1.msra.mxu0 %v4867
          %4869 = vmatprep.subr.mxu0 0.0
          %v4870 = vand.u32 %v4387, 4294901760
          %v4871 = vsub.f32 %v4387, %v4870
          %v4872 = vand.u32 %v4871, 4294901760
          %4873 = vmatpush1.msra.mxu0 %v4872
          %4874 = vmatprep.subr.mxu0 0.0
          %v4875 = vand.u32 %v4388, 4294901760
          %v4876 = vsub.f32 %v4388, %v4875
          %v4877 = vand.u32 %v4876, 4294901760
          %4878 = vmatpush1.msra.mxu0 %v4877
          %4879 = vmatprep.subr.mxu0 0.0
          %v4880 = vand.u32 %v4389, 4294901760
          %v4881 = vsub.f32 %v4389, %v4880
          %v4882 = vand.u32 %v4881, 4294901760
          %4883 = vmatpush1.msra.mxu0 %v4882
          %4884 = vmatprep.subr.mxu0 0.0
          %v4885 = vand.u32 %v4390, 4294901760
          %v4886 = vsub.f32 %v4390, %v4885
          %v4887 = vand.u32 %v4886, 4294901760
          %4888 = vmatpush1.msra.mxu0 %v4887
          %4889 = vmatprep.subr.mxu0 0.0
          %v4890 = vand.u32 %v4391, 4294901760
          %v4891 = vsub.f32 %v4391, %v4890
          %v4892 = vand.u32 %v4891, 4294901760
          %4893 = vmatpush1.msra.mxu0 %v4892
          %4894 = vmatprep.subr.mxu0 0.0
          %v4895 = vand.u32 %v4392, 4294901760
          %v4896 = vsub.f32 %v4392, %v4895
          %v4897 = vand.u32 %v4896, 4294901760
          %4898 = vmatpush1.msra.mxu0 %v4897
          %4899 = vmatprep.subr.mxu0 0.0
          %v4900 = vand.u32 %v4393, 4294901760
          %v4901 = vsub.f32 %v4393, %v4900
          %v4902 = vand.u32 %v4901, 4294901760
          %4903 = vmatpush1.msra.mxu0 %v4902
          %4904 = vmatprep.subr.mxu0 0.0
          %v4905 = vand.u32 %v4394, 4294901760
          %v4906 = vsub.f32 %v4394, %v4905
          %v4907 = vand.u32 %v4906, 4294901760
          %4908 = vmatpush1.msra.mxu0 %v4907
          %4909 = vmatprep.subr.mxu0 0.0
          %v4910 = vand.u32 %v4395, 4294901760
          %v4911 = vsub.f32 %v4395, %v4910
          %v4912 = vand.u32 %v4911, 4294901760
          %4913 = vmatpush1.msra.mxu0 %v4912
          %4914 = vmatprep.subr.mxu0 0.0
          %v4915 = vand.u32 %v4396, 4294901760
          %v4916 = vsub.f32 %v4396, %v4915
          %v4917 = vand.u32 %v4916, 4294901760
          %4918 = vmatpush1.msra.mxu0 %v4917
          %4919 = vmatprep.subr.mxu0 0.0
          %4920 = vmatpush1.msra.mxu0 0.0
          %4921 = vmatprep.subr.mxu0 0.0
          %4922 = vmatpush1.msra.mxu0 0.0
          %4923 = vmatprep.subr.mxu0 0.0
          %4924 = vmatpush1.msra.mxu0 0.0
          %4925 = vmatprep.subr.mxu0 0.0
          %4926 = vmatpush1.msra.mxu0 0.0
          %4927 = vmatprep.subr.mxu0 0.0
          %4928 = vmatpush1.msra.mxu0 0.0
          %4929 = vmatprep.subr.mxu0 0.0
          %4930 = vmatpush1.msra.mxu0 0.0
          %4931 = vmatprep.subr.mxu0 0.0
          %4932 = vmatpush1.msra.mxu0 0.0
          %4933 = vmatprep.subr.mxu0 0.0
          %4934 = vmatpush1.msra.mxu0 0.0
          %4935 = vmatprep.subr.mxu0 0.0
          %4936 = vmatpush1.msra.mxu0 0.0
          %4937 = vmatprep.subr.mxu0 0.0
          %4938 = vmatpush1.msra.mxu0 0.0
          %4939 = vmatprep.subr.mxu0 0.0
          %4940 = vmatpush1.msra.mxu0 0.0
          %4941 = vmatprep.subr.mxu0 0.0
          %4942 = vmatpush1.msra.mxu0 0.0
          %4943 = vmatprep.subr.mxu0 0.0
          %4944 = vmatpush1.msra.mxu0 0.0
          %4945 = vmatprep.subr.mxu0 0.0
          %4946 = vmatpush1.msra.mxu0 0.0
          %4947 = vmatprep.subr.mxu0 0.0
          %4948 = vmatpush1.msra.mxu0 0.0
          %4949 = vmatprep.subr.mxu0 0.0
          %4950 = vmatpush1.msra.mxu0 0.0
          %4951 = vmatprep.mubr.f32.mxu0 0.0
          %v4952 = vand.u32 %v4380, 4294901760
          %4953 = vmatmul.mubr.f32.gmra.mrb[0].mxu0 %v4952
          %v4954 = vpop.f32.mrb[0].mxu0
          %v4955 = vadd.f32 %v4836, %v4954
          %v4956 = vpop.f32.mrb[0].mxu0
          %4957 = vdwg.mxu0
          %4958 = vmatprep.subr.mxu0 0.0
          %v4959 = vand.u32 %v4381, 4294901760
          %4960 = vmatpush1.msra.mxu0 %v4959
          %4961 = vmatprep.subr.mxu0 0.0
          %v4962 = vand.u32 %v4382, 4294901760
          %4963 = vmatpush1.msra.mxu0 %v4962
          %4964 = vmatprep.subr.mxu0 0.0
          %v4965 = vand.u32 %v4383, 4294901760
          %4966 = vmatpush1.msra.mxu0 %v4965
          %4967 = vmatprep.subr.mxu0 0.0
          %v4968 = vand.u32 %v4384, 4294901760
          %4969 = vmatpush1.msra.mxu0 %v4968
          %4970 = vmatprep.subr.mxu0 0.0
          %v4971 = vand.u32 %v4385, 4294901760
          %4972 = vmatpush1.msra.mxu0 %v4971
          %4973 = vmatprep.subr.mxu0 0.0
          %v4974 = vand.u32 %v4386, 4294901760
          %4975 = vmatpush1.msra.mxu0 %v4974
          %4976 = vmatprep.subr.mxu0 0.0
          %v4977 = vand.u32 %v4387, 4294901760
          %4978 = vmatpush1.msra.mxu0 %v4977
          %4979 = vmatprep.subr.mxu0 0.0
          %v4980 = vand.u32 %v4388, 4294901760
          %4981 = vmatpush1.msra.mxu0 %v4980
          %4982 = vmatprep.subr.mxu0 0.0
          %v4983 = vand.u32 %v4389, 4294901760
          %4984 = vmatpush1.msra.mxu0 %v4983
          %4985 = vmatprep.subr.mxu0 0.0
          %v4986 = vand.u32 %v4390, 4294901760
          %4987 = vmatpush1.msra.mxu0 %v4986
          %4988 = vmatprep.subr.mxu0 0.0
          %v4989 = vand.u32 %v4391, 4294901760
          %4990 = vmatpush1.msra.mxu0 %v4989
          %4991 = vmatprep.subr.mxu0 0.0
          %v4992 = vand.u32 %v4392, 4294901760
          %4993 = vmatpush1.msra.mxu0 %v4992
          %4994 = vmatprep.subr.mxu0 0.0
          %v4995 = vand.u32 %v4393, 4294901760
          %4996 = vmatpush1.msra.mxu0 %v4995
          %4997 = vmatprep.subr.mxu0 0.0
          %v4998 = vand.u32 %v4394, 4294901760
          %4999 = vmatpush1.msra.mxu0 %v4998
          %5000 = vmatprep.subr.mxu0 0.0
          %v5001 = vand.u32 %v4395, 4294901760
          %5002 = vmatpush1.msra.mxu0 %v5001
          %5003 = vmatprep.subr.mxu0 0.0
          %v5004 = vand.u32 %v4396, 4294901760
          %5005 = vmatpush1.msra.mxu0 %v5004
          %5006 = vmatprep.subr.mxu0 0.0
          %5007 = vmatpush1.msra.mxu0 0.0
          %5008 = vmatprep.subr.mxu0 0.0
          %5009 = vmatpush1.msra.mxu0 0.0
          %5010 = vmatprep.subr.mxu0 0.0
          %5011 = vmatpush1.msra.mxu0 0.0
          %5012 = vmatprep.subr.mxu0 0.0
          %5013 = vmatpush1.msra.mxu0 0.0
          %5014 = vmatprep.subr.mxu0 0.0
          %5015 = vmatpush1.msra.mxu0 0.0
          %5016 = vmatprep.subr.mxu0 0.0
          %5017 = vmatpush1.msra.mxu0 0.0
          %5018 = vmatprep.subr.mxu0 0.0
          %5019 = vmatpush1.msra.mxu0 0.0
          %5020 = vmatprep.subr.mxu0 0.0
          %5021 = vmatpush1.msra.mxu0 0.0
          %5022 = vmatprep.subr.mxu0 0.0
          %5023 = vmatpush1.msra.mxu0 0.0
          %5024 = vmatprep.subr.mxu0 0.0
          %5025 = vmatpush1.msra.mxu0 0.0
          %5026 = vmatprep.subr.mxu0 0.0
          %5027 = vmatpush1.msra.mxu0 0.0
          %5028 = vmatprep.subr.mxu0 0.0
          %5029 = vmatpush1.msra.mxu0 0.0
          %5030 = vmatprep.subr.mxu0 0.0
          %5031 = vmatpush1.msra.mxu0 0.0
          %5032 = vmatprep.subr.mxu0 0.0
          %5033 = vmatpush1.msra.mxu0 0.0
          %5034 = vmatprep.subr.mxu0 0.0
          %5035 = vmatpush1.msra.mxu0 0.0
          %5036 = vmatprep.subr.mxu0 0.0
          %5037 = vmatpush1.msra.mxu0 0.0
          %5038 = vmatprep.mubr.f32.mxu0 0.0
          %v5039 = vand.u32 %v4380, 4294901760
          %5040 = vmatmul.mubr.f32.gmra.mrb[0].mxu0 %v5039
          %v5041 = vpop.f32.mrb[0].mxu0
          %v5042 = vadd.f32 %v4955, %v5041
          %v5043 = vpop.f32.mrb[0].mxu0
          %5044 = vdwg.mxu0
          %v5045 = vadd.f32 %v3683, %v5042
          %v5046 = vld [vmem:[%s6] sm:$0x1]
          %v5047 = vld [vmem:[%s7] sm:$0x1]
          %5048 = vadd.xlane.f32.xlu0 %v5045
          %v5049 = vpop.xlane.xlu0 %5048
          %v5050 = vmul.f32 %v5049, 0.03125
          %v5051 = vsub.f32 %v5045, %v5050
          %v5052 = vmul.f32 %v5051, %v3686
          %v5053 = vmul.f32 %v5052, %v5052
          %5054 = vadd.xlane.f32.xlu0 %v5053
          %v5055 = vpop.xlane.xlu0 %5054
          %v5056 = vmul.f32 %v5055, 0.03125
          %v5057 = vadd.f32 %v5056, 1e-05
          %v5058 = vrsqrt.pop %v5057
          %v5059 = vmul.f32 %v5052, %v5058
          %v5061 = vlaneseq
          %v5062 = vshrl.u32 %v5061, 7
          %v5063 = vsub.s32 0, %v5062
          %v5064 = vrot.slane %v5046, %v5063
          %v5066 = vmul.f32 %v5059, %v5064
          %v5068 = vlaneseq
          %v5069 = vshrl.u32 %v5068, 7
          %v5070 = vsub.s32 0, %v5069
          %v5071 = vrot.slane %v5047, %v5070
          %v5073 = vadd.f32 %v5066, %v5071
          %5074 = vst [vmem:[%s546] sm:$0xff] %v5073
        $region96: #{tpu_custom_call.1} parent=67 // pred_fallthru
          _
        %s5075 = sand.u32 %s320, 1
        %s5076 = scalar_lea.sflag [#allocation5], %s5075
        %s5077 = sand.u32 %s320, 1
        %s5078 = smul.addr %s5077, 8
        %s5079 = scalar_lea.vmem [#allocation12], %s5078
        // Predicated region
        $region97: #{tpu_custom_call.1} parent=67 // pred_check
          %p5080 = pneg %p330
        $region98: #{tpu_custom_call.1} parent=67 // pred_check_branch
          %5082 = sbr.rel (%p5080) target = $region100
        $region99: #{tpu_custom_call.1} parent=67 // pred_region
          %s5084 = ssub.s32 128, 128
          %5085 = vsyncadd %s5076, %s5084
          %s5086 = smul.addr %s37, 128
          %s5087 = scalar_lea.hbm %s12, %s5086
          %s5089 = sshll.u32 %s5079, 4
          %s5090 = int_to_ptr.vmem [resolvable:$true] %s5089
          %5092 = dma.vmem_to_hbm [thread:$0]  %s5090, 128, %s5087, %s5076
        $region100: #{tpu_custom_call.1} parent=67 // pred_fallthru
          _
      $region68: #{tpu_custom_call.1} parent=5 // pred_fallthru
        _
      %p5093 = scmp.le.s32.totalorder 2, %s28
      // Predicated region
      $region101: #{tpu_custom_call.1} parent=5 // pred_check
        %p5094 = pneg %p5093
      $region102: #{tpu_custom_call.1} parent=5 // pred_check_branch
        %5096 = sbr.rel (%p5094) target = $region104
      $region103: #{tpu_custom_call.1} parent=5 // pred_region
        %s5097 = ssub.s32 %s28, 2
        // Predicated region
        $region105: #{tpu_custom_call.1} parent=103 // pred_check
          %p5098 = pneg %p336
        $region106: #{tpu_custom_call.1} parent=103 // pred_check_branch
          %5100 = sbr.rel (%p5098) target = $region108
        $region107: #{tpu_custom_call.1} parent=103 // pred_region
          %s5101 = sand.u32 %s321, 1
          %s5102 = scalar_lea.sflag [#allocation5], %s5101
          %s5103 = sand.u32 %s321, 1
          %s5104 = smul.addr %s5103, 8
          %s5105 = scalar_lea.vmem [#allocation12], %s5104
          %5106 = dma.done %s5102, 128
        $region108: #{tpu_custom_call.1} parent=103 // pred_fallthru
          _
      $region104: #{tpu_custom_call.1} parent=5 // pred_fallthru
        _
    $region6: #{tpu_custom_call.1} parent=1 // loop_footer
      %s32 = sadd.s32 1, %s28
    $region7: #{tpu_custom_call.1} parent=1 // loop_footer_branch
      %27 = sbr.rel target = $region3
    $region8: #{tpu_custom_call.1} parent=1 // loop_exit
      _
    %5107 = vsyncpa [#allocation4], 1
    %s5108 = scalar_lea.sflag [#allocation4], 1
    %5109 = vsyncpa %s5108, 1
    %5110 = vsyncpa [#allocation7], 1
    %s5111 = scalar_lea.sflag [#allocation7], 1
    %5112 = vsyncpa %s5111, 1
    %5113 = vsyncpa [#allocation10], 1
    %5114 = vsyncpa [#allocation5], 1
    %s5115 = scalar_lea.sflag [#allocation5], 1
    %5116 = vsyncpa %s5115, 1

// kernel: tpu_custom_call.1
$region0: #{tpu_custom_call.1}
  #allocation0 [shape = 'u32[]', space=smem, size = 0x4, offset = 0x4, fixed_abs, tag = 'smem constant byte address 0x4 - core index']
  #allocation1 [shape = 'u32[144,128]{1,0:T(1,128)}', space=vmem, size = 0x12000, scoped, tag = 'internal scratch']
  #allocation2 [shape = 'f32[8,128]{1,0:T(8,128)}', space=vmem, size = 0x1000, scoped, tag = 'scratch operand']
  %s0 = inlined_call_operand.hbm [shape: f32[16,128], index: 0, kind: input, shape index: {}]
  %s1 = inlined_call_operand.hbm [shape: f32[2,128,384], index: 1, kind: input, shape index: {}]
  %s2 = inlined_call_operand.hbm [shape: f32[2,128,128], index: 2, kind: input, shape index: {}]
  %s3 = inlined_call_operand.vmem [shape: f32[1,128], index: 3, kind: input, shape index: {}]
  %s4 = inlined_call_operand.vmem [shape: f32[1,128], index: 4, kind: input, shape index: {}]
  %s5 = inlined_call_operand.vmem [shape: f32[1,128], index: 5, kind: input, shape index: {}]
  %s6 = inlined_call_operand.vmem [shape: f32[1,128], index: 6, kind: input, shape index: {}]
  %s7 = inlined_call_operand.vmem [shape: f32[1,128], index: 7, kind: input, shape index: {}]
  %s8 = inlined_call_operand.hbm [shape: f32[128,128], index: 8, kind: input, shape index: {}]
  %s9 = inlined_call_operand.vmem [shape: f32[1,128], index: 9, kind: input, shape index: {}]
  %s10 = inlined_call_operand.hbm [shape: f32[128,128], index: 10, kind: input, shape index: {}]
  %s11 = inlined_call_operand.vmem [shape: f32[1,128], index: 11, kind: input, shape index: {}]
  %s12 = inlined_call_operand.hbm [shape: f32[16,128], index: 12, kind: output, shape index: {}]
  %s13 = sld [smem:[#allocation0]]
  $region109: #{tpu_custom_call.1} parent=0
    _
  %s15 = ssub.s32 1, %s13
  %s16 = scalar_select 0, %s15, %s13
  $region1: #{tpu_custom_call.1} parent=0
    #allocation3 [shape = 'u8[8192]{0}', space=vmem, size = 0x2000, scoped, tag = 'input window, operand 0']
    #allocation4 [shape = 's32[2]{0}', space=sflag, size = 0x8, scoped, tag = 'scoped memory for tpu_custom_call.1']
    #allocation5 [shape = 's32[2]{0}', space=sflag, size = 0x8, scoped, tag = 'scoped memory for tpu_custom_call.1']
    #allocation6 [shape = 'u8[393216]{0}', space=vmem, size = 0x60000, scoped, tag = 'input window, operand 1']
    #allocation7 [shape = 's32[2]{0}', space=sflag, size = 0x8, scoped, tag = 'scoped memory for tpu_custom_call.1']
    #allocation8 [shape = 'u8[131072]{0}', space=vmem, size = 0x20000, scoped, tag = 'input window, operand 2']
    #allocation9 [shape = 'u8[65536]{0}', space=vmem, size = 0x10000, scoped, tag = 'input window, operand 8, single buffered']
    #allocation10 [shape = 's32[1]{0}', space=sflag, size = 0x4, scoped, tag = 'scoped memory for tpu_custom_call.1']
    #allocation11 [shape = 'u8[65536]{0}', space=vmem, size = 0x10000, scoped, tag = 'input window, operand 10, single buffered']
    #allocation12 [shape = 'u8[8192]{0}', space=vmem, size = 0x2000, scoped, tag = 'output window, operand 0']
    %17 = vsyncpa [#allocation4], 0
    %s18 = scalar_lea.sflag [#allocation4], 1
    %19 = vsyncpa %s18, 0
    %20 = vsyncpa [#allocation7], 0
    %s21 = scalar_lea.sflag [#allocation7], 1
    %22 = vsyncpa %s21, 0
    %23 = vsyncpa [#allocation10], 0
    %24 = vsyncpa [#allocation5], 0
    %s25 = scalar_lea.sflag [#allocation5], 1
    %26 = vsyncpa %s25, 0
    loop: start=0, step=1, limit=6
    $region2: #{tpu_custom_call.1} parent=1 // loop_pre_header
      _
    $region3: #{tpu_custom_call.1} parent=1 // loop_header
      %s28 = sphi 0, %s32
      %p29 = scmp.ge.s32.totalorder %s28, 6
      %s35 = sphi 0, %s47
      %s36 = sphi 0, %s43
      %s37 = sphi 0, %s35
      %s38 = sphi 0, %s36
      %s39 = sphi 0, %s37
      %s40 = sphi 0, %s38
      %s50 = sphi 0, %s52
      %s53 = sphi 0, %s50
      %s54 = sphi 0, %s53
      %s70 = sphi 0, %s54
      %s76 = sphi 0, %s78
      %s79 = sphi 0, %s76
      %s80 = sphi 0, %s79
      %s96 = sphi 0, %s80
      %s102 = sphi 0, %s104
      %s105 = sphi 0, %s102
      %s106 = sphi 0, %s105
      %s122 = sphi 0, %s106
      %s126 = sphi 0, %s126
      %s128 = sphi 0, %s126
      %s129 = sphi 0, %s128
      %s143 = sphi 0, %s129
      %s147 = sphi 0, %s147
      %s149 = sphi 0, %s147
      %s150 = sphi 0, %s149
      %s164 = sphi 0, %s150
      %s168 = sphi 0, %s168
      %s170 = sphi 0, %s168
      %s171 = sphi 0, %s170
      %s185 = sphi 0, %s171
      %s189 = sphi 0, %s189
      %s191 = sphi 0, %s189
      %s192 = sphi 0, %s191
      %s206 = sphi 0, %s192
      %s210 = sphi 0, %s210
      %s212 = sphi 0, %s210
      %s213 = sphi 0, %s212
      %s227 = sphi 0, %s213
      %s231 = sphi 0, %s231
      %s233 = sphi 0, %s231
      %s234 = sphi 0, %s233
      %s248 = sphi 0, %s234
      %s252 = sphi 0, %s252
      %s254 = sphi 0, %s252
      %s255 = sphi 0, %s254
      %s269 = sphi 0, %s255
      %s273 = sphi 0, %s273
      %s275 = sphi 0, %s273
      %s276 = sphi 0, %s275
      %s290 = sphi 0, %s276
      %s294 = sphi 0, %s294
      %s296 = sphi 0, %s294
      %s297 = sphi 0, %s296
      %s311 = sphi 0, %s297
      %s317 = sphi 0, %s319
      %s320 = sphi 0, %s317
      %s321 = sphi 0, %s320
      %s337 = sphi 0, %s321
    $region4: #{tpu_custom_call.1} parent=1 // loop_header_branch
      %31 = sbr.rel (%p29) target = $region8
    $region5: #{tpu_custom_call.1} parent=1 // loop_body
      %s33 = ssub.s32 %s28, 1
      %s34 = ssub.s32 %s28, 2
      %s41 = sadd.s32 1, %s36
      %p42 = scmp.ge.s32.totalorder %s41, 2
      %s43 = scalar_select %p42, 0, %s41
      %s44 = sadd.s32 1, %s35
      %s45 = scalar_select %p42, %s44, %s35
      %p46 = scmp.ge.s32.totalorder %s45, 2
      %s47 = scalar_select %p46, 0, %s45
      %s48 = ssub.s32 %s35, %s47
      %p49 = scmp.eq.s32.totalorder %s48, 0
      %s51 = sadd.s32 %s50, 1
      %s52 = scalar_select %p49, %s50, %s51
      %p55 = pneg %p49
      %p56 = scmp.eq.s32.totalorder %s28, 3
      %p57 = por %p55, %p56
      %p58 = scmp.ne.s32.totalorder %s50, %s53
      %p59 = scmp.eq.s32.totalorder %s28, 0
      %p60 = por %p58, %p59
      %p61 = scmp.ne.s32.totalorder %s50, %s53
      %p62 = scmp.eq.s32.totalorder %s33, 3
      %p63 = por %p61, %p62
      %p64 = scmp.ne.s32.totalorder %s53, %s54
      %p65 = scmp.eq.s32.totalorder %s33, 0
      %p66 = por %p64, %p65
      %p67 = scmp.ne.s32.totalorder %s53, %s54
      %p68 = scmp.eq.s32.totalorder %s34, 3
      %p69 = por %p67, %p68
      %p71 = scmp.ne.s32.totalorder %s54, %s70
      %p72 = scmp.eq.s32.totalorder %s34, 0
      %p73 = por %p71, %p72
      %s74 = ssub.s32 %s36, %s43
      %p75 = scmp.eq.s32.totalorder %s74, 0
      %s77 = sadd.s32 %s76, 1
      %s78 = scalar_select %p75, %s76, %s77
      %p81 = pneg %p75
      %p82 = scmp.eq.s32.totalorder %s28, 3
      %p83 = por %p81, %p82
      %p84 = scmp.ne.s32.totalorder %s76, %s79
      %p85 = scmp.eq.s32.totalorder %s28, 0
      %p86 = por %p84, %p85
      %p87 = scmp.ne.s32.totalorder %s76, %s79
      %p88 = scmp.eq.s32.totalorder %s33, 3
      %p89 = por %p87, %p88
      %p90 = scmp.ne.s32.totalorder %s79, %s80
      %p91 = scmp.eq.s32.totalorder %s33, 0
      %p92 = por %p90, %p91
      %p93 = scmp.ne.s32.totalorder %s79, %s80
      %p94 = scmp.eq.s32.totalorder %s34, 3
      %p95 = por %p93, %p94
      %p97 = scmp.ne.s32.totalorder %s80, %s96
      %p98 = scmp.eq.s32.totalorder %s34, 0
      %p99 = por %p97, %p98
      %s100 = ssub.s32 %s36, %s43
      %p101 = scmp.eq.s32.totalorder %s100, 0
      %s103 = sadd.s32 %s102, 1
      %s104 = scalar_select %p101, %s102, %s103
      %p107 = pneg %p101
      %p108 = scmp.eq.s32.totalorder %s28, 3
      %p109 = por %p107, %p108
      %p110 = scmp.ne.s32.totalorder %s102, %s105
      %p111 = scmp.eq.s32.totalorder %s28, 0
      %p112 = por %p110, %p111
      %p113 = scmp.ne.s32.totalorder %s102, %s105
      %p114 = scmp.eq.s32.totalorder %s33, 3
      %p115 = por %p113, %p114
      %p116 = scmp.ne.s32.totalorder %s105, %s106
      %p117 = scmp.eq.s32.totalorder %s33, 0
      %p118 = por %p116, %p117
      %p119 = scmp.ne.s32.totalorder %s105, %s106
      %p120 = scmp.eq.s32.totalorder %s34, 3
      %p121 = por %p119, %p120
      %p123 = scmp.ne.s32.totalorder %s106, %s122
      %p124 = scmp.eq.s32.totalorder %s34, 0
      %p125 = por %p123, %p124
      %s127 = sadd.s32 %s126, 1
      %p130 = scmp.eq.s32.totalorder %s28, 3
      %p131 = scmp.ne.s32.totalorder %s126, %s128
      %p132 = scmp.eq.s32.totalorder %s28, 0
      %p133 = por %p131, %p132
      %p134 = scmp.ne.s32.totalorder %s126, %s128
      %p135 = scmp.eq.s32.totalorder %s33, 3
      %p136 = por %p134, %p135
      %p137 = scmp.ne.s32.totalorder %s128, %s129
      %p138 = scmp.eq.s32.totalorder %s33, 0
      %p139 = por %p137, %p138
      %p140 = scmp.ne.s32.totalorder %s128, %s129
      %p141 = scmp.eq.s32.totalorder %s34, 3
      %p142 = por %p140, %p141
      %p144 = scmp.ne.s32.totalorder %s129, %s143
      %p145 = scmp.eq.s32.totalorder %s34, 0
      %p146 = por %p144, %p145
      %s148 = sadd.s32 %s147, 1
      %p151 = scmp.eq.s32.totalorder %s28, 3
      %p152 = scmp.ne.s32.totalorder %s147, %s149
      %p153 = scmp.eq.s32.totalorder %s28, 0
      %p154 = por %p152, %p153
      %p155 = scmp.ne.s32.totalorder %s147, %s149
      %p156 = scmp.eq.s32.totalorder %s33, 3
      %p157 = por %p155, %p156
      %p158 = scmp.ne.s32.totalorder %s149, %s150
      %p159 = scmp.eq.s32.totalorder %s33, 0
      %p160 = por %p158, %p159
      %p161 = scmp.ne.s32.totalorder %s149, %s150
      %p162 = scmp.eq.s32.totalorder %s34, 3
      %p163 = por %p161, %p162
      %p165 = scmp.ne.s32.totalorder %s150, %s164
      %p166 = scmp.eq.s32.totalorder %s34, 0
      %p167 = por %p165, %p166
      %s169 = sadd.s32 %s168, 1
      %p172 = scmp.eq.s32.totalorder %s28, 3
      %p173 = scmp.ne.s32.totalorder %s168, %s170
      %p174 = scmp.eq.s32.totalorder %s28, 0
      %p175 = por %p173, %p174
      %p176 = scmp.ne.s32.totalorder %s168, %s170
      %p177 = scmp.eq.s32.totalorder %s33, 3
      %p178 = por %p176, %p177
      %p179 = scmp.ne.s32.totalorder %s170, %s171
      %p180 = scmp.eq.s32.totalorder %s33, 0
      %p181 = por %p179, %p180
      %p182 = scmp.ne.s32.totalorder %s170, %s171
      %p183 = scmp.eq.s32.totalorder %s34, 3
      %p184 = por %p182, %p183
      %p186 = scmp.ne.s32.totalorder %s171, %s185
      %p187 = scmp.eq.s32.totalorder %s34, 0
      %p188 = por %p186, %p187
      %s190 = sadd.s32 %s189, 1
      %p193 = scmp.eq.s32.totalorder %s28, 3
      %p194 = scmp.ne.s32.totalorder %s189, %s191
      %p195 = scmp.eq.s32.totalorder %s28, 0
      %p196 = por %p194, %p195
      %p197 = scmp.ne.s32.totalorder %s189, %s191
      %p198 = scmp.eq.s32.totalorder %s33, 3
      %p199 = por %p197, %p198
      %p200 = scmp.ne.s32.totalorder %s191, %s192
      %p201 = scmp.eq.s32.totalorder %s33, 0
      %p202 = por %p200, %p201
      %p203 = scmp.ne.s32.totalorder %s191, %s192
      %p204 = scmp.eq.s32.totalorder %s34, 3
      %p205 = por %p203, %p204
      %p207 = scmp.ne.s32.totalorder %s192, %s206
      %p208 = scmp.eq.s32.totalorder %s34, 0
      %p209 = por %p207, %p208
      %s211 = sadd.s32 %s210, 1
      %p214 = scmp.eq.s32.totalorder %s28, 3
      %p215 = scmp.ne.s32.totalorder %s210, %s212
      %p216 = scmp.eq.s32.totalorder %s28, 0
      %p217 = por %p215, %p216
      %p218 = scmp.ne.s32.totalorder %s210, %s212
      %p219 = scmp.eq.s32.totalorder %s33, 3
      %p220 = por %p218, %p219
      %p221 = scmp.ne.s32.totalorder %s212, %s213
      %p222 = scmp.eq.s32.totalorder %s33, 0
      %p223 = por %p221, %p222
      %p224 = scmp.ne.s32.totalorder %s212, %s213
      %p225 = scmp.eq.s32.totalorder %s34, 3
      %p226 = por %p224, %p225
      %p228 = scmp.ne.s32.totalorder %s213, %s227
      %p229 = scmp.eq.s32.totalorder %s34, 0
      %p230 = por %p228, %p229
      %s232 = sadd.s32 %s231, 1
      %p235 = scmp.eq.s32.totalorder %s28, 3
      %p236 = scmp.ne.s32.totalorder %s231, %s233
      %p237 = scmp.eq.s32.totalorder %s28, 0
      %p238 = por %p236, %p237
      %p239 = scmp.ne.s32.totalorder %s231, %s233
      %p240 = scmp.eq.s32.totalorder %s33, 3
      %p241 = por %p239, %p240
      %p242 = scmp.ne.s32.totalorder %s233, %s234
      %p243 = scmp.eq.s32.totalorder %s33, 0
      %p244 = por %p242, %p243
      %p245 = scmp.ne.s32.totalorder %s233, %s234
      %p246 = scmp.eq.s32.totalorder %s34, 3
      %p247 = por %p245, %p246
      %p249 = scmp.ne.s32.totalorder %s234, %s248
      %p250 = scmp.eq.s32.totalorder %s34, 0
      %p251 = por %p249, %p250
      %s253 = sadd.s32 %s252, 1
      %p256 = scmp.eq.s32.totalorder %s28, 3
      %p257 = scmp.ne.s32.totalorder %s252, %s254
      %p258 = scmp.eq.s32.totalorder %s28, 0
      %p259 = por %p257, %p258
      %p260 = scmp.ne.s32.totalorder %s252, %s254
      %p261 = scmp.eq.s32.totalorder %s33, 3
      %p262 = por %p260, %p261
      %p263 = scmp.ne.s32.totalorder %s254, %s255
      %p264 = scmp.eq.s32.totalorder %s33, 0
      %p265 = por %p263, %p264
      %p266 = scmp.ne.s32.totalorder %s254, %s255
      %p267 = scmp.eq.s32.totalorder %s34, 3
      %p268 = por %p266, %p267
      %p270 = scmp.ne.s32.totalorder %s255, %s269
      %p271 = scmp.eq.s32.totalorder %s34, 0
      %p272 = por %p270, %p271
      %s274 = sadd.s32 %s273, 1
      %p277 = scmp.eq.s32.totalorder %s28, 3
      %p278 = scmp.ne.s32.totalorder %s273, %s275
      %p279 = scmp.eq.s32.totalorder %s28, 0
      %p280 = por %p278, %p279
      %p281 = scmp.ne.s32.totalorder %s273, %s275
      %p282 = scmp.eq.s32.totalorder %s33, 3
      %p283 = por %p281, %p282
      %p284 = scmp.ne.s32.totalorder %s275, %s276
      %p285 = scmp.eq.s32.totalorder %s33, 0
      %p286 = por %p284, %p285
      %p287 = scmp.ne.s32.totalorder %s275, %s276
      %p288 = scmp.eq.s32.totalorder %s34, 3
      %p289 = por %p287, %p288
      %p291 = scmp.ne.s32.totalorder %s276, %s290
      %p292 = scmp.eq.s32.totalorder %s34, 0
      %p293 = por %p291, %p292
      %s295 = sadd.s32 %s294, 1
      %p298 = scmp.eq.s32.totalorder %s28, 3
      %p299 = scmp.ne.s32.totalorder %s294, %s296
      %p300 = scmp.eq.s32.totalorder %s28, 0
      %p301 = por %p299, %p300
      %p302 = scmp.ne.s32.totalorder %s294, %s296
      %p303 = scmp.eq.s32.totalorder %s33, 3
      %p304 = por %p302, %p303
      %p305 = scmp.ne.s32.totalorder %s296, %s297
      %p306 = scmp.eq.s32.totalorder %s33, 0
      %p307 = por %p305, %p306
      %p308 = scmp.ne.s32.totalorder %s296, %s297
      %p309 = scmp.eq.s32.totalorder %s34, 3
      %p310 = por %p308, %p309
      %p312 = scmp.ne.s32.totalorder %s297, %s311
      %p313 = scmp.eq.s32.totalorder %s34, 0
      %p314 = por %p312, %p313
      %s315 = ssub.s32 %s35, %s47
      %p316 = scmp.eq.s32.totalorder %s315, 0
      %s318 = sadd.s32 %s317, 1
      %s319 = scalar_select %p316, %s317, %s318
      %p322 = pneg %p316
      %p323 = scmp.eq.s32.totalorder %s28, 3
      %p324 = por %p322, %p323
      %p325 = scmp.ne.s32.totalorder %s317, %s320
      %p326 = scmp.eq.s32.totalorder %s28, 0
      %p327 = por %p325, %p326
      %p328 = scmp.ne.s32.totalorder %s317, %s320
      %p329 = scmp.eq.s32.totalorder %s33, 3
      %p330 = por %p328, %p329
      %p331 = scmp.ne.s32.totalorder %s320, %s321
      %p332 = scmp.eq.s32.totalorder %s33, 0
      %p333 = por %p331, %p332
      %p334 = scmp.ne.s32.totalorder %s320, %s321
      %p335 = scmp.eq.s32.totalorder %s34, 3
      %p336 = por %p334, %p335
      %p338 = scmp.ne.s32.totalorder %s321, %s337
      %p339 = scmp.eq.s32.totalorder %s34, 0
      %p340 = por %p338, %p339
      %p341 = scmp.le.s32.totalorder 1, %s28
      %p342 = scmp.lt.s32.totalorder %s28, 5
      %p343 = pnand %p341, %p342
      %p344 = pneg %p343
      // Predicated region
      $region9: #{tpu_custom_call.1} parent=5 // pred_check
        _
      $region10: #{tpu_custom_call.1} parent=5 // pred_check_branch
        %346 = sbr.rel (%p343) target = $region12
      $region11: #{tpu_custom_call.1} parent=5 // pred_region
        %s347 = ssub.s32 %s28, 1
        // Predicated region
        $region13: #{tpu_custom_call.1} parent=11 // pred_check
          %p348 = pneg %p139
        $region14: #{tpu_custom_call.1} parent=11 // pred_check_branch
          %350 = sbr.rel (%p348) target = $region16
        $region15: #{tpu_custom_call.1} parent=11 // pred_region
          _
        $region16: #{tpu_custom_call.1} parent=11 // pred_fallthru
          _
        // Predicated region
        $region17: #{tpu_custom_call.1} parent=11 // pred_check
          %p351 = pneg %p160
        $region18: #{tpu_custom_call.1} parent=11 // pred_check_branch
          %353 = sbr.rel (%p351) target = $region20
        $region19: #{tpu_custom_call.1} parent=11 // pred_region
          _
        $region20: #{tpu_custom_call.1} parent=11 // pred_fallthru
          _
        // Predicated region
        $region21: #{tpu_custom_call.1} parent=11 // pred_check
          %p354 = pneg %p181
        $region22: #{tpu_custom_call.1} parent=11 // pred_check_branch
          %356 = sbr.rel (%p354) target = $region24
        $region23: #{tpu_custom_call.1} parent=11 // pred_region
          _
        $region24: #{tpu_custom_call.1} parent=11 // pred_fallthru
          _
        // Predicated region
        $region25: #{tpu_custom_call.1} parent=11 // pred_check
          %p357 = pneg %p202
        $region26: #{tpu_custom_call.1} parent=11 // pred_check_branch
          %359 = sbr.rel (%p357) target = $region28
        $region27: #{tpu_custom_call.1} parent=11 // pred_region
          _
        $region28: #{tpu_custom_call.1} parent=11 // pred_fallthru
          _
        // Predicated region
        $region29: #{tpu_custom_call.1} parent=11 // pred_check
          %p360 = pneg %p223
        $region30: #{tpu_custom_call.1} parent=11 // pred_check_branch
          %362 = sbr.rel (%p360) target = $region32
        $region31: #{tpu_custom_call.1} parent=11 // pred_region
          _
        $region32: #{tpu_custom_call.1} parent=11 // pred_fallthru
          _
        // Predicated region
        $region33: #{tpu_custom_call.1} parent=11 // pred_check
          %p363 = pneg %p244
        $region34: #{tpu_custom_call.1} parent=11 // pred_check_branch
          %365 = sbr.rel (%p363) target = $region36
        $region35: #{tpu_custom_call.1} parent=11 // pred_region
          %s367 = ssub.s32 2048, 2048
          %368 = vsyncadd [#allocation10], %s367
          %s369 = sshll.u32 [#allocation9], 4
          %s370 = int_to_ptr.vmem [resolvable:$true] %s369
          %375 = dma.hbm_to_vmem [thread:$0]  %s8, 2048, %s370, [#allocation10], 128, 128, 8
        $region36: #{tpu_custom_call.1} parent=11 // pred_fallthru
          _
        // Predicated region
        $region37: #{tpu_custom_call.1} parent=11 // pred_check
          %p376 = pneg %p265
        $region38: #{tpu_custom_call.1} parent=11 // pred_check_branch
          %378 = sbr.rel (%p376) target = $region40
        $region39: #{tpu_custom_call.1} parent=11 // pred_region
          _
        $region40: #{tpu_custom_call.1} parent=11 // pred_fallthru
          _
        // Predicated region
        $region41: #{tpu_custom_call.1} parent=11 // pred_check
          %p379 = pneg %p286
        $region42: #{tpu_custom_call.1} parent=11 // pred_check_branch
          %381 = sbr.rel (%p379) target = $region44
        $region43: #{tpu_custom_call.1} parent=11 // pred_region
          %s383 = ssub.s32 2048, 2048
          %384 = vsyncadd [#allocation10], %s383
          %s385 = sshll.u32 [#allocation11], 4
          %s386 = int_to_ptr.vmem [resolvable:$true] %s385
          %391 = dma.hbm_to_vmem [thread:$0]  %s10, 2048, %s386, [#allocation10], 128, 128, 8
        $region44: #{tpu_custom_call.1} parent=11 // pred_fallthru
          _
        // Predicated region
        $region45: #{tpu_custom_call.1} parent=11 // pred_check
          %p392 = pneg %p307
        $region46: #{tpu_custom_call.1} parent=11 // pred_check_branch
          %394 = sbr.rel (%p392) target = $region48
        $region47: #{tpu_custom_call.1} parent=11 // pred_region
          _
        $region48: #{tpu_custom_call.1} parent=11 // pred_fallthru
          _
      $region12: #{tpu_custom_call.1} parent=5 // pred_fallthru
        _
      %p395 = scmp.lt.s32.totalorder %s28, 4
      // Predicated region
      $region49: #{tpu_custom_call.1} parent=5 // pred_check
        %p396 = pneg %p395
      $region50: #{tpu_custom_call.1} parent=5 // pred_check_branch
        %398 = sbr.rel (%p396) target = $region52
      $region51: #{tpu_custom_call.1} parent=5 // pred_region
        // Predicated region
        $region53: #{tpu_custom_call.1} parent=51 // pred_check
          %p399 = pneg %p60
        $region54: #{tpu_custom_call.1} parent=51 // pred_check_branch
          %401 = sbr.rel (%p399) target = $region56
        $region55: #{tpu_custom_call.1} parent=51 // pred_region
          %s402 = sand.u32 %s50, 1
          %s403 = scalar_lea.sflag [#allocation4], %s402
          %s404 = sand.u32 %s50, 1
          %s405 = smul.addr %s404, 8
          %s406 = scalar_lea.vmem [#allocation3], %s405
          %s408 = ssub.s32 128, 128
          %409 = vsyncadd %s403, %s408
          %s410 = smul.addr %s35, 128
          %s411 = scalar_lea.hbm %s0, %s410
          %s413 = sshll.u32 %s406, 4
          %s414 = int_to_ptr.vmem [resolvable:$true] %s413
          %416 = dma.hbm_to_vmem [thread:$0]  %s411, 128, %s414, %s403
        $region56: #{tpu_custom_call.1} parent=51 // pred_fallthru
          _
        // Predicated region
        $region57: #{tpu_custom_call.1} parent=51 // pred_check
          %p417 = pneg %p86
        $region58: #{tpu_custom_call.1} parent=51 // pred_check_branch
          %419 = sbr.rel (%p417) target = $region60
        $region59: #{tpu_custom_call.1} parent=51 // pred_region
          %s420 = sand.u32 %s28, 1
          %s421 = scalar_lea.sflag [#allocation7], %s420
          %s422 = sand.u32 %s76, 1
          %s423 = smul.addr %s422, 384
          %s424 = scalar_lea.vmem [#allocation6], %s423
          %s426 = ssub.s32 6144, 6144
          %427 = vsyncadd %s421, %s426
          %s428 = smul.addr %s36, 48
          %s429 = smul.addr %s428, 128
          %s430 = scalar_lea.hbm %s1, %s429
          %s431 = sshll.u32 %s424, 4
          %s432 = int_to_ptr.vmem [resolvable:$true] %s431
          %437 = dma.hbm_to_vmem [thread:$0]  %s430, 6144, %s432, %s421, 384, 384, 24
        $region60: #{tpu_custom_call.1} parent=51 // pred_fallthru
          _
        // Predicated region
        $region61: #{tpu_custom_call.1} parent=51 // pred_check
          %p438 = pneg %p112
        $region62: #{tpu_custom_call.1} parent=51 // pred_check_branch
          %440 = sbr.rel (%p438) target = $region64
        $region63: #{tpu_custom_call.1} parent=51 // pred_region
          %s441 = sand.u32 %s28, 1
          %s442 = scalar_lea.sflag [#allocation7], %s441
          %s443 = sand.u32 %s102, 1
          %s444 = smul.addr %s443, 128
          %s445 = scalar_lea.vmem [#allocation8], %s444
          %s447 = ssub.s32 2048, 2048
          %448 = vsyncadd %s442, %s447
          %s449 = smul.addr %s36, 16
          %s450 = smul.addr %s449, 128
          %s451 = scalar_lea.hbm %s2, %s450
          %s452 = sshll.u32 %s445, 4
          %s453 = int_to_ptr.vmem [resolvable:$true] %s452
          %458 = dma.hbm_to_vmem [thread:$0]  %s451, 2048, %s453, %s442, 128, 128, 8
        $region64: #{tpu_custom_call.1} parent=51 // pred_fallthru
          _
      $region52: #{tpu_custom_call.1} parent=5 // pred_fallthru
        _
      %p459 = scmp.le.s32.totalorder 1, %s28
      %p460 = scmp.lt.s32.totalorder %s28, 5
      %p461 = pnand %p459, %p460
      %p462 = pneg %p461
      // Predicated region
      $region65: #{tpu_custom_call.1} parent=5 // pred_check
        _
      $region66: #{tpu_custom_call.1} parent=5 // pred_check_branch
        %464 = sbr.rel (%p461) target = $region68
      $region67: #{tpu_custom_call.1} parent=5 // pred_region
        %s465 = ssub.s32 %s28, 1
        %s466 = sand.u32 %s53, 1
        %s467 = scalar_lea.sflag [#allocation4], %s466
        %s468 = sand.u32 %s53, 1
        %s469 = smul.addr %s468, 8
        %s470 = scalar_lea.vmem [#allocation3], %s469
        // Predicated region
        $region69: #{tpu_custom_call.1} parent=67 // pred_check
          %p471 = pneg %p66
        $region70: #{tpu_custom_call.1} parent=67 // pred_check_branch
          %473 = sbr.rel (%p471) target = $region72
        $region71: #{tpu_custom_call.1} parent=67 // pred_region
          %474 = dma.done %s467, 128
        $region72: #{tpu_custom_call.1} parent=67 // pred_fallthru
          _
        %s475 = sand.u32 %s33, 1
        %s476 = scalar_lea.sflag [#allocation7], %s475
        %s477 = sand.u32 %s79, 1
        %s478 = smul.addr %s477, 384
        %s479 = scalar_lea.vmem [#allocation6], %s478
        // Predicated region
        $region73: #{tpu_custom_call.1} parent=67 // pred_check
          %p480 = pneg %p92
        $region74: #{tpu_custom_call.1} parent=67 // pred_check_branch
          %482 = sbr.rel (%p480) target = $region76
        $region75: #{tpu_custom_call.1} parent=67 // pred_region
          %483 = dma.done %s476, 6144
        $region76: #{tpu_custom_call.1} parent=67 // pred_fallthru
          _
        %s484 = sand.u32 %s33, 1
        %s485 = scalar_lea.sflag [#allocation7], %s484
        %s486 = sand.u32 %s105, 1
        %s487 = smul.addr %s486, 128
        %s488 = scalar_lea.vmem [#allocation8], %s487
        // Predicated region
        $region77: #{tpu_custom_call.1} parent=67 // pred_check
          %p489 = pneg %p118
        $region78: #{tpu_custom_call.1} parent=67 // pred_check_branch
          %491 = sbr.rel (%p489) target = $region80
        $region79: #{tpu_custom_call.1} parent=67 // pred_region
          %492 = dma.done %s485, 2048
        $region80: #{tpu_custom_call.1} parent=67 // pred_fallthru
          _
        // Predicated region
        $region81: #{tpu_custom_call.1} parent=67 // pred_check
          %p493 = pneg %p244
        $region82: #{tpu_custom_call.1} parent=67 // pred_check_branch
          %495 = sbr.rel (%p493) target = $region84
        $region83: #{tpu_custom_call.1} parent=67 // pred_region
          %496 = dma.done [#allocation10], 2048
        $region84: #{tpu_custom_call.1} parent=67 // pred_fallthru
          _
        // Predicated region
        $region85: #{tpu_custom_call.1} parent=67 // pred_check
          %p497 = pneg %p286
        $region86: #{tpu_custom_call.1} parent=67 // pred_check_branch
          %499 = sbr.rel (%p497) target = $region88
        $region87: #{tpu_custom_call.1} parent=67 // pred_region
          %500 = dma.done [#allocation10], 2048
        $region88: #{tpu_custom_call.1} parent=67 // pred_fallthru
          _
        %s501 = sand.u32 %s53, 1
        %s502 = scalar_lea.sflag [#allocation4], %s501
        %s503 = sand.u32 %s53, 1
        %s504 = smul.addr %s503, 8
        %s505 = scalar_lea.vmem [#allocation3], %s504
        %p506 = pneg %p66
        %p507 = pneg %p63
        %s508 = sand.u32 %s33, 1
        %s509 = scalar_lea.sflag [#allocation7], %s508
        %s510 = sand.u32 %s79, 1
        %s511 = smul.addr %s510, 384
        %s512 = scalar_lea.vmem [#allocation6], %s511
        %p513 = pneg %p92
        %p514 = pneg %p89
        %s515 = sand.u32 %s33, 1
        %s516 = scalar_lea.sflag [#allocation7], %s515
        %s517 = sand.u32 %s105, 1
        %s518 = smul.addr %s517, 128
        %s519 = scalar_lea.vmem [#allocation8], %s518
        %p520 = pneg %p118
        %p521 = pneg %p115
        %p522 = pneg %p139
        %p523 = pneg %p136
        %p524 = pneg %p160
        %p525 = pneg %p157
        %p526 = pneg %p181
        %p527 = pneg %p178
        %p528 = pneg %p202
        %p529 = pneg %p199
        %p530 = pneg %p223
        %p531 = pneg %p220
        %p532 = pneg %p244
        %p533 = pneg %p241
        %p534 = pneg %p265
        %p535 = pneg %p262
        %p536 = pneg %p286
        %p537 = pneg %p283
        %p538 = pneg %p307
        %p539 = pneg %p304
        %p540 = pneg %p333
        %p541 = pneg %p330
        %s542 = sand.u32 %s320, 1
        %s543 = scalar_lea.sflag [#allocation5], %s542
        %s544 = sand.u32 %s320, 1
        %s545 = smul.addr %s544, 8
        %s546 = scalar_lea.vmem [#allocation12], %s545
        %p547 = scmp.eq.s32.totalorder %s38, 0
        // Predicated region
        $region89: #{tpu_custom_call.1} parent=67 // pred_check
          %p548 = pneg %p547
        $region90: #{tpu_custom_call.1} parent=67 // pred_check_branch
          %550 = sbr.rel (%p548) target = $region92
        $region91: #{tpu_custom_call.1} parent=67 // pred_region
          %551 = vst [vmem:[#allocation2] sm:$0xff] 0.0
        $region92: #{tpu_custom_call.1} parent=67 // pred_fallthru
          _
        %v552 = vld [vmem:[%s470] sm:$0xff]
        %v553 = vld [vmem:[%s479] sm:$0xff]
        %v554 = vld [vmem:[%s479 + $0x8] sm:$0xff]
        %v555 = vld [vmem:[%s479 + $0x10] sm:$0xff]
        %v556 = vld [vmem:[%s479 + $0x18] sm:$0xff]
        %v557 = vld [vmem:[%s479 + $0x20] sm:$0xff]
        %v558 = vld [vmem:[%s479 + $0x28] sm:$0xff]
        %v559 = vld [vmem:[%s479 + $0x30] sm:$0xff]
        %v560 = vld [vmem:[%s479 + $0x38] sm:$0xff]
        %v561 = vld [vmem:[%s479 + $0x40] sm:$0xff]
        %v562 = vld [vmem:[%s479 + $0x48] sm:$0xff]
        %v563 = vld [vmem:[%s479 + $0x50] sm:$0xff]
        %v564 = vld [vmem:[%s479 + $0x58] sm:$0xff]
        %v565 = vld [vmem:[%s479 + $0x60] sm:$0xff]
        %v566 = vld [vmem:[%s479 + $0x68] sm:$0xff]
        %v567 = vld [vmem:[%s479 + $0x70] sm:$0xff]
        %v568 = vld [vmem:[%s479 + $0x78] sm:$0xff]
        %v569 = vld [vmem:[%s479 + $0x80] sm:$0xff]
        %v570 = vld [vmem:[%s479 + $0x88] sm:$0xff]
        %v571 = vld [vmem:[%s479 + $0x90] sm:$0xff]
        %v572 = vld [vmem:[%s479 + $0x98] sm:$0xff]
        %v573 = vld [vmem:[%s479 + $0xa0] sm:$0xff]
        %v574 = vld [vmem:[%s479 + $0xa8] sm:$0xff]
        %v575 = vld [vmem:[%s479 + $0xb0] sm:$0xff]
        %v576 = vld [vmem:[%s479 + $0xb8] sm:$0xff]
        %v577 = vld [vmem:[%s479 + $0xc0] sm:$0xff]
        %v578 = vld [vmem:[%s479 + $0xc8] sm:$0xff]
        %v579 = vld [vmem:[%s479 + $0xd0] sm:$0xff]
        %v580 = vld [vmem:[%s479 + $0xd8] sm:$0xff]
        %v581 = vld [vmem:[%s479 + $0xe0] sm:$0xff]
        %v582 = vld [vmem:[%s479 + $0xe8] sm:$0xff]
        %v583 = vld [vmem:[%s479 + $0xf0] sm:$0xff]
        %v584 = vld [vmem:[%s479 + $0xf8] sm:$0xff]
        %v585 = vld [vmem:[%s479 + $0x100] sm:$0xff]
        %v586 = vld [vmem:[%s479 + $0x108] sm:$0xff]
        %v587 = vld [vmem:[%s479 + $0x110] sm:$0xff]
        %v588 = vld [vmem:[%s479 + $0x118] sm:$0xff]
        %v589 = vld [vmem:[%s479 + $0x120] sm:$0xff]
        %v590 = vld [vmem:[%s479 + $0x128] sm:$0xff]
        %v591 = vld [vmem:[%s479 + $0x130] sm:$0xff]
        %v592 = vld [vmem:[%s479 + $0x138] sm:$0xff]
        %v593 = vld [vmem:[%s479 + $0x140] sm:$0xff]
        %v594 = vld [vmem:[%s479 + $0x148] sm:$0xff]
        %v595 = vld [vmem:[%s479 + $0x150] sm:$0xff]
        %v596 = vld [vmem:[%s479 + $0x158] sm:$0xff]
        %v597 = vld [vmem:[%s479 + $0x160] sm:$0xff]
        %v598 = vld [vmem:[%s479 + $0x168] sm:$0xff]
        %v599 = vld [vmem:[%s479 + $0x170] sm:$0xff]
        %v600 = vld [vmem:[%s479 + $0x178] sm:$0xff]
        %v601 = vand.u32 %v554, 4294901760
        %602 = vmatprep.subr.mxu0 %v601
        %v603 = vand.u32 %v553, 4294901760
        %604 = vmatpush1.msra.mxu0 %v603
        %v605 = vand.u32 %v557, 4294901760
        %606 = vmatprep.subr.mxu0 %v605
        %v607 = vand.u32 %v556, 4294901760
        %608 = vmatpush1.msra.mxu0 %v607
        %v609 = vand.u32 %v560, 4294901760
        %610 = vmatprep.subr.mxu0 %v609
        %v611 = vand.u32 %v559, 4294901760
        %612 = vmatpush1.msra.mxu0 %v611
        %v613 = vand.u32 %v563, 4294901760
        %614 = vmatprep.subr.mxu0 %v613
        %v615 = vand.u32 %v562, 4294901760
        %616 = vmatpush1.msra.mxu0 %v615
        %v617 = vand.u32 %v566, 4294901760
        %618 = vmatprep.subr.mxu0 %v617
        %v619 = vand.u32 %v565, 4294901760
        %620 = vmatpush1.msra.mxu0 %v619
        %v621 = vand.u32 %v569, 4294901760
        %622 = vmatprep.subr.mxu0 %v621
        %v623 = vand.u32 %v568, 4294901760
        %624 = vmatpush1.msra.mxu0 %v623
        %v625 = vand.u32 %v572, 4294901760
        %626 = vmatprep.subr.mxu0 %v625
        %v627 = vand.u32 %v571, 4294901760
        %628 = vmatpush1.msra.mxu0 %v627
        %v629 = vand.u32 %v575, 4294901760
        %630 = vmatprep.subr.mxu0 %v629
        %v631 = vand.u32 %v574, 4294901760
        %632 = vmatpush1.msra.mxu0 %v631
        %v633 = vand.u32 %v578, 4294901760
        %634 = vmatprep.subr.mxu0 %v633
        %v635 = vand.u32 %v577, 4294901760
        %636 = vmatpush1.msra.mxu0 %v635
        %v637 = vand.u32 %v581, 4294901760
        %638 = vmatprep.subr.mxu0 %v637
        %v639 = vand.u32 %v580, 4294901760
        %640 = vmatpush1.msra.mxu0 %v639
        %v641 = vand.u32 %v584, 4294901760
        %642 = vmatprep.subr.mxu0 %v641
        %v643 = vand.u32 %v583, 4294901760
        %644 = vmatpush1.msra.mxu0 %v643
        %v645 = vand.u32 %v587, 4294901760
        %646 = vmatprep.subr.mxu0 %v645
        %v647 = vand.u32 %v586, 4294901760
        %648 = vmatpush1.msra.mxu0 %v647
        %v649 = vand.u32 %v590, 4294901760
        %650 = vmatprep.subr.mxu0 %v649
        %v651 = vand.u32 %v589, 4294901760
        %652 = vmatpush1.msra.mxu0 %v651
        %v653 = vand.u32 %v593, 4294901760
        %654 = vmatprep.subr.mxu0 %v653
        %v655 = vand.u32 %v592, 4294901760
        %656 = vmatpush1.msra.mxu0 %v655
        %v657 = vand.u32 %v596, 4294901760
        %658 = vmatprep.subr.mxu0 %v657
        %v659 = vand.u32 %v595, 4294901760
        %660 = vmatpush1.msra.mxu0 %v659
        %v661 = vand.u32 %v599, 4294901760
        %662 = vmatprep.subr.mxu0 %v661
        %v663 = vand.u32 %v598, 4294901760
        %664 = vmatpush1.msra.mxu0 %v663
        %665 = vmatprep.subr.mxu0 0.0
        %666 = vmatpush1.msra.mxu0 0.0
        %667 = vmatprep.subr.mxu0 0.0
        %668 = vmatpush1.msra.mxu0 0.0
        %669 = vmatprep.subr.mxu0 0.0
        %670 = vmatpush1.msra.mxu0 0.0
        %671 = vmatprep.subr.mxu0 0.0
        %672 = vmatpush1.msra.mxu0 0.0
        %673 = vmatprep.subr.mxu0 0.0
        %674 = vmatpush1.msra.mxu0 0.0
        %675 = vmatprep.subr.mxu0 0.0
        %676 = vmatpush1.msra.mxu0 0.0
        %677 = vmatprep.subr.mxu0 0.0
        %678 = vmatpush1.msra.mxu0 0.0
        %679 = vmatprep.subr.mxu0 0.0
        %680 = vmatpush1.msra.mxu0 0.0
        %681 = vmatprep.subr.mxu0 0.0
        %682 = vmatpush1.msra.mxu0 0.0
        %683 = vmatprep.subr.mxu0 0.0
        %684 = vmatpush1.msra.mxu0 0.0
        %685 = vmatprep.subr.mxu0 0.0
        %686 = vmatpush1.msra.mxu0 0.0
        %687 = vmatprep.subr.mxu0 0.0
        %688 = vmatpush1.msra.mxu0 0.0
        %689 = vmatprep.subr.mxu0 0.0
        %690 = vmatpush1.msra.mxu0 0.0
        %691 = vmatprep.subr.mxu0 0.0
        %692 = vmatpush1.msra.mxu0 0.0
        %693 = vmatprep.subr.mxu0 0.0
        %694 = vmatpush1.msra.mxu0 0.0
        %695 = vmatprep.subr.mxu0 0.0
        %696 = vmatpush1.msra.mxu0 0.0
        %697 = vmatprep.mubr.f32.mxu0 0.0
        %v698 = vand.u32 %v552, 4294901760
        %v699 = vsub.f32 %v552, %v698
        %v700 = vand.u32 %v699, 4294901760
        %v701 = vsub.f32 %v699, %v700
        %v702 = vand.u32 %v701, 4294901760
        %703 = vmatmul.mubr.f32.gmra.mrb[0].mxu0 %v702
        %v704 = vpop.f32.mrb[0].mxu0
        %v705 = vadd.f32 0.0, %v704
        %v706 = vpop.f32.mrb[0].mxu0
        %v707 = vadd.f32 0.0, %v706
        %708 = vdwg.mxu0
        %v709 = vand.u32 %v554, 4294901760
        %v710 = vsub.f32 %v554, %v709
        %v711 = vand.u32 %v710, 4294901760
        %v712 = vsub.f32 %v710, %v711
        %v713 = vand.u32 %v712, 4294901760
        %714 = vmatprep.subr.mxu0 %v713
        %v715 = vand.u32 %v553, 4294901760
        %v716 = vsub.f32 %v553, %v715
        %v717 = vand.u32 %v716, 4294901760
        %v718 = vsub.f32 %v716, %v717
        %v719 = vand.u32 %v718, 4294901760
        %720 = vmatpush1.msra.mxu0 %v719
        %v721 = vand.u32 %v557, 4294901760
        %v722 = vsub.f32 %v557, %v721
        %v723 = vand.u32 %v722, 4294901760
        %v724 = vsub.f32 %v722, %v723
        %v725 = vand.u32 %v724, 4294901760
        %726 = vmatprep.subr.mxu0 %v725
        %v727 = vand.u32 %v556, 4294901760
        %v728 = vsub.f32 %v556, %v727
        %v729 = vand.u32 %v728, 4294901760
        %v730 = vsub.f32 %v728, %v729
        %v731 = vand.u32 %v730, 4294901760
        %732 = vmatpush1.msra.mxu0 %v731
        %v733 = vand.u32 %v560, 4294901760
        %v734 = vsub.f32 %v560, %v733
        %v735 = vand.u32 %v734, 4294901760
        %v736 = vsub.f32 %v734, %v735
        %v737 = vand.u32 %v736, 4294901760
        %738 = vmatprep.subr.mxu0 %v737
        %v739 = vand.u32 %v559, 4294901760
        %v740 = vsub.f32 %v559, %v739
        %v741 = vand.u32 %v740, 4294901760
        %v742 = vsub.f32 %v740, %v741
        %v743 = vand.u32 %v742, 4294901760
        %744 = vmatpush1.msra.mxu0 %v743
        %v745 = vand.u32 %v563, 4294901760
        %v746 = vsub.f32 %v563, %v745
        %v747 = vand.u32 %v746, 4294901760
        %v748 = vsub.f32 %v746, %v747
        %v749 = vand.u32 %v748, 4294901760
        %750 = vmatprep.subr.mxu0 %v749
        %v751 = vand.u32 %v562, 4294901760
        %v752 = vsub.f32 %v562, %v751
        %v753 = vand.u32 %v752, 4294901760
        %v754 = vsub.f32 %v752, %v753
        %v755 = vand.u32 %v754, 4294901760
        %756 = vmatpush1.msra.mxu0 %v755
        %v757 = vand.u32 %v566, 4294901760
        %v758 = vsub.f32 %v566, %v757
        %v759 = vand.u32 %v758, 4294901760
        %v760 = vsub.f32 %v758, %v759
        %v761 = vand.u32 %v760, 4294901760
        %762 = vmatprep.subr.mxu0 %v761
        %v763 = vand.u32 %v565, 4294901760
        %v764 = vsub.f32 %v565, %v763
        %v765 = vand.u32 %v764, 4294901760
        %v766 = vsub.f32 %v764, %v765
        %v767 = vand.u32 %v766, 4294901760
        %768 = vmatpush1.msra.mxu0 %v767
        %v769 = vand.u32 %v569, 4294901760
        %v770 = vsub.f32 %v569, %v769
        %v771 = vand.u32 %v770, 4294901760
        %v772 = vsub.f32 %v770, %v771
        %v773 = vand.u32 %v772, 4294901760
        %774 = vmatprep.subr.mxu0 %v773
        %v775 = vand.u32 %v568, 4294901760
        %v776 = vsub.f32 %v568, %v775
        %v777 = vand.u32 %v776, 4294901760
        %v778 = vsub.f32 %v776, %v777
        %v779 = vand.u32 %v778, 4294901760
        %780 = vmatpush1.msra.mxu0 %v779
        %v781 = vand.u32 %v572, 4294901760
        %v782 = vsub.f32 %v572, %v781
        %v783 = vand.u32 %v782, 4294901760
        %v784 = vsub.f32 %v782, %v783
        %v785 = vand.u32 %v784, 4294901760
        %786 = vmatprep.subr.mxu0 %v785
        %v787 = vand.u32 %v571, 4294901760
        %v788 = vsub.f32 %v571, %v787
        %v789 = vand.u32 %v788, 4294901760
        %v790 = vsub.f32 %v788, %v789
        %v791 = vand.u32 %v790, 4294901760
        %792 = vmatpush1.msra.mxu0 %v791
        %v793 = vand.u32 %v575, 4294901760
        %v794 = vsub.f32 %v575, %v793
        %v795 = vand.u32 %v794, 4294901760
        %v796 = vsub.f32 %v794, %v795
        %v797 = vand.u32 %v796, 4294901760
        %798 = vmatprep.subr.mxu0 %v797
        %v799 = vand.u32 %v574, 4294901760
        %v800 = vsub.f32 %v574, %v799
        %v801 = vand.u32 %v800, 4294901760
        %v802 = vsub.f32 %v800, %v801
        %v803 = vand.u32 %v802, 4294901760
        %804 = vmatpush1.msra.mxu0 %v803
        %v805 = vand.u32 %v578, 4294901760
        %v806 = vsub.f32 %v578, %v805
        %v807 = vand.u32 %v806, 4294901760
        %v808 = vsub.f32 %v806, %v807
        %v809 = vand.u32 %v808, 4294901760
        %810 = vmatprep.subr.mxu0 %v809
        %v811 = vand.u32 %v577, 4294901760
        %v812 = vsub.f32 %v577, %v811
        %v813 = vand.u32 %v812, 4294901760
        %v814 = vsub.f32 %v812, %v813
        %v815 = vand.u32 %v814, 4294901760
        %816 = vmatpush1.msra.mxu0 %v815
        %v817 = vand.u32 %v581, 4294901760
        %v818 = vsub.f32 %v581, %v817
        %v819 = vand.u32 %v818, 4294901760
        %v820 = vsub.f32 %v818, %v819
        %v821 = vand.u32 %v820, 4294901760
        %822 = vmatprep.subr.mxu0 %v821
        %v823 = vand.u32 %v580, 4294901760
        %v824 = vsub.f32 %v580, %v823
        %v825 = vand.u32 %v824, 4294901760
        %v826 = vsub.f32 %v824, %v825
        %v827 = vand.u32 %v826, 4294901760
        %828 = vmatpush1.msra.mxu0 %v827
        %v829 = vand.u32 %v584, 4294901760
        %v830 = vsub.f32 %v584, %v829
        %v831 = vand.u32 %v830, 4294901760
        %v832 = vsub.f32 %v830, %v831
        %v833 = vand.u32 %v832, 4294901760
        %834 = vmatprep.subr.mxu0 %v833
        %v835 = vand.u32 %v583, 4294901760
        %v836 = vsub.f32 %v583, %v835
        %v837 = vand.u32 %v836, 4294901760
        %v838 = vsub.f32 %v836, %v837
        %v839 = vand.u32 %v838, 4294901760
        %840 = vmatpush1.msra.mxu0 %v839
        %v841 = vand.u32 %v587, 4294901760
        %v842 = vsub.f32 %v587, %v841
        %v843 = vand.u32 %v842, 4294901760
        %v844 = vsub.f32 %v842, %v843
        %v845 = vand.u32 %v844, 4294901760
        %846 = vmatprep.subr.mxu0 %v845
        %v847 = vand.u32 %v586, 4294901760
        %v848 = vsub.f32 %v586, %v847
        %v849 = vand.u32 %v848, 4294901760
        %v850 = vsub.f32 %v848, %v849
        %v851 = vand.u32 %v850, 4294901760
        %852 = vmatpush1.msra.mxu0 %v851
        %v853 = vand.u32 %v590, 4294901760
        %v854 = vsub.f32 %v590, %v853
        %v855 = vand.u32 %v854, 4294901760
        %v856 = vsub.f32 %v854, %v855
        %v857 = vand.u32 %v856, 4294901760
        %858 = vmatprep.subr.mxu0 %v857
        %v859 = vand.u32 %v589, 4294901760
        %v860 = vsub.f32 %v589, %v859
        %v861 = vand.u32 %v860, 4294901760
        %v862 = vsub.f32 %v860, %v861
        %v863 = vand.u32 %v862, 4294901760
        %864 = vmatpush1.msra.mxu0 %v863
        %v865 = vand.u32 %v593, 4294901760
        %v866 = vsub.f32 %v593, %v865
        %v867 = vand.u32 %v866, 4294901760
        %v868 = vsub.f32 %v866, %v867
        %v869 = vand.u32 %v868, 4294901760
        %870 = vmatprep.subr.mxu0 %v869
        %v871 = vand.u32 %v592, 4294901760
        %v872 = vsub.f32 %v592, %v871
        %v873 = vand.u32 %v872, 4294901760
        %v874 = vsub.f32 %v872, %v873
        %v875 = vand.u32 %v874, 4294901760
        %876 = vmatpush1.msra.mxu0 %v875
        %v877 = vand.u32 %v596, 4294901760
        %v878 = vsub.f32 %v596, %v877
        %v879 = vand.u32 %v878, 4294901760
        %v880 = vsub.f32 %v878, %v879
        %v881 = vand.u32 %v880, 4294901760
        %882 = vmatprep.subr.mxu0 %v881
        %v883 = vand.u32 %v595, 4294901760
        %v884 = vsub.f32 %v595, %v883
        %v885 = vand.u32 %v884, 4294901760
        %v886 = vsub.f32 %v884, %v885
        %v887 = vand.u32 %v886, 4294901760
        %888 = vmatpush1.msra.mxu0 %v887
        %v889 = vand.u32 %v599, 4294901760
        %v890 = vsub.f32 %v599, %v889
        %v891 = vand.u32 %v890, 4294901760
        %v892 = vsub.f32 %v890, %v891
        %v893 = vand.u32 %v892, 4294901760
        %894 = vmatprep.subr.mxu0 %v893
        %v895 = vand.u32 %v598, 4294901760
        %v896 = vsub.f32 %v598, %v895
        %v897 = vand.u32 %v896, 4294901760
        %v898 = vsub.f32 %v896, %v897
        %v899 = vand.u32 %v898, 4294901760
        %900 = vmatpush1.msra.mxu0 %v899
        %901 = vmatprep.subr.mxu0 0.0
        %902 = vmatpush1.msra.mxu0 0.0
        %903 = vmatprep.subr.mxu0 0.0
        %904 = vmatpush1.msra.mxu0 0.0
        %905 = vmatprep.subr.mxu0 0.0
        %906 = vmatpush1.msra.mxu0 0.0
        %907 = vmatprep.subr.mxu0 0.0
        %908 = vmatpush1.msra.mxu0 0.0
        %909 = vmatprep.subr.mxu0 0.0
        %910 = vmatpush1.msra.mxu0 0.0
        %911 = vmatprep.subr.mxu0 0.0
        %912 = vmatpush1.msra.mxu0 0.0
        %913 = vmatprep.subr.mxu0 0.0
        %914 = vmatpush1.msra.mxu0 0.0
        %915 = vmatprep.subr.mxu0 0.0
        %916 = vmatpush1.msra.mxu0 0.0
        %917 = vmatprep.subr.mxu0 0.0
        %918 = vmatpush1.msra.mxu0 0.0
        %919 = vmatprep.subr.mxu0 0.0
        %920 = vmatpush1.msra.mxu0 0.0
        %921 = vmatprep.subr.mxu0 0.0
        %922 = vmatpush1.msra.mxu0 0.0
        %923 = vmatprep.subr.mxu0 0.0
        %924 = vmatpush1.msra.mxu0 0.0
        %925 = vmatprep.subr.mxu0 0.0
        %926 = vmatpush1.msra.mxu0 0.0
        %927 = vmatprep.subr.mxu0 0.0
        %928 = vmatpush1.msra.mxu0 0.0
        %929 = vmatprep.subr.mxu0 0.0
        %930 = vmatpush1.msra.mxu0 0.0
        %931 = vmatprep.subr.mxu0 0.0
        %932 = vmatpush1.msra.mxu0 0.0
        %933 = vmatprep.mubr.f32.mxu0 0.0
        %v934 = vand.u32 %v552, 4294901760
        %935 = vmatmul.mubr.f32.gmra.mrb[0].mxu0 %v934
        %v936 = vpop.f32.mrb[0].mxu0
        %v937 = vadd.f32 %v705, %v936
        %v938 = vpop.f32.mrb[0].mxu0
        %v939 = vadd.f32 %v707, %v938
        %940 = vdwg.mxu0
        %v941 = vand.u32 %v554, 4294901760
        %v942 = vsub.f32 %v554, %v941
        %943 = vmatprep.subr.mxu0 %v942
        %v944 = vand.u32 %v553, 4294901760
        %v945 = vsub.f32 %v553, %v944
        %946 = vmatpush1.msra.mxu0 %v945
        %v947 = vand.u32 %v557, 4294901760
        %v948 = vsub.f32 %v557, %v947
        %949 = vmatprep.subr.mxu0 %v948
        %v950 = vand.u32 %v556, 4294901760
        %v951 = vsub.f32 %v556, %v950
        %952 = vmatpush1.msra.mxu0 %v951
        %v953 = vand.u32 %v560, 4294901760
        %v954 = vsub.f32 %v560, %v953
        %955 = vmatprep.subr.mxu0 %v954
        %v956 = vand.u32 %v559, 4294901760
        %v957 = vsub.f32 %v559, %v956
        %958 = vmatpush1.msra.mxu0 %v957
        %v959 = vand.u32 %v563, 4294901760
        %v960 = vsub.f32 %v563, %v959
        %961 = vmatprep.subr.mxu0 %v960
        %v962 = vand.u32 %v562, 4294901760
        %v963 = vsub.f32 %v562, %v962
        %964 = vmatpush1.msra.mxu0 %v963
        %v965 = vand.u32 %v566, 4294901760
        %v966 = vsub.f32 %v566, %v965
        %967 = vmatprep.subr.mxu0 %v966
        %v968 = vand.u32 %v565, 4294901760
        %v969 = vsub.f32 %v565, %v968
        %970 = vmatpush1.msra.mxu0 %v969
        %v971 = vand.u32 %v569, 4294901760
        %v972 = vsub.f32 %v569, %v971
        %973 = vmatprep.subr.mxu0 %v972
        %v974 = vand.u32 %v568, 4294901760
        %v975 = vsub.f32 %v568, %v974
        %976 = vmatpush1.msra.mxu0 %v975
        %v977 = vand.u32 %v572, 4294901760
        %v978 = vsub.f32 %v572, %v977
        %979 = vmatprep.subr.mxu0 %v978
        %v980 = vand.u32 %v571, 4294901760
        %v981 = vsub.f32 %v571, %v980
        %982 = vmatpush1.msra.mxu0 %v981
        %v983 = vand.u32 %v575, 4294901760
        %v984 = vsub.f32 %v575, %v983
        %985 = vmatprep.subr.mxu0 %v984
        %v986 = vand.u32 %v574, 4294901760
        %v987 = vsub.f32 %v574, %v986
        %988 = vmatpush1.msra.mxu0 %v987
        %v989 = vand.u32 %v578, 4294901760
        %v990 = vsub.f32 %v578, %v989
        %991 = vmatprep.subr.mxu0 %v990
        %v992 = vand.u32 %v577, 4294901760
        %v993 = vsub.f32 %v577, %v992
        %994 = vmatpush1.msra.mxu0 %v993
        %v995 = vand.u32 %v581, 4294901760
        %v996 = vsub.f32 %v581, %v995
        %997 = vmatprep.subr.mxu0 %v996
        %v998 = vand.u32 %v580, 4294901760
        %v999 = vsub.f32 %v580, %v998
        %1000 = vmatpush1.msra.mxu0 %v999
        %v1001 = vand.u32 %v584, 4294901760
        %v1002 = vsub.f32 %v584, %v1001
        %1003 = vmatprep.subr.mxu0 %v1002
        %v1004 = vand.u32 %v583, 4294901760
        %v1005 = vsub.f32 %v583, %v1004
        %1006 = vmatpush1.msra.mxu0 %v1005
        %v1007 = vand.u32 %v587, 4294901760
        %v1008 = vsub.f32 %v587, %v1007
        %1009 = vmatprep.subr.mxu0 %v1008
        %v1010 = vand.u32 %v586, 4294901760
        %v1011 = vsub.f32 %v586, %v1010
        %1012 = vmatpush1.msra.mxu0 %v1011
        %v1013 = vand.u32 %v590, 4294901760
        %v1014 = vsub.f32 %v590, %v1013
        %1015 = vmatprep.subr.mxu0 %v1014
        %v1016 = vand.u32 %v589, 4294901760
        %v1017 = vsub.f32 %v589, %v1016
        %1018 = vmatpush1.msra.mxu0 %v1017
        %v1019 = vand.u32 %v593, 4294901760
        %v1020 = vsub.f32 %v593, %v1019
        %1021 = vmatprep.subr.mxu0 %v1020
        %v1022 = vand.u32 %v592, 4294901760
        %v1023 = vsub.f32 %v592, %v1022
        %1024 = vmatpush1.msra.mxu0 %v1023
        %v1025 = vand.u32 %v596, 4294901760
        %v1026 = vsub.f32 %v596, %v1025
        %1027 = vmatprep.subr.mxu0 %v1026
        %v1028 = vand.u32 %v595, 4294901760
        %v1029 = vsub.f32 %v595, %v1028
        %1030 = vmatpush1.msra.mxu0 %v1029
        %v1031 = vand.u32 %v599, 4294901760
        %v1032 = vsub.f32 %v599, %v1031
        %1033 = vmatprep.subr.mxu0 %v1032
        %v1034 = vand.u32 %v598, 4294901760
        %v1035 = vsub.f32 %v598, %v1034
        %1036 = vmatpush1.msra.mxu0 %v1035
        %1037 = vmatprep.subr.mxu0 0.0
        %1038 = vmatpush1.msra.mxu0 0.0
        %1039 = vmatprep.subr.mxu0 0.0
        %1040 = vmatpush1.msra.mxu0 0.0
        %1041 = vmatprep.subr.mxu0 0.0
        %1042 = vmatpush1.msra.mxu0 0.0
        %1043 = vmatprep.subr.mxu0 0.0
        %1044 = vmatpush1.msra.mxu0 0.0
        %1045 = vmatprep.subr.mxu0 0.0
        %1046 = vmatpush1.msra.mxu0 0.0
        %1047 = vmatprep.subr.mxu0 0.0
        %1048 = vmatpush1.msra.mxu0 0.0
        %1049 = vmatprep.subr.mxu0 0.0
        %1050 = vmatpush1.msra.mxu0 0.0
        %1051 = vmatprep.subr.mxu0 0.0
        %1052 = vmatpush1.msra.mxu0 0.0
        %1053 = vmatprep.subr.mxu0 0.0
        %1054 = vmatpush1.msra.mxu0 0.0
        %1055 = vmatprep.subr.mxu0 0.0
        %1056 = vmatpush1.msra.mxu0 0.0
        %1057 = vmatprep.subr.mxu0 0.0
        %1058 = vmatpush1.msra.mxu0 0.0
        %1059 = vmatprep.subr.mxu0 0.0
        %1060 = vmatpush1.msra.mxu0 0.0
        %1061 = vmatprep.subr.mxu0 0.0
        %1062 = vmatpush1.msra.mxu0 0.0
        %1063 = vmatprep.subr.mxu0 0.0
        %1064 = vmatpush1.msra.mxu0 0.0
        %1065 = vmatprep.subr.mxu0 0.0
        %1066 = vmatpush1.msra.mxu0 0.0
        %1067 = vmatprep.subr.mxu0 0.0
        %1068 = vmatpush1.msra.mxu0 0.0
        %1069 = vmatprep.mubr.f32.mxu0 0.0
        %v1070 = vand.u32 %v552, 4294901760
        %v1071 = vsub.f32 %v552, %v1070
        %1072 = vmatmul.mubr.f32.gmra.mrb[0].mxu0 %v1071
        %v1073 = vpop.f32.mrb[0].mxu0
        %v1074 = vadd.f32 %v937, %v1073
        %v1075 = vpop.f32.mrb[0].mxu0
        %v1076 = vadd.f32 %v939, %v1075
        %1077 = vdwg.mxu0
        %v1078 = vand.u32 %v554, 4294901760
        %1079 = vmatprep.subr.mxu0 %v1078
        %v1080 = vand.u32 %v553, 4294901760
        %1081 = vmatpush1.msra.mxu0 %v1080
        %v1082 = vand.u32 %v557, 4294901760
        %1083 = vmatprep.subr.mxu0 %v1082
        %v1084 = vand.u32 %v556, 4294901760
        %1085 = vmatpush1.msra.mxu0 %v1084
        %v1086 = vand.u32 %v560, 4294901760
        %1087 = vmatprep.subr.mxu0 %v1086
        %v1088 = vand.u32 %v559, 4294901760
        %1089 = vmatpush1.msra.mxu0 %v1088
        %v1090 = vand.u32 %v563, 4294901760
        %1091 = vmatprep.subr.mxu0 %v1090
        %v1092 = vand.u32 %v562, 4294901760
        %1093 = vmatpush1.msra.mxu0 %v1092
        %v1094 = vand.u32 %v566, 4294901760
        %1095 = vmatprep.subr.mxu0 %v1094
        %v1096 = vand.u32 %v565, 4294901760
        %1097 = vmatpush1.msra.mxu0 %v1096
        %v1098 = vand.u32 %v569, 4294901760
        %1099 = vmatprep.subr.mxu0 %v1098
        %v1100 = vand.u32 %v568, 4294901760
        %1101 = vmatpush1.msra.mxu0 %v1100
        %v1102 = vand.u32 %v572, 4294901760
        %1103 = vmatprep.subr.mxu0 %v1102
        %v1104 = vand.u32 %v571, 4294901760
        %1105 = vmatpush1.msra.mxu0 %v1104
        %v1106 = vand.u32 %v575, 4294901760
        %1107 = vmatprep.subr.mxu0 %v1106
        %v1108 = vand.u32 %v574, 4294901760
        %1109 = vmatpush1.msra.mxu0 %v1108
        %v1110 = vand.u32 %v578, 4294901760
        %1111 = vmatprep.subr.mxu0 %v1110
        %v1112 = vand.u32 %v577, 4294901760
        %1113 = vmatpush1.msra.mxu0 %v1112
        %v1114 = vand.u32 %v581, 4294901760
        %1115 = vmatprep.subr.mxu0 %v1114
        %v1116 = vand.u32 %v580, 4294901760
        %1117 = vmatpush1.msra.mxu0 %v1116
        %v1118 = vand.u32 %v584, 4294901760
        %1119 = vmatprep.subr.mxu0 %v1118
        %v1120 = vand.u32 %v583, 4294901760
        %1121 = vmatpush1.msra.mxu0 %v1120
        %v1122 = vand.u32 %v587, 4294901760
        %1123 = vmatprep.subr.mxu0 %v1122
        %v1124 = vand.u32 %v586, 4294901760
        %1125 = vmatpush1.msra.mxu0 %v1124
        %v1126 = vand.u32 %v590, 4294901760
        %1127 = vmatprep.subr.mxu0 %v1126
        %v1128 = vand.u32 %v589, 4294901760
        %1129 = vmatpush1.msra.mxu0 %v1128
        %v1130 = vand.u32 %v593, 4294901760
        %1131 = vmatprep.subr.mxu0 %v1130
        %v1132 = vand.u32 %v592, 4294901760
        %1133 = vmatpush1.msra.mxu0 %v1132
        %v1134 = vand.u32 %v596, 4294901760
        %1135 = vmatprep.subr.mxu0 %v1134
        %v1136 = vand.u32 %v595, 4294901760
        %1137 = vmatpush1.msra.mxu0 %v1136
        %v1138 = vand.u32 %v599, 4294901760
        %1139 = vmatprep.subr.mxu0 %v1138
        %v1140 = vand.u32 %v598, 4294901760
        %1141 = vmatpush1.msra.mxu0 %v1140
        %1142 = vmatprep.subr.mxu0 0.0
        %1143 = vmatpush1.msra.mxu0 0.0
        %1144 = vmatprep.subr.mxu0 0.0
        %1145 = vmatpush1.msra.mxu0 0.0
        %1146 = vmatprep.subr.mxu0 0.0
        %1147 = vmatpush1.msra.mxu0 0.0
        %1148 = vmatprep.subr.mxu0 0.0
        %1149 = vmatpush1.msra.mxu0 0.0
        %1150 = vmatprep.subr.mxu0 0.0
        %1151 = vmatpush1.msra.mxu0 0.0
        %1152 = vmatprep.subr.mxu0 0.0
        %1153 = vmatpush1.msra.mxu0 0.0
        %1154 = vmatprep.subr.mxu0 0.0
        %1155 = vmatpush1.msra.mxu0 0.0
        %1156 = vmatprep.subr.mxu0 0.0
        %1157 = vmatpush1.msra.mxu0 0.0
        %1158 = vmatprep.subr.mxu0 0.0
        %1159 = vmatpush1.msra.mxu0 0.0
        %1160 = vmatprep.subr.mxu0 0.0
        %1161 = vmatpush1.msra.mxu0 0.0
        %1162 = vmatprep.subr.mxu0 0.0
        %1163 = vmatpush1.msra.mxu0 0.0
        %1164 = vmatprep.subr.mxu0 0.0
        %1165 = vmatpush1.msra.mxu0 0.0
        %1166 = vmatprep.subr.mxu0 0.0
        %1167 = vmatpush1.msra.mxu0 0.0
        %1168 = vmatprep.subr.mxu0 0.0
        %1169 = vmatpush1.msra.mxu0 0.0
        %1170 = vmatprep.subr.mxu0 0.0
        %1171 = vmatpush1.msra.mxu0 0.0
        %1172 = vmatprep.subr.mxu0 0.0
        %1173 = vmatpush1.msra.mxu0 0.0
        %1174 = vmatprep.mubr.f32.mxu0 0.0
        %v1175 = vand.u32 %v552, 4294901760
        %v1176 = vsub.f32 %v552, %v1175
        %v1177 = vand.u32 %v1176, 4294901760
        %1178 = vmatmul.mubr.f32.gmra.mrb[0].mxu0 %v1177
        %v1179 = vpop.f32.mrb[0].mxu0
        %v1180 = vadd.f32 %v1074, %v1179
        %v1181 = vpop.f32.mrb[0].mxu0
        %v1182 = vadd.f32 %v1076, %v1181
        %1183 = vdwg.mxu0
        %v1184 = vand.u32 %v554, 4294901760
        %v1185 = vsub.f32 %v554, %v1184
        %v1186 = vand.u32 %v1185, 4294901760
        %1187 = vmatprep.subr.mxu0 %v1186
        %v1188 = vand.u32 %v553, 4294901760
        %v1189 = vsub.f32 %v553, %v1188
        %v1190 = vand.u32 %v1189, 4294901760
        %1191 = vmatpush1.msra.mxu0 %v1190
        %v1192 = vand.u32 %v557, 4294901760
        %v1193 = vsub.f32 %v557, %v1192
        %v1194 = vand.u32 %v1193, 4294901760
        %1195 = vmatprep.subr.mxu0 %v1194
        %v1196 = vand.u32 %v556, 4294901760
        %v1197 = vsub.f32 %v556, %v1196
        %v1198 = vand.u32 %v1197, 4294901760
        %1199 = vmatpush1.msra.mxu0 %v1198
        %v1200 = vand.u32 %v560, 4294901760
        %v1201 = vsub.f32 %v560, %v1200
        %v1202 = vand.u32 %v1201, 4294901760
        %1203 = vmatprep.subr.mxu0 %v1202
        %v1204 = vand.u32 %v559, 4294901760
        %v1205 = vsub.f32 %v559, %v1204
        %v1206 = vand.u32 %v1205, 4294901760
        %1207 = vmatpush1.msra.mxu0 %v1206
        %v1208 = vand.u32 %v563, 4294901760
        %v1209 = vsub.f32 %v563, %v1208
        %v1210 = vand.u32 %v1209, 4294901760
        %1211 = vmatprep.subr.mxu0 %v1210
        %v1212 = vand.u32 %v562, 4294901760
        %v1213 = vsub.f32 %v562, %v1212
        %v1214 = vand.u32 %v1213, 4294901760
        %1215 = vmatpush1.msra.mxu0 %v1214
        %v1216 = vand.u32 %v566, 4294901760
        %v1217 = vsub.f32 %v566, %v1216
        %v1218 = vand.u32 %v1217, 4294901760
        %1219 = vmatprep.subr.mxu0 %v1218
        %v1220 = vand.u32 %v565, 4294901760
        %v1221 = vsub.f32 %v565, %v1220
        %v1222 = vand.u32 %v1221, 4294901760
        %1223 = vmatpush1.msra.mxu0 %v1222
        %v1224 = vand.u32 %v569, 4294901760
        %v1225 = vsub.f32 %v569, %v1224
        %v1226 = vand.u32 %v1225, 4294901760
        %1227 = vmatprep.subr.mxu0 %v1226
        %v1228 = vand.u32 %v568, 4294901760
        %v1229 = vsub.f32 %v568, %v1228
        %v1230 = vand.u32 %v1229, 4294901760
        %1231 = vmatpush1.msra.mxu0 %v1230
        %v1232 = vand.u32 %v572, 4294901760
        %v1233 = vsub.f32 %v572, %v1232
        %v1234 = vand.u32 %v1233, 4294901760
        %1235 = vmatprep.subr.mxu0 %v1234
        %v1236 = vand.u32 %v571, 4294901760
        %v1237 = vsub.f32 %v571, %v1236
        %v1238 = vand.u32 %v1237, 4294901760
        %1239 = vmatpush1.msra.mxu0 %v1238
        %v1240 = vand.u32 %v575, 4294901760
        %v1241 = vsub.f32 %v575, %v1240
        %v1242 = vand.u32 %v1241, 4294901760
        %1243 = vmatprep.subr.mxu0 %v1242
        %v1244 = vand.u32 %v574, 4294901760
        %v1245 = vsub.f32 %v574, %v1244
        %v1246 = vand.u32 %v1245, 4294901760
        %1247 = vmatpush1.msra.mxu0 %v1246
        %v1248 = vand.u32 %v578, 4294901760
        %v1249 = vsub.f32 %v578, %v1248
        %v1250 = vand.u32 %v1249, 4294901760
        %1251 = vmatprep.subr.mxu0 %v1250
        %v1252 = vand.u32 %v577, 4294901760
        %v1253 = vsub.f32 %v577, %v1252
        %v1254 = vand.u32 %v1253, 4294901760
        %1255 = vmatpush1.msra.mxu0 %v1254
        %v1256 = vand.u32 %v581, 4294901760
        %v1257 = vsub.f32 %v581, %v1256
        %v1258 = vand.u32 %v1257, 4294901760
        %1259 = vmatprep.subr.mxu0 %v1258
        %v1260 = vand.u32 %v580, 4294901760
        %v1261 = vsub.f32 %v580, %v1260
        %v1262 = vand.u32 %v1261, 4294901760
        %1263 = vmatpush1.msra.mxu0 %v1262
        %v1264 = vand.u32 %v584, 4294901760
        %v1265 = vsub.f32 %v584, %v1264
        %v1266 = vand.u32 %v1265, 4294901760
        %1267 = vmatprep.subr.mxu0 %v1266
        %v1268 = vand.u32 %v583, 4294901760
        %v1269 = vsub.f32 %v583, %v1268
        %v1270 = vand.u32 %v1269, 4294901760
        %1271 = vmatpush1.msra.mxu0 %v1270
        %v1272 = vand.u32 %v587, 4294901760
        %v1273 = vsub.f32 %v587, %v1272
        %v1274 = vand.u32 %v1273, 4294901760
        %1275 = vmatprep.subr.mxu0 %v1274
        %v1276 = vand.u32 %v586, 4294901760
        %v1277 = vsub.f32 %v586, %v1276
        %v1278 = vand.u32 %v1277, 4294901760
        %1279 = vmatpush1.msra.mxu0 %v1278
        %v1280 = vand.u32 %v590, 4294901760
        %v1281 = vsub.f32 %v590, %v1280
        %v1282 = vand.u32 %v1281, 4294901760
        %1283 = vmatprep.subr.mxu0 %v1282
        %v1284 = vand.u32 %v589, 4294901760
        %v1285 = vsub.f32 %v589, %v1284
        %v1286 = vand.u32 %v1285, 4294901760
        %1287 = vmatpush1.msra.mxu0 %v1286
        %v1288 = vand.u32 %v593, 4294901760
        %v1289 = vsub.f32 %v593, %v1288
        %v1290 = vand.u32 %v1289, 4294901760
        %1291 = vmatprep.subr.mxu0 %v1290
        %v1292 = vand.u32 %v592, 4294901760
        %v1293 = vsub.f32 %v592, %v1292
        %v1294 = vand.u32 %v1293, 4294901760
        %1295 = vmatpush1.msra.mxu0 %v1294
        %v1296 = vand.u32 %v596, 4294901760
        %v1297 = vsub.f32 %v596, %v1296
        %v1298 = vand.u32 %v1297, 4294901760
        %1299 = vmatprep.subr.mxu0 %v1298
        %v1300 = vand.u32 %v595, 4294901760
        %v1301 = vsub.f32 %v595, %v1300
        %v1302 = vand.u32 %v1301, 4294901760
        %1303 = vmatpush1.msra.mxu0 %v1302
        %v1304 = vand.u32 %v599, 4294901760
        %v1305 = vsub.f32 %v599, %v1304
        %v1306 = vand.u32 %v1305, 4294901760
        %1307 = vmatprep.subr.mxu0 %v1306
        %v1308 = vand.u32 %v598, 4294901760
        %v1309 = vsub.f32 %v598, %v1308
        %v1310 = vand.u32 %v1309, 4294901760
        %1311 = vmatpush1.msra.mxu0 %v1310
        %1312 = vmatprep.subr.mxu0 0.0
        %1313 = vmatpush1.msra.mxu0 0.0
        %1314 = vmatprep.subr.mxu0 0.0
        %1315 = vmatpush1.msra.mxu0 0.0
        %1316 = vmatprep.subr.mxu0 0.0
        %1317 = vmatpush1.msra.mxu0 0.0
        %1318 = vmatprep.subr.mxu0 0.0
        %1319 = vmatpush1.msra.mxu0 0.0
        %1320 = vmatprep.subr.mxu0 0.0
        %1321 = vmatpush1.msra.mxu0 0.0
        %1322 = vmatprep.subr.mxu0 0.0
        %1323 = vmatpush1.msra.mxu0 0.0
        %1324 = vmatprep.subr.mxu0 0.0
        %1325 = vmatpush1.msra.mxu0 0.0
        %1326 = vmatprep.subr.mxu0 0.0
        %1327 = vmatpush1.msra.mxu0 0.0
        %1328 = vmatprep.subr.mxu0 0.0
        %1329 = vmatpush1.msra.mxu0 0.0
        %1330 = vmatprep.subr.mxu0 0.0
        %1331 = vmatpush1.msra.mxu0 0.0
        %1332 = vmatprep.subr.mxu0 0.0
        %1333 = vmatpush1.msra.mxu0 0.0
        %1334 = vmatprep.subr.mxu0 0.0
        %1335 = vmatpush1.msra.mxu0 0.0
        %1336 = vmatprep.subr.mxu0 0.0
        %1337 = vmatpush1.msra.mxu0 0.0
        %1338 = vmatprep.subr.mxu0 0.0
        %1339 = vmatpush1.msra.mxu0 0.0
        %1340 = vmatprep.subr.mxu0 0.0
        %1341 = vmatpush1.msra.mxu0 0.0
        %1342 = vmatprep.subr.mxu0 0.0
        %1343 = vmatpush1.msra.mxu0 0.0
        %1344 = vmatprep.mubr.f32.mxu0 0.0
        %v1345 = vand.u32 %v552, 4294901760
        %1346 = vmatmul.mubr.f32.gmra.mrb[0].mxu0 %v1345
        %v1347 = vpop.f32.mrb[0].mxu0
        %v1348 = vadd.f32 %v1180, %v1347
        %v1349 = vpop.f32.mrb[0].mxu0
        %v1350 = vadd.f32 %v1182, %v1349
        %1351 = vdwg.mxu0
        %v1352 = vand.u32 %v554, 4294901760
        %1353 = vmatprep.subr.mxu0 %v1352
        %v1354 = vand.u32 %v553, 4294901760
        %1355 = vmatpush1.msra.mxu0 %v1354
        %v1356 = vand.u32 %v557, 4294901760
        %1357 = vmatprep.subr.mxu0 %v1356
        %v1358 = vand.u32 %v556, 4294901760
        %1359 = vmatpush1.msra.mxu0 %v1358
        %v1360 = vand.u32 %v560, 4294901760
        %1361 = vmatprep.subr.mxu0 %v1360
        %v1362 = vand.u32 %v559, 4294901760
        %1363 = vmatpush1.msra.mxu0 %v1362
        %v1364 = vand.u32 %v563, 4294901760
        %1365 = vmatprep.subr.mxu0 %v1364
        %v1366 = vand.u32 %v562, 4294901760
        %1367 = vmatpush1.msra.mxu0 %v1366
        %v1368 = vand.u32 %v566, 4294901760
        %1369 = vmatprep.subr.mxu0 %v1368
        %v1370 = vand.u32 %v565, 4294901760
        %1371 = vmatpush1.msra.mxu0 %v1370
        %v1372 = vand.u32 %v569, 4294901760
        %1373 = vmatprep.subr.mxu0 %v1372
        %v1374 = vand.u32 %v568, 4294901760
        %1375 = vmatpush1.msra.mxu0 %v1374
        %v1376 = vand.u32 %v572, 4294901760
        %1377 = vmatprep.subr.mxu0 %v1376
        %v1378 = vand.u32 %v571, 4294901760
        %1379 = vmatpush1.msra.mxu0 %v1378
        %v1380 = vand.u32 %v575, 4294901760
        %1381 = vmatprep.subr.mxu0 %v1380
        %v1382 = vand.u32 %v574, 4294901760
        %1383 = vmatpush1.msra.mxu0 %v1382
        %v1384 = vand.u32 %v578, 4294901760
        %1385 = vmatprep.subr.mxu0 %v1384
        %v1386 = vand.u32 %v577, 4294901760
        %1387 = vmatpush1.msra.mxu0 %v1386
        %v1388 = vand.u32 %v581, 4294901760
        %1389 = vmatprep.subr.mxu0 %v1388
        %v1390 = vand.u32 %v580, 4294901760
        %1391 = vmatpush1.msra.mxu0 %v1390
        %v1392 = vand.u32 %v584, 4294901760
        %1393 = vmatprep.subr.mxu0 %v1392
        %v1394 = vand.u32 %v583, 4294901760
        %1395 = vmatpush1.msra.mxu0 %v1394
        %v1396 = vand.u32 %v587, 4294901760
        %1397 = vmatprep.subr.mxu0 %v1396
        %v1398 = vand.u32 %v586, 4294901760
        %1399 = vmatpush1.msra.mxu0 %v1398
        %v1400 = vand.u32 %v590, 4294901760
        %1401 = vmatprep.subr.mxu0 %v1400
        %v1402 = vand.u32 %v589, 4294901760
        %1403 = vmatpush1.msra.mxu0 %v1402
        %v1404 = vand.u32 %v593, 4294901760
        %1405 = vmatprep.subr.mxu0 %v1404
        %v1406 = vand.u32 %v592, 4294901760
        %1407 = vmatpush1.msra.mxu0 %v1406
        %v1408 = vand.u32 %v596, 4294901760
        %1409 = vmatprep.subr.mxu0 %v1408
        %v1410 = vand.u32 %v595, 4294901760
        %1411 = vmatpush1.msra.mxu0 %v1410
        %v1412 = vand.u32 %v599, 4294901760
        %1413 = vmatprep.subr.mxu0 %v1412
        %v1414 = vand.u32 %v598, 4294901760
        %1415 = vmatpush1.msra.mxu0 %v1414
        %1416 = vmatprep.subr.mxu0 0.0
        %1417 = vmatpush1.msra.mxu0 0.0
        %1418 = vmatprep.subr.mxu0 0.0
        %1419 = vmatpush1.msra.mxu0 0.0
        %1420 = vmatprep.subr.mxu0 0.0
        %1421 = vmatpush1.msra.mxu0 0.0
        %1422 = vmatprep.subr.mxu0 0.0
        %1423 = vmatpush1.msra.mxu0 0.0
        %1424 = vmatprep.subr.mxu0 0.0
        %1425 = vmatpush1.msra.mxu0 0.0
        %1426 = vmatprep.subr.mxu0 0.0
        %1427 = vmatpush1.msra.mxu0 0.0
        %1428 = vmatprep.subr.mxu0 0.0
        %1429 = vmatpush1.msra.mxu0 0.0
        %1430 = vmatprep.subr.mxu0 0.0
        %1431 = vmatpush1.msra.mxu0 0.0
        %1432 = vmatprep.subr.mxu0 0.0
        %1433 = vmatpush1.msra.mxu0 0.0
        %1434 = vmatprep.subr.mxu0 0.0
        %1435 = vmatpush1.msra.mxu0 0.0
        %1436 = vmatprep.subr.mxu0 0.0
        %1437 = vmatpush1.msra.mxu0 0.0
        %1438 = vmatprep.subr.mxu0 0.0
        %1439 = vmatpush1.msra.mxu0 0.0
        %1440 = vmatprep.subr.mxu0 0.0
        %1441 = vmatpush1.msra.mxu0 0.0
        %1442 = vmatprep.subr.mxu0 0.0
        %1443 = vmatpush1.msra.mxu0 0.0
        %1444 = vmatprep.subr.mxu0 0.0
        %1445 = vmatpush1.msra.mxu0 0.0
        %1446 = vmatprep.subr.mxu0 0.0
        %1447 = vmatpush1.msra.mxu0 0.0
        %1448 = vmatprep.mubr.f32.mxu0 0.0
        %v1449 = vand.u32 %v552, 4294901760
        %1450 = vmatmul.mubr.f32.gmra.mrb[0].mxu0 %v1449
        %v1451 = vpop.f32.mrb[0].mxu0
        %v1452 = vadd.f32 %v1348, %v1451
        %v1453 = vpop.f32.mrb[0].mxu0
        %v1454 = vadd.f32 %v1350, %v1453
        %1455 = vdwg.mxu0
        %1456 = vmatprep.subr.mxu0 0.0
        %v1457 = vand.u32 %v555, 4294901760
        %1458 = vmatpush1.msra.mxu0 %v1457
        %1459 = vmatprep.subr.mxu0 0.0
        %v1460 = vand.u32 %v558, 4294901760
        %1461 = vmatpush1.msra.mxu0 %v1460
        %1462 = vmatprep.subr.mxu0 0.0
        %v1463 = vand.u32 %v561, 4294901760
        %1464 = vmatpush1.msra.mxu0 %v1463
        %1465 = vmatprep.subr.mxu0 0.0
        %v1466 = vand.u32 %v564, 4294901760
        %1467 = vmatpush1.msra.mxu0 %v1466
        %1468 = vmatprep.subr.mxu0 0.0
        %v1469 = vand.u32 %v567, 4294901760
        %1470 = vmatpush1.msra.mxu0 %v1469
        %1471 = vmatprep.subr.mxu0 0.0
        %v1472 = vand.u32 %v570, 4294901760
        %1473 = vmatpush1.msra.mxu0 %v1472
        %1474 = vmatprep.subr.mxu0 0.0
        %v1475 = vand.u32 %v573, 4294901760
        %1476 = vmatpush1.msra.mxu0 %v1475
        %1477 = vmatprep.subr.mxu0 0.0
        %v1478 = vand.u32 %v576, 4294901760
        %1479 = vmatpush1.msra.mxu0 %v1478
        %1480 = vmatprep.subr.mxu0 0.0
        %v1481 = vand.u32 %v579, 4294901760
        %1482 = vmatpush1.msra.mxu0 %v1481
        %1483 = vmatprep.subr.mxu0 0.0
        %v1484 = vand.u32 %v582, 4294901760
        %1485 = vmatpush1.msra.mxu0 %v1484
        %1486 = vmatprep.subr.mxu0 0.0
        %v1487 = vand.u32 %v585, 4294901760
        %1488 = vmatpush1.msra.mxu0 %v1487
        %1489 = vmatprep.subr.mxu0 0.0
        %v1490 = vand.u32 %v588, 4294901760
        %1491 = vmatpush1.msra.mxu0 %v1490
        %1492 = vmatprep.subr.mxu0 0.0
        %v1493 = vand.u32 %v591, 4294901760
        %1494 = vmatpush1.msra.mxu0 %v1493
        %1495 = vmatprep.subr.mxu0 0.0
        %v1496 = vand.u32 %v594, 4294901760
        %1497 = vmatpush1.msra.mxu0 %v1496
        %1498 = vmatprep.subr.mxu0 0.0
        %v1499 = vand.u32 %v597, 4294901760
        %1500 = vmatpush1.msra.mxu0 %v1499
        %1501 = vmatprep.subr.mxu0 0.0
        %v1502 = vand.u32 %v600, 4294901760
        %1503 = vmatpush1.msra.mxu0 %v1502
        %1504 = vmatprep.subr.mxu0 0.0
        %1505 = vmatpush1.msra.mxu0 0.0
        %1506 = vmatprep.subr.mxu0 0.0
        %1507 = vmatpush1.msra.mxu0 0.0
        %1508 = vmatprep.subr.mxu0 0.0
        %1509 = vmatpush1.msra.mxu0 0.0
        %1510 = vmatprep.subr.mxu0 0.0
        %1511 = vmatpush1.msra.mxu0 0.0
        %1512 = vmatprep.subr.mxu0 0.0
        %1513 = vmatpush1.msra.mxu0 0.0
        %1514 = vmatprep.subr.mxu0 0.0
        %1515 = vmatpush1.msra.mxu0 0.0
        %1516 = vmatprep.subr.mxu0 0.0
        %1517 = vmatpush1.msra.mxu0 0.0
        %1518 = vmatprep.subr.mxu0 0.0
        %1519 = vmatpush1.msra.mxu0 0.0
        %1520 = vmatprep.subr.mxu0 0.0
        %1521 = vmatpush1.msra.mxu0 0.0
        %1522 = vmatprep.subr.mxu0 0.0
        %1523 = vmatpush1.msra.mxu0 0.0
        %1524 = vmatprep.subr.mxu0 0.0
        %1525 = vmatpush1.msra.mxu0 0.0
        %1526 = vmatprep.subr.mxu0 0.0
        %1527 = vmatpush1.msra.mxu0 0.0
        %1528 = vmatprep.subr.mxu0 0.0
        %1529 = vmatpush1.msra.mxu0 0.0
        %1530 = vmatprep.subr.mxu0 0.0
        %1531 = vmatpush1.msra.mxu0 0.0
        %1532 = vmatprep.subr.mxu0 0.0
        %1533 = vmatpush1.msra.mxu0 0.0
        %1534 = vmatprep.subr.mxu0 0.0
        %1535 = vmatpush1.msra.mxu0 0.0
        %1536 = vmatprep.mubr.f32.mxu0 0.0
        %v1537 = vand.u32 %v552, 4294901760
        %v1538 = vsub.f32 %v552, %v1537
        %v1539 = vand.u32 %v1538, 4294901760
        %v1540 = vsub.f32 %v1538, %v1539
        %v1541 = vand.u32 %v1540, 4294901760
        %1542 = vmatmul.mubr.f32.gmra.mrb[0].mxu0 %v1541
        %v1543 = vpop.f32.mrb[0].mxu0
        %v1544 = vadd.f32 0.0, %v1543
        %v1545 = vpop.f32.mrb[0].mxu0
        %1546 = vdwg.mxu0
        %1547 = vmatprep.subr.mxu0 0.0
        %v1548 = vand.u32 %v555, 4294901760
        %v1549 = vsub.f32 %v555, %v1548
        %v1550 = vand.u32 %v1549, 4294901760
        %v1551 = vsub.f32 %v1549, %v1550
        %v1552 = vand.u32 %v1551, 4294901760
        %1553 = vmatpush1.msra.mxu0 %v1552
        %1554 = vmatprep.subr.mxu0 0.0
        %v1555 = vand.u32 %v558, 4294901760
        %v1556 = vsub.f32 %v558, %v1555
        %v1557 = vand.u32 %v1556, 4294901760
        %v1558 = vsub.f32 %v1556, %v1557
        %v1559 = vand.u32 %v1558, 4294901760
        %1560 = vmatpush1.msra.mxu0 %v1559
        %1561 = vmatprep.subr.mxu0 0.0
        %v1562 = vand.u32 %v561, 4294901760
        %v1563 = vsub.f32 %v561, %v1562
        %v1564 = vand.u32 %v1563, 4294901760
        %v1565 = vsub.f32 %v1563, %v1564
        %v1566 = vand.u32 %v1565, 4294901760
        %1567 = vmatpush1.msra.mxu0 %v1566
        %1568 = vmatprep.subr.mxu0 0.0
        %v1569 = vand.u32 %v564, 4294901760
        %v1570 = vsub.f32 %v564, %v1569
        %v1571 = vand.u32 %v1570, 4294901760
        %v1572 = vsub.f32 %v1570, %v1571
        %v1573 = vand.u32 %v1572, 4294901760
        %1574 = vmatpush1.msra.mxu0 %v1573
        %1575 = vmatprep.subr.mxu0 0.0
        %v1576 = vand.u32 %v567, 4294901760
        %v1577 = vsub.f32 %v567, %v1576
        %v1578 = vand.u32 %v1577, 4294901760
        %v1579 = vsub.f32 %v1577, %v1578
        %v1580 = vand.u32 %v1579, 4294901760
        %1581 = vmatpush1.msra.mxu0 %v1580
        %1582 = vmatprep.subr.mxu0 0.0
        %v1583 = vand.u32 %v570, 4294901760
        %v1584 = vsub.f32 %v570, %v1583
        %v1585 = vand.u32 %v1584, 4294901760
        %v1586 = vsub.f32 %v1584, %v1585
        %v1587 = vand.u32 %v1586, 4294901760
        %1588 = vmatpush1.msra.mxu0 %v1587
        %1589 = vmatprep.subr.mxu0 0.0
        %v1590 = vand.u32 %v573, 4294901760
        %v1591 = vsub.f32 %v573, %v1590
        %v1592 = vand.u32 %v1591, 4294901760
        %v1593 = vsub.f32 %v1591, %v1592
        %v1594 = vand.u32 %v1593, 4294901760
        %1595 = vmatpush1.msra.mxu0 %v1594
        %1596 = vmatprep.subr.mxu0 0.0
        %v1597 = vand.u32 %v576, 4294901760
        %v1598 = vsub.f32 %v576, %v1597
        %v1599 = vand.u32 %v1598, 4294901760
        %v1600 = vsub.f32 %v1598, %v1599
        %v1601 = vand.u32 %v1600, 4294901760
        %1602 = vmatpush1.msra.mxu0 %v1601
        %1603 = vmatprep.subr.mxu0 0.0
        %v1604 = vand.u32 %v579, 4294901760
        %v1605 = vsub.f32 %v579, %v1604
        %v1606 = vand.u32 %v1605, 4294901760
        %v1607 = vsub.f32 %v1605, %v1606
        %v1608 = vand.u32 %v1607, 4294901760
        %1609 = vmatpush1.msra.mxu0 %v1608
        %1610 = vmatprep.subr.mxu0 0.0
        %v1611 = vand.u32 %v582, 4294901760
        %v1612 = vsub.f32 %v582, %v1611
        %v1613 = vand.u32 %v1612, 4294901760
        %v1614 = vsub.f32 %v1612, %v1613
        %v1615 = vand.u32 %v1614, 4294901760
        %1616 = vmatpush1.msra.mxu0 %v1615
        %1617 = vmatprep.subr.mxu0 0.0
        %v1618 = vand.u32 %v585, 4294901760
        %v1619 = vsub.f32 %v585, %v1618
        %v1620 = vand.u32 %v1619, 4294901760
        %v1621 = vsub.f32 %v1619, %v1620
        %v1622 = vand.u32 %v1621, 4294901760
        %1623 = vmatpush1.msra.mxu0 %v1622
        %1624 = vmatprep.subr.mxu0 0.0
        %v1625 = vand.u32 %v588, 4294901760
        %v1626 = vsub.f32 %v588, %v1625
        %v1627 = vand.u32 %v1626, 4294901760
        %v1628 = vsub.f32 %v1626, %v1627
        %v1629 = vand.u32 %v1628, 4294901760
        %1630 = vmatpush1.msra.mxu0 %v1629
        %1631 = vmatprep.subr.mxu0 0.0
        %v1632 = vand.u32 %v591, 4294901760
        %v1633 = vsub.f32 %v591, %v1632
        %v1634 = vand.u32 %v1633, 4294901760
        %v1635 = vsub.f32 %v1633, %v1634
        %v1636 = vand.u32 %v1635, 4294901760
        %1637 = vmatpush1.msra.mxu0 %v1636
        %1638 = vmatprep.subr.mxu0 0.0
        %v1639 = vand.u32 %v594, 4294901760
        %v1640 = vsub.f32 %v594, %v1639
        %v1641 = vand.u32 %v1640, 4294901760
        %v1642 = vsub.f32 %v1640, %v1641
        %v1643 = vand.u32 %v1642, 4294901760
        %1644 = vmatpush1.msra.mxu0 %v1643
        %1645 = vmatprep.subr.mxu0 0.0
        %v1646 = vand.u32 %v597, 4294901760
        %v1647 = vsub.f32 %v597, %v1646
        %v1648 = vand.u32 %v1647, 4294901760
        %v1649 = vsub.f32 %v1647, %v1648
        %v1650 = vand.u32 %v1649, 4294901760
        %1651 = vmatpush1.msra.mxu0 %v1650
        %1652 = vmatprep.subr.mxu0 0.0
        %v1653 = vand.u32 %v600, 4294901760
        %v1654 = vsub.f32 %v600, %v1653
        %v1655 = vand.u32 %v1654, 4294901760
        %v1656 = vsub.f32 %v1654, %v1655
        %v1657 = vand.u32 %v1656, 4294901760
        %1658 = vmatpush1.msra.mxu0 %v1657
        %1659 = vmatprep.subr.mxu0 0.0
        %1660 = vmatpush1.msra.mxu0 0.0
        %1661 = vmatprep.subr.mxu0 0.0
        %1662 = vmatpush1.msra.mxu0 0.0
        %1663 = vmatprep.subr.mxu0 0.0
        %1664 = vmatpush1.msra.mxu0 0.0
        %1665 = vmatprep.subr.mxu0 0.0
        %1666 = vmatpush1.msra.mxu0 0.0
        %1667 = vmatprep.subr.mxu0 0.0
        %1668 = vmatpush1.msra.mxu0 0.0
        %1669 = vmatprep.subr.mxu0 0.0
        %1670 = vmatpush1.msra.mxu0 0.0
        %1671 = vmatprep.subr.mxu0 0.0
        %1672 = vmatpush1.msra.mxu0 0.0
        %1673 = vmatprep.subr.mxu0 0.0
        %1674 = vmatpush1.msra.mxu0 0.0
        %1675 = vmatprep.subr.mxu0 0.0
        %1676 = vmatpush1.msra.mxu0 0.0
        %1677 = vmatprep.subr.mxu0 0.0
        %1678 = vmatpush1.msra.mxu0 0.0
        %1679 = vmatprep.subr.mxu0 0.0
        %1680 = vmatpush1.msra.mxu0 0.0
        %1681 = vmatprep.subr.mxu0 0.0
        %1682 = vmatpush1.msra.mxu0 0.0
        %1683 = vmatprep.subr.mxu0 0.0
        %1684 = vmatpush1.msra.mxu0 0.0
        %1685 = vmatprep.subr.mxu0 0.0
        %1686 = vmatpush1.msra.mxu0 0.0
        %1687 = vmatprep.subr.mxu0 0.0
        %1688 = vmatpush1.msra.mxu0 0.0
        %1689 = vmatprep.subr.mxu0 0.0
        %1690 = vmatpush1.msra.mxu0 0.0
        %1691 = vmatprep.mubr.f32.mxu0 0.0
        %v1692 = vand.u32 %v552, 4294901760
        %1693 = vmatmul.mubr.f32.gmra.mrb[0].mxu0 %v1692
        %v1694 = vpop.f32.mrb[0].mxu0
        %v1695 = vadd.f32 %v1544, %v1694
        %v1696 = vpop.f32.mrb[0].mxu0
        %1697 = vdwg.mxu0
        %1698 = vmatprep.subr.mxu0 0.0
        %v1699 = vand.u32 %v555, 4294901760
        %v1700 = vsub.f32 %v555, %v1699
        %1701 = vmatpush1.msra.mxu0 %v1700
        %1702 = vmatprep.subr.mxu0 0.0
        %v1703 = vand.u32 %v558, 4294901760
        %v1704 = vsub.f32 %v558, %v1703
        %1705 = vmatpush1.msra.mxu0 %v1704
        %1706 = vmatprep.subr.mxu0 0.0
        %v1707 = vand.u32 %v561, 4294901760
        %v1708 = vsub.f32 %v561, %v1707
        %1709 = vmatpush1.msra.mxu0 %v1708
        %1710 = vmatprep.subr.mxu0 0.0
        %v1711 = vand.u32 %v564, 4294901760
        %v1712 = vsub.f32 %v564, %v1711
        %1713 = vmatpush1.msra.mxu0 %v1712
        %1714 = vmatprep.subr.mxu0 0.0
        %v1715 = vand.u32 %v567, 4294901760
        %v1716 = vsub.f32 %v567, %v1715
        %1717 = vmatpush1.msra.mxu0 %v1716
        %1718 = vmatprep.subr.mxu0 0.0
        %v1719 = vand.u32 %v570, 4294901760
        %v1720 = vsub.f32 %v570, %v1719
        %1721 = vmatpush1.msra.mxu0 %v1720
        %1722 = vmatprep.subr.mxu0 0.0
        %v1723 = vand.u32 %v573, 4294901760
        %v1724 = vsub.f32 %v573, %v1723
        %1725 = vmatpush1.msra.mxu0 %v1724
        %1726 = vmatprep.subr.mxu0 0.0
        %v1727 = vand.u32 %v576, 4294901760
        %v1728 = vsub.f32 %v576, %v1727
        %1729 = vmatpush1.msra.mxu0 %v1728
        %1730 = vmatprep.subr.mxu0 0.0
        %v1731 = vand.u32 %v579, 4294901760
        %v1732 = vsub.f32 %v579, %v1731
        %1733 = vmatpush1.msra.mxu0 %v1732
        %1734 = vmatprep.subr.mxu0 0.0
        %v1735 = vand.u32 %v582, 4294901760
        %v1736 = vsub.f32 %v582, %v1735
        %1737 = vmatpush1.msra.mxu0 %v1736
        %1738 = vmatprep.subr.mxu0 0.0
        %v1739 = vand.u32 %v585, 4294901760
        %v1740 = vsub.f32 %v585, %v1739
        %1741 = vmatpush1.msra.mxu0 %v1740
        %1742 = vmatprep.subr.mxu0 0.0
        %v1743 = vand.u32 %v588, 4294901760
        %v1744 = vsub.f32 %v588, %v1743
        %1745 = vmatpush1.msra.mxu0 %v1744
        %1746 = vmatprep.subr.mxu0 0.0
        %v1747 = vand.u32 %v591, 4294901760
        %v1748 = vsub.f32 %v591, %v1747
        %1749 = vmatpush1.msra.mxu0 %v1748
        %1750 = vmatprep.subr.mxu0 0.0
        %v1751 = vand.u32 %v594, 4294901760
        %v1752 = vsub.f32 %v594, %v1751
        %1753 = vmatpush1.msra.mxu0 %v1752
        %1754 = vmatprep.subr.mxu0 0.0
        %v1755 = vand.u32 %v597, 4294901760
        %v1756 = vsub.f32 %v597, %v1755
        %1757 = vmatpush1.msra.mxu0 %v1756
        %1758 = vmatprep.subr.mxu0 0.0
        %v1759 = vand.u32 %v600, 4294901760
        %v1760 = vsub.f32 %v600, %v1759
        %1761 = vmatpush1.msra.mxu0 %v1760
        %1762 = vmatprep.subr.mxu0 0.0
        %1763 = vmatpush1.msra.mxu0 0.0
        %1764 = vmatprep.subr.mxu0 0.0
        %1765 = vmatpush1.msra.mxu0 0.0
        %1766 = vmatprep.subr.mxu0 0.0
        %1767 = vmatpush1.msra.mxu0 0.0
        %1768 = vmatprep.subr.mxu0 0.0
        %1769 = vmatpush1.msra.mxu0 0.0
        %1770 = vmatprep.subr.mxu0 0.0
        %1771 = vmatpush1.msra.mxu0 0.0
        %1772 = vmatprep.subr.mxu0 0.0
        %1773 = vmatpush1.msra.mxu0 0.0
        %1774 = vmatprep.subr.mxu0 0.0
        %1775 = vmatpush1.msra.mxu0 0.0
        %1776 = vmatprep.subr.mxu0 0.0
        %1777 = vmatpush1.msra.mxu0 0.0
        %1778 = vmatprep.subr.mxu0 0.0
        %1779 = vmatpush1.msra.mxu0 0.0
        %1780 = vmatprep.subr.mxu0 0.0
        %1781 = vmatpush1.msra.mxu0 0.0
        %1782 = vmatprep.subr.mxu0 0.0
        %1783 = vmatpush1.msra.mxu0 0.0
        %1784 = vmatprep.subr.mxu0 0.0
        %1785 = vmatpush1.msra.mxu0 0.0
        %1786 = vmatprep.subr.mxu0 0.0
        %1787 = vmatpush1.msra.mxu0 0.0
        %1788 = vmatprep.subr.mxu0 0.0
        %1789 = vmatpush1.msra.mxu0 0.0
        %1790 = vmatprep.subr.mxu0 0.0
        %1791 = vmatpush1.msra.mxu0 0.0
        %1792 = vmatprep.subr.mxu0 0.0
        %1793 = vmatpush1.msra.mxu0 0.0
        %1794 = vmatprep.mubr.f32.mxu0 0.0
        %v1795 = vand.u32 %v552, 4294901760
        %v1796 = vsub.f32 %v552, %v1795
        %1797 = vmatmul.mubr.f32.gmra.mrb[0].mxu0 %v1796
        %v1798 = vpop.f32.mrb[0].mxu0
        %v1799 = vadd.f32 %v1695, %v1798
        %v1800 = vpop.f32.mrb[0].mxu0
        %1801 = vdwg.mxu0
        %1802 = vmatprep.subr.mxu0 0.0
        %v1803 = vand.u32 %v555, 4294901760
        %1804 = vmatpush1.msra.mxu0 %v1803
        %1805 = vmatprep.subr.mxu0 0.0
        %v1806 = vand.u32 %v558, 4294901760
        %1807 = vmatpush1.msra.mxu0 %v1806
        %1808 = vmatprep.subr.mxu0 0.0
        %v1809 = vand.u32 %v561, 4294901760
        %1810 = vmatpush1.msra.mxu0 %v1809
        %1811 = vmatprep.subr.mxu0 0.0
        %v1812 = vand.u32 %v564, 4294901760
        %1813 = vmatpush1.msra.mxu0 %v1812
        %1814 = vmatprep.subr.mxu0 0.0
        %v1815 = vand.u32 %v567, 4294901760
        %1816 = vmatpush1.msra.mxu0 %v1815
        %1817 = vmatprep.subr.mxu0 0.0
        %v1818 = vand.u32 %v570, 4294901760
        %1819 = vmatpush1.msra.mxu0 %v1818
        %1820 = vmatprep.subr.mxu0 0.0
        %v1821 = vand.u32 %v573, 4294901760
        %1822 = vmatpush1.msra.mxu0 %v1821
        %1823 = vmatprep.subr.mxu0 0.0
        %v1824 = vand.u32 %v576, 4294901760
        %1825 = vmatpush1.msra.mxu0 %v1824
        %1826 = vmatprep.subr.mxu0 0.0
        %v1827 = vand.u32 %v579, 4294901760
        %1828 = vmatpush1.msra.mxu0 %v1827
        %1829 = vmatprep.subr.mxu0 0.0
        %v1830 = vand.u32 %v582, 4294901760
        %1831 = vmatpush1.msra.mxu0 %v1830
        %1832 = vmatprep.subr.mxu0 0.0
        %v1833 = vand.u32 %v585, 4294901760
        %1834 = vmatpush1.msra.mxu0 %v1833
        %1835 = vmatprep.subr.mxu0 0.0
        %v1836 = vand.u32 %v588, 4294901760
        %1837 = vmatpush1.msra.mxu0 %v1836
        %1838 = vmatprep.subr.mxu0 0.0
        %v1839 = vand.u32 %v591, 4294901760
        %1840 = vmatpush1.msra.mxu0 %v1839
        %1841 = vmatprep.subr.mxu0 0.0
        %v1842 = vand.u32 %v594, 4294901760
        %1843 = vmatpush1.msra.mxu0 %v1842
        %1844 = vmatprep.subr.mxu0 0.0
        %v1845 = vand.u32 %v597, 4294901760
        %1846 = vmatpush1.msra.mxu0 %v1845
        %1847 = vmatprep.subr.mxu0 0.0
        %v1848 = vand.u32 %v600, 4294901760
        %1849 = vmatpush1.msra.mxu0 %v1848
        %1850 = vmatprep.subr.mxu0 0.0
        %1851 = vmatpush1.msra.mxu0 0.0
        %1852 = vmatprep.subr.mxu0 0.0
        %1853 = vmatpush1.msra.mxu0 0.0
        %1854 = vmatprep.subr.mxu0 0.0
        %1855 = vmatpush1.msra.mxu0 0.0
        %1856 = vmatprep.subr.mxu0 0.0
        %1857 = vmatpush1.msra.mxu0 0.0
        %1858 = vmatprep.subr.mxu0 0.0
        %1859 = vmatpush1.msra.mxu0 0.0
        %1860 = vmatprep.subr.mxu0 0.0
        %1861 = vmatpush1.msra.mxu0 0.0
        %1862 = vmatprep.subr.mxu0 0.0
        %1863 = vmatpush1.msra.mxu0 0.0
        %1864 = vmatprep.subr.mxu0 0.0
        %1865 = vmatpush1.msra.mxu0 0.0
        %1866 = vmatprep.subr.mxu0 0.0
        %1867 = vmatpush1.msra.mxu0 0.0
        %1868 = vmatprep.subr.mxu0 0.0
        %1869 = vmatpush1.msra.mxu0 0.0
        %1870 = vmatprep.subr.mxu0 0.0
        %1871 = vmatpush1.msra.mxu0 0.0
        %1872 = vmatprep.subr.mxu0 0.0
        %1873 = vmatpush1.msra.mxu0 0.0
        %1874 = vmatprep.subr.mxu0 0.0
        %1875 = vmatpush1.msra.mxu0 0.0
        %1876 = vmatprep.subr.mxu0 0.0
        %1877 = vmatpush1.msra.mxu0 0.0
        %1878 = vmatprep.subr.mxu0 0.0
        %1879 = vmatpush1.msra.mxu0 0.0
        %1880 = vmatprep.subr.mxu0 0.0
        %1881 = vmatpush1.msra.mxu0 0.0
        %1882 = vmatprep.mubr.f32.mxu0 0.0
        %v1883 = vand.u32 %v552, 4294901760
        %v1884 = vsub.f32 %v552, %v1883
        %v1885 = vand.u32 %v1884, 4294901760
        %1886 = vmatmul.mubr.f32.gmra.mrb[0].mxu0 %v1885
        %v1887 = vpop.f32.mrb[0].mxu0
        %v1888 = vadd.f32 %v1799, %v1887
        %v1889 = vpop.f32.mrb[0].mxu0
        %1890 = vdwg.mxu0
        %1891 = vmatprep.subr.mxu0 0.0
        %v1892 = vand.u32 %v555, 4294901760
        %v1893 = vsub.f32 %v555, %v1892
        %v1894 = vand.u32 %v1893, 4294901760
        %1895 = vmatpush1.msra.mxu0 %v1894
        %1896 = vmatprep.subr.mxu0 0.0
        %v1897 = vand.u32 %v558, 4294901760
        %v1898 = vsub.f32 %v558, %v1897
        %v1899 = vand.u32 %v1898, 4294901760
        %1900 = vmatpush1.msra.mxu0 %v1899
        %1901 = vmatprep.subr.mxu0 0.0
        %v1902 = vand.u32 %v561, 4294901760
        %v1903 = vsub.f32 %v561, %v1902
        %v1904 = vand.u32 %v1903, 4294901760
        %1905 = vmatpush1.msra.mxu0 %v1904
        %1906 = vmatprep.subr.mxu0 0.0
        %v1907 = vand.u32 %v564, 4294901760
        %v1908 = vsub.f32 %v564, %v1907
        %v1909 = vand.u32 %v1908, 4294901760
        %1910 = vmatpush1.msra.mxu0 %v1909
        %1911 = vmatprep.subr.mxu0 0.0
        %v1912 = vand.u32 %v567, 4294901760
        %v1913 = vsub.f32 %v567, %v1912
        %v1914 = vand.u32 %v1913, 4294901760
        %1915 = vmatpush1.msra.mxu0 %v1914
        %1916 = vmatprep.subr.mxu0 0.0
        %v1917 = vand.u32 %v570, 4294901760
        %v1918 = vsub.f32 %v570, %v1917
        %v1919 = vand.u32 %v1918, 4294901760
        %1920 = vmatpush1.msra.mxu0 %v1919
        %1921 = vmatprep.subr.mxu0 0.0
        %v1922 = vand.u32 %v573, 4294901760
        %v1923 = vsub.f32 %v573, %v1922
        %v1924 = vand.u32 %v1923, 4294901760
        %1925 = vmatpush1.msra.mxu0 %v1924
        %1926 = vmatprep.subr.mxu0 0.0
        %v1927 = vand.u32 %v576, 4294901760
        %v1928 = vsub.f32 %v576, %v1927
        %v1929 = vand.u32 %v1928, 4294901760
        %1930 = vmatpush1.msra.mxu0 %v1929
        %1931 = vmatprep.subr.mxu0 0.0
        %v1932 = vand.u32 %v579, 4294901760
        %v1933 = vsub.f32 %v579, %v1932
        %v1934 = vand.u32 %v1933, 4294901760
        %1935 = vmatpush1.msra.mxu0 %v1934
        %1936 = vmatprep.subr.mxu0 0.0
        %v1937 = vand.u32 %v582, 4294901760
        %v1938 = vsub.f32 %v582, %v1937
        %v1939 = vand.u32 %v1938, 4294901760
        %1940 = vmatpush1.msra.mxu0 %v1939
        %1941 = vmatprep.subr.mxu0 0.0
        %v1942 = vand.u32 %v585, 4294901760
        %v1943 = vsub.f32 %v585, %v1942
        %v1944 = vand.u32 %v1943, 4294901760
        %1945 = vmatpush1.msra.mxu0 %v1944
        %1946 = vmatprep.subr.mxu0 0.0
        %v1947 = vand.u32 %v588, 4294901760
        %v1948 = vsub.f32 %v588, %v1947
        %v1949 = vand.u32 %v1948, 4294901760
        %1950 = vmatpush1.msra.mxu0 %v1949
        %1951 = vmatprep.subr.mxu0 0.0
        %v1952 = vand.u32 %v591, 4294901760
        %v1953 = vsub.f32 %v591, %v1952
        %v1954 = vand.u32 %v1953, 4294901760
        %1955 = vmatpush1.msra.mxu0 %v1954
        %1956 = vmatprep.subr.mxu0 0.0
        %v1957 = vand.u32 %v594, 4294901760
        %v1958 = vsub.f32 %v594, %v1957
        %v1959 = vand.u32 %v1958, 4294901760
        %1960 = vmatpush1.msra.mxu0 %v1959
        %1961 = vmatprep.subr.mxu0 0.0
        %v1962 = vand.u32 %v597, 4294901760
        %v1963 = vsub.f32 %v597, %v1962
        %v1964 = vand.u32 %v1963, 4294901760
        %1965 = vmatpush1.msra.mxu0 %v1964
        %1966 = vmatprep.subr.mxu0 0.0
        %v1967 = vand.u32 %v600, 4294901760
        %v1968 = vsub.f32 %v600, %v1967
        %v1969 = vand.u32 %v1968, 4294901760
        %1970 = vmatpush1.msra.mxu0 %v1969
        %1971 = vmatprep.subr.mxu0 0.0
        %1972 = vmatpush1.msra.mxu0 0.0
        %1973 = vmatprep.subr.mxu0 0.0
        %1974 = vmatpush1.msra.mxu0 0.0
        %1975 = vmatprep.subr.mxu0 0.0
        %1976 = vmatpush1.msra.mxu0 0.0
        %1977 = vmatprep.subr.mxu0 0.0
        %1978 = vmatpush1.msra.mxu0 0.0
        %1979 = vmatprep.subr.mxu0 0.0
        %1980 = vmatpush1.msra.mxu0 0.0
        %1981 = vmatprep.subr.mxu0 0.0
        %1982 = vmatpush1.msra.mxu0 0.0
        %1983 = vmatprep.subr.mxu0 0.0
        %1984 = vmatpush1.msra.mxu0 0.0
        %1985 = vmatprep.subr.mxu0 0.0
        %1986 = vmatpush1.msra.mxu0 0.0
        %1987 = vmatprep.subr.mxu0 0.0
        %1988 = vmatpush1.msra.mxu0 0.0
        %1989 = vmatprep.subr.mxu0 0.0
        %1990 = vmatpush1.msra.mxu0 0.0
        %1991 = vmatprep.subr.mxu0 0.0
        %1992 = vmatpush1.msra.mxu0 0.0
        %1993 = vmatprep.subr.mxu0 0.0
        %1994 = vmatpush1.msra.mxu0 0.0
        %1995 = vmatprep.subr.mxu0 0.0
        %1996 = vmatpush1.msra.mxu0 0.0
        %1997 = vmatprep.subr.mxu0 0.0
        %1998 = vmatpush1.msra.mxu0 0.0
        %1999 = vmatprep.subr.mxu0 0.0
        %2000 = vmatpush1.msra.mxu0 0.0
        %2001 = vmatprep.subr.mxu0 0.0
        %2002 = vmatpush1.msra.mxu0 0.0
        %2003 = vmatprep.mubr.f32.mxu0 0.0
        %v2004 = vand.u32 %v552, 4294901760
        %2005 = vmatmul.mubr.f32.gmra.mrb[0].mxu0 %v2004
        %v2006 = vpop.f32.mrb[0].mxu0
        %v2007 = vadd.f32 %v1888, %v2006
        %v2008 = vpop.f32.mrb[0].mxu0
        %2009 = vdwg.mxu0
        %2010 = vmatprep.subr.mxu0 0.0
        %v2011 = vand.u32 %v555, 4294901760
        %2012 = vmatpush1.msra.mxu0 %v2011
        %2013 = vmatprep.subr.mxu0 0.0
        %v2014 = vand.u32 %v558, 4294901760
        %2015 = vmatpush1.msra.mxu0 %v2014
        %2016 = vmatprep.subr.mxu0 0.0
        %v2017 = vand.u32 %v561, 4294901760
        %2018 = vmatpush1.msra.mxu0 %v2017
        %2019 = vmatprep.subr.mxu0 0.0
        %v2020 = vand.u32 %v564, 4294901760
        %2021 = vmatpush1.msra.mxu0 %v2020
        %2022 = vmatprep.subr.mxu0 0.0
        %v2023 = vand.u32 %v567, 4294901760
        %2024 = vmatpush1.msra.mxu0 %v2023
        %2025 = vmatprep.subr.mxu0 0.0
        %v2026 = vand.u32 %v570, 4294901760
        %2027 = vmatpush1.msra.mxu0 %v2026
        %2028 = vmatprep.subr.mxu0 0.0
        %v2029 = vand.u32 %v573, 4294901760
        %2030 = vmatpush1.msra.mxu0 %v2029
        %2031 = vmatprep.subr.mxu0 0.0
        %v2032 = vand.u32 %v576, 4294901760
        %2033 = vmatpush1.msra.mxu0 %v2032
        %2034 = vmatprep.subr.mxu0 0.0
        %v2035 = vand.u32 %v579, 4294901760
        %2036 = vmatpush1.msra.mxu0 %v2035
        %2037 = vmatprep.subr.mxu0 0.0
        %v2038 = vand.u32 %v582, 4294901760
        %2039 = vmatpush1.msra.mxu0 %v2038
        %2040 = vmatprep.subr.mxu0 0.0
        %v2041 = vand.u32 %v585, 4294901760
        %2042 = vmatpush1.msra.mxu0 %v2041
        %2043 = vmatprep.subr.mxu0 0.0
        %v2044 = vand.u32 %v588, 4294901760
        %2045 = vmatpush1.msra.mxu0 %v2044
        %2046 = vmatprep.subr.mxu0 0.0
        %v2047 = vand.u32 %v591, 4294901760
        %2048 = vmatpush1.msra.mxu0 %v2047
        %2049 = vmatprep.subr.mxu0 0.0
        %v2050 = vand.u32 %v594, 4294901760
        %2051 = vmatpush1.msra.mxu0 %v2050
        %2052 = vmatprep.subr.mxu0 0.0
        %v2053 = vand.u32 %v597, 4294901760
        %2054 = vmatpush1.msra.mxu0 %v2053
        %2055 = vmatprep.subr.mxu0 0.0
        %v2056 = vand.u32 %v600, 4294901760
        %2057 = vmatpush1.msra.mxu0 %v2056
        %2058 = vmatprep.subr.mxu0 0.0
        %2059 = vmatpush1.msra.mxu0 0.0
        %2060 = vmatprep.subr.mxu0 0.0
        %2061 = vmatpush1.msra.mxu0 0.0
        %2062 = vmatprep.subr.mxu0 0.0
        %2063 = vmatpush1.msra.mxu0 0.0
        %2064 = vmatprep.subr.mxu0 0.0
        %2065 = vmatpush1.msra.mxu0 0.0
        %2066 = vmatprep.subr.mxu0 0.0
        %2067 = vmatpush1.msra.mxu0 0.0
        %2068 = vmatprep.subr.mxu0 0.0
        %2069 = vmatpush1.msra.mxu0 0.0
        %2070 = vmatprep.subr.mxu0 0.0
        %2071 = vmatpush1.msra.mxu0 0.0
        %2072 = vmatprep.subr.mxu0 0.0
        %2073 = vmatpush1.msra.mxu0 0.0
        %2074 = vmatprep.subr.mxu0 0.0
        %2075 = vmatpush1.msra.mxu0 0.0
        %2076 = vmatprep.subr.mxu0 0.0
        %2077 = vmatpush1.msra.mxu0 0.0
        %2078 = vmatprep.subr.mxu0 0.0
        %2079 = vmatpush1.msra.mxu0 0.0
        %2080 = vmatprep.subr.mxu0 0.0
        %2081 = vmatpush1.msra.mxu0 0.0
        %2082 = vmatprep.subr.mxu0 0.0
        %2083 = vmatpush1.msra.mxu0 0.0
        %2084 = vmatprep.subr.mxu0 0.0
        %2085 = vmatpush1.msra.mxu0 0.0
        %2086 = vmatprep.subr.mxu0 0.0
        %2087 = vmatpush1.msra.mxu0 0.0
        %2088 = vmatprep.subr.mxu0 0.0
        %2089 = vmatpush1.msra.mxu0 0.0
        %2090 = vmatprep.mubr.f32.mxu0 0.0
        %v2091 = vand.u32 %v552, 4294901760
        %2092 = vmatmul.mubr.f32.gmra.mrb[0].mxu0 %v2091
        %v2093 = vpop.f32.mrb[0].mxu0
        %v2094 = vadd.f32 %v2007, %v2093
        %v2095 = vpop.f32.mrb[0].mxu0
        %2096 = vdwg.mxu0
        %v2097 = vld [vmem:[%s488] sm:$0xff]
        %v2098 = vld [vmem:[%s488 + $0x8] sm:$0xff]
        %v2099 = vld [vmem:[%s488 + $0x10] sm:$0xff]
        %v2100 = vld [vmem:[%s488 + $0x18] sm:$0xff]
        %v2101 = vld [vmem:[%s488 + $0x20] sm:$0xff]
        %v2102 = vld [vmem:[%s488 + $0x28] sm:$0xff]
        %v2103 = vld [vmem:[%s488 + $0x30] sm:$0xff]
        %v2104 = vld [vmem:[%s488 + $0x38] sm:$0xff]
        %v2105 = vld [vmem:[%s488 + $0x40] sm:$0xff]
        %v2106 = vld [vmem:[%s488 + $0x48] sm:$0xff]
        %v2107 = vld [vmem:[%s488 + $0x50] sm:$0xff]
        %v2108 = vld [vmem:[%s488 + $0x58] sm:$0xff]
        %v2109 = vld [vmem:[%s488 + $0x60] sm:$0xff]
        %v2110 = vld [vmem:[%s488 + $0x68] sm:$0xff]
        %v2111 = vld [vmem:[%s488 + $0x70] sm:$0xff]
        %v2112 = vld [vmem:[%s488 + $0x78] sm:$0xff]
        %v2113 = vlaneseq
        %v2114 = vshrl.u32 %v2113, 7
        %v2115 = vlaneseq
        %v2116 = vand.u32 %v2115, 127
        %vm2117 = vcmp.le.s32.totalorder %v2116, %v2114
        %v2118 = vsel %vm2117, 0.0, -1e+30
        %2119 = vmatprep.subr.mxu0 0.0
        %v2120 = vand.u32 %v1454, 4294901760
        %2121 = vmatpush1.xpose.msra.mxu0 %v2120
        %2122 = vmatprep.subr.mxu0 0.0
        %2123 = vmatpush1.xpose.msra.mxu0 0.0
        %2124 = vmatprep.subr.mxu0 0.0
        %2125 = vmatpush1.xpose.msra.mxu0 0.0
        %2126 = vmatprep.subr.mxu0 0.0
        %2127 = vmatpush1.xpose.msra.mxu0 0.0
        %2128 = vmatprep.subr.mxu0 0.0
        %2129 = vmatpush1.xpose.msra.mxu0 0.0
        %2130 = vmatprep.subr.mxu0 0.0
        %2131 = vmatpush1.xpose.msra.mxu0 0.0
        %2132 = vmatprep.subr.mxu0 0.0
        %2133 = vmatpush1.xpose.msra.mxu0 0.0
        %2134 = vmatprep.subr.mxu0 0.0
        %2135 = vmatpush1.xpose.msra.mxu0 0.0
        %2136 = vmatprep.subr.mxu0 0.0
        %2137 = vmatpush1.xpose.msra.mxu0 0.0
        %2138 = vmatprep.subr.mxu0 0.0
        %2139 = vmatpush1.xpose.msra.mxu0 0.0
        %2140 = vmatprep.subr.mxu0 0.0
        %2141 = vmatpush1.xpose.msra.mxu0 0.0
        %2142 = vmatprep.subr.mxu0 0.0
        %2143 = vmatpush1.xpose.msra.mxu0 0.0
        %2144 = vmatprep.subr.mxu0 0.0
        %2145 = vmatpush1.xpose.msra.mxu0 0.0
        %2146 = vmatprep.subr.mxu0 0.0
        %2147 = vmatpush1.xpose.msra.mxu0 0.0
        %2148 = vmatprep.subr.mxu0 0.0
        %2149 = vmatpush1.xpose.msra.mxu0 0.0
        %2150 = vmatprep.subr.mxu0 0.0
        %2151 = vmatpush1.xpose.msra.mxu0 0.0
        %2152 = vmatprep.subr.mxu0 0.0
        %2153 = vmatpush1.xpose.msra.mxu0 0.0
        %2154 = vmatprep.subr.mxu0 0.0
        %2155 = vmatpush1.xpose.msra.mxu0 0.0
        %2156 = vmatprep.subr.mxu0 0.0
        %2157 = vmatpush1.xpose.msra.mxu0 0.0
        %2158 = vmatprep.subr.mxu0 0.0
        %2159 = vmatpush1.xpose.msra.mxu0 0.0
        %2160 = vmatprep.subr.mxu0 0.0
        %2161 = vmatpush1.xpose.msra.mxu0 0.0
        %2162 = vmatprep.subr.mxu0 0.0
        %2163 = vmatpush1.xpose.msra.mxu0 0.0
        %2164 = vmatprep.subr.mxu0 0.0
        %2165 = vmatpush1.xpose.msra.mxu0 0.0
        %2166 = vmatprep.subr.mxu0 0.0
        %2167 = vmatpush1.xpose.msra.mxu0 0.0
        %2168 = vmatprep.subr.mxu0 0.0
        %2169 = vmatpush1.xpose.msra.mxu0 0.0
        %2170 = vmatprep.subr.mxu0 0.0
        %2171 = vmatpush1.xpose.msra.mxu0 0.0
        %2172 = vmatprep.subr.mxu0 0.0
        %2173 = vmatpush1.xpose.msra.mxu0 0.0
        %2174 = vmatprep.subr.mxu0 0.0
        %2175 = vmatpush1.xpose.msra.mxu0 0.0
        %2176 = vmatprep.subr.mxu0 0.0
        %2177 = vmatpush1.xpose.msra.mxu0 0.0
        %2178 = vmatprep.subr.mxu0 0.0
        %2179 = vmatpush1.xpose.msra.mxu0 0.0
        %2180 = vmatprep.subr.mxu0 0.0
        %2181 = vmatpush1.xpose.msra.mxu0 0.0
        %2182 = vmatprep.subr.mxu0 0.0
        %2183 = vmatpush1.xpose.msra.mxu0 0.0
        %2184 = vmatprep.mubr.f32.mxu0 0.0
        %v2185 = vand.u32 %v1452, 4294901760
        %v2186 = vsub.f32 %v1452, %v2185
        %v2187 = vand.u32 %v2186, 4294901760
        %v2188 = vsub.f32 %v2186, %v2187
        %v2189 = vand.u32 %v2188, 4294901760
        %2190 = vmatmul.mubr.f32.gmra.mrb[0].mxu0 %v2189
        %v2191 = vpop.f32.mrb[0].mxu0
        %v2192 = vadd.f32 %v2118, %v2191
        %v2193 = vpop.f32.mrb[0].mxu0
        %2194 = vdwg.mxu0
        %2195 = vmatprep.subr.mxu0 0.0
        %v2196 = vand.u32 %v1454, 4294901760
        %v2197 = vsub.f32 %v1454, %v2196
        %v2198 = vand.u32 %v2197, 4294901760
        %v2199 = vsub.f32 %v2197, %v2198
        %v2200 = vand.u32 %v2199, 4294901760
        %2201 = vmatpush1.xpose.msra.mxu0 %v2200
        %2202 = vmatprep.subr.mxu0 0.0
        %2203 = vmatpush1.xpose.msra.mxu0 0.0
        %2204 = vmatprep.subr.mxu0 0.0
        %2205 = vmatpush1.xpose.msra.mxu0 0.0
        %2206 = vmatprep.subr.mxu0 0.0
        %2207 = vmatpush1.xpose.msra.mxu0 0.0
        %2208 = vmatprep.subr.mxu0 0.0
        %2209 = vmatpush1.xpose.msra.mxu0 0.0
        %2210 = vmatprep.subr.mxu0 0.0
        %2211 = vmatpush1.xpose.msra.mxu0 0.0
        %2212 = vmatprep.subr.mxu0 0.0
        %2213 = vmatpush1.xpose.msra.mxu0 0.0
        %2214 = vmatprep.subr.mxu0 0.0
        %2215 = vmatpush1.xpose.msra.mxu0 0.0
        %2216 = vmatprep.subr.mxu0 0.0
        %2217 = vmatpush1.xpose.msra.mxu0 0.0
        %2218 = vmatprep.subr.mxu0 0.0
        %2219 = vmatpush1.xpose.msra.mxu0 0.0
        %2220 = vmatprep.subr.mxu0 0.0
        %2221 = vmatpush1.xpose.msra.mxu0 0.0
        %2222 = vmatprep.subr.mxu0 0.0
        %2223 = vmatpush1.xpose.msra.mxu0 0.0
        %2224 = vmatprep.subr.mxu0 0.0
        %2225 = vmatpush1.xpose.msra.mxu0 0.0
        %2226 = vmatprep.subr.mxu0 0.0
        %2227 = vmatpush1.xpose.msra.mxu0 0.0
        %2228 = vmatprep.subr.mxu0 0.0
        %2229 = vmatpush1.xpose.msra.mxu0 0.0
        %2230 = vmatprep.subr.mxu0 0.0
        %2231 = vmatpush1.xpose.msra.mxu0 0.0
        %2232 = vmatprep.subr.mxu0 0.0
        %2233 = vmatpush1.xpose.msra.mxu0 0.0
        %2234 = vmatprep.subr.mxu0 0.0
        %2235 = vmatpush1.xpose.msra.mxu0 0.0
        %2236 = vmatprep.subr.mxu0 0.0
        %2237 = vmatpush1.xpose.msra.mxu0 0.0
        %2238 = vmatprep.subr.mxu0 0.0
        %2239 = vmatpush1.xpose.msra.mxu0 0.0
        %2240 = vmatprep.subr.mxu0 0.0
        %2241 = vmatpush1.xpose.msra.mxu0 0.0
        %2242 = vmatprep.subr.mxu0 0.0
        %2243 = vmatpush1.xpose.msra.mxu0 0.0
        %2244 = vmatprep.subr.mxu0 0.0
        %2245 = vmatpush1.xpose.msra.mxu0 0.0
        %2246 = vmatprep.subr.mxu0 0.0
        %2247 = vmatpush1.xpose.msra.mxu0 0.0
        %2248 = vmatprep.subr.mxu0 0.0
        %2249 = vmatpush1.xpose.msra.mxu0 0.0
        %2250 = vmatprep.subr.mxu0 0.0
        %2251 = vmatpush1.xpose.msra.mxu0 0.0
        %2252 = vmatprep.subr.mxu0 0.0
        %2253 = vmatpush1.xpose.msra.mxu0 0.0
        %2254 = vmatprep.subr.mxu0 0.0
        %2255 = vmatpush1.xpose.msra.mxu0 0.0
        %2256 = vmatprep.subr.mxu0 0.0
        %2257 = vmatpush1.xpose.msra.mxu0 0.0
        %2258 = vmatprep.subr.mxu0 0.0
        %2259 = vmatpush1.xpose.msra.mxu0 0.0
        %2260 = vmatprep.subr.mxu0 0.0
        %2261 = vmatpush1.xpose.msra.mxu0 0.0
        %2262 = vmatprep.subr.mxu0 0.0
        %2263 = vmatpush1.xpose.msra.mxu0 0.0
        %2264 = vmatprep.mubr.f32.mxu0 0.0
        %v2265 = vand.u32 %v1452, 4294901760
        %2266 = vmatmul.mubr.f32.gmra.mrb[0].mxu0 %v2265
        %v2267 = vpop.f32.mrb[0].mxu0
        %v2268 = vadd.f32 %v2192, %v2267
        %v2269 = vpop.f32.mrb[0].mxu0
        %2270 = vdwg.mxu0
        %2271 = vmatprep.subr.mxu0 0.0
        %v2272 = vand.u32 %v1454, 4294901760
        %v2273 = vsub.f32 %v1454, %v2272
        %2274 = vmatpush1.xpose.msra.mxu0 %v2273
        %2275 = vmatprep.subr.mxu0 0.0
        %2276 = vmatpush1.xpose.msra.mxu0 0.0
        %2277 = vmatprep.subr.mxu0 0.0
        %2278 = vmatpush1.xpose.msra.mxu0 0.0
        %2279 = vmatprep.subr.mxu0 0.0
        %2280 = vmatpush1.xpose.msra.mxu0 0.0
        %2281 = vmatprep.subr.mxu0 0.0
        %2282 = vmatpush1.xpose.msra.mxu0 0.0
        %2283 = vmatprep.subr.mxu0 0.0
        %2284 = vmatpush1.xpose.msra.mxu0 0.0
        %2285 = vmatprep.subr.mxu0 0.0
        %2286 = vmatpush1.xpose.msra.mxu0 0.0
        %2287 = vmatprep.subr.mxu0 0.0
        %2288 = vmatpush1.xpose.msra.mxu0 0.0
        %2289 = vmatprep.subr.mxu0 0.0
        %2290 = vmatpush1.xpose.msra.mxu0 0.0
        %2291 = vmatprep.subr.mxu0 0.0
        %2292 = vmatpush1.xpose.msra.mxu0 0.0
        %2293 = vmatprep.subr.mxu0 0.0
        %2294 = vmatpush1.xpose.msra.mxu0 0.0
        %2295 = vmatprep.subr.mxu0 0.0
        %2296 = vmatpush1.xpose.msra.mxu0 0.0
        %2297 = vmatprep.subr.mxu0 0.0
        %2298 = vmatpush1.xpose.msra.mxu0 0.0
        %2299 = vmatprep.subr.mxu0 0.0
        %2300 = vmatpush1.xpose.msra.mxu0 0.0
        %2301 = vmatprep.subr.mxu0 0.0
        %2302 = vmatpush1.xpose.msra.mxu0 0.0
        %2303 = vmatprep.subr.mxu0 0.0
        %2304 = vmatpush1.xpose.msra.mxu0 0.0
        %2305 = vmatprep.subr.mxu0 0.0
        %2306 = vmatpush1.xpose.msra.mxu0 0.0
        %2307 = vmatprep.subr.mxu0 0.0
        %2308 = vmatpush1.xpose.msra.mxu0 0.0
        %2309 = vmatprep.subr.mxu0 0.0
        %2310 = vmatpush1.xpose.msra.mxu0 0.0
        %2311 = vmatprep.subr.mxu0 0.0
        %2312 = vmatpush1.xpose.msra.mxu0 0.0
        %2313 = vmatprep.subr.mxu0 0.0
        %2314 = vmatpush1.xpose.msra.mxu0 0.0
        %2315 = vmatprep.subr.mxu0 0.0
        %2316 = vmatpush1.xpose.msra.mxu0 0.0
        %2317 = vmatprep.subr.mxu0 0.0
        %2318 = vmatpush1.xpose.msra.mxu0 0.0
        %2319 = vmatprep.subr.mxu0 0.0
        %2320 = vmatpush1.xpose.msra.mxu0 0.0
        %2321 = vmatprep.subr.mxu0 0.0
        %2322 = vmatpush1.xpose.msra.mxu0 0.0
        %2323 = vmatprep.subr.mxu0 0.0
        %2324 = vmatpush1.xpose.msra.mxu0 0.0
        %2325 = vmatprep.subr.mxu0 0.0
        %2326 = vmatpush1.xpose.msra.mxu0 0.0
        %2327 = vmatprep.subr.mxu0 0.0
        %2328 = vmatpush1.xpose.msra.mxu0 0.0
        %2329 = vmatprep.subr.mxu0 0.0
        %2330 = vmatpush1.xpose.msra.mxu0 0.0
        %2331 = vmatprep.subr.mxu0 0.0
        %2332 = vmatpush1.xpose.msra.mxu0 0.0
        %2333 = vmatprep.subr.mxu0 0.0
        %2334 = vmatpush1.xpose.msra.mxu0 0.0
        %2335 = vmatprep.subr.mxu0 0.0
        %2336 = vmatpush1.xpose.msra.mxu0 0.0
        %2337 = vmatprep.mubr.f32.mxu0 0.0
        %v2338 = vand.u32 %v1452, 4294901760
        %v2339 = vsub.f32 %v1452, %v2338
        %2340 = vmatmul.mubr.f32.gmra.mrb[0].mxu0 %v2339
        %v2341 = vpop.f32.mrb[0].mxu0
        %v2342 = vadd.f32 %v2268, %v2341
        %v2343 = vpop.f32.mrb[0].mxu0
        %2344 = vdwg.mxu0
        %2345 = vmatprep.subr.mxu0 0.0
        %v2346 = vand.u32 %v1454, 4294901760
        %2347 = vmatpush1.xpose.msra.mxu0 %v2346
        %2348 = vmatprep.subr.mxu0 0.0
        %2349 = vmatpush1.xpose.msra.mxu0 0.0
        %2350 = vmatprep.subr.mxu0 0.0
        %2351 = vmatpush1.xpose.msra.mxu0 0.0
        %2352 = vmatprep.subr.mxu0 0.0
        %2353 = vmatpush1.xpose.msra.mxu0 0.0
        %2354 = vmatprep.subr.mxu0 0.0
        %2355 = vmatpush1.xpose.msra.mxu0 0.0
        %2356 = vmatprep.subr.mxu0 0.0
        %2357 = vmatpush1.xpose.msra.mxu0 0.0
        %2358 = vmatprep.subr.mxu0 0.0
        %2359 = vmatpush1.xpose.msra.mxu0 0.0
        %2360 = vmatprep.subr.mxu0 0.0
        %2361 = vmatpush1.xpose.msra.mxu0 0.0
        %2362 = vmatprep.subr.mxu0 0.0
        %2363 = vmatpush1.xpose.msra.mxu0 0.0
        %2364 = vmatprep.subr.mxu0 0.0
        %2365 = vmatpush1.xpose.msra.mxu0 0.0
        %2366 = vmatprep.subr.mxu0 0.0
        %2367 = vmatpush1.xpose.msra.mxu0 0.0
        %2368 = vmatprep.subr.mxu0 0.0
        %2369 = vmatpush1.xpose.msra.mxu0 0.0
        %2370 = vmatprep.subr.mxu0 0.0
        %2371 = vmatpush1.xpose.msra.mxu0 0.0
        %2372 = vmatprep.subr.mxu0 0.0
        %2373 = vmatpush1.xpose.msra.mxu0 0.0
        %2374 = vmatprep.subr.mxu0 0.0
        %2375 = vmatpush1.xpose.msra.mxu0 0.0
        %2376 = vmatprep.subr.mxu0 0.0
        %2377 = vmatpush1.xpose.msra.mxu0 0.0
        %2378 = vmatprep.subr.mxu0 0.0
        %2379 = vmatpush1.xpose.msra.mxu0 0.0
        %2380 = vmatprep.subr.mxu0 0.0
        %2381 = vmatpush1.xpose.msra.mxu0 0.0
        %2382 = vmatprep.subr.mxu0 0.0
        %2383 = vmatpush1.xpose.msra.mxu0 0.0
        %2384 = vmatprep.subr.mxu0 0.0
        %2385 = vmatpush1.xpose.msra.mxu0 0.0
        %2386 = vmatprep.subr.mxu0 0.0
        %2387 = vmatpush1.xpose.msra.mxu0 0.0
        %2388 = vmatprep.subr.mxu0 0.0
        %2389 = vmatpush1.xpose.msra.mxu0 0.0
        %2390 = vmatprep.subr.mxu0 0.0
        %2391 = vmatpush1.xpose.msra.mxu0 0.0
        %2392 = vmatprep.subr.mxu0 0.0
        %2393 = vmatpush1.xpose.msra.mxu0 0.0
        %2394 = vmatprep.subr.mxu0 0.0
        %2395 = vmatpush1.xpose.msra.mxu0 0.0
        %2396 = vmatprep.subr.mxu0 0.0
        %2397 = vmatpush1.xpose.msra.mxu0 0.0
        %2398 = vmatprep.subr.mxu0 0.0
        %2399 = vmatpush1.xpose.msra.mxu0 0.0
        %2400 = vmatprep.subr.mxu0 0.0
        %2401 = vmatpush1.xpose.msra.mxu0 0.0
        %2402 = vmatprep.subr.mxu0 0.0
        %2403 = vmatpush1.xpose.msra.mxu0 0.0
        %2404 = vmatprep.subr.mxu0 0.0
        %2405 = vmatpush1.xpose.msra.mxu0 0.0
        %2406 = vmatprep.subr.mxu0 0.0
        %2407 = vmatpush1.xpose.msra.mxu0 0.0
        %2408 = vmatprep.subr.mxu0 0.0
        %2409 = vmatpush1.xpose.msra.mxu0 0.0
        %2410 = vmatprep.mubr.f32.mxu0 0.0
        %v2411 = vand.u32 %v1452, 4294901760
        %v2412 = vsub.f32 %v1452, %v2411
        %v2413 = vand.u32 %v2412, 4294901760
        %2414 = vmatmul.mubr.f32.gmra.mrb[0].mxu0 %v2413
        %v2415 = vpop.f32.mrb[0].mxu0
        %v2416 = vadd.f32 %v2342, %v2415
        %v2417 = vpop.f32.mrb[0].mxu0
        %2418 = vdwg.mxu0
        %2419 = vmatprep.subr.mxu0 0.0
        %v2420 = vand.u32 %v1454, 4294901760
        %v2421 = vsub.f32 %v1454, %v2420
        %v2422 = vand.u32 %v2421, 4294901760
        %2423 = vmatpush1.xpose.msra.mxu0 %v2422
        %2424 = vmatprep.subr.mxu0 0.0
        %2425 = vmatpush1.xpose.msra.mxu0 0.0
        %2426 = vmatprep.subr.mxu0 0.0
        %2427 = vmatpush1.xpose.msra.mxu0 0.0
        %2428 = vmatprep.subr.mxu0 0.0
        %2429 = vmatpush1.xpose.msra.mxu0 0.0
        %2430 = vmatprep.subr.mxu0 0.0
        %2431 = vmatpush1.xpose.msra.mxu0 0.0
        %2432 = vmatprep.subr.mxu0 0.0
        %2433 = vmatpush1.xpose.msra.mxu0 0.0
        %2434 = vmatprep.subr.mxu0 0.0
        %2435 = vmatpush1.xpose.msra.mxu0 0.0
        %2436 = vmatprep.subr.mxu0 0.0
        %2437 = vmatpush1.xpose.msra.mxu0 0.0
        %2438 = vmatprep.subr.mxu0 0.0
        %2439 = vmatpush1.xpose.msra.mxu0 0.0
        %2440 = vmatprep.subr.mxu0 0.0
        %2441 = vmatpush1.xpose.msra.mxu0 0.0
        %2442 = vmatprep.subr.mxu0 0.0
        %2443 = vmatpush1.xpose.msra.mxu0 0.0
        %2444 = vmatprep.subr.mxu0 0.0
        %2445 = vmatpush1.xpose.msra.mxu0 0.0
        %2446 = vmatprep.subr.mxu0 0.0
        %2447 = vmatpush1.xpose.msra.mxu0 0.0
        %2448 = vmatprep.subr.mxu0 0.0
        %2449 = vmatpush1.xpose.msra.mxu0 0.0
        %2450 = vmatprep.subr.mxu0 0.0
        %2451 = vmatpush1.xpose.msra.mxu0 0.0
        %2452 = vmatprep.subr.mxu0 0.0
        %2453 = vmatpush1.xpose.msra.mxu0 0.0
        %2454 = vmatprep.subr.mxu0 0.0
        %2455 = vmatpush1.xpose.msra.mxu0 0.0
        %2456 = vmatprep.subr.mxu0 0.0
        %2457 = vmatpush1.xpose.msra.mxu0 0.0
        %2458 = vmatprep.subr.mxu0 0.0
        %2459 = vmatpush1.xpose.msra.mxu0 0.0
        %2460 = vmatprep.subr.mxu0 0.0
        %2461 = vmatpush1.xpose.msra.mxu0 0.0
        %2462 = vmatprep.subr.mxu0 0.0
        %2463 = vmatpush1.xpose.msra.mxu0 0.0
        %2464 = vmatprep.subr.mxu0 0.0
        %2465 = vmatpush1.xpose.msra.mxu0 0.0
        %2466 = vmatprep.subr.mxu0 0.0
        %2467 = vmatpush1.xpose.msra.mxu0 0.0
        %2468 = vmatprep.subr.mxu0 0.0
        %2469 = vmatpush1.xpose.msra.mxu0 0.0
        %2470 = vmatprep.subr.mxu0 0.0
        %2471 = vmatpush1.xpose.msra.mxu0 0.0
        %2472 = vmatprep.subr.mxu0 0.0
        %2473 = vmatpush1.xpose.msra.mxu0 0.0
        %2474 = vmatprep.subr.mxu0 0.0
        %2475 = vmatpush1.xpose.msra.mxu0 0.0
        %2476 = vmatprep.subr.mxu0 0.0
        %2477 = vmatpush1.xpose.msra.mxu0 0.0
        %2478 = vmatprep.subr.mxu0 0.0
        %2479 = vmatpush1.xpose.msra.mxu0 0.0
        %2480 = vmatprep.subr.mxu0 0.0
        %2481 = vmatpush1.xpose.msra.mxu0 0.0
        %2482 = vmatprep.subr.mxu0 0.0
        %2483 = vmatpush1.xpose.msra.mxu0 0.0
        %2484 = vmatprep.subr.mxu0 0.0
        %2485 = vmatpush1.xpose.msra.mxu0 0.0
        %2486 = vmatprep.mubr.f32.mxu0 0.0
        %v2487 = vand.u32 %v1452, 4294901760
        %2488 = vmatmul.mubr.f32.gmra.mrb[0].mxu0 %v2487
        %v2489 = vpop.f32.mrb[0].mxu0
        %v2490 = vadd.f32 %v2416, %v2489
        %v2491 = vpop.f32.mrb[0].mxu0
        %2492 = vdwg.mxu0
        %2493 = vmatprep.subr.mxu0 0.0
        %v2494 = vand.u32 %v1454, 4294901760
        %2495 = vmatpush1.xpose.msra.mxu0 %v2494
        %2496 = vmatprep.subr.mxu0 0.0
        %2497 = vmatpush1.xpose.msra.mxu0 0.0
        %2498 = vmatprep.subr.mxu0 0.0
        %2499 = vmatpush1.xpose.msra.mxu0 0.0
        %2500 = vmatprep.subr.mxu0 0.0
        %2501 = vmatpush1.xpose.msra.mxu0 0.0
        %2502 = vmatprep.subr.mxu0 0.0
        %2503 = vmatpush1.xpose.msra.mxu0 0.0
        %2504 = vmatprep.subr.mxu0 0.0
        %2505 = vmatpush1.xpose.msra.mxu0 0.0
        %2506 = vmatprep.subr.mxu0 0.0
        %2507 = vmatpush1.xpose.msra.mxu0 0.0
        %2508 = vmatprep.subr.mxu0 0.0
        %2509 = vmatpush1.xpose.msra.mxu0 0.0
        %2510 = vmatprep.subr.mxu0 0.0
        %2511 = vmatpush1.xpose.msra.mxu0 0.0
        %2512 = vmatprep.subr.mxu0 0.0
        %2513 = vmatpush1.xpose.msra.mxu0 0.0
        %2514 = vmatprep.subr.mxu0 0.0
        %2515 = vmatpush1.xpose.msra.mxu0 0.0
        %2516 = vmatprep.subr.mxu0 0.0
        %2517 = vmatpush1.xpose.msra.mxu0 0.0
        %2518 = vmatprep.subr.mxu0 0.0
        %2519 = vmatpush1.xpose.msra.mxu0 0.0
        %2520 = vmatprep.subr.mxu0 0.0
        %2521 = vmatpush1.xpose.msra.mxu0 0.0
        %2522 = vmatprep.subr.mxu0 0.0
        %2523 = vmatpush1.xpose.msra.mxu0 0.0
        %2524 = vmatprep.subr.mxu0 0.0
        %2525 = vmatpush1.xpose.msra.mxu0 0.0
        %2526 = vmatprep.subr.mxu0 0.0
        %2527 = vmatpush1.xpose.msra.mxu0 0.0
        %2528 = vmatprep.subr.mxu0 0.0
        %2529 = vmatpush1.xpose.msra.mxu0 0.0
        %2530 = vmatprep.subr.mxu0 0.0
        %2531 = vmatpush1.xpose.msra.mxu0 0.0
        %2532 = vmatprep.subr.mxu0 0.0
        %2533 = vmatpush1.xpose.msra.mxu0 0.0
        %2534 = vmatprep.subr.mxu0 0.0
        %2535 = vmatpush1.xpose.msra.mxu0 0.0
        %2536 = vmatprep.subr.mxu0 0.0
        %2537 = vmatpush1.xpose.msra.mxu0 0.0
        %2538 = vmatprep.subr.mxu0 0.0
        %2539 = vmatpush1.xpose.msra.mxu0 0.0
        %2540 = vmatprep.subr.mxu0 0.0
        %2541 = vmatpush1.xpose.msra.mxu0 0.0
        %2542 = vmatprep.subr.mxu0 0.0
        %2543 = vmatpush1.xpose.msra.mxu0 0.0
        %2544 = vmatprep.subr.mxu0 0.0
        %2545 = vmatpush1.xpose.msra.mxu0 0.0
        %2546 = vmatprep.subr.mxu0 0.0
        %2547 = vmatpush1.xpose.msra.mxu0 0.0
        %2548 = vmatprep.subr.mxu0 0.0
        %2549 = vmatpush1.xpose.msra.mxu0 0.0
        %2550 = vmatprep.subr.mxu0 0.0
        %2551 = vmatpush1.xpose.msra.mxu0 0.0
        %2552 = vmatprep.subr.mxu0 0.0
        %2553 = vmatpush1.xpose.msra.mxu0 0.0
        %2554 = vmatprep.subr.mxu0 0.0
        %2555 = vmatpush1.xpose.msra.mxu0 0.0
        %2556 = vmatprep.subr.mxu0 0.0
        %2557 = vmatpush1.xpose.msra.mxu0 0.0
        %2558 = vmatprep.mubr.f32.mxu0 0.0
        %v2559 = vand.u32 %v1452, 4294901760
        %2560 = vmatmul.mubr.f32.gmra.mrb[0].mxu0 %v2559
        %v2561 = vpop.f32.mrb[0].mxu0
        %v2562 = vadd.f32 %v2490, %v2561
        %v2563 = vpop.f32.mrb[0].mxu0
        %2564 = vdwg.mxu0
        %vm2565 = vcmask 64512
        %v2566 = vsel %vm2565, %v2562, -inf
        %2567 = vmax.xlane.f32.xlu0 %v2566
        %v2568 = vpop.xlane.xlu0 %2567
        %v2569 = vsub.f32 %v2562, %v2568
        %v2570 = vmul.f32 %v2569, 1.442695
        %v2571 = vpow.pop %v2570
        %v2572 = vsel %vm2565, %v2571, 0.0
        %2573 = vadd.xlane.f32.xlu0 %v2572
        %v2574 = vpop.xlane.xlu0 %2573
        %v2575 = vrcp.pop %v2574
        %v2577 = vsel %vm2565, %v2571, 0
        %2579 = vmatprep.subr.mxu0 0.0
        %v2580 = vand.u32 %v2094, 4294901760
        %2581 = vmatpush1.msra.mxu0 %v2580
        %2582 = vmatprep.subr.mxu0 0.0
        %2583 = vmatpush1.msra.mxu0 0.0
        %2584 = vmatprep.subr.mxu0 0.0
        %2585 = vmatpush1.msra.mxu0 0.0
        %2586 = vmatprep.subr.mxu0 0.0
        %2587 = vmatpush1.msra.mxu0 0.0
        %2588 = vmatprep.subr.mxu0 0.0
        %2589 = vmatpush1.msra.mxu0 0.0
        %2590 = vmatprep.subr.mxu0 0.0
        %2591 = vmatpush1.msra.mxu0 0.0
        %2592 = vmatprep.subr.mxu0 0.0
        %2593 = vmatpush1.msra.mxu0 0.0
        %2594 = vmatprep.subr.mxu0 0.0
        %2595 = vmatpush1.msra.mxu0 0.0
        %2596 = vmatprep.subr.mxu0 0.0
        %2597 = vmatpush1.msra.mxu0 0.0
        %2598 = vmatprep.subr.mxu0 0.0
        %2599 = vmatpush1.msra.mxu0 0.0
        %2600 = vmatprep.subr.mxu0 0.0
        %2601 = vmatpush1.msra.mxu0 0.0
        %2602 = vmatprep.subr.mxu0 0.0
        %2603 = vmatpush1.msra.mxu0 0.0
        %2604 = vmatprep.subr.mxu0 0.0
        %2605 = vmatpush1.msra.mxu0 0.0
        %2606 = vmatprep.subr.mxu0 0.0
        %2607 = vmatpush1.msra.mxu0 0.0
        %2608 = vmatprep.subr.mxu0 0.0
        %2609 = vmatpush1.msra.mxu0 0.0
        %2610 = vmatprep.subr.mxu0 0.0
        %2611 = vmatpush1.msra.mxu0 0.0
        %2612 = vmatprep.subr.mxu0 0.0
        %2613 = vmatpush1.msra.mxu0 0.0
        %2614 = vmatprep.subr.mxu0 0.0
        %2615 = vmatpush1.msra.mxu0 0.0
        %2616 = vmatprep.subr.mxu0 0.0
        %2617 = vmatpush1.msra.mxu0 0.0
        %2618 = vmatprep.subr.mxu0 0.0
        %2619 = vmatpush1.msra.mxu0 0.0
        %2620 = vmatprep.subr.mxu0 0.0
        %2621 = vmatpush1.msra.mxu0 0.0
        %2622 = vmatprep.subr.mxu0 0.0
        %2623 = vmatpush1.msra.mxu0 0.0
        %2624 = vmatprep.subr.mxu0 0.0
        %2625 = vmatpush1.msra.mxu0 0.0
        %2626 = vmatprep.subr.mxu0 0.0
        %2627 = vmatpush1.msra.mxu0 0.0
        %2628 = vmatprep.subr.mxu0 0.0
        %2629 = vmatpush1.msra.mxu0 0.0
        %2630 = vmatprep.subr.mxu0 0.0
        %2631 = vmatpush1.msra.mxu0 0.0
        %2632 = vmatprep.subr.mxu0 0.0
        %2633 = vmatpush1.msra.mxu0 0.0
        %2634 = vmatprep.subr.mxu0 0.0
        %2635 = vmatpush1.msra.mxu0 0.0
        %2636 = vmatprep.subr.mxu0 0.0
        %2637 = vmatpush1.msra.mxu0 0.0
        %2638 = vmatprep.subr.mxu0 0.0
        %2639 = vmatpush1.msra.mxu0 0.0
        %2640 = vmatprep.subr.mxu0 0.0
        %2641 = vmatpush1.msra.mxu0 0.0
        %2642 = vmatprep.subr.mxu0 0.0
        %2643 = vmatpush1.msra.mxu0 0.0
        %2644 = vmatprep.mubr.f32.mxu0 0.0
        %v2645 = vand.u32 %v2577, 4294901760
        %v2646 = vsub.f32 %v2577, %v2645
        %v2647 = vand.u32 %v2646, 4294901760
        %v2648 = vsub.f32 %v2646, %v2647
        %v2649 = vand.u32 %v2648, 4294901760
        %2650 = vmatmul.mubr.f32.gmra.mrb[0].mxu0 %v2649
        %v2651 = vpop.f32.mrb[0].mxu0
        %v2652 = vadd.f32 0.0, %v2651
        %v2653 = vpop.f32.mrb[0].mxu0
        %2654 = vdwg.mxu0
        %2655 = vmatprep.subr.mxu0 0.0
        %v2656 = vand.u32 %v2094, 4294901760
        %v2657 = vsub.f32 %v2094, %v2656
        %v2658 = vand.u32 %v2657, 4294901760
        %v2659 = vsub.f32 %v2657, %v2658
        %v2660 = vand.u32 %v2659, 4294901760
        %2661 = vmatpush1.msra.mxu0 %v2660
        %2662 = vmatprep.subr.mxu0 0.0
        %2663 = vmatpush1.msra.mxu0 0.0
        %2664 = vmatprep.subr.mxu0 0.0
        %2665 = vmatpush1.msra.mxu0 0.0
        %2666 = vmatprep.subr.mxu0 0.0
        %2667 = vmatpush1.msra.mxu0 0.0
        %2668 = vmatprep.subr.mxu0 0.0
        %2669 = vmatpush1.msra.mxu0 0.0
        %2670 = vmatprep.subr.mxu0 0.0
        %2671 = vmatpush1.msra.mxu0 0.0
        %2672 = vmatprep.subr.mxu0 0.0
        %2673 = vmatpush1.msra.mxu0 0.0
        %2674 = vmatprep.subr.mxu0 0.0
        %2675 = vmatpush1.msra.mxu0 0.0
        %2676 = vmatprep.subr.mxu0 0.0
        %2677 = vmatpush1.msra.mxu0 0.0
        %2678 = vmatprep.subr.mxu0 0.0
        %2679 = vmatpush1.msra.mxu0 0.0
        %2680 = vmatprep.subr.mxu0 0.0
        %2681 = vmatpush1.msra.mxu0 0.0
        %2682 = vmatprep.subr.mxu0 0.0
        %2683 = vmatpush1.msra.mxu0 0.0
        %2684 = vmatprep.subr.mxu0 0.0
        %2685 = vmatpush1.msra.mxu0 0.0
        %2686 = vmatprep.subr.mxu0 0.0
        %2687 = vmatpush1.msra.mxu0 0.0
        %2688 = vmatprep.subr.mxu0 0.0
        %2689 = vmatpush1.msra.mxu0 0.0
        %2690 = vmatprep.subr.mxu0 0.0
        %2691 = vmatpush1.msra.mxu0 0.0
        %2692 = vmatprep.subr.mxu0 0.0
        %2693 = vmatpush1.msra.mxu0 0.0
        %2694 = vmatprep.subr.mxu0 0.0
        %2695 = vmatpush1.msra.mxu0 0.0
        %2696 = vmatprep.subr.mxu0 0.0
        %2697 = vmatpush1.msra.mxu0 0.0
        %2698 = vmatprep.subr.mxu0 0.0
        %2699 = vmatpush1.msra.mxu0 0.0
        %2700 = vmatprep.subr.mxu0 0.0
        %2701 = vmatpush1.msra.mxu0 0.0
        %2702 = vmatprep.subr.mxu0 0.0
        %2703 = vmatpush1.msra.mxu0 0.0
        %2704 = vmatprep.subr.mxu0 0.0
        %2705 = vmatpush1.msra.mxu0 0.0
        %2706 = vmatprep.subr.mxu0 0.0
        %2707 = vmatpush1.msra.mxu0 0.0
        %2708 = vmatprep.subr.mxu0 0.0
        %2709 = vmatpush1.msra.mxu0 0.0
        %2710 = vmatprep.subr.mxu0 0.0
        %2711 = vmatpush1.msra.mxu0 0.0
        %2712 = vmatprep.subr.mxu0 0.0
        %2713 = vmatpush1.msra.mxu0 0.0
        %2714 = vmatprep.subr.mxu0 0.0
        %2715 = vmatpush1.msra.mxu0 0.0
        %2716 = vmatprep.subr.mxu0 0.0
        %2717 = vmatpush1.msra.mxu0 0.0
        %2718 = vmatprep.subr.mxu0 0.0
        %2719 = vmatpush1.msra.mxu0 0.0
        %2720 = vmatprep.subr.mxu0 0.0
        %2721 = vmatpush1.msra.mxu0 0.0
        %2722 = vmatprep.subr.mxu0 0.0
        %2723 = vmatpush1.msra.mxu0 0.0
        %2724 = vmatprep.mubr.f32.mxu0 0.0
        %v2725 = vand.u32 %v2577, 4294901760
        %2726 = vmatmul.mubr.f32.gmra.mrb[0].mxu0 %v2725
        %v2727 = vpop.f32.mrb[0].mxu0
        %v2728 = vadd.f32 %v2652, %v2727
        %v2729 = vpop.f32.mrb[0].mxu0
        %2730 = vdwg.mxu0
        %2731 = vmatprep.subr.mxu0 0.0
        %v2732 = vand.u32 %v2094, 4294901760
        %v2733 = vsub.f32 %v2094, %v2732
        %2734 = vmatpush1.msra.mxu0 %v2733
        %2735 = vmatprep.subr.mxu0 0.0
        %2736 = vmatpush1.msra.mxu0 0.0
        %2737 = vmatprep.subr.mxu0 0.0
        %2738 = vmatpush1.msra.mxu0 0.0
        %2739 = vmatprep.subr.mxu0 0.0
        %2740 = vmatpush1.msra.mxu0 0.0
        %2741 = vmatprep.subr.mxu0 0.0
        %2742 = vmatpush1.msra.mxu0 0.0
        %2743 = vmatprep.subr.mxu0 0.0
        %2744 = vmatpush1.msra.mxu0 0.0
        %2745 = vmatprep.subr.mxu0 0.0
        %2746 = vmatpush1.msra.mxu0 0.0
        %2747 = vmatprep.subr.mxu0 0.0
        %2748 = vmatpush1.msra.mxu0 0.0
        %2749 = vmatprep.subr.mxu0 0.0
        %2750 = vmatpush1.msra.mxu0 0.0
        %2751 = vmatprep.subr.mxu0 0.0
        %2752 = vmatpush1.msra.mxu0 0.0
        %2753 = vmatprep.subr.mxu0 0.0
        %2754 = vmatpush1.msra.mxu0 0.0
        %2755 = vmatprep.subr.mxu0 0.0
        %2756 = vmatpush1.msra.mxu0 0.0
        %2757 = vmatprep.subr.mxu0 0.0
        %2758 = vmatpush1.msra.mxu0 0.0
        %2759 = vmatprep.subr.mxu0 0.0
        %2760 = vmatpush1.msra.mxu0 0.0
        %2761 = vmatprep.subr.mxu0 0.0
        %2762 = vmatpush1.msra.mxu0 0.0
        %2763 = vmatprep.subr.mxu0 0.0
        %2764 = vmatpush1.msra.mxu0 0.0
        %2765 = vmatprep.subr.mxu0 0.0
        %2766 = vmatpush1.msra.mxu0 0.0
        %2767 = vmatprep.subr.mxu0 0.0
        %2768 = vmatpush1.msra.mxu0 0.0
        %2769 = vmatprep.subr.mxu0 0.0
        %2770 = vmatpush1.msra.mxu0 0.0
        %2771 = vmatprep.subr.mxu0 0.0
        %2772 = vmatpush1.msra.mxu0 0.0
        %2773 = vmatprep.subr.mxu0 0.0
        %2774 = vmatpush1.msra.mxu0 0.0
        %2775 = vmatprep.subr.mxu0 0.0
        %2776 = vmatpush1.msra.mxu0 0.0
        %2777 = vmatprep.subr.mxu0 0.0
        %2778 = vmatpush1.msra.mxu0 0.0
        %2779 = vmatprep.subr.mxu0 0.0
        %2780 = vmatpush1.msra.mxu0 0.0
        %2781 = vmatprep.subr.mxu0 0.0
        %2782 = vmatpush1.msra.mxu0 0.0
        %2783 = vmatprep.subr.mxu0 0.0
        %2784 = vmatpush1.msra.mxu0 0.0
        %2785 = vmatprep.subr.mxu0 0.0
        %2786 = vmatpush1.msra.mxu0 0.0
        %2787 = vmatprep.subr.mxu0 0.0
        %2788 = vmatpush1.msra.mxu0 0.0
        %2789 = vmatprep.subr.mxu0 0.0
        %2790 = vmatpush1.msra.mxu0 0.0
        %2791 = vmatprep.subr.mxu0 0.0
        %2792 = vmatpush1.msra.mxu0 0.0
        %2793 = vmatprep.subr.mxu0 0.0
        %2794 = vmatpush1.msra.mxu0 0.0
        %2795 = vmatprep.subr.mxu0 0.0
        %2796 = vmatpush1.msra.mxu0 0.0
        %2797 = vmatprep.mubr.f32.mxu0 0.0
        %v2798 = vand.u32 %v2577, 4294901760
        %v2799 = vsub.f32 %v2577, %v2798
        %2800 = vmatmul.mubr.f32.gmra.mrb[0].mxu0 %v2799
        %v2801 = vpop.f32.mrb[0].mxu0
        %v2802 = vadd.f32 %v2728, %v2801
        %v2803 = vpop.f32.mrb[0].mxu0
        %2804 = vdwg.mxu0
        %2805 = vmatprep.subr.mxu0 0.0
        %v2806 = vand.u32 %v2094, 4294901760
        %2807 = vmatpush1.msra.mxu0 %v2806
        %2808 = vmatprep.subr.mxu0 0.0
        %2809 = vmatpush1.msra.mxu0 0.0
        %2810 = vmatprep.subr.mxu0 0.0
        %2811 = vmatpush1.msra.mxu0 0.0
        %2812 = vmatprep.subr.mxu0 0.0
        %2813 = vmatpush1.msra.mxu0 0.0
        %2814 = vmatprep.subr.mxu0 0.0
        %2815 = vmatpush1.msra.mxu0 0.0
        %2816 = vmatprep.subr.mxu0 0.0
        %2817 = vmatpush1.msra.mxu0 0.0
        %2818 = vmatprep.subr.mxu0 0.0
        %2819 = vmatpush1.msra.mxu0 0.0
        %2820 = vmatprep.subr.mxu0 0.0
        %2821 = vmatpush1.msra.mxu0 0.0
        %2822 = vmatprep.subr.mxu0 0.0
        %2823 = vmatpush1.msra.mxu0 0.0
        %2824 = vmatprep.subr.mxu0 0.0
        %2825 = vmatpush1.msra.mxu0 0.0
        %2826 = vmatprep.subr.mxu0 0.0
        %2827 = vmatpush1.msra.mxu0 0.0
        %2828 = vmatprep.subr.mxu0 0.0
        %2829 = vmatpush1.msra.mxu0 0.0
        %2830 = vmatprep.subr.mxu0 0.0
        %2831 = vmatpush1.msra.mxu0 0.0
        %2832 = vmatprep.subr.mxu0 0.0
        %2833 = vmatpush1.msra.mxu0 0.0
        %2834 = vmatprep.subr.mxu0 0.0
        %2835 = vmatpush1.msra.mxu0 0.0
        %2836 = vmatprep.subr.mxu0 0.0
        %2837 = vmatpush1.msra.mxu0 0.0
        %2838 = vmatprep.subr.mxu0 0.0
        %2839 = vmatpush1.msra.mxu0 0.0
        %2840 = vmatprep.subr.mxu0 0.0
        %2841 = vmatpush1.msra.mxu0 0.0
        %2842 = vmatprep.subr.mxu0 0.0
        %2843 = vmatpush1.msra.mxu0 0.0
        %2844 = vmatprep.subr.mxu0 0.0
        %2845 = vmatpush1.msra.mxu0 0.0
        %2846 = vmatprep.subr.mxu0 0.0
        %2847 = vmatpush1.msra.mxu0 0.0
        %2848 = vmatprep.subr.mxu0 0.0
        %2849 = vmatpush1.msra.mxu0 0.0
        %2850 = vmatprep.subr.mxu0 0.0
        %2851 = vmatpush1.msra.mxu0 0.0
        %2852 = vmatprep.subr.mxu0 0.0
        %2853 = vmatpush1.msra.mxu0 0.0
        %2854 = vmatprep.subr.mxu0 0.0
        %2855 = vmatpush1.msra.mxu0 0.0
        %2856 = vmatprep.subr.mxu0 0.0
        %2857 = vmatpush1.msra.mxu0 0.0
        %2858 = vmatprep.subr.mxu0 0.0
        %2859 = vmatpush1.msra.mxu0 0.0
        %2860 = vmatprep.subr.mxu0 0.0
        %2861 = vmatpush1.msra.mxu0 0.0
        %2862 = vmatprep.subr.mxu0 0.0
        %2863 = vmatpush1.msra.mxu0 0.0
        %2864 = vmatprep.subr.mxu0 0.0
        %2865 = vmatpush1.msra.mxu0 0.0
        %2866 = vmatprep.subr.mxu0 0.0
        %2867 = vmatpush1.msra.mxu0 0.0
        %2868 = vmatprep.subr.mxu0 0.0
        %2869 = vmatpush1.msra.mxu0 0.0
        %2870 = vmatprep.mubr.f32.mxu0 0.0
        %v2871 = vand.u32 %v2577, 4294901760
        %v2872 = vsub.f32 %v2577, %v2871
        %v2873 = vand.u32 %v2872, 4294901760
        %2874 = vmatmul.mubr.f32.gmra.mrb[0].mxu0 %v2873
        %v2875 = vpop.f32.mrb[0].mxu0
        %v2876 = vadd.f32 %v2802, %v2875
        %v2877 = vpop.f32.mrb[0].mxu0
        %2878 = vdwg.mxu0
        %2879 = vmatprep.subr.mxu0 0.0
        %v2880 = vand.u32 %v2094, 4294901760
        %v2881 = vsub.f32 %v2094, %v2880
        %v2882 = vand.u32 %v2881, 4294901760
        %2883 = vmatpush1.msra.mxu0 %v2882
        %2884 = vmatprep.subr.mxu0 0.0
        %2885 = vmatpush1.msra.mxu0 0.0
        %2886 = vmatprep.subr.mxu0 0.0
        %2887 = vmatpush1.msra.mxu0 0.0
        %2888 = vmatprep.subr.mxu0 0.0
        %2889 = vmatpush1.msra.mxu0 0.0
        %2890 = vmatprep.subr.mxu0 0.0
        %2891 = vmatpush1.msra.mxu0 0.0
        %2892 = vmatprep.subr.mxu0 0.0
        %2893 = vmatpush1.msra.mxu0 0.0
        %2894 = vmatprep.subr.mxu0 0.0
        %2895 = vmatpush1.msra.mxu0 0.0
        %2896 = vmatprep.subr.mxu0 0.0
        %2897 = vmatpush1.msra.mxu0 0.0
        %2898 = vmatprep.subr.mxu0 0.0
        %2899 = vmatpush1.msra.mxu0 0.0
        %2900 = vmatprep.subr.mxu0 0.0
        %2901 = vmatpush1.msra.mxu0 0.0
        %2902 = vmatprep.subr.mxu0 0.0
        %2903 = vmatpush1.msra.mxu0 0.0
        %2904 = vmatprep.subr.mxu0 0.0
        %2905 = vmatpush1.msra.mxu0 0.0
        %2906 = vmatprep.subr.mxu0 0.0
        %2907 = vmatpush1.msra.mxu0 0.0
        %2908 = vmatprep.subr.mxu0 0.0
        %2909 = vmatpush1.msra.mxu0 0.0
        %2910 = vmatprep.subr.mxu0 0.0
        %2911 = vmatpush1.msra.mxu0 0.0
        %2912 = vmatprep.subr.mxu0 0.0
        %2913 = vmatpush1.msra.mxu0 0.0
        %2914 = vmatprep.subr.mxu0 0.0
        %2915 = vmatpush1.msra.mxu0 0.0
        %2916 = vmatprep.subr.mxu0 0.0
        %2917 = vmatpush1.msra.mxu0 0.0
        %2918 = vmatprep.subr.mxu0 0.0
        %2919 = vmatpush1.msra.mxu0 0.0
        %2920 = vmatprep.subr.mxu0 0.0
        %2921 = vmatpush1.msra.mxu0 0.0
        %2922 = vmatprep.subr.mxu0 0.0
        %2923 = vmatpush1.msra.mxu0 0.0
        %2924 = vmatprep.subr.mxu0 0.0
        %2925 = vmatpush1.msra.mxu0 0.0
        %2926 = vmatprep.subr.mxu0 0.0
        %2927 = vmatpush1.msra.mxu0 0.0
        %2928 = vmatprep.subr.mxu0 0.0
        %2929 = vmatpush1.msra.mxu0 0.0
        %2930 = vmatprep.subr.mxu0 0.0
        %2931 = vmatpush1.msra.mxu0 0.0
        %2932 = vmatprep.subr.mxu0 0.0
        %2933 = vmatpush1.msra.mxu0 0.0
        %2934 = vmatprep.subr.mxu0 0.0
        %2935 = vmatpush1.msra.mxu0 0.0
        %2936 = vmatprep.subr.mxu0 0.0
        %2937 = vmatpush1.msra.mxu0 0.0
        %2938 = vmatprep.subr.mxu0 0.0
        %2939 = vmatpush1.msra.mxu0 0.0
        %2940 = vmatprep.subr.mxu0 0.0
        %2941 = vmatpush1.msra.mxu0 0.0
        %2942 = vmatprep.subr.mxu0 0.0
        %2943 = vmatpush1.msra.mxu0 0.0
        %2944 = vmatprep.subr.mxu0 0.0
        %2945 = vmatpush1.msra.mxu0 0.0
        %2946 = vmatprep.mubr.f32.mxu0 0.0
        %v2947 = vand.u32 %v2577, 4294901760
        %2948 = vmatmul.mubr.f32.gmra.mrb[0].mxu0 %v2947
        %v2949 = vpop.f32.mrb[0].mxu0
        %v2950 = vadd.f32 %v2876, %v2949
        %v2951 = vpop.f32.mrb[0].mxu0
        %2952 = vdwg.mxu0
        %2953 = vmatprep.subr.mxu0 0.0
        %v2954 = vand.u32 %v2094, 4294901760
        %2955 = vmatpush1.msra.mxu0 %v2954
        %2956 = vmatprep.subr.mxu0 0.0
        %2957 = vmatpush1.msra.mxu0 0.0
        %2958 = vmatprep.subr.mxu0 0.0
        %2959 = vmatpush1.msra.mxu0 0.0
        %2960 = vmatprep.subr.mxu0 0.0
        %2961 = vmatpush1.msra.mxu0 0.0
        %2962 = vmatprep.subr.mxu0 0.0
        %2963 = vmatpush1.msra.mxu0 0.0
        %2964 = vmatprep.subr.mxu0 0.0
        %2965 = vmatpush1.msra.mxu0 0.0
        %2966 = vmatprep.subr.mxu0 0.0
        %2967 = vmatpush1.msra.mxu0 0.0
        %2968 = vmatprep.subr.mxu0 0.0
        %2969 = vmatpush1.msra.mxu0 0.0
        %2970 = vmatprep.subr.mxu0 0.0
        %2971 = vmatpush1.msra.mxu0 0.0
        %2972 = vmatprep.subr.mxu0 0.0
        %2973 = vmatpush1.msra.mxu0 0.0
        %2974 = vmatprep.subr.mxu0 0.0
        %2975 = vmatpush1.msra.mxu0 0.0
        %2976 = vmatprep.subr.mxu0 0.0
        %2977 = vmatpush1.msra.mxu0 0.0
        %2978 = vmatprep.subr.mxu0 0.0
        %2979 = vmatpush1.msra.mxu0 0.0
        %2980 = vmatprep.subr.mxu0 0.0
        %2981 = vmatpush1.msra.mxu0 0.0
        %2982 = vmatprep.subr.mxu0 0.0
        %2983 = vmatpush1.msra.mxu0 0.0
        %2984 = vmatprep.subr.mxu0 0.0
        %2985 = vmatpush1.msra.mxu0 0.0
        %2986 = vmatprep.subr.mxu0 0.0
        %2987 = vmatpush1.msra.mxu0 0.0
        %2988 = vmatprep.subr.mxu0 0.0
        %2989 = vmatpush1.msra.mxu0 0.0
        %2990 = vmatprep.subr.mxu0 0.0
        %2991 = vmatpush1.msra.mxu0 0.0
        %2992 = vmatprep.subr.mxu0 0.0
        %2993 = vmatpush1.msra.mxu0 0.0
        %2994 = vmatprep.subr.mxu0 0.0
        %2995 = vmatpush1.msra.mxu0 0.0
        %2996 = vmatprep.subr.mxu0 0.0
        %2997 = vmatpush1.msra.mxu0 0.0
        %2998 = vmatprep.subr.mxu0 0.0
        %2999 = vmatpush1.msra.mxu0 0.0
        %3000 = vmatprep.subr.mxu0 0.0
        %3001 = vmatpush1.msra.mxu0 0.0
        %3002 = vmatprep.subr.mxu0 0.0
        %3003 = vmatpush1.msra.mxu0 0.0
        %3004 = vmatprep.subr.mxu0 0.0
        %3005 = vmatpush1.msra.mxu0 0.0
        %3006 = vmatprep.subr.mxu0 0.0
        %3007 = vmatpush1.msra.mxu0 0.0
        %3008 = vmatprep.subr.mxu0 0.0
        %3009 = vmatpush1.msra.mxu0 0.0
        %3010 = vmatprep.subr.mxu0 0.0
        %3011 = vmatpush1.msra.mxu0 0.0
        %3012 = vmatprep.subr.mxu0 0.0
        %3013 = vmatpush1.msra.mxu0 0.0
        %3014 = vmatprep.subr.mxu0 0.0
        %3015 = vmatpush1.msra.mxu0 0.0
        %3016 = vmatprep.subr.mxu0 0.0
        %3017 = vmatpush1.msra.mxu0 0.0
        %3018 = vmatprep.mubr.f32.mxu0 0.0
        %v3019 = vand.u32 %v2577, 4294901760
        %3020 = vmatmul.mubr.f32.gmra.mrb[0].mxu0 %v3019
        %v3021 = vpop.f32.mrb[0].mxu0
        %v3022 = vadd.f32 %v2950, %v3021
        %v3023 = vpop.f32.mrb[0].mxu0
        %3024 = vdwg.mxu0
        %v3025 = vmul.f32 %v3022, %v2575
        %3026 = vmatprep.subr.mxu0 0.0
        %v3027 = vand.u32 %v2097, 4294901760
        %3028 = vmatpush1.msra.mxu0 %v3027
        %3029 = vmatprep.subr.mxu0 0.0
        %v3030 = vand.u32 %v2098, 4294901760
        %3031 = vmatpush1.msra.mxu0 %v3030
        %3032 = vmatprep.subr.mxu0 0.0
        %v3033 = vand.u32 %v2099, 4294901760
        %3034 = vmatpush1.msra.mxu0 %v3033
        %3035 = vmatprep.subr.mxu0 0.0
        %v3036 = vand.u32 %v2100, 4294901760
        %3037 = vmatpush1.msra.mxu0 %v3036
        %3038 = vmatprep.subr.mxu0 0.0
        %v3039 = vand.u32 %v2101, 4294901760
        %3040 = vmatpush1.msra.mxu0 %v3039
        %3041 = vmatprep.subr.mxu0 0.0
        %v3042 = vand.u32 %v2102, 4294901760
        %3043 = vmatpush1.msra.mxu0 %v3042
        %3044 = vmatprep.subr.mxu0 0.0
        %v3045 = vand.u32 %v2103, 4294901760
        %3046 = vmatpush1.msra.mxu0 %v3045
        %3047 = vmatprep.subr.mxu0 0.0
        %v3048 = vand.u32 %v2104, 4294901760
        %3049 = vmatpush1.msra.mxu0 %v3048
        %3050 = vmatprep.subr.mxu0 0.0
        %v3051 = vand.u32 %v2105, 4294901760
        %3052 = vmatpush1.msra.mxu0 %v3051
        %3053 = vmatprep.subr.mxu0 0.0
        %v3054 = vand.u32 %v2106, 4294901760
        %3055 = vmatpush1.msra.mxu0 %v3054
        %3056 = vmatprep.subr.mxu0 0.0
        %v3057 = vand.u32 %v2107, 4294901760
        %3058 = vmatpush1.msra.mxu0 %v3057
        %3059 = vmatprep.subr.mxu0 0.0
        %v3060 = vand.u32 %v2108, 4294901760
        %3061 = vmatpush1.msra.mxu0 %v3060
        %3062 = vmatprep.subr.mxu0 0.0
        %v3063 = vand.u32 %v2109, 4294901760
        %3064 = vmatpush1.msra.mxu0 %v3063
        %3065 = vmatprep.subr.mxu0 0.0
        %v3066 = vand.u32 %v2110, 4294901760
        %3067 = vmatpush1.msra.mxu0 %v3066
        %3068 = vmatprep.subr.mxu0 0.0
        %v3069 = vand.u32 %v2111, 4294901760
        %3070 = vmatpush1.msra.mxu0 %v3069
        %3071 = vmatprep.subr.mxu0 0.0
        %v3072 = vand.u32 %v2112, 4294901760
        %3073 = vmatpush1.msra.mxu0 %v3072
        %3074 = vmatprep.subr.mxu0 0.0
        %3075 = vmatpush1.msra.mxu0 0.0
        %3076 = vmatprep.subr.mxu0 0.0
        %3077 = vmatpush1.msra.mxu0 0.0
        %3078 = vmatprep.subr.mxu0 0.0
        %3079 = vmatpush1.msra.mxu0 0.0
        %3080 = vmatprep.subr.mxu0 0.0
        %3081 = vmatpush1.msra.mxu0 0.0
        %3082 = vmatprep.subr.mxu0 0.0
        %3083 = vmatpush1.msra.mxu0 0.0
        %3084 = vmatprep.subr.mxu0 0.0
        %3085 = vmatpush1.msra.mxu0 0.0
        %3086 = vmatprep.subr.mxu0 0.0
        %3087 = vmatpush1.msra.mxu0 0.0
        %3088 = vmatprep.subr.mxu0 0.0
        %3089 = vmatpush1.msra.mxu0 0.0
        %3090 = vmatprep.subr.mxu0 0.0
        %3091 = vmatpush1.msra.mxu0 0.0
        %3092 = vmatprep.subr.mxu0 0.0
        %3093 = vmatpush1.msra.mxu0 0.0
        %3094 = vmatprep.subr.mxu0 0.0
        %3095 = vmatpush1.msra.mxu0 0.0
        %3096 = vmatprep.subr.mxu0 0.0
        %3097 = vmatpush1.msra.mxu0 0.0
        %3098 = vmatprep.subr.mxu0 0.0
        %3099 = vmatpush1.msra.mxu0 0.0
        %3100 = vmatprep.subr.mxu0 0.0
        %3101 = vmatpush1.msra.mxu0 0.0
        %3102 = vmatprep.subr.mxu0 0.0
        %3103 = vmatpush1.msra.mxu0 0.0
        %3104 = vmatprep.subr.mxu0 0.0
        %3105 = vmatpush1.msra.mxu0 0.0
        %3106 = vmatprep.mubr.f32.mxu0 0.0
        %v3107 = vand.u32 %v3025, 4294901760
        %v3108 = vsub.f32 %v3025, %v3107
        %v3109 = vand.u32 %v3108, 4294901760
        %v3110 = vsub.f32 %v3108, %v3109
        %v3111 = vand.u32 %v3110, 4294901760
        %3112 = vmatmul.mubr.f32.gmra.mrb[0].mxu0 %v3111
        %v3113 = vpop.f32.mrb[0].mxu0
        %v3114 = vadd.f32 0.0, %v3113
        %v3115 = vpop.f32.mrb[0].mxu0
        %3116 = vdwg.mxu0
        %3117 = vmatprep.subr.mxu0 0.0
        %v3118 = vand.u32 %v2097, 4294901760
        %v3119 = vsub.f32 %v2097, %v3118
        %v3120 = vand.u32 %v3119, 4294901760
        %v3121 = vsub.f32 %v3119, %v3120
        %v3122 = vand.u32 %v3121, 4294901760
        %3123 = vmatpush1.msra.mxu0 %v3122
        %3124 = vmatprep.subr.mxu0 0.0
        %v3125 = vand.u32 %v2098, 4294901760
        %v3126 = vsub.f32 %v2098, %v3125
        %v3127 = vand.u32 %v3126, 4294901760
        %v3128 = vsub.f32 %v3126, %v3127
        %v3129 = vand.u32 %v3128, 4294901760
        %3130 = vmatpush1.msra.mxu0 %v3129
        %3131 = vmatprep.subr.mxu0 0.0
        %v3132 = vand.u32 %v2099, 4294901760
        %v3133 = vsub.f32 %v2099, %v3132
        %v3134 = vand.u32 %v3133, 4294901760
        %v3135 = vsub.f32 %v3133, %v3134
        %v3136 = vand.u32 %v3135, 4294901760
        %3137 = vmatpush1.msra.mxu0 %v3136
        %3138 = vmatprep.subr.mxu0 0.0
        %v3139 = vand.u32 %v2100, 4294901760
        %v3140 = vsub.f32 %v2100, %v3139
        %v3141 = vand.u32 %v3140, 4294901760
        %v3142 = vsub.f32 %v3140, %v3141
        %v3143 = vand.u32 %v3142, 4294901760
        %3144 = vmatpush1.msra.mxu0 %v3143
        %3145 = vmatprep.subr.mxu0 0.0
        %v3146 = vand.u32 %v2101, 4294901760
        %v3147 = vsub.f32 %v2101, %v3146
        %v3148 = vand.u32 %v3147, 4294901760
        %v3149 = vsub.f32 %v3147, %v3148
        %v3150 = vand.u32 %v3149, 4294901760
        %3151 = vmatpush1.msra.mxu0 %v3150
        %3152 = vmatprep.subr.mxu0 0.0
        %v3153 = vand.u32 %v2102, 4294901760
        %v3154 = vsub.f32 %v2102, %v3153
        %v3155 = vand.u32 %v3154, 4294901760
        %v3156 = vsub.f32 %v3154, %v3155
        %v3157 = vand.u32 %v3156, 4294901760
        %3158 = vmatpush1.msra.mxu0 %v3157
        %3159 = vmatprep.subr.mxu0 0.0
        %v3160 = vand.u32 %v2103, 4294901760
        %v3161 = vsub.f32 %v2103, %v3160
        %v3162 = vand.u32 %v3161, 4294901760
        %v3163 = vsub.f32 %v3161, %v3162
        %v3164 = vand.u32 %v3163, 4294901760
        %3165 = vmatpush1.msra.mxu0 %v3164
        %3166 = vmatprep.subr.mxu0 0.0
        %v3167 = vand.u32 %v2104, 4294901760
        %v3168 = vsub.f32 %v2104, %v3167
        %v3169 = vand.u32 %v3168, 4294901760
        %v3170 = vsub.f32 %v3168, %v3169
        %v3171 = vand.u32 %v3170, 4294901760
        %3172 = vmatpush1.msra.mxu0 %v3171
        %3173 = vmatprep.subr.mxu0 0.0
        %v3174 = vand.u32 %v2105, 4294901760
        %v3175 = vsub.f32 %v2105, %v3174
        %v3176 = vand.u32 %v3175, 4294901760
        %v3177 = vsub.f32 %v3175, %v3176
        %v3178 = vand.u32 %v3177, 4294901760
        %3179 = vmatpush1.msra.mxu0 %v3178
        %3180 = vmatprep.subr.mxu0 0.0
        %v3181 = vand.u32 %v2106, 4294901760
        %v3182 = vsub.f32 %v2106, %v3181
        %v3183 = vand.u32 %v3182, 4294901760
        %v3184 = vsub.f32 %v3182, %v3183
        %v3185 = vand.u32 %v3184, 4294901760
        %3186 = vmatpush1.msra.mxu0 %v3185
        %3187 = vmatprep.subr.mxu0 0.0
        %v3188 = vand.u32 %v2107, 4294901760
        %v3189 = vsub.f32 %v2107, %v3188
        %v3190 = vand.u32 %v3189, 4294901760
        %v3191 = vsub.f32 %v3189, %v3190
        %v3192 = vand.u32 %v3191, 4294901760
        %3193 = vmatpush1.msra.mxu0 %v3192
        %3194 = vmatprep.subr.mxu0 0.0
        %v3195 = vand.u32 %v2108, 4294901760
        %v3196 = vsub.f32 %v2108, %v3195
        %v3197 = vand.u32 %v3196, 4294901760
        %v3198 = vsub.f32 %v3196, %v3197
        %v3199 = vand.u32 %v3198, 4294901760
        %3200 = vmatpush1.msra.mxu0 %v3199
        %3201 = vmatprep.subr.mxu0 0.0
        %v3202 = vand.u32 %v2109, 4294901760
        %v3203 = vsub.f32 %v2109, %v3202
        %v3204 = vand.u32 %v3203, 4294901760
        %v3205 = vsub.f32 %v3203, %v3204
        %v3206 = vand.u32 %v3205, 4294901760
        %3207 = vmatpush1.msra.mxu0 %v3206
        %3208 = vmatprep.subr.mxu0 0.0
        %v3209 = vand.u32 %v2110, 4294901760
        %v3210 = vsub.f32 %v2110, %v3209
        %v3211 = vand.u32 %v3210, 4294901760
        %v3212 = vsub.f32 %v3210, %v3211
        %v3213 = vand.u32 %v3212, 4294901760
        %3214 = vmatpush1.msra.mxu0 %v3213
        %3215 = vmatprep.subr.mxu0 0.0
        %v3216 = vand.u32 %v2111, 4294901760
        %v3217 = vsub.f32 %v2111, %v3216
        %v3218 = vand.u32 %v3217, 4294901760
        %v3219 = vsub.f32 %v3217, %v3218
        %v3220 = vand.u32 %v3219, 4294901760
        %3221 = vmatpush1.msra.mxu0 %v3220
        %3222 = vmatprep.subr.mxu0 0.0
        %v3223 = vand.u32 %v2112, 4294901760
        %v3224 = vsub.f32 %v2112, %v3223
        %v3225 = vand.u32 %v3224, 4294901760
        %v3226 = vsub.f32 %v3224, %v3225
        %v3227 = vand.u32 %v3226, 4294901760
        %3228 = vmatpush1.msra.mxu0 %v3227
        %3229 = vmatprep.subr.mxu0 0.0
        %3230 = vmatpush1.msra.mxu0 0.0
        %3231 = vmatprep.subr.mxu0 0.0
        %3232 = vmatpush1.msra.mxu0 0.0
        %3233 = vmatprep.subr.mxu0 0.0
        %3234 = vmatpush1.msra.mxu0 0.0
        %3235 = vmatprep.subr.mxu0 0.0
        %3236 = vmatpush1.msra.mxu0 0.0
        %3237 = vmatprep.subr.mxu0 0.0
        %3238 = vmatpush1.msra.mxu0 0.0
        %3239 = vmatprep.subr.mxu0 0.0
        %3240 = vmatpush1.msra.mxu0 0.0
        %3241 = vmatprep.subr.mxu0 0.0
        %3242 = vmatpush1.msra.mxu0 0.0
        %3243 = vmatprep.subr.mxu0 0.0
        %3244 = vmatpush1.msra.mxu0 0.0
        %3245 = vmatprep.subr.mxu0 0.0
        %3246 = vmatpush1.msra.mxu0 0.0
        %3247 = vmatprep.subr.mxu0 0.0
        %3248 = vmatpush1.msra.mxu0 0.0
        %3249 = vmatprep.subr.mxu0 0.0
        %3250 = vmatpush1.msra.mxu0 0.0
        %3251 = vmatprep.subr.mxu0 0.0
        %3252 = vmatpush1.msra.mxu0 0.0
        %3253 = vmatprep.subr.mxu0 0.0
        %3254 = vmatpush1.msra.mxu0 0.0
        %3255 = vmatprep.subr.mxu0 0.0
        %3256 = vmatpush1.msra.mxu0 0.0
        %3257 = vmatprep.subr.mxu0 0.0
        %3258 = vmatpush1.msra.mxu0 0.0
        %3259 = vmatprep.subr.mxu0 0.0
        %3260 = vmatpush1.msra.mxu0 0.0
        %3261 = vmatprep.mubr.f32.mxu0 0.0
        %v3262 = vand.u32 %v3025, 4294901760
        %3263 = vmatmul.mubr.f32.gmra.mrb[0].mxu0 %v3262
        %v3264 = vpop.f32.mrb[0].mxu0
        %v3265 = vadd.f32 %v3114, %v3264
        %v3266 = vpop.f32.mrb[0].mxu0
        %3267 = vdwg.mxu0
        %3268 = vmatprep.subr.mxu0 0.0
        %v3269 = vand.u32 %v2097, 4294901760
        %v3270 = vsub.f32 %v2097, %v3269
        %3271 = vmatpush1.msra.mxu0 %v3270
        %3272 = vmatprep.subr.mxu0 0.0
        %v3273 = vand.u32 %v2098, 4294901760
        %v3274 = vsub.f32 %v2098, %v3273
        %3275 = vmatpush1.msra.mxu0 %v3274
        %3276 = vmatprep.subr.mxu0 0.0
        %v3277 = vand.u32 %v2099, 4294901760
        %v3278 = vsub.f32 %v2099, %v3277
        %3279 = vmatpush1.msra.mxu0 %v3278
        %3280 = vmatprep.subr.mxu0 0.0
        %v3281 = vand.u32 %v2100, 4294901760
        %v3282 = vsub.f32 %v2100, %v3281
        %3283 = vmatpush1.msra.mxu0 %v3282
        %3284 = vmatprep.subr.mxu0 0.0
        %v3285 = vand.u32 %v2101, 4294901760
        %v3286 = vsub.f32 %v2101, %v3285
        %3287 = vmatpush1.msra.mxu0 %v3286
        %3288 = vmatprep.subr.mxu0 0.0
        %v3289 = vand.u32 %v2102, 4294901760
        %v3290 = vsub.f32 %v2102, %v3289
        %3291 = vmatpush1.msra.mxu0 %v3290
        %3292 = vmatprep.subr.mxu0 0.0
        %v3293 = vand.u32 %v2103, 4294901760
        %v3294 = vsub.f32 %v2103, %v3293
        %3295 = vmatpush1.msra.mxu0 %v3294
        %3296 = vmatprep.subr.mxu0 0.0
        %v3297 = vand.u32 %v2104, 4294901760
        %v3298 = vsub.f32 %v2104, %v3297
        %3299 = vmatpush1.msra.mxu0 %v3298
        %3300 = vmatprep.subr.mxu0 0.0
        %v3301 = vand.u32 %v2105, 4294901760
        %v3302 = vsub.f32 %v2105, %v3301
        %3303 = vmatpush1.msra.mxu0 %v3302
        %3304 = vmatprep.subr.mxu0 0.0
        %v3305 = vand.u32 %v2106, 4294901760
        %v3306 = vsub.f32 %v2106, %v3305
        %3307 = vmatpush1.msra.mxu0 %v3306
        %3308 = vmatprep.subr.mxu0 0.0
        %v3309 = vand.u32 %v2107, 4294901760
        %v3310 = vsub.f32 %v2107, %v3309
        %3311 = vmatpush1.msra.mxu0 %v3310
        %3312 = vmatprep.subr.mxu0 0.0
        %v3313 = vand.u32 %v2108, 4294901760
        %v3314 = vsub.f32 %v2108, %v3313
        %3315 = vmatpush1.msra.mxu0 %v3314
        %3316 = vmatprep.subr.mxu0 0.0
        %v3317 = vand.u32 %v2109, 4294901760
        %v3318 = vsub.f32 %v2109, %v3317
        %3319 = vmatpush1.msra.mxu0 %v3318
        %3320 = vmatprep.subr.mxu0 0.0
        %v3321 = vand.u32 %v2110, 4294901760
        %v3322 = vsub.f32 %v2110, %v3321
        %3323 = vmatpush1.msra.mxu0 %v3322
        %3324 = vmatprep.subr.mxu0 0.0
        %v3325 = vand.u32 %v2111, 4294901760
        %v3326 = vsub.f32 %v2111, %v3325
        %3327 = vmatpush1.msra.mxu0 %v3326
        %3328 = vmatprep.subr.mxu0 0.0
        %v3329 = vand.u32 %v2112, 4294901760
        %v3330 = vsub.f32 %v2112, %v3329
        %3331 = vmatpush1.msra.mxu0 %v3330
        %3332 = vmatprep.subr.mxu0 0.0
        %3333 = vmatpush1.msra.mxu0 0.0
        %3334 = vmatprep.subr.mxu0 0.0
        %3335 = vmatpush1.msra.mxu0 0.0
        %3336 = vmatprep.subr.mxu0 0.0
        %3337 = vmatpush1.msra.mxu0 0.0
        %3338 = vmatprep.subr.mxu0 0.0
        %3339 = vmatpush1.msra.mxu0 0.0
        %3340 = vmatprep.subr.mxu0 0.0
        %3341 = vmatpush1.msra.mxu0 0.0
        %3342 = vmatprep.subr.mxu0 0.0
        %3343 = vmatpush1.msra.mxu0 0.0
        %3344 = vmatprep.subr.mxu0 0.0
        %3345 = vmatpush1.msra.mxu0 0.0
        %3346 = vmatprep.subr.mxu0 0.0
        %3347 = vmatpush1.msra.mxu0 0.0
        %3348 = vmatprep.subr.mxu0 0.0
        %3349 = vmatpush1.msra.mxu0 0.0
        %3350 = vmatprep.subr.mxu0 0.0
        %3351 = vmatpush1.msra.mxu0 0.0
        %3352 = vmatprep.subr.mxu0 0.0
        %3353 = vmatpush1.msra.mxu0 0.0
        %3354 = vmatprep.subr.mxu0 0.0
        %3355 = vmatpush1.msra.mxu0 0.0
        %3356 = vmatprep.subr.mxu0 0.0
        %3357 = vmatpush1.msra.mxu0 0.0
        %3358 = vmatprep.subr.mxu0 0.0
        %3359 = vmatpush1.msra.mxu0 0.0
        %3360 = vmatprep.subr.mxu0 0.0
        %3361 = vmatpush1.msra.mxu0 0.0
        %3362 = vmatprep.subr.mxu0 0.0
        %3363 = vmatpush1.msra.mxu0 0.0
        %3364 = vmatprep.mubr.f32.mxu0 0.0
        %v3365 = vand.u32 %v3025, 4294901760
        %v3366 = vsub.f32 %v3025, %v3365
        %3367 = vmatmul.mubr.f32.gmra.mrb[0].mxu0 %v3366
        %v3368 = vpop.f32.mrb[0].mxu0
        %v3369 = vadd.f32 %v3265, %v3368
        %v3370 = vpop.f32.mrb[0].mxu0
        %3371 = vdwg.mxu0
        %3372 = vmatprep.subr.mxu0 0.0
        %v3373 = vand.u32 %v2097, 4294901760
        %3374 = vmatpush1.msra.mxu0 %v3373
        %3375 = vmatprep.subr.mxu0 0.0
        %v3376 = vand.u32 %v2098, 4294901760
        %3377 = vmatpush1.msra.mxu0 %v3376
        %3378 = vmatprep.subr.mxu0 0.0
        %v3379 = vand.u32 %v2099, 4294901760
        %3380 = vmatpush1.msra.mxu0 %v3379
        %3381 = vmatprep.subr.mxu0 0.0
        %v3382 = vand.u32 %v2100, 4294901760
        %3383 = vmatpush1.msra.mxu0 %v3382
        %3384 = vmatprep.subr.mxu0 0.0
        %v3385 = vand.u32 %v2101, 4294901760
        %3386 = vmatpush1.msra.mxu0 %v3385
        %3387 = vmatprep.subr.mxu0 0.0
        %v3388 = vand.u32 %v2102, 4294901760
        %3389 = vmatpush1.msra.mxu0 %v3388
        %3390 = vmatprep.subr.mxu0 0.0
        %v3391 = vand.u32 %v2103, 4294901760
        %3392 = vmatpush1.msra.mxu0 %v3391
        %3393 = vmatprep.subr.mxu0 0.0
        %v3394 = vand.u32 %v2104, 4294901760
        %3395 = vmatpush1.msra.mxu0 %v3394
        %3396 = vmatprep.subr.mxu0 0.0
        %v3397 = vand.u32 %v2105, 4294901760
        %3398 = vmatpush1.msra.mxu0 %v3397
        %3399 = vmatprep.subr.mxu0 0.0
        %v3400 = vand.u32 %v2106, 4294901760
        %3401 = vmatpush1.msra.mxu0 %v3400
        %3402 = vmatprep.subr.mxu0 0.0
        %v3403 = vand.u32 %v2107, 4294901760
        %3404 = vmatpush1.msra.mxu0 %v3403
        %3405 = vmatprep.subr.mxu0 0.0
        %v3406 = vand.u32 %v2108, 4294901760
        %3407 = vmatpush1.msra.mxu0 %v3406
        %3408 = vmatprep.subr.mxu0 0.0
        %v3409 = vand.u32 %v2109, 4294901760
        %3410 = vmatpush1.msra.mxu0 %v3409
        %3411 = vmatprep.subr.mxu0 0.0
        %v3412 = vand.u32 %v2110, 4294901760
        %3413 = vmatpush1.msra.mxu0 %v3412
        %3414 = vmatprep.subr.mxu0 0.0
        %v3415 = vand.u32 %v2111, 4294901760
        %3416 = vmatpush1.msra.mxu0 %v3415
        %3417 = vmatprep.subr.mxu0 0.0
        %v3418 = vand.u32 %v2112, 4294901760
        %3419 = vmatpush1.msra.mxu0 %v3418
        %3420 = vmatprep.subr.mxu0 0.0
        %3421 = vmatpush1.msra.mxu0 0.0
        %3422 = vmatprep.subr.mxu0 0.0
        %3423 = vmatpush1.msra.mxu0 0.0
        %3424 = vmatprep.subr.mxu0 0.0
        %3425 = vmatpush1.msra.mxu0 0.0
        %3426 = vmatprep.subr.mxu0 0.0
        %3427 = vmatpush1.msra.mxu0 0.0
        %3428 = vmatprep.subr.mxu0 0.0
        %3429 = vmatpush1.msra.mxu0 0.0
        %3430 = vmatprep.subr.mxu0 0.0
        %3431 = vmatpush1.msra.mxu0 0.0
        %3432 = vmatprep.subr.mxu0 0.0
        %3433 = vmatpush1.msra.mxu0 0.0
        %3434 = vmatprep.subr.mxu0 0.0
        %3435 = vmatpush1.msra.mxu0 0.0
        %3436 = vmatprep.subr.mxu0 0.0
        %3437 = vmatpush1.msra.mxu0 0.0
        %3438 = vmatprep.subr.mxu0 0.0
        %3439 = vmatpush1.msra.mxu0 0.0
        %3440 = vmatprep.subr.mxu0 0.0
        %3441 = vmatpush1.msra.mxu0 0.0
        %3442 = vmatprep.subr.mxu0 0.0
        %3443 = vmatpush1.msra.mxu0 0.0
        %3444 = vmatprep.subr.mxu0 0.0
        %3445 = vmatpush1.msra.mxu0 0.0
        %3446 = vmatprep.subr.mxu0 0.0
        %3447 = vmatpush1.msra.mxu0 0.0
        %3448 = vmatprep.subr.mxu0 0.0
        %3449 = vmatpush1.msra.mxu0 0.0
        %3450 = vmatprep.subr.mxu0 0.0
        %3451 = vmatpush1.msra.mxu0 0.0
        %3452 = vmatprep.mubr.f32.mxu0 0.0
        %v3453 = vand.u32 %v3025, 4294901760
        %v3454 = vsub.f32 %v3025, %v3453
        %v3455 = vand.u32 %v3454, 4294901760
        %3456 = vmatmul.mubr.f32.gmra.mrb[0].mxu0 %v3455
        %v3457 = vpop.f32.mrb[0].mxu0
        %v3458 = vadd.f32 %v3369, %v3457
        %v3459 = vpop.f32.mrb[0].mxu0
        %3460 = vdwg.mxu0
        %3461 = vmatprep.subr.mxu0 0.0
        %v3462 = vand.u32 %v2097, 4294901760
        %v3463 = vsub.f32 %v2097, %v3462
        %v3464 = vand.u32 %v3463, 4294901760
        %3465 = vmatpush1.msra.mxu0 %v3464
        %3466 = vmatprep.subr.mxu0 0.0
        %v3467 = vand.u32 %v2098, 4294901760
        %v3468 = vsub.f32 %v2098, %v3467
        %v3469 = vand.u32 %v3468, 4294901760
        %3470 = vmatpush1.msra.mxu0 %v3469
        %3471 = vmatprep.subr.mxu0 0.0
        %v3472 = vand.u32 %v2099, 4294901760
        %v3473 = vsub.f32 %v2099, %v3472
        %v3474 = vand.u32 %v3473, 4294901760
        %3475 = vmatpush1.msra.mxu0 %v3474
        %3476 = vmatprep.subr.mxu0 0.0
        %v3477 = vand.u32 %v2100, 4294901760
        %v3478 = vsub.f32 %v2100, %v3477
        %v3479 = vand.u32 %v3478, 4294901760
        %3480 = vmatpush1.msra.mxu0 %v3479
        %3481 = vmatprep.subr.mxu0 0.0
        %v3482 = vand.u32 %v2101, 4294901760
        %v3483 = vsub.f32 %v2101, %v3482
        %v3484 = vand.u32 %v3483, 4294901760
        %3485 = vmatpush1.msra.mxu0 %v3484
        %3486 = vmatprep.subr.mxu0 0.0
        %v3487 = vand.u32 %v2102, 4294901760
        %v3488 = vsub.f32 %v2102, %v3487
        %v3489 = vand.u32 %v3488, 4294901760
        %3490 = vmatpush1.msra.mxu0 %v3489
        %3491 = vmatprep.subr.mxu0 0.0
        %v3492 = vand.u32 %v2103, 4294901760
        %v3493 = vsub.f32 %v2103, %v3492
        %v3494 = vand.u32 %v3493, 4294901760
        %3495 = vmatpush1.msra.mxu0 %v3494
        %3496 = vmatprep.subr.mxu0 0.0
        %v3497 = vand.u32 %v2104, 4294901760
        %v3498 = vsub.f32 %v2104, %v3497
        %v3499 = vand.u32 %v3498, 4294901760
        %3500 = vmatpush1.msra.mxu0 %v3499
        %3501 = vmatprep.subr.mxu0 0.0
        %v3502 = vand.u32 %v2105, 4294901760
        %v3503 = vsub.f32 %v2105, %v3502
        %v3504 = vand.u32 %v3503, 4294901760
        %3505 = vmatpush1.msra.mxu0 %v3504
        %3506 = vmatprep.subr.mxu0 0.0
        %v3507 = vand.u32 %v2106, 4294901760
        %v3508 = vsub.f32 %v2106, %v3507
        %v3509 = vand.u32 %v3508, 4294901760
        %3510 = vmatpush1.msra.mxu0 %v3509
        %3511 = vmatprep.subr.mxu0 0.0
        %v3512 = vand.u32 %v2107, 4294901760
        %v3513 = vsub.f32 %v2107, %v3512
        %v3514 = vand.u32 %v3513, 4294901760
        %3515 = vmatpush1.msra.mxu0 %v3514
        %3516 = vmatprep.subr.mxu0 0.0
        %v3517 = vand.u32 %v2108, 4294901760
        %v3518 = vsub.f32 %v2108, %v3517
        %v3519 = vand.u32 %v3518, 4294901760
        %3520 = vmatpush1.msra.mxu0 %v3519
        %3521 = vmatprep.subr.mxu0 0.0
        %v3522 = vand.u32 %v2109, 4294901760
        %v3523 = vsub.f32 %v2109, %v3522
        %v3524 = vand.u32 %v3523, 4294901760
        %3525 = vmatpush1.msra.mxu0 %v3524
        %3526 = vmatprep.subr.mxu0 0.0
        %v3527 = vand.u32 %v2110, 4294901760
        %v3528 = vsub.f32 %v2110, %v3527
        %v3529 = vand.u32 %v3528, 4294901760
        %3530 = vmatpush1.msra.mxu0 %v3529
        %3531 = vmatprep.subr.mxu0 0.0
        %v3532 = vand.u32 %v2111, 4294901760
        %v3533 = vsub.f32 %v2111, %v3532
        %v3534 = vand.u32 %v3533, 4294901760
        %3535 = vmatpush1.msra.mxu0 %v3534
        %3536 = vmatprep.subr.mxu0 0.0
        %v3537 = vand.u32 %v2112, 4294901760
        %v3538 = vsub.f32 %v2112, %v3537
        %v3539 = vand.u32 %v3538, 4294901760
        %3540 = vmatpush1.msra.mxu0 %v3539
        %3541 = vmatprep.subr.mxu0 0.0
        %3542 = vmatpush1.msra.mxu0 0.0
        %3543 = vmatprep.subr.mxu0 0.0
        %3544 = vmatpush1.msra.mxu0 0.0
        %3545 = vmatprep.subr.mxu0 0.0
        %3546 = vmatpush1.msra.mxu0 0.0
        %3547 = vmatprep.subr.mxu0 0.0
        %3548 = vmatpush1.msra.mxu0 0.0
        %3549 = vmatprep.subr.mxu0 0.0
        %3550 = vmatpush1.msra.mxu0 0.0
        %3551 = vmatprep.subr.mxu0 0.0
        %3552 = vmatpush1.msra.mxu0 0.0
        %3553 = vmatprep.subr.mxu0 0.0
        %3554 = vmatpush1.msra.mxu0 0.0
        %3555 = vmatprep.subr.mxu0 0.0
        %3556 = vmatpush1.msra.mxu0 0.0
        %3557 = vmatprep.subr.mxu0 0.0
        %3558 = vmatpush1.msra.mxu0 0.0
        %3559 = vmatprep.subr.mxu0 0.0
        %3560 = vmatpush1.msra.mxu0 0.0
        %3561 = vmatprep.subr.mxu0 0.0
        %3562 = vmatpush1.msra.mxu0 0.0
        %3563 = vmatprep.subr.mxu0 0.0
        %3564 = vmatpush1.msra.mxu0 0.0
        %3565 = vmatprep.subr.mxu0 0.0
        %3566 = vmatpush1.msra.mxu0 0.0
        %3567 = vmatprep.subr.mxu0 0.0
        %3568 = vmatpush1.msra.mxu0 0.0
        %3569 = vmatprep.subr.mxu0 0.0
        %3570 = vmatpush1.msra.mxu0 0.0
        %3571 = vmatprep.subr.mxu0 0.0
        %3572 = vmatpush1.msra.mxu0 0.0
        %3573 = vmatprep.mubr.f32.mxu0 0.0
        %v3574 = vand.u32 %v3025, 4294901760
        %3575 = vmatmul.mubr.f32.gmra.mrb[0].mxu0 %v3574
        %v3576 = vpop.f32.mrb[0].mxu0
        %v3577 = vadd.f32 %v3458, %v3576
        %v3578 = vpop.f32.mrb[0].mxu0
        %3579 = vdwg.mxu0
        %3580 = vmatprep.subr.mxu0 0.0
        %v3581 = vand.u32 %v2097, 4294901760
        %3582 = vmatpush1.msra.mxu0 %v3581
        %3583 = vmatprep.subr.mxu0 0.0
        %v3584 = vand.u32 %v2098, 4294901760
        %3585 = vmatpush1.msra.mxu0 %v3584
        %3586 = vmatprep.subr.mxu0 0.0
        %v3587 = vand.u32 %v2099, 4294901760
        %3588 = vmatpush1.msra.mxu0 %v3587
        %3589 = vmatprep.subr.mxu0 0.0
        %v3590 = vand.u32 %v2100, 4294901760
        %3591 = vmatpush1.msra.mxu0 %v3590
        %3592 = vmatprep.subr.mxu0 0.0
        %v3593 = vand.u32 %v2101, 4294901760
        %3594 = vmatpush1.msra.mxu0 %v3593
        %3595 = vmatprep.subr.mxu0 0.0
        %v3596 = vand.u32 %v2102, 4294901760
        %3597 = vmatpush1.msra.mxu0 %v3596
        %3598 = vmatprep.subr.mxu0 0.0
        %v3599 = vand.u32 %v2103, 4294901760
        %3600 = vmatpush1.msra.mxu0 %v3599
        %3601 = vmatprep.subr.mxu0 0.0
        %v3602 = vand.u32 %v2104, 4294901760
        %3603 = vmatpush1.msra.mxu0 %v3602
        %3604 = vmatprep.subr.mxu0 0.0
        %v3605 = vand.u32 %v2105, 4294901760
        %3606 = vmatpush1.msra.mxu0 %v3605
        %3607 = vmatprep.subr.mxu0 0.0
        %v3608 = vand.u32 %v2106, 4294901760
        %3609 = vmatpush1.msra.mxu0 %v3608
        %3610 = vmatprep.subr.mxu0 0.0
        %v3611 = vand.u32 %v2107, 4294901760
        %3612 = vmatpush1.msra.mxu0 %v3611
        %3613 = vmatprep.subr.mxu0 0.0
        %v3614 = vand.u32 %v2108, 4294901760
        %3615 = vmatpush1.msra.mxu0 %v3614
        %3616 = vmatprep.subr.mxu0 0.0
        %v3617 = vand.u32 %v2109, 4294901760
        %3618 = vmatpush1.msra.mxu0 %v3617
        %3619 = vmatprep.subr.mxu0 0.0
        %v3620 = vand.u32 %v2110, 4294901760
        %3621 = vmatpush1.msra.mxu0 %v3620
        %3622 = vmatprep.subr.mxu0 0.0
        %v3623 = vand.u32 %v2111, 4294901760
        %3624 = vmatpush1.msra.mxu0 %v3623
        %3625 = vmatprep.subr.mxu0 0.0
        %v3626 = vand.u32 %v2112, 4294901760
        %3627 = vmatpush1.msra.mxu0 %v3626
        %3628 = vmatprep.subr.mxu0 0.0
        %3629 = vmatpush1.msra.mxu0 0.0
        %3630 = vmatprep.subr.mxu0 0.0
        %3631 = vmatpush1.msra.mxu0 0.0
        %3632 = vmatprep.subr.mxu0 0.0
        %3633 = vmatpush1.msra.mxu0 0.0
        %3634 = vmatprep.subr.mxu0 0.0
        %3635 = vmatpush1.msra.mxu0 0.0
        %3636 = vmatprep.subr.mxu0 0.0
        %3637 = vmatpush1.msra.mxu0 0.0
        %3638 = vmatprep.subr.mxu0 0.0
        %3639 = vmatpush1.msra.mxu0 0.0
        %3640 = vmatprep.subr.mxu0 0.0
        %3641 = vmatpush1.msra.mxu0 0.0
        %3642 = vmatprep.subr.mxu0 0.0
        %3643 = vmatpush1.msra.mxu0 0.0
        %3644 = vmatprep.subr.mxu0 0.0
        %3645 = vmatpush1.msra.mxu0 0.0
        %3646 = vmatprep.subr.mxu0 0.0
        %3647 = vmatpush1.msra.mxu0 0.0
        %3648 = vmatprep.subr.mxu0 0.0
        %3649 = vmatpush1.msra.mxu0 0.0
        %3650 = vmatprep.subr.mxu0 0.0
        %3651 = vmatpush1.msra.mxu0 0.0
        %3652 = vmatprep.subr.mxu0 0.0
        %3653 = vmatpush1.msra.mxu0 0.0
        %3654 = vmatprep.subr.mxu0 0.0
        %3655 = vmatpush1.msra.mxu0 0.0
        %3656 = vmatprep.subr.mxu0 0.0
        %3657 = vmatpush1.msra.mxu0 0.0
        %3658 = vmatprep.subr.mxu0 0.0
        %3659 = vmatpush1.msra.mxu0 0.0
        %3660 = vmatprep.mubr.f32.mxu0 0.0
        %v3661 = vand.u32 %v3025, 4294901760
        %3662 = vmatmul.mubr.f32.gmra.mrb[0].mxu0 %v3661
        %v3663 = vpop.f32.mrb[0].mxu0
        %v3664 = vadd.f32 %v3577, %v3663
        %v3665 = vpop.f32.mrb[0].mxu0
        %3666 = vdwg.mxu0
        %v3667 = vld [vmem:[#allocation2] sm:$0xff]
        %v3668 = vadd.f32 %v3667, %v3664
        %3669 = vst [vmem:[#allocation2] sm:$0xff] %v3668
        %p3670 = scmp.eq.s32.totalorder %s38, 1
        // Predicated region
        $region93: #{tpu_custom_call.1} parent=67 // pred_check
          %p3671 = pneg %p3670
        $region94: #{tpu_custom_call.1} parent=67 // pred_check_branch
          %3673 = sbr.rel (%p3671) target = $region96
        $region95: #{tpu_custom_call.1} parent=67 // pred_region
          %v3674 = vld [vmem:[%s470] sm:$0xff]
          %v3675 = vld [vmem:[#allocation2] sm:$0xff]
          %v3676 = vld [vmem:[%s3] sm:$0x1]
          %v3678 = vlaneseq
          %v3679 = vshrl.u32 %v3678, 7
          %v3680 = vsub.s32 0, %v3679
          %v3681 = vrot.slane %v3676, %v3680
          %v3683 = vadd.f32 %v3675, %v3681
          %vm3684 = vcmp.lt.s32.totalorder %v2116, 32
          %v3685 = vsel %vm3684, 1, 0
          %v3686 = vcvt.s32.f32 %v3685
          %v3687 = vadd.f32 %v3683, %v3674
          %v3688 = vld [vmem:[%s4] sm:$0x1]
          %v3689 = vld [vmem:[%s5] sm:$0x1]
          %3690 = vadd.xlane.f32.xlu0 %v3687
          %v3691 = vpop.xlane.xlu0 %3690
          %v3692 = vmul.f32 %v3691, 0.03125
          %v3693 = vsub.f32 %v3687, %v3692
          %v3694 = vmul.f32 %v3693, %v3686
          %v3695 = vmul.f32 %v3694, %v3694
          %3696 = vadd.xlane.f32.xlu0 %v3695
          %v3697 = vpop.xlane.xlu0 %3696
          %v3698 = vmul.f32 %v3697, 0.03125
          %v3699 = vadd.f32 %v3698, 1e-05
          %v3700 = vrsqrt.pop %v3699
          %v3701 = vmul.f32 %v3694, %v3700
          %v3703 = vlaneseq
          %v3704 = vshrl.u32 %v3703, 7
          %v3705 = vsub.s32 0, %v3704
          %v3706 = vrot.slane %v3688, %v3705
          %v3708 = vmul.f32 %v3701, %v3706
          %v3710 = vlaneseq
          %v3711 = vshrl.u32 %v3710, 7
          %v3712 = vsub.s32 0, %v3711
          %v3713 = vrot.slane %v3689, %v3712
          %v3715 = vadd.f32 %v3708, %v3713
          %v3716 = vld [vmem:[#allocation9] sm:$0xff]
          %v3717 = vld [vmem:[#allocation9 + $0x8] sm:$0xff]
          %v3718 = vld [vmem:[#allocation9 + $0x10] sm:$0xff]
          %v3719 = vld [vmem:[#allocation9 + $0x18] sm:$0xff]
          %v3720 = vld [vmem:[#allocation9 + $0x20] sm:$0xff]
          %v3721 = vld [vmem:[#allocation9 + $0x28] sm:$0xff]
          %v3722 = vld [vmem:[#allocation9 + $0x30] sm:$0xff]
          %v3723 = vld [vmem:[#allocation9 + $0x38] sm:$0xff]
          %v3724 = vld [vmem:[#allocation9 + $0x40] sm:$0xff]
          %v3725 = vld [vmem:[#allocation9 + $0x48] sm:$0xff]
          %v3726 = vld [vmem:[#allocation9 + $0x50] sm:$0xff]
          %v3727 = vld [vmem:[#allocation9 + $0x58] sm:$0xff]
          %v3728 = vld [vmem:[#allocation9 + $0x60] sm:$0xff]
          %v3729 = vld [vmem:[#allocation9 + $0x68] sm:$0xff]
          %v3730 = vld [vmem:[#allocation9 + $0x70] sm:$0xff]
          %v3731 = vld [vmem:[#allocation9 + $0x78] sm:$0xff]
          %v3732 = vld [vmem:[%s9] sm:$0x1]
          %v3734 = vlaneseq
          %v3735 = vshrl.u32 %v3734, 7
          %v3736 = vsub.s32 0, %v3735
          %v3737 = vrot.slane %v3732, %v3736
          %3739 = vmatprep.subr.mxu0 0.0
          %v3740 = vand.u32 %v3716, 4294901760
          %3741 = vmatpush1.msra.mxu0 %v3740
          %3742 = vmatprep.subr.mxu0 0.0
          %v3743 = vand.u32 %v3717, 4294901760
          %3744 = vmatpush1.msra.mxu0 %v3743
          %3745 = vmatprep.subr.mxu0 0.0
          %v3746 = vand.u32 %v3718, 4294901760
          %3747 = vmatpush1.msra.mxu0 %v3746
          %3748 = vmatprep.subr.mxu0 0.0
          %v3749 = vand.u32 %v3719, 4294901760
          %3750 = vmatpush1.msra.mxu0 %v3749
          %3751 = vmatprep.subr.mxu0 0.0
          %v3752 = vand.u32 %v3720, 4294901760
          %3753 = vmatpush1.msra.mxu0 %v3752
          %3754 = vmatprep.subr.mxu0 0.0
          %v3755 = vand.u32 %v3721, 4294901760
          %3756 = vmatpush1.msra.mxu0 %v3755
          %3757 = vmatprep.subr.mxu0 0.0
          %v3758 = vand.u32 %v3722, 4294901760
          %3759 = vmatpush1.msra.mxu0 %v3758
          %3760 = vmatprep.subr.mxu0 0.0
          %v3761 = vand.u32 %v3723, 4294901760
          %3762 = vmatpush1.msra.mxu0 %v3761
          %3763 = vmatprep.subr.mxu0 0.0
          %v3764 = vand.u32 %v3724, 4294901760
          %3765 = vmatpush1.msra.mxu0 %v3764
          %3766 = vmatprep.subr.mxu0 0.0
          %v3767 = vand.u32 %v3725, 4294901760
          %3768 = vmatpush1.msra.mxu0 %v3767
          %3769 = vmatprep.subr.mxu0 0.0
          %v3770 = vand.u32 %v3726, 4294901760
          %3771 = vmatpush1.msra.mxu0 %v3770
          %3772 = vmatprep.subr.mxu0 0.0
          %v3773 = vand.u32 %v3727, 4294901760
          %3774 = vmatpush1.msra.mxu0 %v3773
          %3775 = vmatprep.subr.mxu0 0.0
          %v3776 = vand.u32 %v3728, 4294901760
          %3777 = vmatpush1.msra.mxu0 %v3776
          %3778 = vmatprep.subr.mxu0 0.0
          %v3779 = vand.u32 %v3729, 4294901760
          %3780 = vmatpush1.msra.mxu0 %v3779
          %3781 = vmatprep.subr.mxu0 0.0
          %v3782 = vand.u32 %v3730, 4294901760
          %3783 = vmatpush1.msra.mxu0 %v3782
          %3784 = vmatprep.subr.mxu0 0.0
          %v3785 = vand.u32 %v3731, 4294901760
          %3786 = vmatpush1.msra.mxu0 %v3785
          %3787 = vmatprep.subr.mxu0 0.0
          %3788 = vmatpush1.msra.mxu0 0.0
          %3789 = vmatprep.subr.mxu0 0.0
          %3790 = vmatpush1.msra.mxu0 0.0
          %3791 = vmatprep.subr.mxu0 0.0
          %3792 = vmatpush1.msra.mxu0 0.0
          %3793 = vmatprep.subr.mxu0 0.0
          %3794 = vmatpush1.msra.mxu0 0.0
          %3795 = vmatprep.subr.mxu0 0.0
          %3796 = vmatpush1.msra.mxu0 0.0
          %3797 = vmatprep.subr.mxu0 0.0
          %3798 = vmatpush1.msra.mxu0 0.0
          %3799 = vmatprep.subr.mxu0 0.0
          %3800 = vmatpush1.msra.mxu0 0.0
          %3801 = vmatprep.subr.mxu0 0.0
          %3802 = vmatpush1.msra.mxu0 0.0
          %3803 = vmatprep.subr.mxu0 0.0
          %3804 = vmatpush1.msra.mxu0 0.0
          %3805 = vmatprep.subr.mxu0 0.0
          %3806 = vmatpush1.msra.mxu0 0.0
          %3807 = vmatprep.subr.mxu0 0.0
          %3808 = vmatpush1.msra.mxu0 0.0
          %3809 = vmatprep.subr.mxu0 0.0
          %3810 = vmatpush1.msra.mxu0 0.0
          %3811 = vmatprep.subr.mxu0 0.0
          %3812 = vmatpush1.msra.mxu0 0.0
          %3813 = vmatprep.subr.mxu0 0.0
          %3814 = vmatpush1.msra.mxu0 0.0
          %3815 = vmatprep.subr.mxu0 0.0
          %3816 = vmatpush1.msra.mxu0 0.0
          %3817 = vmatprep.subr.mxu0 0.0
          %3818 = vmatpush1.msra.mxu0 0.0
          %3819 = vmatprep.mubr.f32.mxu0 0.0
          %v3820 = vand.u32 %v3715, 4294901760
          %v3821 = vsub.f32 %v3715, %v3820
          %v3822 = vand.u32 %v3821, 4294901760
          %v3823 = vsub.f32 %v3821, %v3822
          %v3824 = vand.u32 %v3823, 4294901760
          %3825 = vmatmul.mubr.f32.gmra.mrb[0].mxu0 %v3824
          %v3826 = vpop.f32.mrb[0].mxu0
          %v3827 = vadd.f32 %v3737, %v3826
          %v3828 = vpop.f32.mrb[0].mxu0
          %3829 = vdwg.mxu0
          %3830 = vmatprep.subr.mxu0 0.0
          %v3831 = vand.u32 %v3716, 4294901760
          %v3832 = vsub.f32 %v3716, %v3831
          %v3833 = vand.u32 %v3832, 4294901760
          %v3834 = vsub.f32 %v3832, %v3833
          %v3835 = vand.u32 %v3834, 4294901760
          %3836 = vmatpush1.msra.mxu0 %v3835
          %3837 = vmatprep.subr.mxu0 0.0
          %v3838 = vand.u32 %v3717, 4294901760
          %v3839 = vsub.f32 %v3717, %v3838
          %v3840 = vand.u32 %v3839, 4294901760
          %v3841 = vsub.f32 %v3839, %v3840
          %v3842 = vand.u32 %v3841, 4294901760
          %3843 = vmatpush1.msra.mxu0 %v3842
          %3844 = vmatprep.subr.mxu0 0.0
          %v3845 = vand.u32 %v3718, 4294901760
          %v3846 = vsub.f32 %v3718, %v3845
          %v3847 = vand.u32 %v3846, 4294901760
          %v3848 = vsub.f32 %v3846, %v3847
          %v3849 = vand.u32 %v3848, 4294901760
          %3850 = vmatpush1.msra.mxu0 %v3849
          %3851 = vmatprep.subr.mxu0 0.0
          %v3852 = vand.u32 %v3719, 4294901760
          %v3853 = vsub.f32 %v3719, %v3852
          %v3854 = vand.u32 %v3853, 4294901760
          %v3855 = vsub.f32 %v3853, %v3854
          %v3856 = vand.u32 %v3855, 4294901760
          %3857 = vmatpush1.msra.mxu0 %v3856
          %3858 = vmatprep.subr.mxu0 0.0
          %v3859 = vand.u32 %v3720, 4294901760
          %v3860 = vsub.f32 %v3720, %v3859
          %v3861 = vand.u32 %v3860, 4294901760
          %v3862 = vsub.f32 %v3860, %v3861
          %v3863 = vand.u32 %v3862, 4294901760
          %3864 = vmatpush1.msra.mxu0 %v3863
          %3865 = vmatprep.subr.mxu0 0.0
          %v3866 = vand.u32 %v3721, 4294901760
          %v3867 = vsub.f32 %v3721, %v3866
          %v3868 = vand.u32 %v3867, 4294901760
          %v3869 = vsub.f32 %v3867, %v3868
          %v3870 = vand.u32 %v3869, 4294901760
          %3871 = vmatpush1.msra.mxu0 %v3870
          %3872 = vmatprep.subr.mxu0 0.0
          %v3873 = vand.u32 %v3722, 4294901760
          %v3874 = vsub.f32 %v3722, %v3873
          %v3875 = vand.u32 %v3874, 4294901760
          %v3876 = vsub.f32 %v3874, %v3875
          %v3877 = vand.u32 %v3876, 4294901760
          %3878 = vmatpush1.msra.mxu0 %v3877
          %3879 = vmatprep.subr.mxu0 0.0
          %v3880 = vand.u32 %v3723, 4294901760
          %v3881 = vsub.f32 %v3723, %v3880
          %v3882 = vand.u32 %v3881, 4294901760
          %v3883 = vsub.f32 %v3881, %v3882
          %v3884 = vand.u32 %v3883, 4294901760
          %3885 = vmatpush1.msra.mxu0 %v3884
          %3886 = vmatprep.subr.mxu0 0.0
          %v3887 = vand.u32 %v3724, 4294901760
          %v3888 = vsub.f32 %v3724, %v3887
          %v3889 = vand.u32 %v3888, 4294901760
          %v3890 = vsub.f32 %v3888, %v3889
          %v3891 = vand.u32 %v3890, 4294901760
          %3892 = vmatpush1.msra.mxu0 %v3891
          %3893 = vmatprep.subr.mxu0 0.0
          %v3894 = vand.u32 %v3725, 4294901760
          %v3895 = vsub.f32 %v3725, %v3894
          %v3896 = vand.u32 %v3895, 4294901760
          %v3897 = vsub.f32 %v3895, %v3896
          %v3898 = vand.u32 %v3897, 4294901760
          %3899 = vmatpush1.msra.mxu0 %v3898
          %3900 = vmatprep.subr.mxu0 0.0
          %v3901 = vand.u32 %v3726, 4294901760
          %v3902 = vsub.f32 %v3726, %v3901
          %v3903 = vand.u32 %v3902, 4294901760
          %v3904 = vsub.f32 %v3902, %v3903
          %v3905 = vand.u32 %v3904, 4294901760
          %3906 = vmatpush1.msra.mxu0 %v3905
          %3907 = vmatprep.subr.mxu0 0.0
          %v3908 = vand.u32 %v3727, 4294901760
          %v3909 = vsub.f32 %v3727, %v3908
          %v3910 = vand.u32 %v3909, 4294901760
          %v3911 = vsub.f32 %v3909, %v3910
          %v3912 = vand.u32 %v3911, 4294901760
          %3913 = vmatpush1.msra.mxu0 %v3912
          %3914 = vmatprep.subr.mxu0 0.0
          %v3915 = vand.u32 %v3728, 4294901760
          %v3916 = vsub.f32 %v3728, %v3915
          %v3917 = vand.u32 %v3916, 4294901760
          %v3918 = vsub.f32 %v3916, %v3917
          %v3919 = vand.u32 %v3918, 4294901760
          %3920 = vmatpush1.msra.mxu0 %v3919
          %3921 = vmatprep.subr.mxu0 0.0
          %v3922 = vand.u32 %v3729, 4294901760
          %v3923 = vsub.f32 %v3729, %v3922
          %v3924 = vand.u32 %v3923, 4294901760
          %v3925 = vsub.f32 %v3923, %v3924
          %v3926 = vand.u32 %v3925, 4294901760
          %3927 = vmatpush1.msra.mxu0 %v3926
          %3928 = vmatprep.subr.mxu0 0.0
          %v3929 = vand.u32 %v3730, 4294901760
          %v3930 = vsub.f32 %v3730, %v3929
          %v3931 = vand.u32 %v3930, 4294901760
          %v3932 = vsub.f32 %v3930, %v3931
          %v3933 = vand.u32 %v3932, 4294901760
          %3934 = vmatpush1.msra.mxu0 %v3933
          %3935 = vmatprep.subr.mxu0 0.0
          %v3936 = vand.u32 %v3731, 4294901760
          %v3937 = vsub.f32 %v3731, %v3936
          %v3938 = vand.u32 %v3937, 4294901760
          %v3939 = vsub.f32 %v3937, %v3938
          %v3940 = vand.u32 %v3939, 4294901760
          %3941 = vmatpush1.msra.mxu0 %v3940
          %3942 = vmatprep.subr.mxu0 0.0
          %3943 = vmatpush1.msra.mxu0 0.0
          %3944 = vmatprep.subr.mxu0 0.0
          %3945 = vmatpush1.msra.mxu0 0.0
          %3946 = vmatprep.subr.mxu0 0.0
          %3947 = vmatpush1.msra.mxu0 0.0
          %3948 = vmatprep.subr.mxu0 0.0
          %3949 = vmatpush1.msra.mxu0 0.0
          %3950 = vmatprep.subr.mxu0 0.0
          %3951 = vmatpush1.msra.mxu0 0.0
          %3952 = vmatprep.subr.mxu0 0.0
          %3953 = vmatpush1.msra.mxu0 0.0
          %3954 = vmatprep.subr.mxu0 0.0
          %3955 = vmatpush1.msra.mxu0 0.0
          %3956 = vmatprep.subr.mxu0 0.0
          %3957 = vmatpush1.msra.mxu0 0.0
          %3958 = vmatprep.subr.mxu0 0.0
          %3959 = vmatpush1.msra.mxu0 0.0
          %3960 = vmatprep.subr.mxu0 0.0
          %3961 = vmatpush1.msra.mxu0 0.0
          %3962 = vmatprep.subr.mxu0 0.0
          %3963 = vmatpush1.msra.mxu0 0.0
          %3964 = vmatprep.subr.mxu0 0.0
          %3965 = vmatpush1.msra.mxu0 0.0
          %3966 = vmatprep.subr.mxu0 0.0
          %3967 = vmatpush1.msra.mxu0 0.0
          %3968 = vmatprep.subr.mxu0 0.0
          %3969 = vmatpush1.msra.mxu0 0.0
          %3970 = vmatprep.subr.mxu0 0.0
          %3971 = vmatpush1.msra.mxu0 0.0
          %3972 = vmatprep.subr.mxu0 0.0
          %3973 = vmatpush1.msra.mxu0 0.0
          %3974 = vmatprep.mubr.f32.mxu0 0.0
          %v3975 = vand.u32 %v3715, 4294901760
          %3976 = vmatmul.mubr.f32.gmra.mrb[0].mxu0 %v3975
          %v3977 = vpop.f32.mrb[0].mxu0
          %v3978 = vadd.f32 %v3827, %v3977
          %v3979 = vpop.f32.mrb[0].mxu0
          %3980 = vdwg.mxu0
          %3981 = vmatprep.subr.mxu0 0.0
          %v3982 = vand.u32 %v3716, 4294901760
          %v3983 = vsub.f32 %v3716, %v3982
          %3984 = vmatpush1.msra.mxu0 %v3983
          %3985 = vmatprep.subr.mxu0 0.0
          %v3986 = vand.u32 %v3717, 4294901760
          %v3987 = vsub.f32 %v3717, %v3986
          %3988 = vmatpush1.msra.mxu0 %v3987
          %3989 = vmatprep.subr.mxu0 0.0
          %v3990 = vand.u32 %v3718, 4294901760
          %v3991 = vsub.f32 %v3718, %v3990
          %3992 = vmatpush1.msra.mxu0 %v3991
          %3993 = vmatprep.subr.mxu0 0.0
          %v3994 = vand.u32 %v3719, 4294901760
          %v3995 = vsub.f32 %v3719, %v3994
          %3996 = vmatpush1.msra.mxu0 %v3995
          %3997 = vmatprep.subr.mxu0 0.0
          %v3998 = vand.u32 %v3720, 4294901760
          %v3999 = vsub.f32 %v3720, %v3998
          %4000 = vmatpush1.msra.mxu0 %v3999
          %4001 = vmatprep.subr.mxu0 0.0
          %v4002 = vand.u32 %v3721, 4294901760
          %v4003 = vsub.f32 %v3721, %v4002
          %4004 = vmatpush1.msra.mxu0 %v4003
          %4005 = vmatprep.subr.mxu0 0.0
          %v4006 = vand.u32 %v3722, 4294901760
          %v4007 = vsub.f32 %v3722, %v4006
          %4008 = vmatpush1.msra.mxu0 %v4007
          %4009 = vmatprep.subr.mxu0 0.0
          %v4010 = vand.u32 %v3723, 4294901760
          %v4011 = vsub.f32 %v3723, %v4010
          %4012 = vmatpush1.msra.mxu0 %v4011
          %4013 = vmatprep.subr.mxu0 0.0
          %v4014 = vand.u32 %v3724, 4294901760
          %v4015 = vsub.f32 %v3724, %v4014
          %4016 = vmatpush1.msra.mxu0 %v4015
          %4017 = vmatprep.subr.mxu0 0.0
          %v4018 = vand.u32 %v3725, 4294901760
          %v4019 = vsub.f32 %v3725, %v4018
          %4020 = vmatpush1.msra.mxu0 %v4019
          %4021 = vmatprep.subr.mxu0 0.0
          %v4022 = vand.u32 %v3726, 4294901760
          %v4023 = vsub.f32 %v3726, %v4022
          %4024 = vmatpush1.msra.mxu0 %v4023
          %4025 = vmatprep.subr.mxu0 0.0
          %v4026 = vand.u32 %v3727, 4294901760
          %v4027 = vsub.f32 %v3727, %v4026
          %4028 = vmatpush1.msra.mxu0 %v4027
          %4029 = vmatprep.subr.mxu0 0.0
          %v4030 = vand.u32 %v3728, 4294901760
          %v4031 = vsub.f32 %v3728, %v4030
          %4032 = vmatpush1.msra.mxu0 %v4031
          %4033 = vmatprep.subr.mxu0 0.0
          %v4034 = vand.u32 %v3729, 4294901760
          %v4035 = vsub.f32 %v3729, %v4034
          %4036 = vmatpush1.msra.mxu0 %v4035
          %4037 = vmatprep.subr.mxu0 0.0
          %v4038 = vand.u32 %v3730, 4294901760
          %v4039 = vsub.f32 %v3730, %v4038
          %4040 = vmatpush1.msra.mxu0 %v4039
          %4041 = vmatprep.subr.mxu0 0.0
          %v4042 = vand.u32 %v3731, 4294901760
          %v4043 = vsub.f32 %v3731, %v4042
          %4044 = vmatpush1.msra.mxu0 %v4043
          %4045 = vmatprep.subr.mxu0 0.0
          %4046 = vmatpush1.msra.mxu0 0.0
          %4047 = vmatprep.subr.mxu0 0.0
          %4048 = vmatpush1.msra.mxu0 0.0
          %4049 = vmatprep.subr.mxu0 0.0
          %4050 = vmatpush1.msra.mxu0 0.0
          %4051 = vmatprep.subr.mxu0 0.0
          %4052 = vmatpush1.msra.mxu0 0.0
          %4053 = vmatprep.subr.mxu0 0.0
          %4054 = vmatpush1.msra.mxu0 0.0
          %4055 = vmatprep.subr.mxu0 0.0
          %4056 = vmatpush1.msra.mxu0 0.0
          %4057 = vmatprep.subr.mxu0 0.0
          %4058 = vmatpush1.msra.mxu0 0.0
          %4059 = vmatprep.subr.mxu0 0.0
          %4060 = vmatpush1.msra.mxu0 0.0
          %4061 = vmatprep.subr.mxu0 0.0
          %4062 = vmatpush1.msra.mxu0 0.0
          %4063 = vmatprep.subr.mxu0 0.0
          %4064 = vmatpush1.msra.mxu0 0.0
          %4065 = vmatprep.subr.mxu0 0.0
          %4066 = vmatpush1.msra.mxu0 0.0
          %4067 = vmatprep.subr.mxu0 0.0
          %4068 = vmatpush1.msra.mxu0 0.0
          %4069 = vmatprep.subr.mxu0 0.0
          %4070 = vmatpush1.msra.mxu0 0.0
          %4071 = vmatprep.subr.mxu0 0.0
          %4072 = vmatpush1.msra.mxu0 0.0
          %4073 = vmatprep.subr.mxu0 0.0
          %4074 = vmatpush1.msra.mxu0 0.0
          %4075 = vmatprep.subr.mxu0 0.0
          %4076 = vmatpush1.msra.mxu0 0.0
          %4077 = vmatprep.mubr.f32.mxu0 0.0
          %v4078 = vand.u32 %v3715, 4294901760
          %v4079 = vsub.f32 %v3715, %v4078
          %4080 = vmatmul.mubr.f32.gmra.mrb[0].mxu0 %v4079
          %v4081 = vpop.f32.mrb[0].mxu0
          %v4082 = vadd.f32 %v3978, %v4081
          %v4083 = vpop.f32.mrb[0].mxu0
          %4084 = vdwg.mxu0
          %4085 = vmatprep.subr.mxu0 0.0
          %v4086 = vand.u32 %v3716, 4294901760
          %4087 = vmatpush1.msra.mxu0 %v4086
          %4088 = vmatprep.subr.mxu0 0.0
          %v4089 = vand.u32 %v3717, 4294901760
          %4090 = vmatpush1.msra.mxu0 %v4089
          %4091 = vmatprep.subr.mxu0 0.0
          %v4092 = vand.u32 %v3718, 4294901760
          %4093 = vmatpush1.msra.mxu0 %v4092
          %4094 = vmatprep.subr.mxu0 0.0
          %v4095 = vand.u32 %v3719, 4294901760
          %4096 = vmatpush1.msra.mxu0 %v4095
          %4097 = vmatprep.subr.mxu0 0.0
          %v4098 = vand.u32 %v3720, 4294901760
          %4099 = vmatpush1.msra.mxu0 %v4098
          %4100 = vmatprep.subr.mxu0 0.0
          %v4101 = vand.u32 %v3721, 4294901760
          %4102 = vmatpush1.msra.mxu0 %v4101
          %4103 = vmatprep.subr.mxu0 0.0
          %v4104 = vand.u32 %v3722, 4294901760
          %4105 = vmatpush1.msra.mxu0 %v4104
          %4106 = vmatprep.subr.mxu0 0.0
          %v4107 = vand.u32 %v3723, 4294901760
          %4108 = vmatpush1.msra.mxu0 %v4107
          %4109 = vmatprep.subr.mxu0 0.0
          %v4110 = vand.u32 %v3724, 4294901760
          %4111 = vmatpush1.msra.mxu0 %v4110
          %4112 = vmatprep.subr.mxu0 0.0
          %v4113 = vand.u32 %v3725, 4294901760
          %4114 = vmatpush1.msra.mxu0 %v4113
          %4115 = vmatprep.subr.mxu0 0.0
          %v4116 = vand.u32 %v3726, 4294901760
          %4117 = vmatpush1.msra.mxu0 %v4116
          %4118 = vmatprep.subr.mxu0 0.0
          %v4119 = vand.u32 %v3727, 4294901760
          %4120 = vmatpush1.msra.mxu0 %v4119
          %4121 = vmatprep.subr.mxu0 0.0
          %v4122 = vand.u32 %v3728, 4294901760
          %4123 = vmatpush1.msra.mxu0 %v4122
          %4124 = vmatprep.subr.mxu0 0.0
          %v4125 = vand.u32 %v3729, 4294901760
          %4126 = vmatpush1.msra.mxu0 %v4125
          %4127 = vmatprep.subr.mxu0 0.0
          %v4128 = vand.u32 %v3730, 4294901760
          %4129 = vmatpush1.msra.mxu0 %v4128
          %4130 = vmatprep.subr.mxu0 0.0
          %v4131 = vand.u32 %v3731, 4294901760
          %4132 = vmatpush1.msra.mxu0 %v4131
          %4133 = vmatprep.subr.mxu0 0.0
          %4134 = vmatpush1.msra.mxu0 0.0
          %4135 = vmatprep.subr.mxu0 0.0
          %4136 = vmatpush1.msra.mxu0 0.0
          %4137 = vmatprep.subr.mxu0 0.0
          %4138 = vmatpush1.msra.mxu0 0.0
          %4139 = vmatprep.subr.mxu0 0.0
          %4140 = vmatpush1.msra.mxu0 0.0
          %4141 = vmatprep.subr.mxu0 0.0
          %4142 = vmatpush1.msra.mxu0 0.0
          %4143 = vmatprep.subr.mxu0 0.0
          %4144 = vmatpush1.msra.mxu0 0.0
          %4145 = vmatprep.subr.mxu0 0.0
          %4146 = vmatpush1.msra.mxu0 0.0
          %4147 = vmatprep.subr.mxu0 0.0
          %4148 = vmatpush1.msra.mxu0 0.0
          %4149 = vmatprep.subr.mxu0 0.0
          %4150 = vmatpush1.msra.mxu0 0.0
          %4151 = vmatprep.subr.mxu0 0.0
          %4152 = vmatpush1.msra.mxu0 0.0
          %4153 = vmatprep.subr.mxu0 0.0
          %4154 = vmatpush1.msra.mxu0 0.0
          %4155 = vmatprep.subr.mxu0 0.0
          %4156 = vmatpush1.msra.mxu0 0.0
          %4157 = vmatprep.subr.mxu0 0.0
          %4158 = vmatpush1.msra.mxu0 0.0
          %4159 = vmatprep.subr.mxu0 0.0
          %4160 = vmatpush1.msra.mxu0 0.0
          %4161 = vmatprep.subr.mxu0 0.0
          %4162 = vmatpush1.msra.mxu0 0.0
          %4163 = vmatprep.subr.mxu0 0.0
          %4164 = vmatpush1.msra.mxu0 0.0
          %4165 = vmatprep.mubr.f32.mxu0 0.0
          %v4166 = vand.u32 %v3715, 4294901760
          %v4167 = vsub.f32 %v3715, %v4166
          %v4168 = vand.u32 %v4167, 4294901760
          %4169 = vmatmul.mubr.f32.gmra.mrb[0].mxu0 %v4168
          %v4170 = vpop.f32.mrb[0].mxu0
          %v4171 = vadd.f32 %v4082, %v4170
          %v4172 = vpop.f32.mrb[0].mxu0
          %4173 = vdwg.mxu0
          %4174 = vmatprep.subr.mxu0 0.0
          %v4175 = vand.u32 %v3716, 4294901760
          %v4176 = vsub.f32 %v3716, %v4175
          %v4177 = vand.u32 %v4176, 4294901760
          %4178 = vmatpush1.msra.mxu0 %v4177
          %4179 = vmatprep.subr.mxu0 0.0
          %v4180 = vand.u32 %v3717, 4294901760
          %v4181 = vsub.f32 %v3717, %v4180
          %v4182 = vand.u32 %v4181, 4294901760
          %4183 = vmatpush1.msra.mxu0 %v4182
          %4184 = vmatprep.subr.mxu0 0.0
          %v4185 = vand.u32 %v3718, 4294901760
          %v4186 = vsub.f32 %v3718, %v4185
          %v4187 = vand.u32 %v4186, 4294901760
          %4188 = vmatpush1.msra.mxu0 %v4187
          %4189 = vmatprep.subr.mxu0 0.0
          %v4190 = vand.u32 %v3719, 4294901760
          %v4191 = vsub.f32 %v3719, %v4190
          %v4192 = vand.u32 %v4191, 4294901760
          %4193 = vmatpush1.msra.mxu0 %v4192
          %4194 = vmatprep.subr.mxu0 0.0
          %v4195 = vand.u32 %v3720, 4294901760
          %v4196 = vsub.f32 %v3720, %v4195
          %v4197 = vand.u32 %v4196, 4294901760
          %4198 = vmatpush1.msra.mxu0 %v4197
          %4199 = vmatprep.subr.mxu0 0.0
          %v4200 = vand.u32 %v3721, 4294901760
          %v4201 = vsub.f32 %v3721, %v4200
          %v4202 = vand.u32 %v4201, 4294901760
          %4203 = vmatpush1.msra.mxu0 %v4202
          %4204 = vmatprep.subr.mxu0 0.0
          %v4205 = vand.u32 %v3722, 4294901760
          %v4206 = vsub.f32 %v3722, %v4205
          %v4207 = vand.u32 %v4206, 4294901760
          %4208 = vmatpush1.msra.mxu0 %v4207
          %4209 = vmatprep.subr.mxu0 0.0
          %v4210 = vand.u32 %v3723, 4294901760
          %v4211 = vsub.f32 %v3723, %v4210
          %v4212 = vand.u32 %v4211, 4294901760
          %4213 = vmatpush1.msra.mxu0 %v4212
          %4214 = vmatprep.subr.mxu0 0.0
          %v4215 = vand.u32 %v3724, 4294901760
          %v4216 = vsub.f32 %v3724, %v4215
          %v4217 = vand.u32 %v4216, 4294901760
          %4218 = vmatpush1.msra.mxu0 %v4217
          %4219 = vmatprep.subr.mxu0 0.0
          %v4220 = vand.u32 %v3725, 4294901760
          %v4221 = vsub.f32 %v3725, %v4220
          %v4222 = vand.u32 %v4221, 4294901760
          %4223 = vmatpush1.msra.mxu0 %v4222
          %4224 = vmatprep.subr.mxu0 0.0
          %v4225 = vand.u32 %v3726, 4294901760
          %v4226 = vsub.f32 %v3726, %v4225
          %v4227 = vand.u32 %v4226, 4294901760
          %4228 = vmatpush1.msra.mxu0 %v4227
          %4229 = vmatprep.subr.mxu0 0.0
          %v4230 = vand.u32 %v3727, 4294901760
          %v4231 = vsub.f32 %v3727, %v4230
          %v4232 = vand.u32 %v4231, 4294901760
          %4233 = vmatpush1.msra.mxu0 %v4232
          %4234 = vmatprep.subr.mxu0 0.0
          %v4235 = vand.u32 %v3728, 4294901760
          %v4236 = vsub.f32 %v3728, %v4235
          %v4237 = vand.u32 %v4236, 4294901760
          %4238 = vmatpush1.msra.mxu0 %v4237
          %4239 = vmatprep.subr.mxu0 0.0
          %v4240 = vand.u32 %v3729, 4294901760
          %v4241 = vsub.f32 %v3729, %v4240
          %v4242 = vand.u32 %v4241, 4294901760
          %4243 = vmatpush1.msra.mxu0 %v4242
          %4244 = vmatprep.subr.mxu0 0.0
          %v4245 = vand.u32 %v3730, 4294901760
          %v4246 = vsub.f32 %v3730, %v4245
          %v4247 = vand.u32 %v4246, 4294901760
          %4248 = vmatpush1.msra.mxu0 %v4247
          %4249 = vmatprep.subr.mxu0 0.0
          %v4250 = vand.u32 %v3731, 4294901760
          %v4251 = vsub.f32 %v3731, %v4250
          %v4252 = vand.u32 %v4251, 4294901760
          %4253 = vmatpush1.msra.mxu0 %v4252
          %4254 = vmatprep.subr.mxu0 0.0
          %4255 = vmatpush1.msra.mxu0 0.0
          %4256 = vmatprep.subr.mxu0 0.0
          %4257 = vmatpush1.msra.mxu0 0.0
          %4258 = vmatprep.subr.mxu0 0.0
          %4259 = vmatpush1.msra.mxu0 0.0
          %4260 = vmatprep.subr.mxu0 0.0
          %4261 = vmatpush1.msra.mxu0 0.0
          %4262 = vmatprep.subr.mxu0 0.0
          %4263 = vmatpush1.msra.mxu0 0.0
          %4264 = vmatprep.subr.mxu0 0.0
          %4265 = vmatpush1.msra.mxu0 0.0
          %4266 = vmatprep.subr.mxu0 0.0
          %4267 = vmatpush1.msra.mxu0 0.0
          %4268 = vmatprep.subr.mxu0 0.0
          %4269 = vmatpush1.msra.mxu0 0.0
          %4270 = vmatprep.subr.mxu0 0.0
          %4271 = vmatpush1.msra.mxu0 0.0
          %4272 = vmatprep.subr.mxu0 0.0
          %4273 = vmatpush1.msra.mxu0 0.0
          %4274 = vmatprep.subr.mxu0 0.0
          %4275 = vmatpush1.msra.mxu0 0.0
          %4276 = vmatprep.subr.mxu0 0.0
          %4277 = vmatpush1.msra.mxu0 0.0
          %4278 = vmatprep.subr.mxu0 0.0
          %4279 = vmatpush1.msra.mxu0 0.0
          %4280 = vmatprep.subr.mxu0 0.0
          %4281 = vmatpush1.msra.mxu0 0.0
          %4282 = vmatprep.subr.mxu0 0.0
          %4283 = vmatpush1.msra.mxu0 0.0
          %4284 = vmatprep.subr.mxu0 0.0
          %4285 = vmatpush1.msra.mxu0 0.0
          %4286 = vmatprep.mubr.f32.mxu0 0.0
          %v4287 = vand.u32 %v3715, 4294901760
          %4288 = vmatmul.mubr.f32.gmra.mrb[0].mxu0 %v4287
          %v4289 = vpop.f32.mrb[0].mxu0
          %v4290 = vadd.f32 %v4171, %v4289
          %v4291 = vpop.f32.mrb[0].mxu0
          %4292 = vdwg.mxu0
          %4293 = vmatprep.subr.mxu0 0.0
          %v4294 = vand.u32 %v3716, 4294901760
          %4295 = vmatpush1.msra.mxu0 %v4294
          %4296 = vmatprep.subr.mxu0 0.0
          %v4297 = vand.u32 %v3717, 4294901760
          %4298 = vmatpush1.msra.mxu0 %v4297
          %4299 = vmatprep.subr.mxu0 0.0
          %v4300 = vand.u32 %v3718, 4294901760
          %4301 = vmatpush1.msra.mxu0 %v4300
          %4302 = vmatprep.subr.mxu0 0.0
          %v4303 = vand.u32 %v3719, 4294901760
          %4304 = vmatpush1.msra.mxu0 %v4303
          %4305 = vmatprep.subr.mxu0 0.0
          %v4306 = vand.u32 %v3720, 4294901760
          %4307 = vmatpush1.msra.mxu0 %v4306
          %4308 = vmatprep.subr.mxu0 0.0
          %v4309 = vand.u32 %v3721, 4294901760
          %4310 = vmatpush1.msra.mxu0 %v4309
          %4311 = vmatprep.subr.mxu0 0.0
          %v4312 = vand.u32 %v3722, 4294901760
          %4313 = vmatpush1.msra.mxu0 %v4312
          %4314 = vmatprep.subr.mxu0 0.0
          %v4315 = vand.u32 %v3723, 4294901760
          %4316 = vmatpush1.msra.mxu0 %v4315
          %4317 = vmatprep.subr.mxu0 0.0
          %v4318 = vand.u32 %v3724, 4294901760
          %4319 = vmatpush1.msra.mxu0 %v4318
          %4320 = vmatprep.subr.mxu0 0.0
          %v4321 = vand.u32 %v3725, 4294901760
          %4322 = vmatpush1.msra.mxu0 %v4321
          %4323 = vmatprep.subr.mxu0 0.0
          %v4324 = vand.u32 %v3726, 4294901760
          %4325 = vmatpush1.msra.mxu0 %v4324
          %4326 = vmatprep.subr.mxu0 0.0
          %v4327 = vand.u32 %v3727, 4294901760
          %4328 = vmatpush1.msra.mxu0 %v4327
          %4329 = vmatprep.subr.mxu0 0.0
          %v4330 = vand.u32 %v3728, 4294901760
          %4331 = vmatpush1.msra.mxu0 %v4330
          %4332 = vmatprep.subr.mxu0 0.0
          %v4333 = vand.u32 %v3729, 4294901760
          %4334 = vmatpush1.msra.mxu0 %v4333
          %4335 = vmatprep.subr.mxu0 0.0
          %v4336 = vand.u32 %v3730, 4294901760
          %4337 = vmatpush1.msra.mxu0 %v4336
          %4338 = vmatprep.subr.mxu0 0.0
          %v4339 = vand.u32 %v3731, 4294901760
          %4340 = vmatpush1.msra.mxu0 %v4339
          %4341 = vmatprep.subr.mxu0 0.0
          %4342 = vmatpush1.msra.mxu0 0.0
          %4343 = vmatprep.subr.mxu0 0.0
          %4344 = vmatpush1.msra.mxu0 0.0
          %4345 = vmatprep.subr.mxu0 0.0
          %4346 = vmatpush1.msra.mxu0 0.0
          %4347 = vmatprep.subr.mxu0 0.0
          %4348 = vmatpush1.msra.mxu0 0.0
          %4349 = vmatprep.subr.mxu0 0.0
          %4350 = vmatpush1.msra.mxu0 0.0
          %4351 = vmatprep.subr.mxu0 0.0
          %4352 = vmatpush1.msra.mxu0 0.0
          %4353 = vmatprep.subr.mxu0 0.0
          %4354 = vmatpush1.msra.mxu0 0.0
          %4355 = vmatprep.subr.mxu0 0.0
          %4356 = vmatpush1.msra.mxu0 0.0
          %4357 = vmatprep.subr.mxu0 0.0
          %4358 = vmatpush1.msra.mxu0 0.0
          %4359 = vmatprep.subr.mxu0 0.0
          %4360 = vmatpush1.msra.mxu0 0.0
          %4361 = vmatprep.subr.mxu0 0.0
          %4362 = vmatpush1.msra.mxu0 0.0
          %4363 = vmatprep.subr.mxu0 0.0
          %4364 = vmatpush1.msra.mxu0 0.0
          %4365 = vmatprep.subr.mxu0 0.0
          %4366 = vmatpush1.msra.mxu0 0.0
          %4367 = vmatprep.subr.mxu0 0.0
          %4368 = vmatpush1.msra.mxu0 0.0
          %4369 = vmatprep.subr.mxu0 0.0
          %4370 = vmatpush1.msra.mxu0 0.0
          %4371 = vmatprep.subr.mxu0 0.0
          %4372 = vmatpush1.msra.mxu0 0.0
          %4373 = vmatprep.mubr.f32.mxu0 0.0
          %v4374 = vand.u32 %v3715, 4294901760
          %4375 = vmatmul.mubr.f32.gmra.mrb[0].mxu0 %v4374
          %v4376 = vpop.f32.mrb[0].mxu0
          %v4377 = vadd.f32 %v4290, %v4376
          %v4378 = vpop.f32.mrb[0].mxu0
          %4379 = vdwg.mxu0
          %v4380 = vmax.f32 %v4377, 0.0
          %v4381 = vld [vmem:[#allocation11] sm:$0xff]
          %v4382 = vld [vmem:[#allocation11 + $0x8] sm:$0xff]
          %v4383 = vld [vmem:[#allocation11 + $0x10] sm:$0xff]
          %v4384 = vld [vmem:[#allocation11 + $0x18] sm:$0xff]
          %v4385 = vld [vmem:[#allocation11 + $0x20] sm:$0xff]
          %v4386 = vld [vmem:[#allocation11 + $0x28] sm:$0xff]
          %v4387 = vld [vmem:[#allocation11 + $0x30] sm:$0xff]
          %v4388 = vld [vmem:[#allocation11 + $0x38] sm:$0xff]
          %v4389 = vld [vmem:[#allocation11 + $0x40] sm:$0xff]
          %v4390 = vld [vmem:[#allocation11 + $0x48] sm:$0xff]
          %v4391 = vld [vmem:[#allocation11 + $0x50] sm:$0xff]
          %v4392 = vld [vmem:[#allocation11 + $0x58] sm:$0xff]
          %v4393 = vld [vmem:[#allocation11 + $0x60] sm:$0xff]
          %v4394 = vld [vmem:[#allocation11 + $0x68] sm:$0xff]
          %v4395 = vld [vmem:[#allocation11 + $0x70] sm:$0xff]
          %v4396 = vld [vmem:[#allocation11 + $0x78] sm:$0xff]
          %v4397 = vld [vmem:[%s11] sm:$0x1]
          %v4399 = vlaneseq
          %v4400 = vshrl.u32 %v4399, 7
          %v4401 = vsub.s32 0, %v4400
          %v4402 = vrot.slane %v4397, %v4401
          %4404 = vmatprep.subr.mxu0 0.0
          %v4405 = vand.u32 %v4381, 4294901760
          %4406 = vmatpush1.msra.mxu0 %v4405
          %4407 = vmatprep.subr.mxu0 0.0
          %v4408 = vand.u32 %v4382, 4294901760
          %4409 = vmatpush1.msra.mxu0 %v4408
          %4410 = vmatprep.subr.mxu0 0.0
          %v4411 = vand.u32 %v4383, 4294901760
          %4412 = vmatpush1.msra.mxu0 %v4411
          %4413 = vmatprep.subr.mxu0 0.0
          %v4414 = vand.u32 %v4384, 4294901760
          %4415 = vmatpush1.msra.mxu0 %v4414
          %4416 = vmatprep.subr.mxu0 0.0
          %v4417 = vand.u32 %v4385, 4294901760
          %4418 = vmatpush1.msra.mxu0 %v4417
          %4419 = vmatprep.subr.mxu0 0.0
          %v4420 = vand.u32 %v4386, 4294901760
          %4421 = vmatpush1.msra.mxu0 %v4420
          %4422 = vmatprep.subr.mxu0 0.0
          %v4423 = vand.u32 %v4387, 4294901760
          %4424 = vmatpush1.msra.mxu0 %v4423
          %4425 = vmatprep.subr.mxu0 0.0
          %v4426 = vand.u32 %v4388, 4294901760
          %4427 = vmatpush1.msra.mxu0 %v4426
          %4428 = vmatprep.subr.mxu0 0.0
          %v4429 = vand.u32 %v4389, 4294901760
          %4430 = vmatpush1.msra.mxu0 %v4429
          %4431 = vmatprep.subr.mxu0 0.0
          %v4432 = vand.u32 %v4390, 4294901760
          %4433 = vmatpush1.msra.mxu0 %v4432
          %4434 = vmatprep.subr.mxu0 0.0
          %v4435 = vand.u32 %v4391, 4294901760
          %4436 = vmatpush1.msra.mxu0 %v4435
          %4437 = vmatprep.subr.mxu0 0.0
          %v4438 = vand.u32 %v4392, 4294901760
          %4439 = vmatpush1.msra.mxu0 %v4438
          %4440 = vmatprep.subr.mxu0 0.0
          %v4441 = vand.u32 %v4393, 4294901760
          %4442 = vmatpush1.msra.mxu0 %v4441
          %4443 = vmatprep.subr.mxu0 0.0
          %v4444 = vand.u32 %v4394, 4294901760
          %4445 = vmatpush1.msra.mxu0 %v4444
          %4446 = vmatprep.subr.mxu0 0.0
          %v4447 = vand.u32 %v4395, 4294901760
          %4448 = vmatpush1.msra.mxu0 %v4447
          %4449 = vmatprep.subr.mxu0 0.0
          %v4450 = vand.u32 %v4396, 4294901760
          %4451 = vmatpush1.msra.mxu0 %v4450
          %4452 = vmatprep.subr.mxu0 0.0
          %4453 = vmatpush1.msra.mxu0 0.0
          %4454 = vmatprep.subr.mxu0 0.0
          %4455 = vmatpush1.msra.mxu0 0.0
          %4456 = vmatprep.subr.mxu0 0.0
          %4457 = vmatpush1.msra.mxu0 0.0
          %4458 = vmatprep.subr.mxu0 0.0
          %4459 = vmatpush1.msra.mxu0 0.0
          %4460 = vmatprep.subr.mxu0 0.0
          %4461 = vmatpush1.msra.mxu0 0.0
          %4462 = vmatprep.subr.mxu0 0.0
          %4463 = vmatpush1.msra.mxu0 0.0
          %4464 = vmatprep.subr.mxu0 0.0
          %4465 = vmatpush1.msra.mxu0 0.0
          %4466 = vmatprep.subr.mxu0 0.0
          %4467 = vmatpush1.msra.mxu0 0.0
          %4468 = vmatprep.subr.mxu0 0.0
          %4469 = vmatpush1.msra.mxu0 0.0
          %4470 = vmatprep.subr.mxu0 0.0
          %4471 = vmatpush1.msra.mxu0 0.0
          %4472 = vmatprep.subr.mxu0 0.0
          %4473 = vmatpush1.msra.mxu0 0.0
          %4474 = vmatprep.subr.mxu0 0.0
          %4475 = vmatpush1.msra.mxu0 0.0
          %4476 = vmatprep.subr.mxu0 0.0
          %4477 = vmatpush1.msra.mxu0 0.0
          %4478 = vmatprep.subr.mxu0 0.0
          %4479 = vmatpush1.msra.mxu0 0.0
          %4480 = vmatprep.subr.mxu0 0.0
          %4481 = vmatpush1.msra.mxu0 0.0
          %4482 = vmatprep.subr.mxu0 0.0
          %4483 = vmatpush1.msra.mxu0 0.0
          %4484 = vmatprep.mubr.f32.mxu0 0.0
          %v4485 = vand.u32 %v4380, 4294901760
          %v4486 = vsub.f32 %v4380, %v4485
          %v4487 = vand.u32 %v4486, 4294901760
          %v4488 = vsub.f32 %v4486, %v4487
          %v4489 = vand.u32 %v4488, 4294901760
          %4490 = vmatmul.mubr.f32.gmra.mrb[0].mxu0 %v4489
          %v4491 = vpop.f32.mrb[0].mxu0
          %v4492 = vadd.f32 %v4402, %v4491
          %v4493 = vpop.f32.mrb[0].mxu0
          %4494 = vdwg.mxu0
          %4495 = vmatprep.subr.mxu0 0.0
          %v4496 = vand.u32 %v4381, 4294901760
          %v4497 = vsub.f32 %v4381, %v4496
          %v4498 = vand.u32 %v4497, 4294901760
          %v4499 = vsub.f32 %v4497, %v4498
          %v4500 = vand.u32 %v4499, 4294901760
          %4501 = vmatpush1.msra.mxu0 %v4500
          %4502 = vmatprep.subr.mxu0 0.0
          %v4503 = vand.u32 %v4382, 4294901760
          %v4504 = vsub.f32 %v4382, %v4503
          %v4505 = vand.u32 %v4504, 4294901760
          %v4506 = vsub.f32 %v4504, %v4505
          %v4507 = vand.u32 %v4506, 4294901760
          %4508 = vmatpush1.msra.mxu0 %v4507
          %4509 = vmatprep.subr.mxu0 0.0
          %v4510 = vand.u32 %v4383, 4294901760
          %v4511 = vsub.f32 %v4383, %v4510
          %v4512 = vand.u32 %v4511, 4294901760
          %v4513 = vsub.f32 %v4511, %v4512
          %v4514 = vand.u32 %v4513, 4294901760
          %4515 = vmatpush1.msra.mxu0 %v4514
          %4516 = vmatprep.subr.mxu0 0.0
          %v4517 = vand.u32 %v4384, 4294901760
          %v4518 = vsub.f32 %v4384, %v4517
          %v4519 = vand.u32 %v4518, 4294901760
          %v4520 = vsub.f32 %v4518, %v4519
          %v4521 = vand.u32 %v4520, 4294901760
          %4522 = vmatpush1.msra.mxu0 %v4521
          %4523 = vmatprep.subr.mxu0 0.0
          %v4524 = vand.u32 %v4385, 4294901760
          %v4525 = vsub.f32 %v4385, %v4524
          %v4526 = vand.u32 %v4525, 4294901760
          %v4527 = vsub.f32 %v4525, %v4526
          %v4528 = vand.u32 %v4527, 4294901760
          %4529 = vmatpush1.msra.mxu0 %v4528
          %4530 = vmatprep.subr.mxu0 0.0
          %v4531 = vand.u32 %v4386, 4294901760
          %v4532 = vsub.f32 %v4386, %v4531
          %v4533 = vand.u32 %v4532, 4294901760
          %v4534 = vsub.f32 %v4532, %v4533
          %v4535 = vand.u32 %v4534, 4294901760
          %4536 = vmatpush1.msra.mxu0 %v4535
          %4537 = vmatprep.subr.mxu0 0.0
          %v4538 = vand.u32 %v4387, 4294901760
          %v4539 = vsub.f32 %v4387, %v4538
          %v4540 = vand.u32 %v4539, 4294901760
          %v4541 = vsub.f32 %v4539, %v4540
          %v4542 = vand.u32 %v4541, 4294901760
          %4543 = vmatpush1.msra.mxu0 %v4542
          %4544 = vmatprep.subr.mxu0 0.0
          %v4545 = vand.u32 %v4388, 4294901760
          %v4546 = vsub.f32 %v4388, %v4545
          %v4547 = vand.u32 %v4546, 4294901760
          %v4548 = vsub.f32 %v4546, %v4547
          %v4549 = vand.u32 %v4548, 4294901760
          %4550 = vmatpush1.msra.mxu0 %v4549
          %4551 = vmatprep.subr.mxu0 0.0
          %v4552 = vand.u32 %v4389, 4294901760
          %v4553 = vsub.f32 %v4389, %v4552
          %v4554 = vand.u32 %v4553, 4294901760
          %v4555 = vsub.f32 %v4553, %v4554
          %v4556 = vand.u32 %v4555, 4294901760
          %4557 = vmatpush1.msra.mxu0 %v4556
          %4558 = vmatprep.subr.mxu0 0.0
          %v4559 = vand.u32 %v4390, 4294901760
          %v4560 = vsub.f32 %v4390, %v4559
          %v4561 = vand.u32 %v4560, 4294901760
          %v4562 = vsub.f32 %v4560, %v4561
          %v4563 = vand.u32 %v4562, 4294901760
          %4564 = vmatpush1.msra.mxu0 %v4563
          %4565 = vmatprep.subr.mxu0 0.0
          %v4566 = vand.u32 %v4391, 4294901760
          %v4567 = vsub.f32 %v4391, %v4566
          %v4568 = vand.u32 %v4567, 4294901760
          %v4569 = vsub.f32 %v4567, %v4568
          %v4570 = vand.u32 %v4569, 4294901760
          %4571 = vmatpush1.msra.mxu0 %v4570
          %4572 = vmatprep.subr.mxu0 0.0
          %v4573 = vand.u32 %v4392, 4294901760
          %v4574 = vsub.f32 %v4392, %v4573
          %v4575 = vand.u32 %v4574, 4294901760
          %v4576 = vsub.f32 %v4574, %v4575
          %v4577 = vand.u32 %v4576, 4294901760
          %4578 = vmatpush1.msra.mxu0 %v4577
          %4579 = vmatprep.subr.mxu0 0.0
          %v4580 = vand.u32 %v4393, 4294901760
          %v4581 = vsub.f32 %v4393, %v4580
          %v4582 = vand.u32 %v4581, 4294901760
          %v4583 = vsub.f32 %v4581, %v4582
          %v4584 = vand.u32 %v4583, 4294901760
          %4585 = vmatpush1.msra.mxu0 %v4584
          %4586 = vmatprep.subr.mxu0 0.0
          %v4587 = vand.u32 %v4394, 4294901760
          %v4588 = vsub.f32 %v4394, %v4587
          %v4589 = vand.u32 %v4588, 4294901760
          %v4590 = vsub.f32 %v4588, %v4589
          %v4591 = vand.u32 %v4590, 4294901760
          %4592 = vmatpush1.msra.mxu0 %v4591
          %4593 = vmatprep.subr.mxu0 0.0
          %v4594 = vand.u32 %v4395, 4294901760
          %v4595 = vsub.f32 %v4395, %v4594
          %v4596 = vand.u32 %v4595, 4294901760
          %v4597 = vsub.f32 %v4595, %v4596
          %v4598 = vand.u32 %v4597, 4294901760
          %4599 = vmatpush1.msra.mxu0 %v4598
          %4600 = vmatprep.subr.mxu0 0.0
          %v4601 = vand.u32 %v4396, 4294901760
          %v4602 = vsub.f32 %v4396, %v4601
          %v4603 = vand.u32 %v4602, 4294901760
          %v4604 = vsub.f32 %v4602, %v4603
          %v4605 = vand.u32 %v4604, 4294901760
          %4606 = vmatpush1.msra.mxu0 %v4605
          %4607 = vmatprep.subr.mxu0 0.0
          %4608 = vmatpush1.msra.mxu0 0.0
          %4609 = vmatprep.subr.mxu0 0.0
          %4610 = vmatpush1.msra.mxu0 0.0
          %4611 = vmatprep.subr.mxu0 0.0
          %4612 = vmatpush1.msra.mxu0 0.0
          %4613 = vmatprep.subr.mxu0 0.0
          %4614 = vmatpush1.msra.mxu0 0.0
          %4615 = vmatprep.subr.mxu0 0.0
          %4616 = vmatpush1.msra.mxu0 0.0
          %4617 = vmatprep.subr.mxu0 0.0
          %4618 = vmatpush1.msra.mxu0 0.0
          %4619 = vmatprep.subr.mxu0 0.0
          %4620 = vmatpush1.msra.mxu0 0.0
          %4621 = vmatprep.subr.mxu0 0.0
          %4622 = vmatpush1.msra.mxu0 0.0
          %4623 = vmatprep.subr.mxu0 0.0
          %4624 = vmatpush1.msra.mxu0 0.0
          %4625 = vmatprep.subr.mxu0 0.0
          %4626 = vmatpush1.msra.mxu0 0.0
          %4627 = vmatprep.subr.mxu0 0.0
          %4628 = vmatpush1.msra.mxu0 0.0
          %4629 = vmatprep.subr.mxu0 0.0
          %4630 = vmatpush1.msra.mxu0 0.0
          %4631 = vmatprep.subr.mxu0 0.0
          %4632 = vmatpush1.msra.mxu0 0.0
          %4633 = vmatprep.subr.mxu0 0.0
          %4634 = vmatpush1.msra.mxu0 0.0
          %4635 = vmatprep.subr.mxu0 0.0
          %4636 = vmatpush1.msra.mxu0 0.0
          %4637 = vmatprep.subr.mxu0 0.0
          %4638 = vmatpush1.msra.mxu0 0.0
          %4639 = vmatprep.mubr.f32.mxu0 0.0
          %v4640 = vand.u32 %v4380, 4294901760
          %4641 = vmatmul.mubr.f32.gmra.mrb[0].mxu0 %v4640
          %v4642 = vpop.f32.mrb[0].mxu0
          %v4643 = vadd.f32 %v4492, %v4642
          %v4644 = vpop.f32.mrb[0].mxu0
          %4645 = vdwg.mxu0
          %4646 = vmatprep.subr.mxu0 0.0
          %v4647 = vand.u32 %v4381, 4294901760
          %v4648 = vsub.f32 %v4381, %v4647
          %4649 = vmatpush1.msra.mxu0 %v4648
          %4650 = vmatprep.subr.mxu0 0.0
          %v4651 = vand.u32 %v4382, 4294901760
          %v4652 = vsub.f32 %v4382, %v4651
          %4653 = vmatpush1.msra.mxu0 %v4652
          %4654 = vmatprep.subr.mxu0 0.0
          %v4655 = vand.u32 %v4383, 4294901760
          %v4656 = vsub.f32 %v4383, %v4655
          %4657 = vmatpush1.msra.mxu0 %v4656
          %4658 = vmatprep.subr.mxu0 0.0
          %v4659 = vand.u32 %v4384, 4294901760
          %v4660 = vsub.f32 %v4384, %v4659
          %4661 = vmatpush1.msra.mxu0 %v4660
          %4662 = vmatprep.subr.mxu0 0.0
          %v4663 = vand.u32 %v4385, 4294901760
          %v4664 = vsub.f32 %v4385, %v4663
          %4665 = vmatpush1.msra.mxu0 %v4664
          %4666 = vmatprep.subr.mxu0 0.0
          %v4667 = vand.u32 %v4386, 4294901760
          %v4668 = vsub.f32 %v4386, %v4667
          %4669 = vmatpush1.msra.mxu0 %v4668
          %4670 = vmatprep.subr.mxu0 0.0
          %v4671 = vand.u32 %v4387, 4294901760
          %v4672 = vsub.f32 %v4387, %v4671
          %4673 = vmatpush1.msra.mxu0 %v4672
          %4674 = vmatprep.subr.mxu0 0.0
          %v4675 = vand.u32 %v4388, 4294901760
          %v4676 = vsub.f32 %v4388, %v4675
          %4677 = vmatpush1.msra.mxu0 %v4676
          %4678 = vmatprep.subr.mxu0 0.0
          %v4679 = vand.u32 %v4389, 4294901760
          %v4680 = vsub.f32 %v4389, %v4679
          %4681 = vmatpush1.msra.mxu0 %v4680
          %4682 = vmatprep.subr.mxu0 0.0
          %v4683 = vand.u32 %v4390, 4294901760
          %v4684 = vsub.f32 %v4390, %v4683
          %4685 = vmatpush1.msra.mxu0 %v4684
          %4686 = vmatprep.subr.mxu0 0.0
          %v4687 = vand.u32 %v4391, 4294901760
          %v4688 = vsub.f32 %v4391, %v4687
          %4689 = vmatpush1.msra.mxu0 %v4688
          %4690 = vmatprep.subr.mxu0 0.0
          %v4691 = vand.u32 %v4392, 4294901760
          %v4692 = vsub.f32 %v4392, %v4691
          %4693 = vmatpush1.msra.mxu0 %v4692
          %4694 = vmatprep.subr.mxu0 0.0
          %v4695 = vand.u32 %v4393, 4294901760
          %v4696 = vsub.f32 %v4393, %v4695
          %4697 = vmatpush1.msra.mxu0 %v4696
          %4698 = vmatprep.subr.mxu0 0.0
          %v4699 = vand.u32 %v4394, 4294901760
          %v4700 = vsub.f32 %v4394, %v4699
          %4701 = vmatpush1.msra.mxu0 %v4700
          %4702 = vmatprep.subr.mxu0 0.0
          %v4703 = vand.u32 %v4395, 4294901760
          %v4704 = vsub.f32 %v4395, %v4703
          %4705 = vmatpush1.msra.mxu0 %v4704
          %4706 = vmatprep.subr.mxu0 0.0
          %v4707 = vand.u32 %v4396, 4294901760
          %v4708 = vsub.f32 %v4396, %v4707
          %4709 = vmatpush1.msra.mxu0 %v4708
          %4710 = vmatprep.subr.mxu0 0.0
          %4711 = vmatpush1.msra.mxu0 0.0
          %4712 = vmatprep.subr.mxu0 0.0
          %4713 = vmatpush1.msra.mxu0 0.0
          %4714 = vmatprep.subr.mxu0 0.0
          %4715 = vmatpush1.msra.mxu0 0.0
          %4716 = vmatprep.subr.mxu0 0.0
          %4717 = vmatpush1.msra.mxu0 0.0
          %4718 = vmatprep.subr.mxu0 0.0
          %4719 = vmatpush1.msra.mxu0 0.0
          %4720 = vmatprep.subr.mxu0 0.0
          %4721 = vmatpush1.msra.mxu0 0.0
          %4722 = vmatprep.subr.mxu0 0.0
          %4723 = vmatpush1.msra.mxu0 0.0
          %4724 = vmatprep.subr.mxu0 0.0
          %4725 = vmatpush1.msra.mxu0 0.0
          %4726 = vmatprep.subr.mxu0 0.0
          %4727 = vmatpush1.msra.mxu0 0.0
          %4728 = vmatprep.subr.mxu0 0.0
          %4729 = vmatpush1.msra.mxu0 0.0
          %4730 = vmatprep.subr.mxu0 0.0
          %4731 = vmatpush1.msra.mxu0 0.0
          %4732 = vmatprep.subr.mxu0 0.0
          %4733 = vmatpush1.msra.mxu0 0.0
          %4734 = vmatprep.subr.mxu0 0.0
          %4735 = vmatpush1.msra.mxu0 0.0
          %4736 = vmatprep.subr.mxu0 0.0
          %4737 = vmatpush1.msra.mxu0 0.0
          %4738 = vmatprep.subr.mxu0 0.0
          %4739 = vmatpush1.msra.mxu0 0.0
          %4740 = vmatprep.subr.mxu0 0.0
          %4741 = vmatpush1.msra.mxu0 0.0
          %4742 = vmatprep.mubr.f32.mxu0 0.0
          %v4743 = vand.u32 %v4380, 4294901760
          %v4744 = vsub.f32 %v4380, %v4743
          %4745 = vmatmul.mubr.f32.gmra.mrb[0].mxu0 %v4744
          %v4746 = vpop.f32.mrb[0].mxu0
          %v4747 = vadd.f32 %v4643, %v4746
          %v4748 = vpop.f32.mrb[0].mxu0
          %4749 = vdwg.mxu0
          %4750 = vmatprep.subr.mxu0 0.0
          %v4751 = vand.u32 %v4381, 4294901760
          %4752 = vmatpush1.msra.mxu0 %v4751
          %4753 = vmatprep.subr.mxu0 0.0
          %v4754 = vand.u32 %v4382, 4294901760
          %4755 = vmatpush1.msra.mxu0 %v4754
          %4756 = vmatprep.subr.mxu0 0.0
          %v4757 = vand.u32 %v4383, 4294901760
          %4758 = vmatpush1.msra.mxu0 %v4757
          %4759 = vmatprep.subr.mxu0 0.0
          %v4760 = vand.u32 %v4384, 4294901760
          %4761 = vmatpush1.msra.mxu0 %v4760
          %4762 = vmatprep.subr.mxu0 0.0
          %v4763 = vand.u32 %v4385, 4294901760
          %4764 = vmatpush1.msra.mxu0 %v4763
          %4765 = vmatprep.subr.mxu0 0.0
          %v4766 = vand.u32 %v4386, 4294901760
          %4767 = vmatpush1.msra.mxu0 %v4766
          %4768 = vmatprep.subr.mxu0 0.0
          %v4769 = vand.u32 %v4387, 4294901760
          %4770 = vmatpush1.msra.mxu0 %v4769
          %4771 = vmatprep.subr.mxu0 0.0
          %v4772 = vand.u32 %v4388, 4294901760
          %4773 = vmatpush1.msra.mxu0 %v4772
          %4774 = vmatprep.subr.mxu0 0.0
          %v4775 = vand.u32 %v4389, 4294901760
          %4776 = vmatpush1.msra.mxu0 %v4775
          %4777 = vmatprep.subr.mxu0 0.0
          %v4778 = vand.u32 %v4390, 4294901760
          %4779 = vmatpush1.msra.mxu0 %v4778
          %4780 = vmatprep.subr.mxu0 0.0
          %v4781 = vand.u32 %v4391, 4294901760
          %4782 = vmatpush1.msra.mxu0 %v4781
          %4783 = vmatprep.subr.mxu0 0.0
          %v4784 = vand.u32 %v4392, 4294901760
          %4785 = vmatpush1.msra.mxu0 %v4784
          %4786 = vmatprep.subr.mxu0 0.0
          %v4787 = vand.u32 %v4393, 4294901760
          %4788 = vmatpush1.msra.mxu0 %v4787
          %4789 = vmatprep.subr.mxu0 0.0
          %v4790 = vand.u32 %v4394, 4294901760
          %4791 = vmatpush1.msra.mxu0 %v4790
          %4792 = vmatprep.subr.mxu0 0.0
          %v4793 = vand.u32 %v4395, 4294901760
          %4794 = vmatpush1.msra.mxu0 %v4793
          %4795 = vmatprep.subr.mxu0 0.0
          %v4796 = vand.u32 %v4396, 4294901760
          %4797 = vmatpush1.msra.mxu0 %v4796
          %4798 = vmatprep.subr.mxu0 0.0
          %4799 = vmatpush1.msra.mxu0 0.0
          %4800 = vmatprep.subr.mxu0 0.0
          %4801 = vmatpush1.msra.mxu0 0.0
          %4802 = vmatprep.subr.mxu0 0.0
          %4803 = vmatpush1.msra.mxu0 0.0
          %4804 = vmatprep.subr.mxu0 0.0
          %4805 = vmatpush1.msra.mxu0 0.0
          %4806 = vmatprep.subr.mxu0 0.0
          %4807 = vmatpush1.msra.mxu0 0.0
          %4808 = vmatprep.subr.mxu0 0.0
          %4809 = vmatpush1.msra.mxu0 0.0
          %4810 = vmatprep.subr.mxu0 0.0
          %4811 = vmatpush1.msra.mxu0 0.0
          %4812 = vmatprep.subr.mxu0 0.0
          %4813 = vmatpush1.msra.mxu0 0.0
          %4814 = vmatprep.subr.mxu0 0.0
          %4815 = vmatpush1.msra.mxu0 0.0
          %4816 = vmatprep.subr.mxu0 0.0
          %4817 = vmatpush1.msra.mxu0 0.0
          %4818 = vmatprep.subr.mxu0 0.0
          %4819 = vmatpush1.msra.mxu0 0.0
          %4820 = vmatprep.subr.mxu0 0.0
          %4821 = vmatpush1.msra.mxu0 0.0
          %4822 = vmatprep.subr.mxu0 0.0
          %4823 = vmatpush1.msra.mxu0 0.0
          %4824 = vmatprep.subr.mxu0 0.0
          %4825 = vmatpush1.msra.mxu0 0.0
          %4826 = vmatprep.subr.mxu0 0.0
          %4827 = vmatpush1.msra.mxu0 0.0
          %4828 = vmatprep.subr.mxu0 0.0
          %4829 = vmatpush1.msra.mxu0 0.0
          %4830 = vmatprep.mubr.f32.mxu0 0.0
          %v4831 = vand.u32 %v4380, 4294901760
          %v4832 = vsub.f32 %v4380, %v4831
          %v4833 = vand.u32 %v4832, 4294901760
          %4834 = vmatmul.mubr.f32.gmra.mrb[0].mxu0 %v4833
          %v4835 = vpop.f32.mrb[0].mxu0
          %v4836 = vadd.f32 %v4747, %v4835
          %v4837 = vpop.f32.mrb[0].mxu0
          %4838 = vdwg.mxu0
          %4839 = vmatprep.subr.mxu0 0.0
          %v4840 = vand.u32 %v4381, 4294901760
          %v4841 = vsub.f32 %v4381, %v4840
          %v4842 = vand.u32 %v4841, 4294901760
          %4843 = vmatpush1.msra.mxu0 %v4842
          %4844 = vmatprep.subr.mxu0 0.0
          %v4845 = vand.u32 %v4382, 4294901760
          %v4846 = vsub.f32 %v4382, %v4845
          %v4847 = vand.u32 %v4846, 4294901760
          %4848 = vmatpush1.msra.mxu0 %v4847
          %4849 = vmatprep.subr.mxu0 0.0
          %v4850 = vand.u32 %v4383, 4294901760
          %v4851 = vsub.f32 %v4383, %v4850
          %v4852 = vand.u32 %v4851, 4294901760
          %4853 = vmatpush1.msra.mxu0 %v4852
          %4854 = vmatprep.subr.mxu0 0.0
          %v4855 = vand.u32 %v4384, 4294901760
          %v4856 = vsub.f32 %v4384, %v4855
          %v4857 = vand.u32 %v4856, 4294901760
          %4858 = vmatpush1.msra.mxu0 %v4857
          %4859 = vmatprep.subr.mxu0 0.0
          %v4860 = vand.u32 %v4385, 4294901760
          %v4861 = vsub.f32 %v4385, %v4860
          %v4862 = vand.u32 %v4861, 4294901760
          %4863 = vmatpush1.msra.mxu0 %v4862
          %4864 = vmatprep.subr.mxu0 0.0
          %v4865 = vand.u32 %v4386, 4294901760
          %v4866 = vsub.f32 %v4386, %v4865
          %v4867 = vand.u32 %v4866, 4294901760
          %4868 = vmatpush1.msra.mxu0 %v4867
          %4869 = vmatprep.subr.mxu0 0.0
          %v4870 = vand.u32 %v4387, 4294901760
          %v4871 = vsub.f32 %v4387, %v4870
          %v4872 = vand.u32 %v4871, 4294901760
          %4873 = vmatpush1.msra.mxu0 %v4872
          %4874 = vmatprep.subr.mxu0 0.0
          %v4875 = vand.u32 %v4388, 4294901760
          %v4876 = vsub.f32 %v4388, %v4875
          %v4877 = vand.u32 %v4876, 4294901760
          %4878 = vmatpush1.msra.mxu0 %v4877
          %4879 = vmatprep.subr.mxu0 0.0
          %v4880 = vand.u32 %v4389, 4294901760
          %v4881 = vsub.f32 %v4389, %v4880
          %v4882 = vand.u32 %v4881, 4294901760
          %4883 = vmatpush1.msra.mxu0 %v4882
          %4884 = vmatprep.subr.mxu0 0.0
          %v4885 = vand.u32 %v4390, 4294901760
          %v4886 = vsub.f32 %v4390, %v4885
          %v4887 = vand.u32 %v4886, 4294901760
          %4888 = vmatpush1.msra.mxu0 %v4887
          %4889 = vmatprep.subr.mxu0 0.0
          %v4890 = vand.u32 %v4391, 4294901760
          %v4891 = vsub.f32 %v4391, %v4890
          %v4892 = vand.u32 %v4891, 4294901760
          %4893 = vmatpush1.msra.mxu0 %v4892
          %4894 = vmatprep.subr.mxu0 0.0
          %v4895 = vand.u32 %v4392, 4294901760
          %v4896 = vsub.f32 %v4392, %v4895
          %v4897 = vand.u32 %v4896, 4294901760
          %4898 = vmatpush1.msra.mxu0 %v4897
          %4899 = vmatprep.subr.mxu0 0.0
          %v4900 = vand.u32 %v4393, 4294901760
          %v4901 = vsub.f32 %v4393, %v4900
          %v4902 = vand.u32 %v4901, 4294901760
          %4903 = vmatpush1.msra.mxu0 %v4902
          %4904 = vmatprep.subr.mxu0 0.0
          %v4905 = vand.u32 %v4394, 4294901760
          %v4906 = vsub.f32 %v4394, %v4905
          %v4907 = vand.u32 %v4906, 4294901760
          %4908 = vmatpush1.msra.mxu0 %v4907
          %4909 = vmatprep.subr.mxu0 0.0
          %v4910 = vand.u32 %v4395, 4294901760
          %v4911 = vsub.f32 %v4395, %v4910
          %v4912 = vand.u32 %v4911, 4294901760
          %4913 = vmatpush1.msra.mxu0 %v4912
          %4914 = vmatprep.subr.mxu0 0.0
          %v4915 = vand.u32 %v4396, 4294901760
          %v4916 = vsub.f32 %v4396, %v4915
          %v4917 = vand.u32 %v4916, 4294901760
          %4918 = vmatpush1.msra.mxu0 %v4917
          %4919 = vmatprep.subr.mxu0 0.0
          %4920 = vmatpush1.msra.mxu0 0.0
          %4921 = vmatprep.subr.mxu0 0.0
          %4922 = vmatpush1.msra.mxu0 0.0
          %4923 = vmatprep.subr.mxu0 0.0
          %4924 = vmatpush1.msra.mxu0 0.0
          %4925 = vmatprep.subr.mxu0 0.0
          %4926 = vmatpush1.msra.mxu0 0.0
          %4927 = vmatprep.subr.mxu0 0.0
          %4928 = vmatpush1.msra.mxu0 0.0
          %4929 = vmatprep.subr.mxu0 0.0
          %4930 = vmatpush1.msra.mxu0 0.0
          %4931 = vmatprep.subr.mxu0 0.0
          %4932 = vmatpush1.msra.mxu0 0.0
          %4933 = vmatprep.subr.mxu0 0.0
          %4934 = vmatpush1.msra.mxu0 0.0
          %4935 = vmatprep.subr.mxu0 0.0
          %4936 = vmatpush1.msra.mxu0 0.0
          %4937 = vmatprep.subr.mxu0 0.0
          %4938 = vmatpush1.msra.mxu0 0.0
          %4939 = vmatprep.subr.mxu0 0.0
          %4940 = vmatpush1.msra.mxu0 0.0
          %4941 = vmatprep.subr.mxu0 0.0
          %4942 = vmatpush1.msra.mxu0 0.0
          %4943 = vmatprep.subr.mxu0 0.0
          %4944 = vmatpush1.msra.mxu0 0.0
          %4945 = vmatprep.subr.mxu0 0.0
          %4946 = vmatpush1.msra.mxu0 0.0
          %4947 = vmatprep.subr.mxu0 0.0
          %4948 = vmatpush1.msra.mxu0 0.0
          %4949 = vmatprep.subr.mxu0 0.0
          %4950 = vmatpush1.msra.mxu0 0.0
          %4951 = vmatprep.mubr.f32.mxu0 0.0
          %v4952 = vand.u32 %v4380, 4294901760
          %4953 = vmatmul.mubr.f32.gmra.mrb[0].mxu0 %v4952
          %v4954 = vpop.f32.mrb[0].mxu0
          %v4955 = vadd.f32 %v4836, %v4954
          %v4956 = vpop.f32.mrb[0].mxu0
          %4957 = vdwg.mxu0
          %4958 = vmatprep.subr.mxu0 0.0
          %v4959 = vand.u32 %v4381, 4294901760
          %4960 = vmatpush1.msra.mxu0 %v4959
          %4961 = vmatprep.subr.mxu0 0.0
          %v4962 = vand.u32 %v4382, 4294901760
          %4963 = vmatpush1.msra.mxu0 %v4962
          %4964 = vmatprep.subr.mxu0 0.0
          %v4965 = vand.u32 %v4383, 4294901760
          %4966 = vmatpush1.msra.mxu0 %v4965
          %4967 = vmatprep.subr.mxu0 0.0
          %v4968 = vand.u32 %v4384, 4294901760
          %4969 = vmatpush1.msra.mxu0 %v4968
          %4970 = vmatprep.subr.mxu0 0.0
          %v4971 = vand.u32 %v4385, 4294901760
          %4972 = vmatpush1.msra.mxu0 %v4971
          %4973 = vmatprep.subr.mxu0 0.0
          %v4974 = vand.u32 %v4386, 4294901760
          %4975 = vmatpush1.msra.mxu0 %v4974
          %4976 = vmatprep.subr.mxu0 0.0
          %v4977 = vand.u32 %v4387, 4294901760
          %4978 = vmatpush1.msra.mxu0 %v4977
          %4979 = vmatprep.subr.mxu0 0.0
          %v4980 = vand.u32 %v4388, 4294901760
          %4981 = vmatpush1.msra.mxu0 %v4980
          %4982 = vmatprep.subr.mxu0 0.0
          %v4983 = vand.u32 %v4389, 4294901760
          %4984 = vmatpush1.msra.mxu0 %v4983
          %4985 = vmatprep.subr.mxu0 0.0
          %v4986 = vand.u32 %v4390, 4294901760
          %4987 = vmatpush1.msra.mxu0 %v4986
          %4988 = vmatprep.subr.mxu0 0.0
          %v4989 = vand.u32 %v4391, 4294901760
          %4990 = vmatpush1.msra.mxu0 %v4989
          %4991 = vmatprep.subr.mxu0 0.0
          %v4992 = vand.u32 %v4392, 4294901760
          %4993 = vmatpush1.msra.mxu0 %v4992
          %4994 = vmatprep.subr.mxu0 0.0
          %v4995 = vand.u32 %v4393, 4294901760
          %4996 = vmatpush1.msra.mxu0 %v4995
          %4997 = vmatprep.subr.mxu0 0.0
          %v4998 = vand.u32 %v4394, 4294901760
          %4999 = vmatpush1.msra.mxu0 %v4998
          %5000 = vmatprep.subr.mxu0 0.0
          %v5001 = vand.u32 %v4395, 4294901760
          %5002 = vmatpush1.msra.mxu0 %v5001
          %5003 = vmatprep.subr.mxu0 0.0
          %v5004 = vand.u32 %v4396, 4294901760
          %5005 = vmatpush1.msra.mxu0 %v5004
          %5006 = vmatprep.subr.mxu0 0.0
          %5007 = vmatpush1.msra.mxu0 0.0
          %5008 = vmatprep.subr.mxu0 0.0
          %5009 = vmatpush1.msra.mxu0 0.0
          %5010 = vmatprep.subr.mxu0 0.0
          %5011 = vmatpush1.msra.mxu0 0.0
          %5012 = vmatprep.subr.mxu0 0.0
          %5013 = vmatpush1.msra.mxu0 0.0
          %5014 = vmatprep.subr.mxu0 0.0
          %5015 = vmatpush1.msra.mxu0 0.0
          %5016 = vmatprep.subr.mxu0 0.0
          %5017 = vmatpush1.msra.mxu0 0.0
          %5018 = vmatprep.subr.mxu0 0.0
          %5019 = vmatpush1.msra.mxu0 0.0
          %5020 = vmatprep.subr.mxu0 0.0
          %5021 = vmatpush1.msra.mxu0 0.0
          %5022 = vmatprep.subr.mxu0 0.0
          %5023 = vmatpush1.msra.mxu0 0.0
          %5024 = vmatprep.subr.mxu0 0.0
          %5025 = vmatpush1.msra.mxu0 0.0
          %5026 = vmatprep.subr.mxu0 0.0
          %5027 = vmatpush1.msra.mxu0 0.0
          %5028 = vmatprep.subr.mxu0 0.0
          %5029 = vmatpush1.msra.mxu0 0.0
          %5030 = vmatprep.subr.mxu0 0.0
          %5031 = vmatpush1.msra.mxu0 0.0
          %5032 = vmatprep.subr.mxu0 0.0
          %5033 = vmatpush1.msra.mxu0 0.0
          %5034 = vmatprep.subr.mxu0 0.0
          %5035 = vmatpush1.msra.mxu0 0.0
          %5036 = vmatprep.subr.mxu0 0.0
          %5037 = vmatpush1.msra.mxu0 0.0
          %5038 = vmatprep.mubr.f32.mxu0 0.0
          %v5039 = vand.u32 %v4380, 4294901760
          %5040 = vmatmul.mubr.f32.gmra.mrb[0].mxu0 %v5039
          %v5041 = vpop.f32.mrb[0].mxu0
          %v5042 = vadd.f32 %v4955, %v5041
          %v5043 = vpop.f32.mrb[0].mxu0
          %5044 = vdwg.mxu0
          %v5045 = vadd.f32 %v3683, %v5042
          %v5046 = vld [vmem:[%s6] sm:$0x1]
          %v5047 = vld [vmem:[%s7] sm:$0x1]
          %5048 = vadd.xlane.f32.xlu0 %v5045
          %v5049 = vpop.xlane.xlu0 %5048
          %v5050 = vmul.f32 %v5049, 0.03125
          %v5051 = vsub.f32 %v5045, %v5050
          %v5052 = vmul.f32 %v5051, %v3686
          %v5053 = vmul.f32 %v5052, %v5052
          %5054 = vadd.xlane.f32.xlu0 %v5053
          %v5055 = vpop.xlane.xlu0 %5054
          %v5056 = vmul.f32 %v5055, 0.03125
          %v5057 = vadd.f32 %v5056, 1e-05
          %v5058 = vrsqrt.pop %v5057
          %v5059 = vmul.f32 %v5052, %v5058
          %v5061 = vlaneseq
          %v5062 = vshrl.u32 %v5061, 7
          %v5063 = vsub.s32 0, %v5062
          %v5064 = vrot.slane %v5046, %v5063
          %v5066 = vmul.f32 %v5059, %v5064
          %v5068 = vlaneseq
          %v5069 = vshrl.u32 %v5068, 7
          %v5070 = vsub.s32 0, %v5069
          %v5071 = vrot.slane %v5047, %v5070
          %v5073 = vadd.f32 %v5066, %v5071
          %5074 = vst [vmem:[%s546] sm:$0xff] %v5073
        $region96: #{tpu_custom_call.1} parent=67 // pred_fallthru
          _
        %s5075 = sand.u32 %s320, 1
        %s5076 = scalar_lea.sflag [#allocation5], %s5075
        %s5077 = sand.u32 %s320, 1
        %s5078 = smul.addr %s5077, 8
        %s5079 = scalar_lea.vmem [#allocation12], %s5078
        // Predicated region
        $region97: #{tpu_custom_call.1} parent=67 // pred_check
          %p5080 = pneg %p330
        $region98: #{tpu_custom_call.1} parent=67 // pred_check_branch
          %5082 = sbr.rel (%p5080) target = $region100
        $region99: #{tpu_custom_call.1} parent=67 // pred_region
          %s5084 = ssub.s32 128, 128
          %5085 = vsyncadd %s5076, %s5084
          %s5086 = smul.addr %s37, 128
          %s5087 = scalar_lea.hbm %s12, %s5086
          %s5089 = sshll.u32 %s5079, 4
          %s5090 = int_to_ptr.vmem [resolvable:$true] %s5089
          %5092 = dma.vmem_to_hbm [thread:$0]  %s5090, 128, %s5087, %s5076
        $region100: #{tpu_custom_call.1} parent=67 // pred_fallthru
          _
      $region68: #{tpu_custom_call.1} parent=5 // pred_fallthru
        _
      %p5093 = scmp.le.s32.totalorder 2, %s28
      // Predicated region
      $region101: #{tpu_custom_call.1} parent=5 // pred_check
        %p5094 = pneg %p5093
      $region102: #{tpu_custom_call.1} parent=5 // pred_check_branch
        %5096 = sbr.rel (%p5094) target = $region104
      $region103: #{tpu_custom_call.1} parent=5 // pred_region
        %s5097 = ssub.s32 %s28, 2
        // Predicated region
        $region105: #{tpu_custom_call.1} parent=103 // pred_check
          %p5098 = pneg %p336
        $region106: #{tpu_custom_call.1} parent=103 // pred_check_branch
          %5100 = sbr.rel (%p5098) target = $region108
        $region107: #{tpu_custom_call.1} parent=103 // pred_region
          %s5101 = sand.u32 %s321, 1
          %s5102 = scalar_lea.sflag [#allocation5], %s5101
          %s5103 = sand.u32 %s321, 1
          %s5104 = smul.addr %s5103, 8
          %s5105 = scalar_lea.vmem [#allocation12], %s5104
          %5106 = dma.done %s5102, 128
        $region108: #{tpu_custom_call.1} parent=103 // pred_fallthru
          _
      $region104: #{tpu_custom_call.1} parent=5 // pred_fallthru
        _
    $region6: #{tpu_custom_call.1} parent=1 // loop_footer
      %s32 = sadd.s32 1, %s28
    $region7: #{tpu_custom_call.1} parent=1 // loop_footer_branch
      %27 = sbr.rel target = $region3
    $region8: #{tpu_custom_call.1} parent=1 // loop_exit
      _
    %5107 = vsyncpa [#allocation4], 1
    %s5108 = scalar_lea.sflag [#allocation4], 1
    %5109 = vsyncpa %s5108, 1
    %5110 = vsyncpa [#allocation7], 1
    %s5111 = scalar_lea.sflag [#allocation7], 1
    %5112 = vsyncpa %s5111, 1
    %5113 = vsyncpa [#allocation10], 1
    %5114 = vsyncpa [#allocation5], 1
    %s5115 = scalar_lea.sflag [#allocation5], 1
    %5116 = vsyncpa %s5115, 1

</llo_original>
